<compile_context>
chip_gen: v7x
topology: tpu7x:2x2x1
jax: 0.10.0
libtpu: 0.0.40
codegen_flags: <defaults>
</compile_context>

<pallas_src>
import numpy as np
import jax
import jax.numpy as jnp
from jax.experimental import pallas as pl
from jax.experimental.pallas import tpu as pltpu


# ---------------- host-side static 1-D pooling / upsampling matrices --------

def adaptive_avg_pool_matrix(out_size, in_size):
    """P[i, j] so that pooled = P @ x reproduces nn.AdaptiveAvgPool (1-D)."""
    P = np.zeros((out_size, in_size), dtype=np.float32)
    for i in range(out_size):
        start = (i * in_size) // out_size
        end = -(-((i + 1) * in_size) // out_size)  # ceil
        P[i, start:end] = 1.0 / (end - start)
    return P


def bilinear_upsample_matrix(out_size, in_size):
    """U[i, j] for 1-D bilinear upsample with align_corners=True."""
    U = np.zeros((out_size, in_size), dtype=np.float32)
    if in_size == 1:
        U[:, 0] = 1.0
        return U
    scale = (in_size - 1) / (out_size - 1) if out_size > 1 else 0.0
    for i in range(out_size):
        src = i * scale
        i0 = min(int(np.floor(src)), in_size - 1)
        i1 = min(i0 + 1, in_size - 1)
        frac = src - i0
        U[i, i0] += 1.0 - frac
        U[i, i1] += frac
    return U


# ---------------- fused Pallas kernel ----------------------------------------

# Interior W offset inside the halo-padded scratch.  16 = bf16 sublane tile, so
# the per-step interior store [1:H+1, _OX:_OX+W, :] is tile aligned (unmasked).
_OX = 16


def _psp_fused_kernel(x_ref, p_ref, u_ref, w1_ref, mask_ref, wp_ref, wx_ref,
                      scale_ref, bias_ref, o_ref, prior_pad, x_pad):
    """Whole PSPModule forward for one batch element.

    x_ref     : (1, H, W, C)       bf16  input features
    p_ref     : (Kp, H*W)          f32   all stages' pooling maps stacked on K
    u_ref     : (H*W, Kp)          bf16  all stages' upsample maps stacked on K
    w1_ref    : (C, Cp)            bf16  1x1 weights, stage s in channel block s
    mask_ref  : (Kp, Cp)           f32   0/1 block mask (row-stage == col-stage)
    wp_ref    : (3, 3*Cp, Cout)    bf16  3x3 weights, prior channels, dx on K
    wx_ref    : (9, C, Cout)       bf16  3x3 weights, raw-input channels, per tap
    scale_ref, bias_ref : (1, Cout) f32  folded BatchNorm (eval mode)
    o_ref     : (1, H, W, Cout)    f32
    prior_pad : (H+2, Wp, Cp)      bf16  VMEM scratch (halo-padded priors)
    x_pad     : (H+2, Wp, C)       bf16  VMEM scratch (halo-padded input)
    """
    H, W, C = x_ref.shape[1], x_ref.shape[2], x_ref.shape[3]
    Cp = w1_ref.shape[1]
    Cout = o_ref.shape[3]
    OX = _OX

    # Zero the halo scratch ONCE.  Interiors are fully rewritten every grid
    # step and scratch persists across steps, so the halo stays zero.  This is
    # only safe because the batch axis is "arbitrary" (never split across
    # TensorCores) -- see compiler_params in the wrapper.
    @pl.when(pl.program_id(0) == 0)
    def _():
        prior_pad[...] = jnp.zeros_like(prior_pad)
        x_pad[...] = jnp.zeros_like(x_pad)

    x = x_ref[0]                                   # (H, W, C) bf16
    x_flat = x.reshape(H * W, C)

    # --- all pyramid stages fused into three matmuls -------------------------
    # Pooling (averaging coefficients) kept on an f32 path for accuracy.
    pooled = jnp.dot(p_ref[...], x_flat.astype(jnp.float32),
                     preferred_element_type=jnp.float32)              # (Kp, C)
    conv = jnp.dot(pooled.astype(jnp.bfloat16), w1_ref[...],
                   preferred_element_type=jnp.float32)                # (Kp, Cp)
    conv = conv * mask_ref[...]            # remove cross-stage channel terms
    priors = jnp.dot(u_ref[...], conv.astype(jnp.bfloat16),
                     preferred_element_type=jnp.float32)              # (HW, Cp)

    # --- interior writes into the persistent halo-padded scratch -------------
    prior_pad[1:H + 1, OX:OX + W, :] = (
        priors.reshape(H, W, Cp).astype(prior_pad.dtype))
    x_pad[1:H + 1, OX:OX + W, :] = x.astype(x_pad.dtype)

    # --- 3x3 conv + folded BatchNorm ------------------------------------------
    # Separate accumulators: the big K=3*Cp matmuls chain back-to-back without
    # interleaved adds from the tiny raw-input dots.
    acc_p = jnp.zeros((H * W, Cout), jnp.float32)
    acc_x = jnp.zeros((H * W, Cout), jnp.float32)
    for dy in range(3):
        rows_p = prior_pad[dy:dy + H, :, :]        # (H, Wp, Cp)
        patch_p = jnp.concatenate(
            [rows_p[:, OX - 1 + dx:OX - 1 + dx + W, :] for dx in range(3)],
            axis=-1).reshape(H * W, 3 * Cp)        # K = 3*Cp (multiple of 128)
        acc_p = acc_p + jnp.dot(patch_p, wp_ref[dy],
                                preferred_element_type=jnp.float32)

        rows_x = x_pad[dy:dy + H, :, :]            # (H, Wp, C)  tiny C block
        for dx in range(3):
            patch_x = rows_x[:, OX - 1 + dx:OX - 1 + dx + W, :].reshape(H * W, C)
            acc_x = acc_x + jnp.dot(patch_x, wx_ref[dy * 3 + dx],
                                    preferred_element_type=jnp.float32)

    out = (acc_p + acc_x) * scale_ref[...] + bias_ref[...]
    o_ref[0] = out.reshape(H, W, Cout).astype(o_ref.dtype)


# ---------------- wrapper -----------------------------------------------------

def psp_module_forward(feats_nchw, params):
    """PSPModule.forward.  feats: (N, C, H, W) float32 (PyTorch NCHW).

    Note: for production use, feed NHWC directly and drop the boundary
    transposes (each is an extra HBM round trip at real channel counts).
    """
    x = jnp.transpose(feats_nchw, (0, 2, 3, 1))            # -> NHWC
    N, H, W, C = x.shape
    sizes = tuple(params["sizes"])
    num_stages = len(sizes)
    F = params["stage_w"][0].shape[1]
    Cp = num_stages * F                                     # prior channels
    w_hwio = params["bottleneck_w"]                         # (3, 3, Cp + C, Cout)
    Cout = w_hwio.shape[-1]

    # Stack every stage's tiny pooling / upsample map along ONE contraction
    # axis (tight packing, padded to a multiple of 8 rows) so the whole
    # pyramid is three matmuls instead of three per stage.
    sq = [s * s for s in sizes]
    offs = np.concatenate([[0], np.cumsum(sq)])
    Kp = int(-(-int(offs[-1]) // 8) * 8)                    # round up to 8
    P_packed = np.zeros((Kp, H * W), np.float32)
    U_packed = np.zeros((H * W, Kp), np.float32)
    mask = np.zeros((Kp, Cp), np.float32)
    for i, s in enumerate(sizes):
        Ph, Pw = adaptive_avg_pool_matrix(s, H), adaptive_avg_pool_matrix(s, W)
        Uh, Uw = bilinear_upsample_matrix(H, s), bilinear_upsample_matrix(W, s)
        r0 = int(offs[i])
        P_packed[r0:r0 + s * s, :] = np.kron(Ph, Pw)        # (s^2, H*W)
        U_packed[:, r0:r0 + s * s] = np.kron(Uh, Uw)        # (H*W, s^2)
        mask[r0:r0 + s * s, i * F:(i + 1) * F] = 1.0        # block mask
    P_packed = jnp.asarray(P_packed, jnp.float32)           # pooling stays f32
    U_packed = jnp.asarray(U_packed, jnp.bfloat16)
    mask = jnp.asarray(mask, jnp.float32)

    # All 1x1 stage weights in one (C, Cp) matrix; stage s occupies channel
    # block s, so (pooled @ w1) * mask followed by the single upsample matmul
    # yields the channel concatenation of the priors directly.
    w1 = np.zeros((C, Cp), np.float32)
    for s in range(num_stages):
        w1[:, s * F:(s + 1) * F] = np.asarray(params["stage_w"][s])
    w1 = jnp.asarray(w1, jnp.bfloat16)

    # Split the 3x3 bottleneck weight: lane-aligned prior block (dx folded into
    # K) and the tiny raw-input block.  Channel order matches
    # torch.cat(priors + [feats], dim=1).
    wp = w_hwio[:, :, :Cp, :].reshape(3, 3 * Cp, Cout).astype(jnp.bfloat16)
    wx = w_hwio[:, :, Cp:, :].reshape(9, C, Cout).astype(jnp.bfloat16)
    scale = params["bn_scale"].reshape(1, Cout).astype(jnp.float32)
    bias = params["bn_bias"].reshape(1, Cout).astype(jnp.float32)

    x_bf = x.astype(jnp.bfloat16)
    Wp = _OX + W + 8                                        # halo-padded width

    flops = 2 * N * (Kp * H * W * C            # pooling
                     + Kp * C * Cp             # fused 1x1
                     + H * W * Kp * Cp         # fused upsample
                     + H * W * 9 * (Cp + C) * Cout)   # 3x3 bottleneck
    bytes_accessed = (x_bf.size * 2 + P_packed.size * 4 + U_packed.size * 2
                      + mask.size * 4 + w1.size * 2 + wp.size * 2 + wx.size * 2
                      + 2 * Cout * 4 + N * H * W * Cout * 4)

    out = pl.pallas_call(
        _psp_fused_kernel,
        out_shape=jax.ShapeDtypeStruct((N, H, W, Cout), jnp.float32),
        grid=(N,),
        in_specs=[
            pl.BlockSpec((1, H, W, C), lambda n: (n, 0, 0, 0)),
            pl.BlockSpec((Kp, H * W), lambda n: (0, 0)),
            pl.BlockSpec((H * W, Kp), lambda n: (0, 0)),
            pl.BlockSpec((C, Cp), lambda n: (0, 0)),
            pl.BlockSpec((Kp, Cp), lambda n: (0, 0)),
            pl.BlockSpec((3, 3 * Cp, Cout), lambda n: (0, 0, 0)),
            pl.BlockSpec((9, C, Cout), lambda n: (0, 0, 0)),
            pl.BlockSpec((1, Cout), lambda n: (0, 0)),
            pl.BlockSpec((1, Cout), lambda n: (0, 0)),
        ],
        out_specs=pl.BlockSpec((1, H, W, Cout), lambda n: (n, 0, 0, 0)),
        scratch_shapes=[
            pltpu.VMEM((H + 2, Wp, Cp), jnp.bfloat16),
            pltpu.VMEM((H + 2, Wp, C), jnp.bfloat16),
        ],
        # "arbitrary": the zero-once halo trick needs the batch axis to stay on
        # one core (megacore parallelism for v7x belongs on a future spatial
        # tile axis, see the TODO at the top of the file).
        compiler_params=pltpu.CompilerParams(
            dimension_semantics=("arbitrary",)),
        cost_estimate=pl.CostEstimate(
            flops=int(flops), transcendentals=0,
            bytes_accessed=int(bytes_accessed)),
    )(x_bf, P_packed, U_packed, w1, mask, wp, wx, scale, bias)

    # Dropout2d(0.1) is identity at inference.
    return jnp.transpose(out, (0, 3, 1, 2))                 # -> NCHW


def init_params(key, features, out_features, sizes):
    """Deterministic synthetic parameters matching the module's shapes.

    Stage 1x1 conv weights are stored as (C_in, C_out) (transpose of PyTorch's
    (C_out, C_in, 1, 1)); bottleneck 3x3 conv weight is HWIO with the input
    channel axis ordered [stage priors..., raw feats].
    """
    ks = jax.random.split(key, len(sizes) + 1)
    stage_w = [0.05 * jax.random.normal(k, (features, out_features), jnp.float32)
               for k in ks[:len(sizes)]]
    cin = features + len(sizes) * out_features
    bott_w = 0.05 * jax.random.normal(ks[-1], (3, 3, cin, out_features), jnp.float32)
    # BatchNorm2d defaults: gamma=1, beta=0, running_mean=0, running_var=1, eps=1e-5
    eps = 1e-5
    gamma = jnp.ones((out_features,), jnp.float32)
    beta = jnp.zeros((out_features,), jnp.float32)
    r_mean = jnp.zeros((out_features,), jnp.float32)
    r_var = jnp.ones((out_features,), jnp.float32)
    scale = gamma / jnp.sqrt(r_var + eps)
    bias = beta - r_mean * scale
    return dict(sizes=tuple(sizes), stage_w=stage_w, bottleneck_w=bott_w,
                bn_scale=scale, bn_bias=bias)


# ---------------- pure-JAX f32 reference (for validation) --------------------

def reference_forward(feats_nchw, params):
    x = jnp.transpose(feats_nchw, (0, 2, 3, 1))
    N, H, W, C = x.shape
    priors = []
    for size, w_cf in zip(params["sizes"], params["stage_w"]):
        Ph = jnp.asarray(adaptive_avg_pool_matrix(size, H))
        Pw = jnp.asarray(adaptive_avg_pool_matrix(size, W))
        Uh = jnp.asarray(bilinear_upsample_matrix(H, size))
        Uw = jnp.asarray(bilinear_upsample_matrix(W, size))
        pooled = jnp.einsum('ph,nhwc,qw->npqc', Ph, x, Pw)     # adaptive avg pool
        conv = jnp.einsum('npqc,cf->npqf', pooled, w_cf)       # 1x1 conv
        up = jnp.einsum('hp,npqf,wq->nhwf', Uh, conv, Uw)      # bilinear upsample
        priors.append(up)
    cat = jnp.concatenate(priors + [x], axis=-1)
    out = jax.lax.conv_general_dilated(
        cat, params["bottleneck_w"], window_strides=(1, 1), padding="SAME",
        dimension_numbers=("NHWC", "HWIO", "NHWC"))
    out = out * params["bn_scale"] + params["bn_bias"]
    return jnp.transpose(out, (0, 3, 1, 2))


if __name__ == "__main__":
    key = jax.random.PRNGKey(0)
    kx, kp = jax.random.split(key)

    N, C, H, W = 2, 4, 16, 16
    out_features = 32
    sizes = (1, 2, 3, 6)

    feats = jax.random.normal(kx, (N, C, H, W), jnp.float32)
    params = init_params(kp, C, out_features, sizes)

    out = jax.block_until_ready(psp_module_forward(feats, params))
    assert out.shape == (N, out_features, H, W), out.shape

    ref = jax.block_until_ready(reference_forward(feats, params))
    if not np.allclose(np.asarray(out), np.asarray(ref), rtol=5e-2, atol=5e-2):
        err = float(jnp.max(jnp.abs(out - ref)))
        raise AssertionError(f"Pallas output mismatch vs reference, max abs err={err}")

    print("KERNEL_OK")
</pallas_src>

<mosaic_0001>
module attributes {stable_mosaic.version = 11 : i64} {
  func.func @_psp_fused_kernel(%arg0: i32, %arg1: memref<1x16x16x4xbf16, #tpu.memory_space<vmem>>, %arg2: memref<56x256xf32, #tpu.memory_space<vmem>>, %arg3: memref<256x56xbf16, #tpu.memory_space<vmem>>, %arg4: memref<4x128xbf16, #tpu.memory_space<vmem>>, %arg5: memref<56x128xf32, #tpu.memory_space<vmem>>, %arg6: memref<3x384x32xbf16, #tpu.memory_space<vmem>>, %arg7: memref<9x4x32xbf16, #tpu.memory_space<vmem>>, %arg8: memref<1x32xf32, #tpu.memory_space<vmem>>, %arg9: memref<1x32xf32, #tpu.memory_space<vmem>>, %arg10: memref<1x16x16x32xf32, #tpu.memory_space<vmem>>, %arg11: memref<18x40x128xbf16, #tpu.memory_space<vmem>>, %arg12: memref<18x40x4xbf16, #tpu.memory_space<vmem>>) attributes {dimension_semantics = [#tpu.dimension_semantics<arbitrary>], iteration_bounds = array<i64: 2>, scalar_prefetch = 0 : i64, scratch_operands = 2 : i64, tpu.core_type = #tpu.core_type<tc>, window_params = [{transform_indices = @transform_0, window_bounds = array<i64: 1, 16, 16, 4>}, {pipeline_mode = #tpu.pipeline_mode<synchronous>, transform_indices = @transform_1, window_bounds = array<i64: 56, 256>}, {pipeline_mode = #tpu.pipeline_mode<synchronous>, transform_indices = @transform_2, window_bounds = array<i64: 256, 56>}, {pipeline_mode = #tpu.pipeline_mode<synchronous>, transform_indices = @transform_3, window_bounds = array<i64: 4, 128>}, {pipeline_mode = #tpu.pipeline_mode<synchronous>, transform_indices = @transform_4, window_bounds = array<i64: 56, 128>}, {pipeline_mode = #tpu.pipeline_mode<synchronous>, transform_indices = @transform_5, window_bounds = array<i64: 3, 384, 32>}, {pipeline_mode = #tpu.pipeline_mode<synchronous>, transform_indices = @transform_6, window_bounds = array<i64: 9, 4, 32>}, {pipeline_mode = #tpu.pipeline_mode<synchronous>, transform_indices = @transform_7, window_bounds = array<i64: 1, 32>}, {pipeline_mode = #tpu.pipeline_mode<synchronous>, transform_indices = @transform_8, window_bounds = array<i64: 1, 32>}, {transform_indices = @transform_9, window_bounds = array<i64: 1, 16, 16, 32>}]} {
    %c0_i32 = arith.constant 0 : i32
    %0 = arith.cmpi eq, %arg0, %c0_i32 : i32
    %1 = arith.extui %0 : i1 to i32
    %c0_i32_0 = arith.constant 0 : i32
    %2 = arith.cmpi ne, %1, %c0_i32_0 : i32
    scf.if %2 {
      %cst_87 = arith.constant 0.000000e+00 : bf16
      %121 = vector.broadcast %cst_87 : bf16 to vector<18x40x128xbf16>
      %c0_88 = arith.constant 0 : index
      %c0_89 = arith.constant 0 : index
      %c0_90 = arith.constant 0 : index
      %122 = vector.load %arg11[%c0_88, %c0_89, %c0_90] : memref<18x40x128xbf16, #tpu.memory_space<vmem>>, vector<18x40x128xbf16>
      tpu.vector_store %arg11[%c0_88, %c0_89, %c0_90], %121 {strides = array<i32>} : memref<18x40x128xbf16, #tpu.memory_space<vmem>>, vector<18x40x128xbf16>,
      %cst_91 = arith.constant 0.000000e+00 : bf16
      %123 = vector.broadcast %cst_91 : bf16 to vector<18x40x4xbf16>
      %c0_92 = arith.constant 0 : index
      %c0_93 = arith.constant 0 : index
      %c0_94 = arith.constant 0 : index
      %124 = vector.load %arg12[%c0_92, %c0_93, %c0_94] : memref<18x40x4xbf16, #tpu.memory_space<vmem>>, vector<18x40x4xbf16>
      tpu.vector_store %arg12[%c0_92, %c0_93, %c0_94], %123 {strides = array<i32>} : memref<18x40x4xbf16, #tpu.memory_space<vmem>>, vector<18x40x4xbf16>,
    } else {
    }
    %c0 = arith.constant 0 : index
    %c0_1 = arith.constant 0 : index
    %c0_2 = arith.constant 0 : index
    %c0_3 = arith.constant 0 : index
    %3 = vector.load %arg1[%c0, %c0_1, %c0_2, %c0_3] : memref<1x16x16x4xbf16, #tpu.memory_space<vmem>>, vector<1x16x16x4xbf16>
    %4 = vector.shape_cast %3 : vector<1x16x16x4xbf16> to vector<16x16x4xbf16>
    %5 = vector.shape_cast %4 : vector<16x16x4xbf16> to vector<256x4xbf16>
    %c0_4 = arith.constant 0 : index
    %c0_5 = arith.constant 0 : index
    %6 = vector.load %arg2[%c0_4, %c0_5] : memref<56x256xf32, #tpu.memory_space<vmem>>, vector<56x256xf32>
    %7 = arith.extf %5 : vector<256x4xbf16> to vector<256x4xf32>
    %cst = arith.constant dense<0.000000e+00> : vector<56x4xf32>
    %8 = tpu.matmul %6, %7, %cst {dimension_numbers = #tpu.dot_dimension_numbers<[1], [0], [0], [1], [0, 0, 1, 1], [], []>} : vector<56x256xf32>, vector<256x4xf32>, vector<56x4xf32> -> vector<56x4xf32>
    %9 = arith.truncf %8 : vector<56x4xf32> to vector<56x4xbf16>
    %c0_6 = arith.constant 0 : index
    %c0_7 = arith.constant 0 : index
    %10 = vector.load %arg4[%c0_6, %c0_7] : memref<4x128xbf16, #tpu.memory_space<vmem>>, vector<4x128xbf16>
    %cst_8 = arith.constant dense<0.000000e+00> : vector<56x128xf32>
    %11 = tpu.matmul %9, %10, %cst_8 {dimension_numbers = #tpu.dot_dimension_numbers<[1], [0], [0], [1], [0, 0, 1, 1], [], []>} : vector<56x4xbf16>, vector<4x128xbf16>, vector<56x128xf32> -> vector<56x128xf32>
    %c0_9 = arith.constant 0 : index
    %c0_10 = arith.constant 0 : index
    %12 = vector.load %arg5[%c0_9, %c0_10] : memref<56x128xf32, #tpu.memory_space<vmem>>, vector<56x128xf32>
    %13 = arith.mulf %11, %12 : vector<56x128xf32>
    %c0_11 = arith.constant 0 : index
    %c0_12 = arith.constant 0 : index
    %14 = vector.load %arg3[%c0_11, %c0_12] : memref<256x56xbf16, #tpu.memory_space<vmem>>, vector<256x56xbf16>
    %15 = arith.truncf %13 : vector<56x128xf32> to vector<56x128xbf16>
    %cst_13 = arith.constant dense<0.000000e+00> : vector<256x128xf32>
    %16 = tpu.matmul %14, %15, %cst_13 {dimension_numbers = #tpu.dot_dimension_numbers<[1], [0], [0], [1], [0, 0, 1, 1], [], []>} : vector<256x56xbf16>, vector<56x128xbf16>, vector<256x128xf32> -> vector<256x128xf32>
    %17 = vector.shape_cast %16 : vector<256x128xf32> to vector<16x16x128xf32>
    %18 = arith.truncf %17 : vector<16x16x128xf32> to vector<16x16x128xbf16>
    %c1 = arith.constant 1 : index
    %c16 = arith.constant 16 : index
    %c0_14 = arith.constant 0 : index
    %19 = vector.load %arg11[%c1, %c16, %c0_14] : memref<18x40x128xbf16, #tpu.memory_space<vmem>>, vector<16x16x128xbf16>
    tpu.vector_store %arg11[%c1, %c16, %c0_14], %18 {strides = array<i32>} : memref<18x40x128xbf16, #tpu.memory_space<vmem>>, vector<16x16x128xbf16>,
    %c1_15 = arith.constant 1 : index
    %c16_16 = arith.constant 16 : index
    %c0_17 = arith.constant 0 : index
    %20 = vector.load %arg12[%c1_15, %c16_16, %c0_17] : memref<18x40x4xbf16, #tpu.memory_space<vmem>>, vector<16x16x4xbf16>
    tpu.vector_store %arg12[%c1_15, %c16_16, %c0_17], %4 {strides = array<i32>} : memref<18x40x4xbf16, #tpu.memory_space<vmem>>, vector<16x16x4xbf16>,
    %cst_18 = arith.constant 0.000000e+00 : f32
    %21 = vector.broadcast %cst_18 : f32 to vector<256x32xf32>
    %cst_19 = arith.constant 0.000000e+00 : f32
    %22 = vector.broadcast %cst_19 : f32 to vector<256x32xf32>
    %c0_20 = arith.constant 0 : index
    %c0_21 = arith.constant 0 : index
    %c0_22 = arith.constant 0 : index
    %23 = vector.load %arg11[%c0_20, %c0_21, %c0_22] : memref<18x40x128xbf16, #tpu.memory_space<vmem>>, vector<16x40x128xbf16>
    %24 = vector.extract_strided_slice %23 {offsets = [0, 15, 0], sizes = [16, 16, 128], strides = [1, 1, 1]} : vector<16x40x128xbf16> to vector<16x16x128xbf16>
    %25 = vector.extract_strided_slice %23 {offsets = [0, 16, 0], sizes = [16, 16, 128], strides = [1, 1, 1]} : vector<16x40x128xbf16> to vector<16x16x128xbf16>
    %26 = vector.extract_strided_slice %23 {offsets = [0, 17, 0], sizes = [16, 16, 128], strides = [1, 1, 1]} : vector<16x40x128xbf16> to vector<16x16x128xbf16>
    %27 = tpu.concatenate %24, %25, %26 in 2 : vector<16x16x128xbf16>, vector<16x16x128xbf16>, vector<16x16x128xbf16> -> vector<16x16x384xbf16>
    %28 = vector.shape_cast %27 : vector<16x16x384xbf16> to vector<256x384xbf16>
    %c0_23 = arith.constant 0 : index
    %c0_24 = arith.constant 0 : index
    %c0_25 = arith.constant 0 : index
    %29 = vector.load %arg6[%c0_23, %c0_24, %c0_25] : memref<3x384x32xbf16, #tpu.memory_space<vmem>>, vector<1x384x32xbf16>
    %30 = vector.shape_cast %29 : vector<1x384x32xbf16> to vector<384x32xbf16>
    %cst_26 = arith.constant dense<0.000000e+00> : vector<256x32xf32>
    %31 = tpu.matmul %28, %30, %cst_26 {dimension_numbers = #tpu.dot_dimension_numbers<[1], [0], [0], [1], [0, 0, 1, 1], [], []>} : vector<256x384xbf16>, vector<384x32xbf16>, vector<256x32xf32> -> vector<256x32xf32>
    %32 = arith.addf %21, %31 : vector<256x32xf32>
    %c0_27 = arith.constant 0 : index
    %c0_28 = arith.constant 0 : index
    %c0_29 = arith.constant 0 : index
    %33 = vector.load %arg12[%c0_27, %c0_28, %c0_29] : memref<18x40x4xbf16, #tpu.memory_space<vmem>>, vector<16x40x4xbf16>
    %34 = vector.extract_strided_slice %33 {offsets = [0, 15, 0], sizes = [16, 16, 4], strides = [1, 1, 1]} : vector<16x40x4xbf16> to vector<16x16x4xbf16>
    %35 = vector.shape_cast %34 : vector<16x16x4xbf16> to vector<256x4xbf16>
    %c0_30 = arith.constant 0 : index
    %c0_31 = arith.constant 0 : index
    %c0_32 = arith.constant 0 : index
    %36 = vector.load %arg7[%c0_30, %c0_31, %c0_32] : memref<9x4x32xbf16, #tpu.memory_space<vmem>>, vector<1x4x32xbf16>
    %37 = vector.shape_cast %36 : vector<1x4x32xbf16> to vector<4x32xbf16>
    %cst_33 = arith.constant dense<0.000000e+00> : vector<256x32xf32>
    %38 = tpu.matmul %35, %37, %cst_33 {dimension_numbers = #tpu.dot_dimension_numbers<[1], [0], [0], [1], [0, 0, 1, 1], [], []>} : vector<256x4xbf16>, vector<4x32xbf16>, vector<256x32xf32> -> vector<256x32xf32>
    %39 = arith.addf %22, %38 : vector<256x32xf32>
    %40 = vector.extract_strided_slice %33 {offsets = [0, 16, 0], sizes = [16, 16, 4], strides = [1, 1, 1]} : vector<16x40x4xbf16> to vector<16x16x4xbf16>
    %41 = vector.shape_cast %40 : vector<16x16x4xbf16> to vector<256x4xbf16>
    %c1_34 = arith.constant 1 : index
    %c0_35 = arith.constant 0 : index
    %c0_36 = arith.constant 0 : index
    %42 = vector.load %arg7[%c1_34, %c0_35, %c0_36] : memref<9x4x32xbf16, #tpu.memory_space<vmem>>, vector<1x4x32xbf16>
    %43 = vector.shape_cast %42 : vector<1x4x32xbf16> to vector<4x32xbf16>
    %cst_37 = arith.constant dense<0.000000e+00> : vector<256x32xf32>
    %44 = tpu.matmul %41, %43, %cst_37 {dimension_numbers = #tpu.dot_dimension_numbers<[1], [0], [0], [1], [0, 0, 1, 1], [], []>} : vector<256x4xbf16>, vector<4x32xbf16>, vector<256x32xf32> -> vector<256x32xf32>
    %45 = arith.addf %39, %44 : vector<256x32xf32>
    %46 = vector.extract_strided_slice %33 {offsets = [0, 17, 0], sizes = [16, 16, 4], strides = [1, 1, 1]} : vector<16x40x4xbf16> to vector<16x16x4xbf16>
    %47 = vector.shape_cast %46 : vector<16x16x4xbf16> to vector<256x4xbf16>
    %c2 = arith.constant 2 : index
    %c0_38 = arith.constant 0 : index
    %c0_39 = arith.constant 0 : index
    %48 = vector.load %arg7[%c2, %c0_38, %c0_39] : memref<9x4x32xbf16, #tpu.memory_space<vmem>>, vector<1x4x32xbf16>
    %49 = vector.shape_cast %48 : vector<1x4x32xbf16> to vector<4x32xbf16>
    %cst_40 = arith.constant dense<0.000000e+00> : vector<256x32xf32>
    %50 = tpu.matmul %47, %49, %cst_40 {dimension_numbers = #tpu.dot_dimension_numbers<[1], [0], [0], [1], [0, 0, 1, 1], [], []>} : vector<256x4xbf16>, vector<4x32xbf16>, vector<256x32xf32> -> vector<256x32xf32>
    %51 = arith.addf %45, %50 : vector<256x32xf32>
    %c1_41 = arith.constant 1 : index
    %c0_42 = arith.constant 0 : index
    %c0_43 = arith.constant 0 : index
    %52 = vector.load %arg11[%c1_41, %c0_42, %c0_43] : memref<18x40x128xbf16, #tpu.memory_space<vmem>>, vector<16x40x128xbf16>
    %53 = vector.extract_strided_slice %52 {offsets = [0, 15, 0], sizes = [16, 16, 128], strides = [1, 1, 1]} : vector<16x40x128xbf16> to vector<16x16x128xbf16>
    %54 = vector.extract_strided_slice %52 {offsets = [0, 16, 0], sizes = [16, 16, 128], strides = [1, 1, 1]} : vector<16x40x128xbf16> to vector<16x16x128xbf16>
    %55 = vector.extract_strided_slice %52 {offsets = [0, 17, 0], sizes = [16, 16, 128], strides = [1, 1, 1]} : vector<16x40x128xbf16> to vector<16x16x128xbf16>
    %56 = tpu.concatenate %53, %54, %55 in 2 : vector<16x16x128xbf16>, vector<16x16x128xbf16>, vector<16x16x128xbf16> -> vector<16x16x384xbf16>
    %57 = vector.shape_cast %56 : vector<16x16x384xbf16> to vector<256x384xbf16>
    %c1_44 = arith.constant 1 : index
    %c0_45 = arith.constant 0 : index
    %c0_46 = arith.constant 0 : index
    %58 = vector.load %arg6[%c1_44, %c0_45, %c0_46] : memref<3x384x32xbf16, #tpu.memory_space<vmem>>, vector<1x384x32xbf16>
    %59 = vector.shape_cast %58 : vector<1x384x32xbf16> to vector<384x32xbf16>
    %cst_47 = arith.constant dense<0.000000e+00> : vector<256x32xf32>
    %60 = tpu.matmul %57, %59, %cst_47 {dimension_numbers = #tpu.dot_dimension_numbers<[1], [0], [0], [1], [0, 0, 1, 1], [], []>} : vector<256x384xbf16>, vector<384x32xbf16>, vector<256x32xf32> -> vector<256x32xf32>
    %61 = arith.addf %32, %60 : vector<256x32xf32>
    %c1_48 = arith.constant 1 : index
    %c0_49 = arith.constant 0 : index
    %c0_50 = arith.constant 0 : index
    %62 = vector.load %arg12[%c1_48, %c0_49, %c0_50] : memref<18x40x4xbf16, #tpu.memory_space<vmem>>, vector<16x40x4xbf16>
    %63 = vector.extract_strided_slice %62 {offsets = [0, 15, 0], sizes = [16, 16, 4], strides = [1, 1, 1]} : vector<16x40x4xbf16> to vector<16x16x4xbf16>
    %64 = vector.shape_cast %63 : vector<16x16x4xbf16> to vector<256x4xbf16>
    %c3 = arith.constant 3 : index
    %c0_51 = arith.constant 0 : index
    %c0_52 = arith.constant 0 : index
    %65 = vector.load %arg7[%c3, %c0_51, %c0_52] : memref<9x4x32xbf16, #tpu.memory_space<vmem>>, vector<1x4x32xbf16>
    %66 = vector.shape_cast %65 : vector<1x4x32xbf16> to vector<4x32xbf16>
    %cst_53 = arith.constant dense<0.000000e+00> : vector<256x32xf32>
    %67 = tpu.matmul %64, %66, %cst_53 {dimension_numbers = #tpu.dot_dimension_numbers<[1], [0], [0], [1], [0, 0, 1, 1], [], []>} : vector<256x4xbf16>, vector<4x32xbf16>, vector<256x32xf32> -> vector<256x32xf32>
    %68 = arith.addf %51, %67 : vector<256x32xf32>
    %69 = vector.extract_strided_slice %62 {offsets = [0, 16, 0], sizes = [16, 16, 4], strides = [1, 1, 1]} : vector<16x40x4xbf16> to vector<16x16x4xbf16>
    %70 = vector.shape_cast %69 : vector<16x16x4xbf16> to vector<256x4xbf16>
    %c4 = arith.constant 4 : index
    %c0_54 = arith.constant 0 : index
    %c0_55 = arith.constant 0 : index
    %71 = vector.load %arg7[%c4, %c0_54, %c0_55] : memref<9x4x32xbf16, #tpu.memory_space<vmem>>, vector<1x4x32xbf16>
    %72 = vector.shape_cast %71 : vector<1x4x32xbf16> to vector<4x32xbf16>
    %cst_56 = arith.constant dense<0.000000e+00> : vector<256x32xf32>
    %73 = tpu.matmul %70, %72, %cst_56 {dimension_numbers = #tpu.dot_dimension_numbers<[1], [0], [0], [1], [0, 0, 1, 1], [], []>} : vector<256x4xbf16>, vector<4x32xbf16>, vector<256x32xf32> -> vector<256x32xf32>
    %74 = arith.addf %68, %73 : vector<256x32xf32>
    %75 = vector.extract_strided_slice %62 {offsets = [0, 17, 0], sizes = [16, 16, 4], strides = [1, 1, 1]} : vector<16x40x4xbf16> to vector<16x16x4xbf16>
    %76 = vector.shape_cast %75 : vector<16x16x4xbf16> to vector<256x4xbf16>
    %c5 = arith.constant 5 : index
    %c0_57 = arith.constant 0 : index
    %c0_58 = arith.constant 0 : index
    %77 = vector.load %arg7[%c5, %c0_57, %c0_58] : memref<9x4x32xbf16, #tpu.memory_space<vmem>>, vector<1x4x32xbf16>
    %78 = vector.shape_cast %77 : vector<1x4x32xbf16> to vector<4x32xbf16>
    %cst_59 = arith.constant dense<0.000000e+00> : vector<256x32xf32>
    %79 = tpu.matmul %76, %78, %cst_59 {dimension_numbers = #tpu.dot_dimension_numbers<[1], [0], [0], [1], [0, 0, 1, 1], [], []>} : vector<256x4xbf16>, vector<4x32xbf16>, vector<256x32xf32> -> vector<256x32xf32>
    %80 = arith.addf %74, %79 : vector<256x32xf32>
    %c2_60 = arith.constant 2 : index
    %c0_61 = arith.constant 0 : index
    %c0_62 = arith.constant 0 : index
    %81 = vector.load %arg11[%c2_60, %c0_61, %c0_62] : memref<18x40x128xbf16, #tpu.memory_space<vmem>>, vector<16x40x128xbf16>
    %82 = vector.extract_strided_slice %81 {offsets = [0, 15, 0], sizes = [16, 16, 128], strides = [1, 1, 1]} : vector<16x40x128xbf16> to vector<16x16x128xbf16>
    %83 = vector.extract_strided_slice %81 {offsets = [0, 16, 0], sizes = [16, 16, 128], strides = [1, 1, 1]} : vector<16x40x128xbf16> to vector<16x16x128xbf16>
    %84 = vector.extract_strided_slice %81 {offsets = [0, 17, 0], sizes = [16, 16, 128], strides = [1, 1, 1]} : vector<16x40x128xbf16> to vector<16x16x128xbf16>
    %85 = tpu.concatenate %82, %83, %84 in 2 : vector<16x16x128xbf16>, vector<16x16x128xbf16>, vector<16x16x128xbf16> -> vector<16x16x384xbf16>
    %86 = vector.shape_cast %85 : vector<16x16x384xbf16> to vector<256x384xbf16>
    %c2_63 = arith.constant 2 : index
    %c0_64 = arith.constant 0 : index
    %c0_65 = arith.constant 0 : index
    %87 = vector.load %arg6[%c2_63, %c0_64, %c0_65] : memref<3x384x32xbf16, #tpu.memory_space<vmem>>, vector<1x384x32xbf16>
    %88 = vector.shape_cast %87 : vector<1x384x32xbf16> to vector<384x32xbf16>
    %cst_66 = arith.constant dense<0.000000e+00> : vector<256x32xf32>
    %89 = tpu.matmul %86, %88, %cst_66 {dimension_numbers = #tpu.dot_dimension_numbers<[1], [0], [0], [1], [0, 0, 1, 1], [], []>} : vector<256x384xbf16>, vector<384x32xbf16>, vector<256x32xf32> -> vector<256x32xf32>
    %90 = arith.addf %61, %89 : vector<256x32xf32>
    %c2_67 = arith.constant 2 : index
    %c0_68 = arith.constant 0 : index
    %c0_69 = arith.constant 0 : index
    %91 = vector.load %arg12[%c2_67, %c0_68, %c0_69] : memref<18x40x4xbf16, #tpu.memory_space<vmem>>, vector<16x40x4xbf16>
    %92 = vector.extract_strided_slice %91 {offsets = [0, 15, 0], sizes = [16, 16, 4], strides = [1, 1, 1]} : vector<16x40x4xbf16> to vector<16x16x4xbf16>
    %93 = vector.shape_cast %92 : vector<16x16x4xbf16> to vector<256x4xbf16>
    %c6 = arith.constant 6 : index
    %c0_70 = arith.constant 0 : index
    %c0_71 = arith.constant 0 : index
    %94 = vector.load %arg7[%c6, %c0_70, %c0_71] : memref<9x4x32xbf16, #tpu.memory_space<vmem>>, vector<1x4x32xbf16>
    %95 = vector.shape_cast %94 : vector<1x4x32xbf16> to vector<4x32xbf16>
    %cst_72 = arith.constant dense<0.000000e+00> : vector<256x32xf32>
    %96 = tpu.matmul %93, %95, %cst_72 {dimension_numbers = #tpu.dot_dimension_numbers<[1], [0], [0], [1], [0, 0, 1, 1], [], []>} : vector<256x4xbf16>, vector<4x32xbf16>, vector<256x32xf32> -> vector<256x32xf32>
    %97 = arith.addf %80, %96 : vector<256x32xf32>
    %98 = vector.extract_strided_slice %91 {offsets = [0, 16, 0], sizes = [16, 16, 4], strides = [1, 1, 1]} : vector<16x40x4xbf16> to vector<16x16x4xbf16>
    %99 = vector.shape_cast %98 : vector<16x16x4xbf16> to vector<256x4xbf16>
    %c7 = arith.constant 7 : index
    %c0_73 = arith.constant 0 : index
    %c0_74 = arith.constant 0 : index
    %100 = vector.load %arg7[%c7, %c0_73, %c0_74] : memref<9x4x32xbf16, #tpu.memory_space<vmem>>, vector<1x4x32xbf16>
    %101 = vector.shape_cast %100 : vector<1x4x32xbf16> to vector<4x32xbf16>
    %cst_75 = arith.constant dense<0.000000e+00> : vector<256x32xf32>
    %102 = tpu.matmul %99, %101, %cst_75 {dimension_numbers = #tpu.dot_dimension_numbers<[1], [0], [0], [1], [0, 0, 1, 1], [], []>} : vector<256x4xbf16>, vector<4x32xbf16>, vector<256x32xf32> -> vector<256x32xf32>
    %103 = arith.addf %97, %102 : vector<256x32xf32>
    %104 = vector.extract_strided_slice %91 {offsets = [0, 17, 0], sizes = [16, 16, 4], strides = [1, 1, 1]} : vector<16x40x4xbf16> to vector<16x16x4xbf16>
    %105 = vector.shape_cast %104 : vector<16x16x4xbf16> to vector<256x4xbf16>
    %c8 = arith.constant 8 : index
    %c0_76 = arith.constant 0 : index
    %c0_77 = arith.constant 0 : index
    %106 = vector.load %arg7[%c8, %c0_76, %c0_77] : memref<9x4x32xbf16, #tpu.memory_space<vmem>>, vector<1x4x32xbf16>
    %107 = vector.shape_cast %106 : vector<1x4x32xbf16> to vector<4x32xbf16>
    %cst_78 = arith.constant dense<0.000000e+00> : vector<256x32xf32>
    %108 = tpu.matmul %105, %107, %cst_78 {dimension_numbers = #tpu.dot_dimension_numbers<[1], [0], [0], [1], [0, 0, 1, 1], [], []>} : vector<256x4xbf16>, vector<4x32xbf16>, vector<256x32xf32> -> vector<256x32xf32>
    %109 = arith.addf %103, %108 : vector<256x32xf32>
    %110 = arith.addf %90, %109 : vector<256x32xf32>
    %c0_79 = arith.constant 0 : index
    %c0_80 = arith.constant 0 : index
    %111 = vector.load %arg8[%c0_79, %c0_80] : memref<1x32xf32, #tpu.memory_space<vmem>>, vector<1x32xf32>
    %112 = vector.broadcast %111 : vector<1x32xf32> to vector<256x32xf32>
    %113 = arith.mulf %110, %112 : vector<256x32xf32>
    %c0_81 = arith.constant 0 : index
    %c0_82 = arith.constant 0 : index
    %114 = vector.load %arg9[%c0_81, %c0_82] : memref<1x32xf32, #tpu.memory_space<vmem>>, vector<1x32xf32>
    %115 = vector.broadcast %114 : vector<1x32xf32> to vector<256x32xf32>
    %116 = arith.addf %113, %115 : vector<256x32xf32>
    %117 = vector.shape_cast %116 : vector<256x32xf32> to vector<16x16x32xf32>
    %c0_83 = arith.constant 0 : index
    %c0_84 = arith.constant 0 : index
    %c0_85 = arith.constant 0 : index
    %c0_86 = arith.constant 0 : index
    %118 = vector.load %arg10[%c0_83, %c0_84, %c0_85, %c0_86] : memref<1x16x16x32xf32, #tpu.memory_space<vmem>>, vector<1x16x16x32xf32>
    %119 = vector.shape_cast %118 : vector<1x16x16x32xf32> to vector<16x16x32xf32>
    %120 = vector.shape_cast %117 : vector<16x16x32xf32> to vector<1x16x16x32xf32>
    tpu.vector_store %arg10[%c0_83, %c0_84, %c0_85, %c0_86], %120 {strides = array<i32>} : memref<1x16x16x32xf32, #tpu.memory_space<vmem>>, vector<1x16x16x32xf32>,
    return
  }
  func.func @transform_0(%arg0: i32) -> (i32, i32, i32, i32) {
    %c0_i32 = arith.constant 0 : i32
    %c0_i32_0 = arith.constant 0 : i32
    %c0_i32_1 = arith.constant 0 : i32
    %c0_i32_2 = arith.constant 0 : i32
    return %arg0, %c0_i32, %c0_i32_0, %c0_i32_1 : i32, i32, i32, i32
  }
  func.func @transform_1(%arg0: i32) -> (i32, i32) {
    %c0_i32 = arith.constant 0 : i32
    %c0_i32_0 = arith.constant 0 : i32
    %c0_i32_1 = arith.constant 0 : i32
    return %c0_i32, %c0_i32_0 : i32, i32
  }
  func.func @transform_2(%arg0: i32) -> (i32, i32) {
    %c0_i32 = arith.constant 0 : i32
    %c0_i32_0 = arith.constant 0 : i32
    %c0_i32_1 = arith.constant 0 : i32
    return %c0_i32, %c0_i32_0 : i32, i32
  }
  func.func @transform_3(%arg0: i32) -> (i32, i32) {
    %c0_i32 = arith.constant 0 : i32
    %c0_i32_0 = arith.constant 0 : i32
    %c0_i32_1 = arith.constant 0 : i32
    return %c0_i32, %c0_i32_0 : i32, i32
  }
  func.func @transform_4(%arg0: i32) -> (i32, i32) {
    %c0_i32 = arith.constant 0 : i32
    %c0_i32_0 = arith.constant 0 : i32
    %c0_i32_1 = arith.constant 0 : i32
    return %c0_i32, %c0_i32_0 : i32, i32
  }
  func.func @transform_5(%arg0: i32) -> (i32, i32, i32) {
    %c0_i32 = arith.constant 0 : i32
    %c0_i32_0 = arith.constant 0 : i32
    %c0_i32_1 = arith.constant 0 : i32
    %c0_i32_2 = arith.constant 0 : i32
    return %c0_i32, %c0_i32_0, %c0_i32_1 : i32, i32, i32
  }
  func.func @transform_6(%arg0: i32) -> (i32, i32, i32) {
    %c0_i32 = arith.constant 0 : i32
    %c0_i32_0 = arith.constant 0 : i32
    %c0_i32_1 = arith.constant 0 : i32
    %c0_i32_2 = arith.constant 0 : i32
    return %c0_i32, %c0_i32_0, %c0_i32_1 : i32, i32, i32
  }
  func.func @transform_7(%arg0: i32) -> (i32, i32) {
    %c0_i32 = arith.constant 0 : i32
    %c0_i32_0 = arith.constant 0 : i32
    %c0_i32_1 = arith.constant 0 : i32
    return %c0_i32, %c0_i32_0 : i32, i32
  }
  func.func @transform_8(%arg0: i32) -> (i32, i32) {
    %c0_i32 = arith.constant 0 : i32
    %c0_i32_0 = arith.constant 0 : i32
    %c0_i32_1 = arith.constant 0 : i32
    return %c0_i32, %c0_i32_0 : i32, i32
  }
  func.func @transform_9(%arg0: i32) -> (i32, i32, i32, i32) {
    %c0_i32 = arith.constant 0 : i32
    %c0_i32_0 = arith.constant 0 : i32
    %c0_i32_1 = arith.constant 0 : i32
    %c0_i32_2 = arith.constant 0 : i32
    return %arg0, %c0_i32, %c0_i32_0, %c0_i32_1 : i32, i32, i32, i32
  }
}

</mosaic_0001>

<llo_original>
// kernel: tpu_custom_call.1
$region0: #{tpu_custom_call.1}
  #allocation0 [shape = 'u32[]', space=smem, size = 0x4, offset = 0x4, fixed_abs, tag = 'smem constant byte address 0x4 - core index']
  #allocation1 [shape = 'u32[144,128]{1,0:T(1,128)}', space=vmem, size = 0x12000, scoped, tag = 'internal scratch']
  #allocation2 [shape = 'bf16[18,40,128]{2,1,0:T(8,128)(2,1)}', space=vmem, size = 0x2d000, scoped, tag = 'scratch operand']
  #allocation3 [shape = 'bf16[18,40,4]{2,1,0:T(8,128)(2,1)}', space=vmem, size = 0x2d000, scoped, tag = 'scratch operand']
  %s0 = inlined_call_operand.vmem [shape: bf16[2,16,16,4], index: 0, kind: input, shape index: {}]
  %s1 = inlined_call_operand.vmem [shape: f32[56,256], index: 1, kind: input, shape index: {}]
  %s2 = inlined_call_operand.vmem [shape: bf16[256,56], index: 2, kind: input, shape index: {}]
  %s3 = inlined_call_operand.vmem [shape: bf16[4,128], index: 3, kind: input, shape index: {}]
  %s4 = inlined_call_operand.vmem [shape: f32[56,128], index: 4, kind: input, shape index: {}]
  %s5 = inlined_call_operand.vmem [shape: bf16[3,384,32], index: 5, kind: input, shape index: {}]
  %s6 = inlined_call_operand.vmem [shape: bf16[9,4,32], index: 6, kind: input, shape index: {}]
  %s7 = inlined_call_operand.vmem [shape: f32[1,32], index: 7, kind: input, shape index: {}]
  %s8 = inlined_call_operand.vmem [shape: f32[1,32], index: 8, kind: input, shape index: {}]
  %s9 = inlined_call_operand.hbm [shape: f32[2,16,16,32], index: 9, kind: output, shape index: {}]
  %s10 = sld [smem:[#allocation0]]
  $region73: #{tpu_custom_call.1} parent=0
    _
  %s12 = ssub.s32 1, %s10
  %s13 = scalar_select 0, %s12, %s10
  $region1: #{tpu_custom_call.1} parent=0
    #allocation4 [shape = 'u8[262144]{0}', space=vmem, size = 0x40000, scoped, tag = 'output window, operand 0']
    #allocation5 [shape = 's32[2]{0}', space=sflag, size = 0x8, scoped, tag = 'scoped memory for tpu_custom_call.1']
    %14 = vsyncpa [#allocation5], 0
    %s15 = scalar_lea.sflag [#allocation5], 1
    %16 = vsyncpa %s15, 0
    loop: start=0, step=1, limit=4
    $region2: #{tpu_custom_call.1} parent=1 // loop_pre_header
      _
    $region3: #{tpu_custom_call.1} parent=1 // loop_header
      %s18 = sphi 0, %s22
      %p19 = scmp.ge.s32.totalorder %s18, 4
      %s28 = sphi 0, %s30
      %s31 = sphi 0, %s28
      %s32 = sphi 0, %s31
      %s48 = sphi 0, %s32
      %s52 = sphi 0, %s52
      %s54 = sphi 0, %s52
      %s55 = sphi 0, %s54
      %s69 = sphi 0, %s55
      %s73 = sphi 0, %s73
      %s75 = sphi 0, %s73
      %s76 = sphi 0, %s75
      %s90 = sphi 0, %s76
      %s94 = sphi 0, %s94
      %s96 = sphi 0, %s94
      %s97 = sphi 0, %s96
      %s111 = sphi 0, %s97
      %s115 = sphi 0, %s115
      %s117 = sphi 0, %s115
      %s118 = sphi 0, %s117
      %s132 = sphi 0, %s118
      %s136 = sphi 0, %s136
      %s138 = sphi 0, %s136
      %s139 = sphi 0, %s138
      %s153 = sphi 0, %s139
      %s157 = sphi 0, %s157
      %s159 = sphi 0, %s157
      %s160 = sphi 0, %s159
      %s174 = sphi 0, %s160
      %s178 = sphi 0, %s178
      %s180 = sphi 0, %s178
      %s181 = sphi 0, %s180
      %s195 = sphi 0, %s181
      %s199 = sphi 0, %s199
      %s201 = sphi 0, %s199
      %s202 = sphi 0, %s201
      %s216 = sphi 0, %s202
      %s222 = sphi 0, %s224
      %s225 = sphi 0, %s222
      %s226 = sphi 0, %s225
      %s242 = sphi 0, %s226
    $region4: #{tpu_custom_call.1} parent=1 // loop_header_branch
      %21 = sbr.rel (%p19) target = $region8
    $region5: #{tpu_custom_call.1} parent=1 // loop_body
      %s23 = ssub.s32 %s18, 1
      %s24 = ssub.s32 %s18, 2
      %s25 = sadd.s32 %s18, 1
      %s26 = ssub.s32 %s18, %s25
      %p27 = scmp.eq.s32.totalorder %s26, 0
      %s29 = sadd.s32 %s28, 1
      %s30 = scalar_select %p27, %s28, %s29
      %p33 = pneg %p27
      %p34 = scmp.eq.s32.totalorder %s18, 1
      %p35 = por %p33, %p34
      %p36 = scmp.ne.s32.totalorder %s28, %s31
      %p37 = scmp.eq.s32.totalorder %s18, 0
      %p38 = por %p36, %p37
      %p39 = scmp.ne.s32.totalorder %s28, %s31
      %p40 = scmp.eq.s32.totalorder %s23, 1
      %p41 = por %p39, %p40
      %p42 = scmp.ne.s32.totalorder %s31, %s32
      %p43 = scmp.eq.s32.totalorder %s23, 0
      %p44 = por %p42, %p43
      %p45 = scmp.ne.s32.totalorder %s31, %s32
      %p46 = scmp.eq.s32.totalorder %s24, 1
      %p47 = por %p45, %p46
      %p49 = scmp.ne.s32.totalorder %s32, %s48
      %p50 = scmp.eq.s32.totalorder %s24, 0
      %p51 = por %p49, %p50
      %s53 = sadd.s32 %s52, 1
      %p56 = scmp.eq.s32.totalorder %s18, 1
      %p57 = scmp.ne.s32.totalorder %s52, %s54
      %p58 = scmp.eq.s32.totalorder %s18, 0
      %p59 = por %p57, %p58
      %p60 = scmp.ne.s32.totalorder %s52, %s54
      %p61 = scmp.eq.s32.totalorder %s23, 1
      %p62 = por %p60, %p61
      %p63 = scmp.ne.s32.totalorder %s54, %s55
      %p64 = scmp.eq.s32.totalorder %s23, 0
      %p65 = por %p63, %p64
      %p66 = scmp.ne.s32.totalorder %s54, %s55
      %p67 = scmp.eq.s32.totalorder %s24, 1
      %p68 = por %p66, %p67
      %p70 = scmp.ne.s32.totalorder %s55, %s69
      %p71 = scmp.eq.s32.totalorder %s24, 0
      %p72 = por %p70, %p71
      %s74 = sadd.s32 %s73, 1
      %p77 = scmp.eq.s32.totalorder %s18, 1
      %p78 = scmp.ne.s32.totalorder %s73, %s75
      %p79 = scmp.eq.s32.totalorder %s18, 0
      %p80 = por %p78, %p79
      %p81 = scmp.ne.s32.totalorder %s73, %s75
      %p82 = scmp.eq.s32.totalorder %s23, 1
      %p83 = por %p81, %p82
      %p84 = scmp.ne.s32.totalorder %s75, %s76
      %p85 = scmp.eq.s32.totalorder %s23, 0
      %p86 = por %p84, %p85
      %p87 = scmp.ne.s32.totalorder %s75, %s76
      %p88 = scmp.eq.s32.totalorder %s24, 1
      %p89 = por %p87, %p88
      %p91 = scmp.ne.s32.totalorder %s76, %s90
      %p92 = scmp.eq.s32.totalorder %s24, 0
      %p93 = por %p91, %p92
      %s95 = sadd.s32 %s94, 1
      %p98 = scmp.eq.s32.totalorder %s18, 1
      %p99 = scmp.ne.s32.totalorder %s94, %s96
      %p100 = scmp.eq.s32.totalorder %s18, 0
      %p101 = por %p99, %p100
      %p102 = scmp.ne.s32.totalorder %s94, %s96
      %p103 = scmp.eq.s32.totalorder %s23, 1
      %p104 = por %p102, %p103
      %p105 = scmp.ne.s32.totalorder %s96, %s97
      %p106 = scmp.eq.s32.totalorder %s23, 0
      %p107 = por %p105, %p106
      %p108 = scmp.ne.s32.totalorder %s96, %s97
      %p109 = scmp.eq.s32.totalorder %s24, 1
      %p110 = por %p108, %p109
      %p112 = scmp.ne.s32.totalorder %s97, %s111
      %p113 = scmp.eq.s32.totalorder %s24, 0
      %p114 = por %p112, %p113
      %s116 = sadd.s32 %s115, 1
      %p119 = scmp.eq.s32.totalorder %s18, 1
      %p120 = scmp.ne.s32.totalorder %s115, %s117
      %p121 = scmp.eq.s32.totalorder %s18, 0
      %p122 = por %p120, %p121
      %p123 = scmp.ne.s32.totalorder %s115, %s117
      %p124 = scmp.eq.s32.totalorder %s23, 1
      %p125 = por %p123, %p124
      %p126 = scmp.ne.s32.totalorder %s117, %s118
      %p127 = scmp.eq.s32.totalorder %s23, 0
      %p128 = por %p126, %p127
      %p129 = scmp.ne.s32.totalorder %s117, %s118
      %p130 = scmp.eq.s32.totalorder %s24, 1
      %p131 = por %p129, %p130
      %p133 = scmp.ne.s32.totalorder %s118, %s132
      %p134 = scmp.eq.s32.totalorder %s24, 0
      %p135 = por %p133, %p134
      %s137 = sadd.s32 %s136, 1
      %p140 = scmp.eq.s32.totalorder %s18, 1
      %p141 = scmp.ne.s32.totalorder %s136, %s138
      %p142 = scmp.eq.s32.totalorder %s18, 0
      %p143 = por %p141, %p142
      %p144 = scmp.ne.s32.totalorder %s136, %s138
      %p145 = scmp.eq.s32.totalorder %s23, 1
      %p146 = por %p144, %p145
      %p147 = scmp.ne.s32.totalorder %s138, %s139
      %p148 = scmp.eq.s32.totalorder %s23, 0
      %p149 = por %p147, %p148
      %p150 = scmp.ne.s32.totalorder %s138, %s139
      %p151 = scmp.eq.s32.totalorder %s24, 1
      %p152 = por %p150, %p151
      %p154 = scmp.ne.s32.totalorder %s139, %s153
      %p155 = scmp.eq.s32.totalorder %s24, 0
      %p156 = por %p154, %p155
      %s158 = sadd.s32 %s157, 1
      %p161 = scmp.eq.s32.totalorder %s18, 1
      %p162 = scmp.ne.s32.totalorder %s157, %s159
      %p163 = scmp.eq.s32.totalorder %s18, 0
      %p164 = por %p162, %p163
      %p165 = scmp.ne.s32.totalorder %s157, %s159
      %p166 = scmp.eq.s32.totalorder %s23, 1
      %p167 = por %p165, %p166
      %p168 = scmp.ne.s32.totalorder %s159, %s160
      %p169 = scmp.eq.s32.totalorder %s23, 0
      %p170 = por %p168, %p169
      %p171 = scmp.ne.s32.totalorder %s159, %s160
      %p172 = scmp.eq.s32.totalorder %s24, 1
      %p173 = por %p171, %p172
      %p175 = scmp.ne.s32.totalorder %s160, %s174
      %p176 = scmp.eq.s32.totalorder %s24, 0
      %p177 = por %p175, %p176
      %s179 = sadd.s32 %s178, 1
      %p182 = scmp.eq.s32.totalorder %s18, 1
      %p183 = scmp.ne.s32.totalorder %s178, %s180
      %p184 = scmp.eq.s32.totalorder %s18, 0
      %p185 = por %p183, %p184
      %p186 = scmp.ne.s32.totalorder %s178, %s180
      %p187 = scmp.eq.s32.totalorder %s23, 1
      %p188 = por %p186, %p187
      %p189 = scmp.ne.s32.totalorder %s180, %s181
      %p190 = scmp.eq.s32.totalorder %s23, 0
      %p191 = por %p189, %p190
      %p192 = scmp.ne.s32.totalorder %s180, %s181
      %p193 = scmp.eq.s32.totalorder %s24, 1
      %p194 = por %p192, %p193
      %p196 = scmp.ne.s32.totalorder %s181, %s195
      %p197 = scmp.eq.s32.totalorder %s24, 0
      %p198 = por %p196, %p197
      %s200 = sadd.s32 %s199, 1
      %p203 = scmp.eq.s32.totalorder %s18, 1
      %p204 = scmp.ne.s32.totalorder %s199, %s201
      %p205 = scmp.eq.s32.totalorder %s18, 0
      %p206 = por %p204, %p205
      %p207 = scmp.ne.s32.totalorder %s199, %s201
      %p208 = scmp.eq.s32.totalorder %s23, 1
      %p209 = por %p207, %p208
      %p210 = scmp.ne.s32.totalorder %s201, %s202
      %p211 = scmp.eq.s32.totalorder %s23, 0
      %p212 = por %p210, %p211
      %p213 = scmp.ne.s32.totalorder %s201, %s202
      %p214 = scmp.eq.s32.totalorder %s24, 1
      %p215 = por %p213, %p214
      %p217 = scmp.ne.s32.totalorder %s202, %s216
      %p218 = scmp.eq.s32.totalorder %s24, 0
      %p219 = por %p217, %p218
      %s220 = ssub.s32 %s18, %s25
      %p221 = scmp.eq.s32.totalorder %s220, 0
      %s223 = sadd.s32 %s222, 1
      %s224 = scalar_select %p221, %s222, %s223
      %p227 = pneg %p221
      %p228 = scmp.eq.s32.totalorder %s18, 1
      %p229 = por %p227, %p228
      %p230 = scmp.ne.s32.totalorder %s222, %s225
      %p231 = scmp.eq.s32.totalorder %s18, 0
      %p232 = por %p230, %p231
      %p233 = scmp.ne.s32.totalorder %s222, %s225
      %p234 = scmp.eq.s32.totalorder %s23, 1
      %p235 = por %p233, %p234
      %p236 = scmp.ne.s32.totalorder %s225, %s226
      %p237 = scmp.eq.s32.totalorder %s23, 0
      %p238 = por %p236, %p237
      %p239 = scmp.ne.s32.totalorder %s225, %s226
      %p240 = scmp.eq.s32.totalorder %s24, 1
      %p241 = por %p239, %p240
      %p243 = scmp.ne.s32.totalorder %s226, %s242
      %p244 = scmp.eq.s32.totalorder %s24, 0
      %p245 = por %p243, %p244
      %p246 = scmp.le.s32.totalorder 1, %s18
      %p247 = scmp.lt.s32.totalorder %s18, 3
      %p248 = pnand %p246, %p247
      %p249 = pneg %p248
      // Predicated region
      $region9: #{tpu_custom_call.1} parent=5 // pred_check
        _
      $region10: #{tpu_custom_call.1} parent=5 // pred_check_branch
        %251 = sbr.rel (%p248) target = $region12
      $region11: #{tpu_custom_call.1} parent=5 // pred_region
        %s252 = ssub.s32 %s18, 1
        // Predicated region
        $region13: #{tpu_custom_call.1} parent=11 // pred_check
          %p253 = pneg %p65
        $region14: #{tpu_custom_call.1} parent=11 // pred_check_branch
          %255 = sbr.rel (%p253) target = $region16
        $region15: #{tpu_custom_call.1} parent=11 // pred_region
          _
        $region16: #{tpu_custom_call.1} parent=11 // pred_fallthru
          _
        // Predicated region
        $region17: #{tpu_custom_call.1} parent=11 // pred_check
          %p256 = pneg %p86
        $region18: #{tpu_custom_call.1} parent=11 // pred_check_branch
          %258 = sbr.rel (%p256) target = $region20
        $region19: #{tpu_custom_call.1} parent=11 // pred_region
          _
        $region20: #{tpu_custom_call.1} parent=11 // pred_fallthru
          _
        // Predicated region
        $region21: #{tpu_custom_call.1} parent=11 // pred_check
          %p259 = pneg %p107
        $region22: #{tpu_custom_call.1} parent=11 // pred_check_branch
          %261 = sbr.rel (%p259) target = $region24
        $region23: #{tpu_custom_call.1} parent=11 // pred_region
          _
        $region24: #{tpu_custom_call.1} parent=11 // pred_fallthru
          _
        // Predicated region
        $region25: #{tpu_custom_call.1} parent=11 // pred_check
          %p262 = pneg %p128
        $region26: #{tpu_custom_call.1} parent=11 // pred_check_branch
          %264 = sbr.rel (%p262) target = $region28
        $region27: #{tpu_custom_call.1} parent=11 // pred_region
          _
        $region28: #{tpu_custom_call.1} parent=11 // pred_fallthru
          _
        // Predicated region
        $region29: #{tpu_custom_call.1} parent=11 // pred_check
          %p265 = pneg %p149
        $region30: #{tpu_custom_call.1} parent=11 // pred_check_branch
          %267 = sbr.rel (%p265) target = $region32
        $region31: #{tpu_custom_call.1} parent=11 // pred_region
          _
        $region32: #{tpu_custom_call.1} parent=11 // pred_fallthru
          _
        // Predicated region
        $region33: #{tpu_custom_call.1} parent=11 // pred_check
          %p268 = pneg %p170
        $region34: #{tpu_custom_call.1} parent=11 // pred_check_branch
          %270 = sbr.rel (%p268) target = $region36
        $region35: #{tpu_custom_call.1} parent=11 // pred_region
          _
        $region36: #{tpu_custom_call.1} parent=11 // pred_fallthru
          _
        // Predicated region
        $region37: #{tpu_custom_call.1} parent=11 // pred_check
          %p271 = pneg %p191
        $region38: #{tpu_custom_call.1} parent=11 // pred_check_branch
          %273 = sbr.rel (%p271) target = $region40
        $region39: #{tpu_custom_call.1} parent=11 // pred_region
          _
        $region40: #{tpu_custom_call.1} parent=11 // pred_fallthru
          _
        // Predicated region
        $region41: #{tpu_custom_call.1} parent=11 // pred_check
          %p274 = pneg %p212
        $region42: #{tpu_custom_call.1} parent=11 // pred_check_branch
          %276 = sbr.rel (%p274) target = $region44
        $region43: #{tpu_custom_call.1} parent=11 // pred_region
          _
        $region44: #{tpu_custom_call.1} parent=11 // pred_fallthru
          _
      $region12: #{tpu_custom_call.1} parent=5 // pred_fallthru
        _
      %p277 = scmp.lt.s32.totalorder %s18, 2
      // Predicated region
      $region45: #{tpu_custom_call.1} parent=5 // pred_check
        %p278 = pneg %p277
      $region46: #{tpu_custom_call.1} parent=5 // pred_check_branch
        %280 = sbr.rel (%p278) target = $region48
      $region47: #{tpu_custom_call.1} parent=5 // pred_region
        // Predicated region
        $region49: #{tpu_custom_call.1} parent=47 // pred_check
          %p281 = pneg %p38
        $region50: #{tpu_custom_call.1} parent=47 // pred_check_branch
          %283 = sbr.rel (%p281) target = $region52
        $region51: #{tpu_custom_call.1} parent=47 // pred_region
          %p284 = scmp.lt.s32.totalorder %s18, 1
          %s285 = scalar_select %p284, %s18, 1
          %s286 = smul.addr %s285, 32
          %s287 = smul.addr %s286, 4
          %s288 = scalar_lea.vmem %s0, %s287
        $region52: #{tpu_custom_call.1} parent=47 // pred_fallthru
          _
      $region48: #{tpu_custom_call.1} parent=5 // pred_fallthru
        _
      %p289 = scmp.le.s32.totalorder 1, %s18
      %p290 = scmp.lt.s32.totalorder %s18, 3
      %p291 = pnand %p289, %p290
      %p292 = pneg %p291
      // Predicated region
      $region53: #{tpu_custom_call.1} parent=5 // pred_check
        _
      $region54: #{tpu_custom_call.1} parent=5 // pred_check_branch
        %294 = sbr.rel (%p291) target = $region56
      $region55: #{tpu_custom_call.1} parent=5 // pred_region
        %s295 = ssub.s32 %s18, 1
        %p296 = scmp.lt.s32.totalorder %s23, 1
        %s297 = scalar_select %p296, %s23, 1
        %s298 = smul.addr %s297, 32
        %s299 = smul.addr %s298, 4
        %s300 = scalar_lea.vmem %s0, %s299
        %p301 = pneg %p44
        %p302 = pneg %p41
        %p303 = pneg %p65
        %p304 = pneg %p62
        %p305 = pneg %p86
        %p306 = pneg %p83
        %p307 = pneg %p107
        %p308 = pneg %p104
        %p309 = pneg %p128
        %p310 = pneg %p125
        %p311 = pneg %p149
        %p312 = pneg %p146
        %p313 = pneg %p170
        %p314 = pneg %p167
        %p315 = pneg %p191
        %p316 = pneg %p188
        %p317 = pneg %p212
        %p318 = pneg %p209
        %p319 = pneg %p238
        %p320 = pneg %p235
        %s321 = sand.u32 %s225, 1
        %s322 = scalar_lea.sflag [#allocation5], %s321
        %s323 = sand.u32 %s225, 1
        %s324 = smul.addr %s323, 256
        %s325 = scalar_lea.vmem [#allocation4], %s324
        %p326 = scmp.lt.s32.totalorder %s23, 1
        %s327 = scalar_select %p326, %s23, 1
        %s328 = smul.addr %s327, 32
        %s329 = smul.addr %s328, 4
        %s330 = scalar_lea.vmem %s0, %s329
        %p332 = scmp.eq.s32.totalorder %s23, 0
        // Predicated region
        $region57: #{tpu_custom_call.1} parent=55 // pred_check
          %p333 = pneg %p332
        $region58: #{tpu_custom_call.1} parent=55 // pred_check_branch
          %335 = sbr.rel (%p333) target = $region60
        $region59: #{tpu_custom_call.1} parent=55 // pred_region
          %336 = vst [vmem:[#allocation2] sm:$0xf] 0
          %337 = vst [vmem:[#allocation2 + $0x4] sm:$0xf] 0
          %338 = vst [vmem:[#allocation2 + $0x8] sm:$0xf] 0
          %339 = vst [vmem:[#allocation2 + $0xc] sm:$0xf] 0
          %340 = vst [vmem:[#allocation2 + $0x10] sm:$0xf] 0
          %341 = vst [vmem:[#allocation2 + $0x14] sm:$0xf] 0
          %342 = vst [vmem:[#allocation2 + $0x18] sm:$0xf] 0
          %343 = vst [vmem:[#allocation2 + $0x1c] sm:$0xf] 0
          %344 = vst [vmem:[#allocation2 + $0x20] sm:$0xf] 0
          %345 = vst [vmem:[#allocation2 + $0x24] sm:$0xf] 0
          %346 = vst [vmem:[#allocation2 + $0x28] sm:$0xf] 0
          %347 = vst [vmem:[#allocation2 + $0x2c] sm:$0xf] 0
          %348 = vst [vmem:[#allocation2 + $0x30] sm:$0xf] 0
          %349 = vst [vmem:[#allocation2 + $0x34] sm:$0xf] 0
          %350 = vst [vmem:[#allocation2 + $0x38] sm:$0xf] 0
          %351 = vst [vmem:[#allocation2 + $0x3c] sm:$0xf] 0
          %352 = vst [vmem:[#allocation2 + $0x40] sm:$0xf] 0
          %353 = vst [vmem:[#allocation2 + $0x44] sm:$0xf] 0
          %354 = vst [vmem:[#allocation2 + $0x48] sm:$0xf] 0
          %355 = vst [vmem:[#allocation2 + $0x4c] sm:$0xf] 0
          %356 = vst [vmem:[#allocation2 + $0x50] sm:$0xf] 0
          %357 = vst [vmem:[#allocation2 + $0x54] sm:$0xf] 0
          %358 = vst [vmem:[#allocation2 + $0x58] sm:$0xf] 0
          %359 = vst [vmem:[#allocation2 + $0x5c] sm:$0xf] 0
          %360 = vst [vmem:[#allocation2 + $0x60] sm:$0xf] 0
          %361 = vst [vmem:[#allocation2 + $0x64] sm:$0xf] 0
          %362 = vst [vmem:[#allocation2 + $0x68] sm:$0xf] 0
          %363 = vst [vmem:[#allocation2 + $0x6c] sm:$0xf] 0
          %364 = vst [vmem:[#allocation2 + $0x70] sm:$0xf] 0
          %365 = vst [vmem:[#allocation2 + $0x74] sm:$0xf] 0
          %366 = vst [vmem:[#allocation2 + $0x78] sm:$0xf] 0
          %367 = vst [vmem:[#allocation2 + $0x7c] sm:$0xf] 0
          %368 = vst [vmem:[#allocation2 + $0x80] sm:$0xf] 0
          %369 = vst [vmem:[#allocation2 + $0x84] sm:$0xf] 0
          %370 = vst [vmem:[#allocation2 + $0x88] sm:$0xf] 0
          %371 = vst [vmem:[#allocation2 + $0x8c] sm:$0xf] 0
          %372 = vst [vmem:[#allocation2 + $0x90] sm:$0xf] 0
          %373 = vst [vmem:[#allocation2 + $0x94] sm:$0xf] 0
          %374 = vst [vmem:[#allocation2 + $0x98] sm:$0xf] 0
          %375 = vst [vmem:[#allocation2 + $0x9c] sm:$0xf] 0
          %376 = vst [vmem:[#allocation2 + $0xa0] sm:$0xf] 0
          %377 = vst [vmem:[#allocation2 + $0xa4] sm:$0xf] 0
          %378 = vst [vmem:[#allocation2 + $0xa8] sm:$0xf] 0
          %379 = vst [vmem:[#allocation2 + $0xac] sm:$0xf] 0
          %380 = vst [vmem:[#allocation2 + $0xb0] sm:$0xf] 0
          %381 = vst [vmem:[#allocation2 + $0xb4] sm:$0xf] 0
          %382 = vst [vmem:[#allocation2 + $0xb8] sm:$0xf] 0
          %383 = vst [vmem:[#allocation2 + $0xbc] sm:$0xf] 0
          %384 = vst [vmem:[#allocation2 + $0xc0] sm:$0xf] 0
          %385 = vst [vmem:[#allocation2 + $0xc4] sm:$0xf] 0
          %386 = vst [vmem:[#allocation2 + $0xc8] sm:$0xf] 0
          %387 = vst [vmem:[#allocation2 + $0xcc] sm:$0xf] 0
          %388 = vst [vmem:[#allocation2 + $0xd0] sm:$0xf] 0
          %389 = vst [vmem:[#allocation2 + $0xd4] sm:$0xf] 0
          %390 = vst [vmem:[#allocation2 + $0xd8] sm:$0xf] 0
          %391 = vst [vmem:[#allocation2 + $0xdc] sm:$0xf] 0
          %392 = vst [vmem:[#allocation2 + $0xe0] sm:$0xf] 0
          %393 = vst [vmem:[#allocation2 + $0xe4] sm:$0xf] 0
          %394 = vst [vmem:[#allocation2 + $0xe8] sm:$0xf] 0
          %395 = vst [vmem:[#allocation2 + $0xec] sm:$0xf] 0
          %396 = vst [vmem:[#allocation2 + $0xf0] sm:$0xf] 0
          %397 = vst [vmem:[#allocation2 + $0xf4] sm:$0xf] 0
          %398 = vst [vmem:[#allocation2 + $0xf8] sm:$0xf] 0
          %399 = vst [vmem:[#allocation2 + $0xfc] sm:$0xf] 0
          %400 = vst [vmem:[#allocation2 + $0x100] sm:$0xf] 0
          %401 = vst [vmem:[#allocation2 + $0x104] sm:$0xf] 0
          %402 = vst [vmem:[#allocation2 + $0x108] sm:$0xf] 0
          %403 = vst [vmem:[#allocation2 + $0x10c] sm:$0xf] 0
          %404 = vst [vmem:[#allocation2 + $0x110] sm:$0xf] 0
          %405 = vst [vmem:[#allocation2 + $0x114] sm:$0xf] 0
          %406 = vst [vmem:[#allocation2 + $0x118] sm:$0xf] 0
          %407 = vst [vmem:[#allocation2 + $0x11c] sm:$0xf] 0
          %408 = vst [vmem:[#allocation2 + $0x120] sm:$0xf] 0
          %409 = vst [vmem:[#allocation2 + $0x124] sm:$0xf] 0
          %410 = vst [vmem:[#allocation2 + $0x128] sm:$0xf] 0
          %411 = vst [vmem:[#allocation2 + $0x12c] sm:$0xf] 0
          %412 = vst [vmem:[#allocation2 + $0x130] sm:$0xf] 0
          %413 = vst [vmem:[#allocation2 + $0x134] sm:$0xf] 0
          %414 = vst [vmem:[#allocation2 + $0x138] sm:$0xf] 0
          %415 = vst [vmem:[#allocation2 + $0x13c] sm:$0xf] 0
          %416 = vst [vmem:[#allocation2 + $0x140] sm:$0xf] 0
          %417 = vst [vmem:[#allocation2 + $0x144] sm:$0xf] 0
          %418 = vst [vmem:[#allocation2 + $0x148] sm:$0xf] 0
          %419 = vst [vmem:[#allocation2 + $0x14c] sm:$0xf] 0
          %420 = vst [vmem:[#allocation2 + $0x150] sm:$0xf] 0
          %421 = vst [vmem:[#allocation2 + $0x154] sm:$0xf] 0
          %422 = vst [vmem:[#allocation2 + $0x158] sm:$0xf] 0
          %423 = vst [vmem:[#allocation2 + $0x15c] sm:$0xf] 0
          %424 = vst [vmem:[#allocation2 + $0x160] sm:$0xf] 0
          %425 = vst [vmem:[#allocation2 + $0x164] sm:$0xf] 0
          %vm426 = vcmask 27648
          %427 = vst.msk [vmem:[#allocation3] sm:$0xf] %vm426, 0
          %428 = vst.msk [vmem:[#allocation3 + $0x4] sm:$0xf] %vm426, 0
          %429 = vst.msk [vmem:[#allocation3 + $0x8] sm:$0xf] %vm426, 0
          %430 = vst.msk [vmem:[#allocation3 + $0xc] sm:$0xf] %vm426, 0
          %431 = vst.msk [vmem:[#allocation3 + $0x10] sm:$0xf] %vm426, 0
          %432 = vst.msk [vmem:[#allocation3 + $0x14] sm:$0xf] %vm426, 0
          %433 = vst.msk [vmem:[#allocation3 + $0x18] sm:$0xf] %vm426, 0
          %434 = vst.msk [vmem:[#allocation3 + $0x1c] sm:$0xf] %vm426, 0
          %435 = vst.msk [vmem:[#allocation3 + $0x20] sm:$0xf] %vm426, 0
          %436 = vst.msk [vmem:[#allocation3 + $0x24] sm:$0xf] %vm426, 0
          %437 = vst.msk [vmem:[#allocation3 + $0x28] sm:$0xf] %vm426, 0
          %438 = vst.msk [vmem:[#allocation3 + $0x2c] sm:$0xf] %vm426, 0
          %439 = vst.msk [vmem:[#allocation3 + $0x30] sm:$0xf] %vm426, 0
          %440 = vst.msk [vmem:[#allocation3 + $0x34] sm:$0xf] %vm426, 0
          %441 = vst.msk [vmem:[#allocation3 + $0x38] sm:$0xf] %vm426, 0
          %442 = vst.msk [vmem:[#allocation3 + $0x3c] sm:$0xf] %vm426, 0
          %443 = vst.msk [vmem:[#allocation3 + $0x40] sm:$0xf] %vm426, 0
          %444 = vst.msk [vmem:[#allocation3 + $0x44] sm:$0xf] %vm426, 0
          %445 = vst.msk [vmem:[#allocation3 + $0x48] sm:$0xf] %vm426, 0
          %446 = vst.msk [vmem:[#allocation3 + $0x4c] sm:$0xf] %vm426, 0
          %447 = vst.msk [vmem:[#allocation3 + $0x50] sm:$0xf] %vm426, 0
          %448 = vst.msk [vmem:[#allocation3 + $0x54] sm:$0xf] %vm426, 0
          %449 = vst.msk [vmem:[#allocation3 + $0x58] sm:$0xf] %vm426, 0
          %450 = vst.msk [vmem:[#allocation3 + $0x5c] sm:$0xf] %vm426, 0
          %451 = vst.msk [vmem:[#allocation3 + $0x60] sm:$0xf] %vm426, 0
          %452 = vst.msk [vmem:[#allocation3 + $0x64] sm:$0xf] %vm426, 0
          %453 = vst.msk [vmem:[#allocation3 + $0x68] sm:$0xf] %vm426, 0
          %454 = vst.msk [vmem:[#allocation3 + $0x6c] sm:$0xf] %vm426, 0
          %455 = vst.msk [vmem:[#allocation3 + $0x70] sm:$0xf] %vm426, 0
          %456 = vst.msk [vmem:[#allocation3 + $0x74] sm:$0xf] %vm426, 0
          %457 = vst.msk [vmem:[#allocation3 + $0x78] sm:$0xf] %vm426, 0
          %458 = vst.msk [vmem:[#allocation3 + $0x7c] sm:$0xf] %vm426, 0
          %459 = vst.msk [vmem:[#allocation3 + $0x80] sm:$0xf] %vm426, 0
          %460 = vst.msk [vmem:[#allocation3 + $0x84] sm:$0xf] %vm426, 0
          %461 = vst.msk [vmem:[#allocation3 + $0x88] sm:$0xf] %vm426, 0
          %462 = vst.msk [vmem:[#allocation3 + $0x8c] sm:$0xf] %vm426, 0
          %463 = vst.msk [vmem:[#allocation3 + $0x90] sm:$0xf] %vm426, 0
          %464 = vst.msk [vmem:[#allocation3 + $0x94] sm:$0xf] %vm426, 0
          %465 = vst.msk [vmem:[#allocation3 + $0x98] sm:$0xf] %vm426, 0
          %466 = vst.msk [vmem:[#allocation3 + $0x9c] sm:$0xf] %vm426, 0
          %467 = vst.msk [vmem:[#allocation3 + $0xa0] sm:$0xf] %vm426, 0
          %468 = vst.msk [vmem:[#allocation3 + $0xa4] sm:$0xf] %vm426, 0
          %469 = vst.msk [vmem:[#allocation3 + $0xa8] sm:$0xf] %vm426, 0
          %470 = vst.msk [vmem:[#allocation3 + $0xac] sm:$0xf] %vm426, 0
          %471 = vst.msk [vmem:[#allocation3 + $0xb0] sm:$0xf] %vm426, 0
          %472 = vst.msk [vmem:[#allocation3 + $0xb4] sm:$0xf] %vm426, 0
          %473 = vst.msk [vmem:[#allocation3 + $0xb8] sm:$0xf] %vm426, 0
          %474 = vst.msk [vmem:[#allocation3 + $0xbc] sm:$0xf] %vm426, 0
          %475 = vst.msk [vmem:[#allocation3 + $0xc0] sm:$0xf] %vm426, 0
          %476 = vst.msk [vmem:[#allocation3 + $0xc4] sm:$0xf] %vm426, 0
          %477 = vst.msk [vmem:[#allocation3 + $0xc8] sm:$0xf] %vm426, 0
          %478 = vst.msk [vmem:[#allocation3 + $0xcc] sm:$0xf] %vm426, 0
          %479 = vst.msk [vmem:[#allocation3 + $0xd0] sm:$0xf] %vm426, 0
          %480 = vst.msk [vmem:[#allocation3 + $0xd4] sm:$0xf] %vm426, 0
          %481 = vst.msk [vmem:[#allocation3 + $0xd8] sm:$0xf] %vm426, 0
          %482 = vst.msk [vmem:[#allocation3 + $0xdc] sm:$0xf] %vm426, 0
          %483 = vst.msk [vmem:[#allocation3 + $0xe0] sm:$0xf] %vm426, 0
          %484 = vst.msk [vmem:[#allocation3 + $0xe4] sm:$0xf] %vm426, 0
          %485 = vst.msk [vmem:[#allocation3 + $0xe8] sm:$0xf] %vm426, 0
          %486 = vst.msk [vmem:[#allocation3 + $0xec] sm:$0xf] %vm426, 0
          %487 = vst.msk [vmem:[#allocation3 + $0xf0] sm:$0xf] %vm426, 0
          %488 = vst.msk [vmem:[#allocation3 + $0xf4] sm:$0xf] %vm426, 0
          %489 = vst.msk [vmem:[#allocation3 + $0xf8] sm:$0xf] %vm426, 0
          %490 = vst.msk [vmem:[#allocation3 + $0xfc] sm:$0xf] %vm426, 0
          %491 = vst.msk [vmem:[#allocation3 + $0x100] sm:$0xf] %vm426, 0
          %492 = vst.msk [vmem:[#allocation3 + $0x104] sm:$0xf] %vm426, 0
          %493 = vst.msk [vmem:[#allocation3 + $0x108] sm:$0xf] %vm426, 0
          %494 = vst.msk [vmem:[#allocation3 + $0x10c] sm:$0xf] %vm426, 0
          %495 = vst.msk [vmem:[#allocation3 + $0x110] sm:$0xf] %vm426, 0
          %496 = vst.msk [vmem:[#allocation3 + $0x114] sm:$0xf] %vm426, 0
          %497 = vst.msk [vmem:[#allocation3 + $0x118] sm:$0xf] %vm426, 0
          %498 = vst.msk [vmem:[#allocation3 + $0x11c] sm:$0xf] %vm426, 0
          %499 = vst.msk [vmem:[#allocation3 + $0x120] sm:$0xf] %vm426, 0
          %500 = vst.msk [vmem:[#allocation3 + $0x124] sm:$0xf] %vm426, 0
          %501 = vst.msk [vmem:[#allocation3 + $0x128] sm:$0xf] %vm426, 0
          %502 = vst.msk [vmem:[#allocation3 + $0x12c] sm:$0xf] %vm426, 0
          %503 = vst.msk [vmem:[#allocation3 + $0x130] sm:$0xf] %vm426, 0
          %504 = vst.msk [vmem:[#allocation3 + $0x134] sm:$0xf] %vm426, 0
          %505 = vst.msk [vmem:[#allocation3 + $0x138] sm:$0xf] %vm426, 0
          %506 = vst.msk [vmem:[#allocation3 + $0x13c] sm:$0xf] %vm426, 0
          %507 = vst.msk [vmem:[#allocation3 + $0x140] sm:$0xf] %vm426, 0
          %508 = vst.msk [vmem:[#allocation3 + $0x144] sm:$0xf] %vm426, 0
          %509 = vst.msk [vmem:[#allocation3 + $0x148] sm:$0xf] %vm426, 0
          %510 = vst.msk [vmem:[#allocation3 + $0x14c] sm:$0xf] %vm426, 0
          %511 = vst.msk [vmem:[#allocation3 + $0x150] sm:$0xf] %vm426, 0
          %512 = vst.msk [vmem:[#allocation3 + $0x154] sm:$0xf] %vm426, 0
          %513 = vst.msk [vmem:[#allocation3 + $0x158] sm:$0xf] %vm426, 0
          %514 = vst.msk [vmem:[#allocation3 + $0x15c] sm:$0xf] %vm426, 0
          %515 = vst.msk [vmem:[#allocation3 + $0x160] sm:$0xf] %vm426, 0
          %516 = vst.msk [vmem:[#allocation3 + $0x164] sm:$0xf] %vm426, 0
        $region60: #{tpu_custom_call.1} parent=55 // pred_fallthru
          _
        %v517 = vld [vmem:[%s330] sm:$0xf]
        %v518 = vld [vmem:[%s330 + $0x4] sm:$0xf]
        %v519 = vld [vmem:[%s330 + $0x8] sm:$0xf]
        %v520 = vld [vmem:[%s330 + $0xc] sm:$0xf]
        %v521 = vld [vmem:[%s330 + $0x10] sm:$0xf]
        %v522 = vld [vmem:[%s330 + $0x14] sm:$0xf]
        %v523 = vld [vmem:[%s330 + $0x18] sm:$0xf]
        %v524 = vld [vmem:[%s330 + $0x1c] sm:$0xf]
        %v525 = vld [vmem:[%s330 + $0x20] sm:$0xf]
        %v526 = vld [vmem:[%s330 + $0x24] sm:$0xf]
        %v527 = vld [vmem:[%s330 + $0x28] sm:$0xf]
        %v528 = vld [vmem:[%s330 + $0x2c] sm:$0xf]
        %v529 = vld [vmem:[%s330 + $0x30] sm:$0xf]
        %v530 = vld [vmem:[%s330 + $0x34] sm:$0xf]
        %v531 = vld [vmem:[%s330 + $0x38] sm:$0xf]
        %v532 = vld [vmem:[%s330 + $0x3c] sm:$0xf]
        %v533 = vld [vmem:[%s330 + $0x40] sm:$0xf]
        %v534 = vld [vmem:[%s330 + $0x44] sm:$0xf]
        %v535 = vld [vmem:[%s330 + $0x48] sm:$0xf]
        %v536 = vld [vmem:[%s330 + $0x4c] sm:$0xf]
        %v537 = vld [vmem:[%s330 + $0x50] sm:$0xf]
        %v538 = vld [vmem:[%s330 + $0x54] sm:$0xf]
        %v539 = vld [vmem:[%s330 + $0x58] sm:$0xf]
        %v540 = vld [vmem:[%s330 + $0x5c] sm:$0xf]
        %v541 = vld [vmem:[%s330 + $0x60] sm:$0xf]
        %v542 = vld [vmem:[%s330 + $0x64] sm:$0xf]
        %v543 = vld [vmem:[%s330 + $0x68] sm:$0xf]
        %v544 = vld [vmem:[%s330 + $0x6c] sm:$0xf]
        %v545 = vld [vmem:[%s330 + $0x70] sm:$0xf]
        %v546 = vld [vmem:[%s330 + $0x74] sm:$0xf]
        %v547 = vld [vmem:[%s330 + $0x78] sm:$0xf]
        %v548 = vld [vmem:[%s330 + $0x7c] sm:$0xf]
        %v549 = vld [vmem:[%s1] sm:$0xff]
        %v550 = vld [vmem:[%s1 + $0x8] sm:$0xff]
        %v551 = vld [vmem:[%s1 + $0x10] sm:$0xff]
        %v552 = vld [vmem:[%s1 + $0x18] sm:$0xff]
        %v553 = vld [vmem:[%s1 + $0x20] sm:$0xff]
        %v554 = vld [vmem:[%s1 + $0x28] sm:$0xff]
        %v555 = vld [vmem:[%s1 + $0x30] sm:$0xff]
        %v556 = vld [vmem:[%s1 + $0x38] sm:$0xff]
        %v557 = vld [vmem:[%s1 + $0x40] sm:$0xff]
        %v558 = vld [vmem:[%s1 + $0x48] sm:$0xff]
        %v559 = vld [vmem:[%s1 + $0x50] sm:$0xff]
        %v560 = vld [vmem:[%s1 + $0x58] sm:$0xff]
        %v561 = vld [vmem:[%s1 + $0x60] sm:$0xff]
        %v562 = vld [vmem:[%s1 + $0x68] sm:$0xff]
        %v563 = vunpack.c.l.bf16 %v517
        %v564 = vunpack.c.l.bf16 %v518
        %v565 = vunpack.c.l.bf16 %v519
        %v566 = vunpack.c.l.bf16 %v520
        %v567 = vunpack.c.l.bf16 %v521
        %v568 = vunpack.c.l.bf16 %v522
        %v569 = vunpack.c.l.bf16 %v523
        %v570 = vunpack.c.l.bf16 %v524
        %v571 = vunpack.c.l.bf16 %v525
        %v572 = vunpack.c.l.bf16 %v526
        %v573 = vunpack.c.l.bf16 %v527
        %v574 = vunpack.c.l.bf16 %v528
        %v575 = vunpack.c.l.bf16 %v529
        %v576 = vunpack.c.l.bf16 %v530
        %v577 = vunpack.c.l.bf16 %v531
        %v578 = vunpack.c.l.bf16 %v532
        %v579 = vunpack.c.l.bf16 %v533
        %v580 = vunpack.c.l.bf16 %v534
        %v581 = vunpack.c.l.bf16 %v535
        %v582 = vunpack.c.l.bf16 %v536
        %v583 = vunpack.c.l.bf16 %v537
        %v584 = vunpack.c.l.bf16 %v538
        %v585 = vunpack.c.l.bf16 %v539
        %v586 = vunpack.c.l.bf16 %v540
        %v587 = vunpack.c.l.bf16 %v541
        %v588 = vunpack.c.l.bf16 %v542
        %v589 = vunpack.c.l.bf16 %v543
        %v590 = vunpack.c.l.bf16 %v544
        %v591 = vunpack.c.l.bf16 %v545
        %v592 = vunpack.c.l.bf16 %v546
        %v593 = vunpack.c.l.bf16 %v547
        %v594 = vunpack.c.l.bf16 %v548
        %595 = vmatprep.subr.mxu0 0.0
        %596 = vmatpush1.msra.mxu0 %v563
        %597 = vmatprep.subr.mxu0 0.0
        %598 = vmatpush1.msra.mxu0 %v564
        %599 = vmatprep.subr.mxu0 0.0
        %600 = vmatpush1.msra.mxu0 %v565
        %601 = vmatprep.subr.mxu0 0.0
        %602 = vmatpush1.msra.mxu0 %v566
        %603 = vmatprep.subr.mxu0 0.0
        %604 = vmatpush1.msra.mxu0 %v567
        %605 = vmatprep.subr.mxu0 0.0
        %606 = vmatpush1.msra.mxu0 %v568
        %607 = vmatprep.subr.mxu0 0.0
        %608 = vmatpush1.msra.mxu0 %v569
        %609 = vmatprep.subr.mxu0 0.0
        %610 = vmatpush1.msra.mxu0 %v570
        %611 = vmatprep.subr.mxu0 0.0
        %612 = vmatpush1.msra.mxu0 %v571
        %613 = vmatprep.subr.mxu0 0.0
        %614 = vmatpush1.msra.mxu0 %v572
        %615 = vmatprep.subr.mxu0 0.0
        %616 = vmatpush1.msra.mxu0 %v573
        %617 = vmatprep.subr.mxu0 0.0
        %618 = vmatpush1.msra.mxu0 %v574
        %619 = vmatprep.subr.mxu0 0.0
        %620 = vmatpush1.msra.mxu0 %v575
        %621 = vmatprep.subr.mxu0 0.0
        %622 = vmatpush1.msra.mxu0 %v576
        %623 = vmatprep.subr.mxu0 0.0
        %624 = vmatpush1.msra.mxu0 %v577
        %625 = vmatprep.subr.mxu0 0.0
        %626 = vmatpush1.msra.mxu0 %v578
        %627 = vmatprep.subr.mxu0 0.0
        %628 = vmatpush1.msra.mxu0 %v579
        %629 = vmatprep.subr.mxu0 0.0
        %630 = vmatpush1.msra.mxu0 %v580
        %631 = vmatprep.subr.mxu0 0.0
        %632 = vmatpush1.msra.mxu0 %v581
        %633 = vmatprep.subr.mxu0 0.0
        %634 = vmatpush1.msra.mxu0 %v582
        %635 = vmatprep.subr.mxu0 0.0
        %636 = vmatpush1.msra.mxu0 %v583
        %637 = vmatprep.subr.mxu0 0.0
        %638 = vmatpush1.msra.mxu0 %v584
        %639 = vmatprep.subr.mxu0 0.0
        %640 = vmatpush1.msra.mxu0 %v585
        %641 = vmatprep.subr.mxu0 0.0
        %642 = vmatpush1.msra.mxu0 %v586
        %643 = vmatprep.subr.mxu0 0.0
        %644 = vmatpush1.msra.mxu0 %v587
        %645 = vmatprep.subr.mxu0 0.0
        %646 = vmatpush1.msra.mxu0 %v588
        %647 = vmatprep.subr.mxu0 0.0
        %648 = vmatpush1.msra.mxu0 %v589
        %649 = vmatprep.subr.mxu0 0.0
        %650 = vmatpush1.msra.mxu0 %v590
        %651 = vmatprep.subr.mxu0 0.0
        %652 = vmatpush1.msra.mxu0 %v591
        %653 = vmatprep.subr.mxu0 0.0
        %654 = vmatpush1.msra.mxu0 %v592
        %655 = vmatprep.subr.mxu0 0.0
        %656 = vmatpush1.msra.mxu0 %v593
        %657 = vmatprep.subr.mxu0 0.0
        %658 = vmatpush1.msra.mxu0 %v594
        %659 = vmatprep.mubr.f32.mxu0 %v550
        %660 = vmatmul.mubr.f32.gmra.mrb[0].mxu0 %v549
        %v661 = vpop.f32.mrb[0].mxu0
        %v662 = vadd.f32 0.0, %v661
        %v663 = vpop.f32.mrb[0].mxu0
        %664 = vmatprep.mubr.f32.mxu0 %v552
        %665 = vmatmul.mubr.f32.gmra.mrb[0].mxu0 %v551
        %v666 = vpop.f32.mrb[0].mxu0
        %v667 = vadd.f32 0.0, %v666
        %v668 = vpop.f32.mrb[0].mxu0
        %669 = vmatprep.mubr.f32.mxu0 %v554
        %670 = vmatmul.mubr.f32.gmra.mrb[0].mxu0 %v553
        %v671 = vpop.f32.mrb[0].mxu0
        %v672 = vadd.f32 0.0, %v671
        %v673 = vpop.f32.mrb[0].mxu0
        %674 = vmatprep.mubr.f32.mxu0 %v556
        %675 = vmatmul.mubr.f32.gmra.mrb[0].mxu0 %v555
        %v676 = vpop.f32.mrb[0].mxu0
        %v677 = vadd.f32 0.0, %v676
        %v678 = vpop.f32.mrb[0].mxu0
        %679 = vmatprep.mubr.f32.mxu0 %v558
        %680 = vmatmul.mubr.f32.gmra.mrb[0].mxu0 %v557
        %v681 = vpop.f32.mrb[0].mxu0
        %v682 = vadd.f32 0.0, %v681
        %v683 = vpop.f32.mrb[0].mxu0
        %684 = vmatprep.mubr.f32.mxu0 %v560
        %685 = vmatmul.mubr.f32.gmra.mrb[0].mxu0 %v559
        %v686 = vpop.f32.mrb[0].mxu0
        %v687 = vadd.f32 0.0, %v686
        %v688 = vpop.f32.mrb[0].mxu0
        %689 = vmatprep.mubr.f32.mxu0 %v562
        %690 = vmatmul.mubr.f32.gmra.mrb[0].mxu0 %v561
        %v691 = vpop.f32.mrb[0].mxu0
        %v692 = vadd.f32 0.0, %v691
        %v693 = vpop.f32.mrb[0].mxu0
        %694 = vdwg.mxu0
        %v695 = vpack.c.bf16 %v667, %v662
        %v696 = vpack.c.bf16 %v677, %v672
        %v697 = vpack.c.bf16 %v687, %v682
        %v698 = vpack.c.bf16 %v692, %v692
        %v699 = vld [vmem:[%s3] sm:$0x3]
        %vm700 = vcmask 31744
        %v702 = vsel %vm700, %v695, 0
        %v705 = vsel %vm700, %v696, 0
        %v708 = vsel %vm700, %v697, 0
        %v711 = vsel %vm700, %v698, 0
        %vm713 = vcmask 1041408
        %v715 = vsel %vm713, %v699, 0
        %717 = vmatprep.subr.bf16.mxu0 0
        %718 = vmatpush1.bf16.msra.mxu0 %v715
        %719 = vmatprep.subr.bf16.mxu0 0
        %720 = vmatpush1.bf16.msra.mxu0 0
        %721 = vmatprep.subr.bf16.mxu0 0
        %722 = vmatpush1.bf16.msra.mxu0 0
        %723 = vmatprep.subr.bf16.mxu0 0
        %724 = vmatpush1.bf16.msra.mxu0 0
        %725 = vmatprep.subr.bf16.mxu0 0
        %726 = vmatpush1.bf16.msra.mxu0 0
        %727 = vmatprep.subr.bf16.mxu0 0
        %728 = vmatpush1.bf16.msra.mxu0 0
        %729 = vmatprep.subr.bf16.mxu0 0
        %730 = vmatpush1.bf16.msra.mxu0 0
        %731 = vmatprep.subr.bf16.mxu0 0
        %732 = vmatpush1.bf16.msra.mxu0 0
        %733 = vmatprep.subr.bf16.mxu0 0
        %734 = vmatpush1.bf16.msra.mxu0 0
        %735 = vmatprep.subr.bf16.mxu0 0
        %736 = vmatpush1.bf16.msra.mxu0 0
        %737 = vmatprep.subr.bf16.mxu0 0
        %738 = vmatpush1.bf16.msra.mxu0 0
        %739 = vmatprep.subr.bf16.mxu0 0
        %740 = vmatpush1.bf16.msra.mxu0 0
        %741 = vmatprep.subr.bf16.mxu0 0
        %742 = vmatpush1.bf16.msra.mxu0 0
        %743 = vmatprep.subr.bf16.mxu0 0
        %744 = vmatpush1.bf16.msra.mxu0 0
        %745 = vmatprep.subr.bf16.mxu0 0
        %746 = vmatpush1.bf16.msra.mxu0 0
        %747 = vmatprep.subr.bf16.mxu0 0
        %748 = vmatpush1.bf16.msra.mxu0 0
        %749 = vmatprep.mubr.bf16.mxu0 0
        %750 = vmatmul.mubr.bf16.gmra.mrb[0].mxu0 %v702
        %v751 = vpop.f32.mrb[0].mxu0
        %v752 = vadd.f32 0.0, %v751
        %v753 = vpop.f32.mrb[0].mxu0
        %v754 = vpop.f32.mrb[0].mxu0
        %v755 = vadd.f32 0.0, %v754
        %v756 = vpop.f32.mrb[0].mxu0
        %757 = vmatprep.mubr.bf16.mxu0 0
        %758 = vmatmul.mubr.bf16.gmra.mrb[0].mxu0 %v705
        %v759 = vpop.f32.mrb[0].mxu0
        %v760 = vadd.f32 0.0, %v759
        %v761 = vpop.f32.mrb[0].mxu0
        %v762 = vpop.f32.mrb[0].mxu0
        %v763 = vadd.f32 0.0, %v762
        %v764 = vpop.f32.mrb[0].mxu0
        %765 = vmatprep.mubr.bf16.mxu0 0
        %766 = vmatmul.mubr.bf16.gmra.mrb[0].mxu0 %v708
        %v767 = vpop.f32.mrb[0].mxu0
        %v768 = vadd.f32 0.0, %v767
        %v769 = vpop.f32.mrb[0].mxu0
        %v770 = vpop.f32.mrb[0].mxu0
        %v771 = vadd.f32 0.0, %v770
        %v772 = vpop.f32.mrb[0].mxu0
        %773 = vmatprep.mubr.bf16.mxu0 0
        %774 = vmatmul.mubr.bf16.gmra.mrb[0].mxu0 %v711
        %v775 = vpop.f32.mrb[0].mxu0
        %v776 = vadd.f32 0.0, %v775
        %v777 = vpop.f32.mrb[0].mxu0
        %v778 = vpop.f32.mrb[0].mxu0
        %v779 = vpop.f32.mrb[0].mxu0
        %780 = vdwg.mxu0
        %v781 = vld [vmem:[%s4] sm:$0xff]
        %v782 = vld [vmem:[%s4 + $0x8] sm:$0xff]
        %v783 = vld [vmem:[%s4 + $0x10] sm:$0xff]
        %v784 = vld [vmem:[%s4 + $0x18] sm:$0xff]
        %v785 = vld [vmem:[%s4 + $0x20] sm:$0xff]
        %v786 = vld [vmem:[%s4 + $0x28] sm:$0xff]
        %v787 = vld [vmem:[%s4 + $0x30] sm:$0xff]
        %v788 = vmul.f32 %v752, %v781
        %v789 = vmul.f32 %v755, %v782
        %v790 = vmul.f32 %v760, %v783
        %v791 = vmul.f32 %v763, %v784
        %v792 = vmul.f32 %v768, %v785
        %v793 = vmul.f32 %v771, %v786
        %v794 = vmul.f32 %v776, %v787
        %v795 = vld [vmem:[%s2] sm:$0xf]
        %v796 = vld [vmem:[%s2 + $0x4] sm:$0xf]
        %v797 = vld [vmem:[%s2 + $0x8] sm:$0xf]
        %v798 = vld [vmem:[%s2 + $0xc] sm:$0xf]
        %v799 = vld [vmem:[%s2 + $0x10] sm:$0xf]
        %v800 = vld [vmem:[%s2 + $0x14] sm:$0xf]
        %v801 = vld [vmem:[%s2 + $0x18] sm:$0xf]
        %v802 = vld [vmem:[%s2 + $0x1c] sm:$0xf]
        %v803 = vld [vmem:[%s2 + $0x20] sm:$0xf]
        %v804 = vld [vmem:[%s2 + $0x24] sm:$0xf]
        %v805 = vld [vmem:[%s2 + $0x28] sm:$0xf]
        %v806 = vld [vmem:[%s2 + $0x2c] sm:$0xf]
        %v807 = vld [vmem:[%s2 + $0x30] sm:$0xf]
        %v808 = vld [vmem:[%s2 + $0x34] sm:$0xf]
        %v809 = vld [vmem:[%s2 + $0x38] sm:$0xf]
        %v810 = vld [vmem:[%s2 + $0x3c] sm:$0xf]
        %v811 = vld [vmem:[%s2 + $0x40] sm:$0xf]
        %v812 = vld [vmem:[%s2 + $0x44] sm:$0xf]
        %v813 = vld [vmem:[%s2 + $0x48] sm:$0xf]
        %v814 = vld [vmem:[%s2 + $0x4c] sm:$0xf]
        %v815 = vld [vmem:[%s2 + $0x50] sm:$0xf]
        %v816 = vld [vmem:[%s2 + $0x54] sm:$0xf]
        %v817 = vld [vmem:[%s2 + $0x58] sm:$0xf]
        %v818 = vld [vmem:[%s2 + $0x5c] sm:$0xf]
        %v819 = vld [vmem:[%s2 + $0x60] sm:$0xf]
        %v820 = vld [vmem:[%s2 + $0x64] sm:$0xf]
        %v821 = vld [vmem:[%s2 + $0x68] sm:$0xf]
        %v822 = vld [vmem:[%s2 + $0x6c] sm:$0xf]
        %v823 = vld [vmem:[%s2 + $0x70] sm:$0xf]
        %v824 = vld [vmem:[%s2 + $0x74] sm:$0xf]
        %v825 = vld [vmem:[%s2 + $0x78] sm:$0xf]
        %v826 = vld [vmem:[%s2 + $0x7c] sm:$0xf]
        %v827 = vpack.c.bf16 %v789, %v788
        %v828 = vpack.c.bf16 %v791, %v790
        %v829 = vpack.c.bf16 %v793, %v792
        %v830 = vpack.c.bf16 %v794, %v794
        %v863 = vunpack.c.l.b16 %v795
        %v864 = vunpack.c.l.b16 %v796
        %v865 = vunpack.c.l.b16 %v797
        %v866 = vunpack.c.l.b16 %v798
        %v867 = vunpack.c.l.b16 %v799
        %v868 = vunpack.c.l.b16 %v800
        %v869 = vunpack.c.l.b16 %v801
        %v870 = vunpack.c.l.b16 %v802
        %v871 = vunpack.c.l.b16 %v803
        %v872 = vunpack.c.l.b16 %v804
        %v873 = vunpack.c.l.b16 %v805
        %v874 = vunpack.c.l.b16 %v806
        %v875 = vunpack.c.l.b16 %v807
        %v876 = vunpack.c.l.b16 %v808
        %v877 = vunpack.c.l.b16 %v809
        %v878 = vunpack.c.l.b16 %v810
        %v879 = vunpack.c.l.b16 %v811
        %v880 = vunpack.c.l.b16 %v812
        %v881 = vunpack.c.l.b16 %v813
        %v882 = vunpack.c.l.b16 %v814
        %v883 = vunpack.c.l.b16 %v815
        %v884 = vunpack.c.l.b16 %v816
        %v885 = vunpack.c.l.b16 %v817
        %v886 = vunpack.c.l.b16 %v818
        %v887 = vunpack.c.l.b16 %v819
        %v888 = vunpack.c.l.b16 %v820
        %v889 = vunpack.c.l.b16 %v821
        %v890 = vunpack.c.l.b16 %v822
        %v891 = vunpack.c.l.b16 %v823
        %v892 = vunpack.c.l.b16 %v824
        %v893 = vunpack.c.l.b16 %v825
        %v894 = vunpack.c.l.b16 %v826
        %v895 = vpack.c.b16 %v864, %v863
        %v896 = vpack.c.b16 %v866, %v865
        %v897 = vpack.c.b16 %v868, %v867
        %v898 = vpack.c.b16 %v870, %v869
        %v899 = vpack.c.b16 %v872, %v871
        %v900 = vpack.c.b16 %v874, %v873
        %v901 = vpack.c.b16 %v876, %v875
        %v902 = vpack.c.b16 %v878, %v877
        %v903 = vpack.c.b16 %v880, %v879
        %v904 = vpack.c.b16 %v882, %v881
        %v905 = vpack.c.b16 %v884, %v883
        %v906 = vpack.c.b16 %v886, %v885
        %v907 = vpack.c.b16 %v888, %v887
        %v908 = vpack.c.b16 %v890, %v889
        %v909 = vpack.c.b16 %v892, %v891
        %v910 = vpack.c.b16 %v894, %v893
        %vm911 = vcmask 457728
        %v913 = vsel %vm911, %v895, 0
        %v916 = vsel %vm911, %v896, 0
        %v919 = vsel %vm911, %v897, 0
        %v922 = vsel %vm911, %v898, 0
        %v925 = vsel %vm911, %v899, 0
        %v928 = vsel %vm911, %v900, 0
        %v931 = vsel %vm911, %v901, 0
        %v934 = vsel %vm911, %v902, 0
        %v937 = vsel %vm911, %v903, 0
        %v940 = vsel %vm911, %v904, 0
        %v943 = vsel %vm911, %v905, 0
        %v946 = vsel %vm911, %v906, 0
        %v949 = vsel %vm911, %v907, 0
        %v952 = vsel %vm911, %v908, 0
        %v955 = vsel %vm911, %v909, 0
        %v958 = vsel %vm911, %v910, 0
        %vm960 = vcmask 1043456
        %v962 = vsel %vm960, %v830, 0
        %964 = vmatprep.subr.bf16.mxu0 0
        %965 = vmatpush1.bf16.msra.mxu0 %v827
        %966 = vmatprep.subr.bf16.mxu0 0
        %967 = vmatpush1.bf16.msra.mxu0 %v828
        %968 = vmatprep.subr.bf16.mxu0 0
        %969 = vmatpush1.bf16.msra.mxu0 %v829
        %970 = vmatprep.subr.bf16.mxu0 0
        %971 = vmatpush1.bf16.msra.mxu0 %v962
        %972 = vmatprep.subr.bf16.mxu0 0
        %973 = vmatpush1.bf16.msra.mxu0 0
        %974 = vmatprep.subr.bf16.mxu0 0
        %975 = vmatpush1.bf16.msra.mxu0 0
        %976 = vmatprep.subr.bf16.mxu0 0
        %977 = vmatpush1.bf16.msra.mxu0 0
        %978 = vmatprep.subr.bf16.mxu0 0
        %979 = vmatpush1.bf16.msra.mxu0 0
        %980 = vmatprep.subr.bf16.mxu0 0
        %981 = vmatpush1.bf16.msra.mxu0 0
        %982 = vmatprep.subr.bf16.mxu0 0
        %983 = vmatpush1.bf16.msra.mxu0 0
        %984 = vmatprep.subr.bf16.mxu0 0
        %985 = vmatpush1.bf16.msra.mxu0 0
        %986 = vmatprep.subr.bf16.mxu0 0
        %987 = vmatpush1.bf16.msra.mxu0 0
        %988 = vmatprep.subr.bf16.mxu0 0
        %989 = vmatpush1.bf16.msra.mxu0 0
        %990 = vmatprep.subr.bf16.mxu0 0
        %991 = vmatpush1.bf16.msra.mxu0 0
        %992 = vmatprep.subr.bf16.mxu0 0
        %993 = vmatpush1.bf16.msra.mxu0 0
        %994 = vmatprep.subr.bf16.mxu0 0
        %995 = vmatpush1.bf16.msra.mxu0 0
        %996 = vmatprep.mubr.bf16.mxu0 0
        %997 = vmatmul.mubr.bf16.gmra.mrb[0].mxu0 %v913
        %v998 = vpop.f32.mrb[0].mxu0
        %v999 = vadd.f32 0.0, %v998
        %v1000 = vpop.f32.mrb[0].mxu0
        %v1001 = vpop.f32.mrb[0].mxu0
        %v1002 = vadd.f32 0.0, %v1001
        %v1003 = vpop.f32.mrb[0].mxu0
        %1004 = vmatprep.mubr.bf16.mxu0 0
        %1005 = vmatmul.mubr.bf16.gmra.mrb[0].mxu0 %v916
        %v1006 = vpop.f32.mrb[0].mxu0
        %v1007 = vadd.f32 0.0, %v1006
        %v1008 = vpop.f32.mrb[0].mxu0
        %v1009 = vpop.f32.mrb[0].mxu0
        %v1010 = vadd.f32 0.0, %v1009
        %v1011 = vpop.f32.mrb[0].mxu0
        %1012 = vmatprep.mubr.bf16.mxu0 0
        %1013 = vmatmul.mubr.bf16.gmra.mrb[0].mxu0 %v919
        %v1014 = vpop.f32.mrb[0].mxu0
        %v1015 = vadd.f32 0.0, %v1014
        %v1016 = vpop.f32.mrb[0].mxu0
        %v1017 = vpop.f32.mrb[0].mxu0
        %v1018 = vadd.f32 0.0, %v1017
        %v1019 = vpop.f32.mrb[0].mxu0
        %1020 = vmatprep.mubr.bf16.mxu0 0
        %1021 = vmatmul.mubr.bf16.gmra.mrb[0].mxu0 %v922
        %v1022 = vpop.f32.mrb[0].mxu0
        %v1023 = vadd.f32 0.0, %v1022
        %v1024 = vpop.f32.mrb[0].mxu0
        %v1025 = vpop.f32.mrb[0].mxu0
        %v1026 = vadd.f32 0.0, %v1025
        %v1027 = vpop.f32.mrb[0].mxu0
        %1028 = vmatprep.mubr.bf16.mxu0 0
        %1029 = vmatmul.mubr.bf16.gmra.mrb[0].mxu0 %v925
        %v1030 = vpop.f32.mrb[0].mxu0
        %v1031 = vadd.f32 0.0, %v1030
        %v1032 = vpop.f32.mrb[0].mxu0
        %v1033 = vpop.f32.mrb[0].mxu0
        %v1034 = vadd.f32 0.0, %v1033
        %v1035 = vpop.f32.mrb[0].mxu0
        %1036 = vmatprep.mubr.bf16.mxu0 0
        %1037 = vmatmul.mubr.bf16.gmra.mrb[0].mxu0 %v928
        %v1038 = vpop.f32.mrb[0].mxu0
        %v1039 = vadd.f32 0.0, %v1038
        %v1040 = vpop.f32.mrb[0].mxu0
        %v1041 = vpop.f32.mrb[0].mxu0
        %v1042 = vadd.f32 0.0, %v1041
        %v1043 = vpop.f32.mrb[0].mxu0
        %1044 = vmatprep.mubr.bf16.mxu0 0
        %1045 = vmatmul.mubr.bf16.gmra.mrb[0].mxu0 %v931
        %v1046 = vpop.f32.mrb[0].mxu0
        %v1047 = vadd.f32 0.0, %v1046
        %v1048 = vpop.f32.mrb[0].mxu0
        %v1049 = vpop.f32.mrb[0].mxu0
        %v1050 = vadd.f32 0.0, %v1049
        %v1051 = vpop.f32.mrb[0].mxu0
        %1052 = vmatprep.mubr.bf16.mxu0 0
        %1053 = vmatmul.mubr.bf16.gmra.mrb[0].mxu0 %v934
        %v1054 = vpop.f32.mrb[0].mxu0
        %v1055 = vadd.f32 0.0, %v1054
        %v1056 = vpop.f32.mrb[0].mxu0
        %v1057 = vpop.f32.mrb[0].mxu0
        %v1058 = vadd.f32 0.0, %v1057
        %v1059 = vpop.f32.mrb[0].mxu0
        %1060 = vmatprep.mubr.bf16.mxu0 0
        %1061 = vmatmul.mubr.bf16.gmra.mrb[0].mxu0 %v937
        %v1062 = vpop.f32.mrb[0].mxu0
        %v1063 = vadd.f32 0.0, %v1062
        %v1064 = vpop.f32.mrb[0].mxu0
        %v1065 = vpop.f32.mrb[0].mxu0
        %v1066 = vadd.f32 0.0, %v1065
        %v1067 = vpop.f32.mrb[0].mxu0
        %1068 = vmatprep.mubr.bf16.mxu0 0
        %1069 = vmatmul.mubr.bf16.gmra.mrb[0].mxu0 %v940
        %v1070 = vpop.f32.mrb[0].mxu0
        %v1071 = vadd.f32 0.0, %v1070
        %v1072 = vpop.f32.mrb[0].mxu0
        %v1073 = vpop.f32.mrb[0].mxu0
        %v1074 = vadd.f32 0.0, %v1073
        %v1075 = vpop.f32.mrb[0].mxu0
        %1076 = vmatprep.mubr.bf16.mxu0 0
        %1077 = vmatmul.mubr.bf16.gmra.mrb[0].mxu0 %v943
        %v1078 = vpop.f32.mrb[0].mxu0
        %v1079 = vadd.f32 0.0, %v1078
        %v1080 = vpop.f32.mrb[0].mxu0
        %v1081 = vpop.f32.mrb[0].mxu0
        %v1082 = vadd.f32 0.0, %v1081
        %v1083 = vpop.f32.mrb[0].mxu0
        %1084 = vmatprep.mubr.bf16.mxu0 0
        %1085 = vmatmul.mubr.bf16.gmra.mrb[0].mxu0 %v946
        %v1086 = vpop.f32.mrb[0].mxu0
        %v1087 = vadd.f32 0.0, %v1086
        %v1088 = vpop.f32.mrb[0].mxu0
        %v1089 = vpop.f32.mrb[0].mxu0
        %v1090 = vadd.f32 0.0, %v1089
        %v1091 = vpop.f32.mrb[0].mxu0
        %1092 = vmatprep.mubr.bf16.mxu0 0
        %1093 = vmatmul.mubr.bf16.gmra.mrb[0].mxu0 %v949
        %v1094 = vpop.f32.mrb[0].mxu0
        %v1095 = vadd.f32 0.0, %v1094
        %v1096 = vpop.f32.mrb[0].mxu0
        %v1097 = vpop.f32.mrb[0].mxu0
        %v1098 = vadd.f32 0.0, %v1097
        %v1099 = vpop.f32.mrb[0].mxu0
        %1100 = vmatprep.mubr.bf16.mxu0 0
        %1101 = vmatmul.mubr.bf16.gmra.mrb[0].mxu0 %v952
        %v1102 = vpop.f32.mrb[0].mxu0
        %v1103 = vadd.f32 0.0, %v1102
        %v1104 = vpop.f32.mrb[0].mxu0
        %v1105 = vpop.f32.mrb[0].mxu0
        %v1106 = vadd.f32 0.0, %v1105
        %v1107 = vpop.f32.mrb[0].mxu0
        %1108 = vmatprep.mubr.bf16.mxu0 0
        %1109 = vmatmul.mubr.bf16.gmra.mrb[0].mxu0 %v955
        %v1110 = vpop.f32.mrb[0].mxu0
        %v1111 = vadd.f32 0.0, %v1110
        %v1112 = vpop.f32.mrb[0].mxu0
        %v1113 = vpop.f32.mrb[0].mxu0
        %v1114 = vadd.f32 0.0, %v1113
        %v1115 = vpop.f32.mrb[0].mxu0
        %1116 = vmatprep.mubr.bf16.mxu0 0
        %1117 = vmatmul.mubr.bf16.gmra.mrb[0].mxu0 %v958
        %v1118 = vpop.f32.mrb[0].mxu0
        %v1119 = vadd.f32 0.0, %v1118
        %v1120 = vpop.f32.mrb[0].mxu0
        %v1121 = vpop.f32.mrb[0].mxu0
        %v1122 = vadd.f32 0.0, %v1121
        %v1123 = vpop.f32.mrb[0].mxu0
        %1124 = vdwg.mxu0
        %v1125 = vpack.c.bf16 %v1002, %v999
        %v1126 = vpack.c.bf16 %v1010, %v1007
        %v1127 = vpack.c.bf16 %v1018, %v1015
        %v1128 = vpack.c.bf16 %v1026, %v1023
        %v1129 = vpack.c.bf16 %v1034, %v1031
        %v1130 = vpack.c.bf16 %v1042, %v1039
        %v1131 = vpack.c.bf16 %v1050, %v1047
        %v1132 = vpack.c.bf16 %v1058, %v1055
        %v1133 = vpack.c.bf16 %v1066, %v1063
        %v1134 = vpack.c.bf16 %v1074, %v1071
        %v1135 = vpack.c.bf16 %v1082, %v1079
        %v1136 = vpack.c.bf16 %v1090, %v1087
        %v1137 = vpack.c.bf16 %v1098, %v1095
        %v1138 = vpack.c.bf16 %v1106, %v1103
        %v1139 = vpack.c.bf16 %v1114, %v1111
        %v1140 = vpack.c.bf16 %v1122, %v1119
        %v1157 = vunpack.c.l.b16 %v1125
        %v1158 = vunpack.c.h.b16 %v1125
        %v1159 = vunpack.c.l.b16 %v1126
        %v1160 = vunpack.c.h.b16 %v1126
        %v1161 = vunpack.c.l.b16 %v1127
        %v1162 = vunpack.c.h.b16 %v1127
        %v1163 = vunpack.c.l.b16 %v1128
        %v1164 = vunpack.c.h.b16 %v1128
        %v1165 = vunpack.c.l.b16 %v1129
        %v1166 = vunpack.c.h.b16 %v1129
        %v1167 = vunpack.c.l.b16 %v1130
        %v1168 = vunpack.c.h.b16 %v1130
        %v1169 = vunpack.c.l.b16 %v1131
        %v1170 = vunpack.c.h.b16 %v1131
        %v1171 = vunpack.c.l.b16 %v1132
        %v1172 = vunpack.c.h.b16 %v1132
        %v1173 = vunpack.c.l.b16 %v1133
        %v1174 = vunpack.c.h.b16 %v1133
        %v1175 = vunpack.c.l.b16 %v1134
        %v1176 = vunpack.c.h.b16 %v1134
        %v1177 = vunpack.c.l.b16 %v1135
        %v1178 = vunpack.c.h.b16 %v1135
        %v1179 = vunpack.c.l.b16 %v1136
        %v1180 = vunpack.c.h.b16 %v1136
        %v1181 = vunpack.c.l.b16 %v1137
        %v1182 = vunpack.c.h.b16 %v1137
        %v1183 = vunpack.c.l.b16 %v1138
        %v1184 = vunpack.c.h.b16 %v1138
        %v1185 = vunpack.c.l.b16 %v1139
        %v1186 = vunpack.c.h.b16 %v1139
        %v1187 = vunpack.c.l.b16 %v1140
        %v1188 = vunpack.c.h.b16 %v1140
        %v1189 = vpack.c.b16 %v1157, %v1157
        %v1190 = vpack.c.b16 %v1158, %v1158
        %v1191 = vpack.c.b16 %v1159, %v1159
        %v1192 = vpack.c.b16 %v1160, %v1160
        %v1193 = vpack.c.b16 %v1161, %v1161
        %v1194 = vpack.c.b16 %v1162, %v1162
        %v1195 = vpack.c.b16 %v1163, %v1163
        %v1196 = vpack.c.b16 %v1164, %v1164
        %v1197 = vpack.c.b16 %v1165, %v1165
        %v1198 = vpack.c.b16 %v1166, %v1166
        %v1199 = vpack.c.b16 %v1167, %v1167
        %v1200 = vpack.c.b16 %v1168, %v1168
        %v1201 = vpack.c.b16 %v1169, %v1169
        %v1202 = vpack.c.b16 %v1170, %v1170
        %v1203 = vpack.c.b16 %v1171, %v1171
        %v1204 = vpack.c.b16 %v1172, %v1172
        %v1205 = vpack.c.b16 %v1173, %v1173
        %v1206 = vpack.c.b16 %v1174, %v1174
        %v1207 = vpack.c.b16 %v1175, %v1175
        %v1208 = vpack.c.b16 %v1176, %v1176
        %v1209 = vpack.c.b16 %v1177, %v1177
        %v1210 = vpack.c.b16 %v1178, %v1178
        %v1211 = vpack.c.b16 %v1179, %v1179
        %v1212 = vpack.c.b16 %v1180, %v1180
        %v1213 = vpack.c.b16 %v1181, %v1181
        %v1214 = vpack.c.b16 %v1182, %v1182
        %v1215 = vpack.c.b16 %v1183, %v1183
        %v1216 = vpack.c.b16 %v1184, %v1184
        %v1217 = vpack.c.b16 %v1185, %v1185
        %v1218 = vpack.c.b16 %v1186, %v1186
        %v1219 = vpack.c.b16 %v1187, %v1187
        %v1220 = vpack.c.b16 %v1188, %v1188
        %s1253 = scalar_lea.vmem [#allocation2], 20
        %1254 = vst [vmem:[%s1253 + $0x8] sm:$0xf] %v1189
        %1255 = vst [vmem:[%s1253 + $0xc] sm:$0xf] %v1190
        %1256 = vst [vmem:[%s1253 + $0x1c] sm:$0xf] %v1191
        %1257 = vst [vmem:[%s1253 + $0x20] sm:$0xf] %v1192
        %1258 = vst [vmem:[%s1253 + $0x30] sm:$0xf] %v1193
        %1259 = vst [vmem:[%s1253 + $0x34] sm:$0xf] %v1194
        %1260 = vst [vmem:[%s1253 + $0x44] sm:$0xf] %v1195
        %1261 = vst [vmem:[%s1253 + $0x48] sm:$0xf] %v1196
        %1262 = vst [vmem:[%s1253 + $0x58] sm:$0xf] %v1197
        %1263 = vst [vmem:[%s1253 + $0x5c] sm:$0xf] %v1198
        %1264 = vst [vmem:[%s1253 + $0x6c] sm:$0xf] %v1199
        %1265 = vst [vmem:[%s1253 + $0x70] sm:$0xf] %v1200
        %1266 = vst [vmem:[%s1253 + $0x80] sm:$0xf] %v1201
        %1267 = vst [vmem:[%s1253 + $0x84] sm:$0xf] %v1202
        %1268 = vst [vmem:[%s1253 + $0x94] sm:$0xf] %v1203
        %1269 = vst [vmem:[%s1253 + $0x98] sm:$0xf] %v1204
        %1270 = vst [vmem:[%s1253 + $0xa8] sm:$0xf] %v1205
        %1271 = vst [vmem:[%s1253 + $0xac] sm:$0xf] %v1206
        %1272 = vst [vmem:[%s1253 + $0xbc] sm:$0xf] %v1207
        %1273 = vst [vmem:[%s1253 + $0xc0] sm:$0xf] %v1208
        %1274 = vst [vmem:[%s1253 + $0xd0] sm:$0xf] %v1209
        %1275 = vst [vmem:[%s1253 + $0xd4] sm:$0xf] %v1210
        %1276 = vst [vmem:[%s1253 + $0xe4] sm:$0xf] %v1211
        %1277 = vst [vmem:[%s1253 + $0xe8] sm:$0xf] %v1212
        %1278 = vst [vmem:[%s1253 + $0xf8] sm:$0xf] %v1213
        %1279 = vst [vmem:[%s1253 + $0xfc] sm:$0xf] %v1214
        %1280 = vst [vmem:[%s1253 + $0x10c] sm:$0xf] %v1215
        %1281 = vst [vmem:[%s1253 + $0x110] sm:$0xf] %v1216
        %1282 = vst [vmem:[%s1253 + $0x120] sm:$0xf] %v1217
        %1283 = vst [vmem:[%s1253 + $0x124] sm:$0xf] %v1218
        %1284 = vst [vmem:[%s1253 + $0x134] sm:$0xf] %v1219
        %1285 = vst [vmem:[%s1253 + $0x138] sm:$0xf] %v1220
        %s1286 = scalar_lea.vmem [#allocation3], 20
        %vm1287 = vcmask 27648
        %1288 = vst.msk [vmem:[%s1286 + $0x8] sm:$0xf] %vm1287, %v517
        %1289 = vst.msk [vmem:[%s1286 + $0xc] sm:$0xf] %vm1287, %v518
        %1290 = vst.msk [vmem:[%s1286 + $0x1c] sm:$0xf] %vm1287, %v519
        %1291 = vst.msk [vmem:[%s1286 + $0x20] sm:$0xf] %vm1287, %v520
        %1292 = vst.msk [vmem:[%s1286 + $0x30] sm:$0xf] %vm1287, %v521
        %1293 = vst.msk [vmem:[%s1286 + $0x34] sm:$0xf] %vm1287, %v522
        %1294 = vst.msk [vmem:[%s1286 + $0x44] sm:$0xf] %vm1287, %v523
        %1295 = vst.msk [vmem:[%s1286 + $0x48] sm:$0xf] %vm1287, %v524
        %1296 = vst.msk [vmem:[%s1286 + $0x58] sm:$0xf] %vm1287, %v525
        %1297 = vst.msk [vmem:[%s1286 + $0x5c] sm:$0xf] %vm1287, %v526
        %1298 = vst.msk [vmem:[%s1286 + $0x6c] sm:$0xf] %vm1287, %v527
        %1299 = vst.msk [vmem:[%s1286 + $0x70] sm:$0xf] %vm1287, %v528
        %1300 = vst.msk [vmem:[%s1286 + $0x80] sm:$0xf] %vm1287, %v529
        %1301 = vst.msk [vmem:[%s1286 + $0x84] sm:$0xf] %vm1287, %v530
        %1302 = vst.msk [vmem:[%s1286 + $0x94] sm:$0xf] %vm1287, %v531
        %1303 = vst.msk [vmem:[%s1286 + $0x98] sm:$0xf] %vm1287, %v532
        %1304 = vst.msk [vmem:[%s1286 + $0xa8] sm:$0xf] %vm1287, %v533
        %1305 = vst.msk [vmem:[%s1286 + $0xac] sm:$0xf] %vm1287, %v534
        %1306 = vst.msk [vmem:[%s1286 + $0xbc] sm:$0xf] %vm1287, %v535
        %1307 = vst.msk [vmem:[%s1286 + $0xc0] sm:$0xf] %vm1287, %v536
        %1308 = vst.msk [vmem:[%s1286 + $0xd0] sm:$0xf] %vm1287, %v537
        %1309 = vst.msk [vmem:[%s1286 + $0xd4] sm:$0xf] %vm1287, %v538
        %1310 = vst.msk [vmem:[%s1286 + $0xe4] sm:$0xf] %vm1287, %v539
        %1311 = vst.msk [vmem:[%s1286 + $0xe8] sm:$0xf] %vm1287, %v540
        %1312 = vst.msk [vmem:[%s1286 + $0xf8] sm:$0xf] %vm1287, %v541
        %1313 = vst.msk [vmem:[%s1286 + $0xfc] sm:$0xf] %vm1287, %v542
        %1314 = vst.msk [vmem:[%s1286 + $0x10c] sm:$0xf] %vm1287, %v543
        %1315 = vst.msk [vmem:[%s1286 + $0x110] sm:$0xf] %vm1287, %v544
        %1316 = vst.msk [vmem:[%s1286 + $0x120] sm:$0xf] %vm1287, %v545
        %1317 = vst.msk [vmem:[%s1286 + $0x124] sm:$0xf] %vm1287, %v546
        %1318 = vst.msk [vmem:[%s1286 + $0x134] sm:$0xf] %vm1287, %v547
        %1319 = vst.msk [vmem:[%s1286 + $0x138] sm:$0xf] %vm1287, %v548
        %v1320 = vld [vmem:[#allocation2 + $0x4] sm:$0xf]
        %v1321 = vld [vmem:[#allocation2 + $0x8] sm:$0xf]
        %v1322 = vld [vmem:[#allocation2 + $0xc] sm:$0xf]
        %v1323 = vld [vmem:[#allocation2 + $0x10] sm:$0xf]
        %v1324 = vld [vmem:[#allocation2 + $0x18] sm:$0xf]
        %v1325 = vld [vmem:[#allocation2 + $0x1c] sm:$0xf]
        %v1326 = vld [vmem:[#allocation2 + $0x20] sm:$0xf]
        %v1327 = vld [vmem:[#allocation2 + $0x24] sm:$0xf]
        %v1328 = vld [vmem:[#allocation2 + $0x2c] sm:$0xf]
        %v1329 = vld [vmem:[#allocation2 + $0x30] sm:$0xf]
        %v1330 = vld [vmem:[#allocation2 + $0x34] sm:$0xf]
        %v1331 = vld [vmem:[#allocation2 + $0x38] sm:$0xf]
        %v1332 = vld [vmem:[#allocation2 + $0x40] sm:$0xf]
        %v1333 = vld [vmem:[#allocation2 + $0x44] sm:$0xf]
        %v1334 = vld [vmem:[#allocation2 + $0x48] sm:$0xf]
        %v1335 = vld [vmem:[#allocation2 + $0x4c] sm:$0xf]
        %v1336 = vld [vmem:[#allocation2 + $0x54] sm:$0xf]
        %v1337 = vld [vmem:[#allocation2 + $0x58] sm:$0xf]
        %v1338 = vld [vmem:[#allocation2 + $0x5c] sm:$0xf]
        %v1339 = vld [vmem:[#allocation2 + $0x60] sm:$0xf]
        %v1340 = vld [vmem:[#allocation2 + $0x68] sm:$0xf]
        %v1341 = vld [vmem:[#allocation2 + $0x6c] sm:$0xf]
        %v1342 = vld [vmem:[#allocation2 + $0x70] sm:$0xf]
        %v1343 = vld [vmem:[#allocation2 + $0x74] sm:$0xf]
        %v1344 = vld [vmem:[#allocation2 + $0x7c] sm:$0xf]
        %v1345 = vld [vmem:[#allocation2 + $0x80] sm:$0xf]
        %v1346 = vld [vmem:[#allocation2 + $0x84] sm:$0xf]
        %v1347 = vld [vmem:[#allocation2 + $0x88] sm:$0xf]
        %v1348 = vld [vmem:[#allocation2 + $0x90] sm:$0xf]
        %v1349 = vld [vmem:[#allocation2 + $0x94] sm:$0xf]
        %v1350 = vld [vmem:[#allocation2 + $0x98] sm:$0xf]
        %v1351 = vld [vmem:[#allocation2 + $0x9c] sm:$0xf]
        %v1352 = vld [vmem:[#allocation2 + $0xa4] sm:$0xf]
        %v1353 = vld [vmem:[#allocation2 + $0xa8] sm:$0xf]
        %v1354 = vld [vmem:[#allocation2 + $0xac] sm:$0xf]
        %v1355 = vld [vmem:[#allocation2 + $0xb0] sm:$0xf]
        %v1356 = vld [vmem:[#allocation2 + $0xb8] sm:$0xf]
        %v1357 = vld [vmem:[#allocation2 + $0xbc] sm:$0xf]
        %v1358 = vld [vmem:[#allocation2 + $0xc0] sm:$0xf]
        %v1359 = vld [vmem:[#allocation2 + $0xc4] sm:$0xf]
        %v1360 = vld [vmem:[#allocation2 + $0xcc] sm:$0xf]
        %v1361 = vld [vmem:[#allocation2 + $0xd0] sm:$0xf]
        %v1362 = vld [vmem:[#allocation2 + $0xd4] sm:$0xf]
        %v1363 = vld [vmem:[#allocation2 + $0xd8] sm:$0xf]
        %v1364 = vld [vmem:[#allocation2 + $0xe0] sm:$0xf]
        %v1365 = vld [vmem:[#allocation2 + $0xe4] sm:$0xf]
        %v1366 = vld [vmem:[#allocation2 + $0xe8] sm:$0xf]
        %v1367 = vld [vmem:[#allocation2 + $0xec] sm:$0xf]
        %v1368 = vld [vmem:[#allocation2 + $0xf4] sm:$0xf]
        %v1369 = vld [vmem:[#allocation2 + $0xf8] sm:$0xf]
        %v1370 = vld [vmem:[#allocation2 + $0xfc] sm:$0xf]
        %v1371 = vld [vmem:[#allocation2 + $0x100] sm:$0xf]
        %v1372 = vld [vmem:[#allocation2 + $0x108] sm:$0xf]
        %v1373 = vld [vmem:[#allocation2 + $0x10c] sm:$0xf]
        %v1374 = vld [vmem:[#allocation2 + $0x110] sm:$0xf]
        %v1375 = vld [vmem:[#allocation2 + $0x114] sm:$0xf]
        %v1376 = vld [vmem:[#allocation2 + $0x11c] sm:$0xf]
        %v1377 = vld [vmem:[#allocation2 + $0x120] sm:$0xf]
        %v1378 = vld [vmem:[#allocation2 + $0x124] sm:$0xf]
        %v1379 = vld [vmem:[#allocation2 + $0x128] sm:$0xf]
        %v1380 = vld [vmem:[#allocation2 + $0x130] sm:$0xf]
        %v1381 = vld [vmem:[#allocation2 + $0x134] sm:$0xf]
        %v1382 = vld [vmem:[#allocation2 + $0x138] sm:$0xf]
        %v1383 = vld [vmem:[#allocation2 + $0x13c] sm:$0xf]
        %v1432 = vunpack.c.l.b16 %v1320
        %v1433 = vunpack.c.l.b16 %v1321
        %v1434 = vunpack.c.l.b16 %v1322
        %v1435 = vunpack.c.l.b16 %v1324
        %v1436 = vunpack.c.l.b16 %v1325
        %v1437 = vunpack.c.l.b16 %v1326
        %v1438 = vunpack.c.l.b16 %v1328
        %v1439 = vunpack.c.l.b16 %v1329
        %v1440 = vunpack.c.l.b16 %v1330
        %v1441 = vunpack.c.l.b16 %v1332
        %v1442 = vunpack.c.l.b16 %v1333
        %v1443 = vunpack.c.l.b16 %v1334
        %v1444 = vunpack.c.l.b16 %v1336
        %v1445 = vunpack.c.l.b16 %v1337
        %v1446 = vunpack.c.l.b16 %v1338
        %v1447 = vunpack.c.l.b16 %v1340
        %v1448 = vunpack.c.l.b16 %v1341
        %v1449 = vunpack.c.l.b16 %v1342
        %v1450 = vunpack.c.l.b16 %v1344
        %v1451 = vunpack.c.l.b16 %v1345
        %v1452 = vunpack.c.l.b16 %v1346
        %v1453 = vunpack.c.l.b16 %v1348
        %v1454 = vunpack.c.l.b16 %v1349
        %v1455 = vunpack.c.l.b16 %v1350
        %v1456 = vunpack.c.l.b16 %v1352
        %v1457 = vunpack.c.l.b16 %v1353
        %v1458 = vunpack.c.l.b16 %v1354
        %v1459 = vunpack.c.l.b16 %v1356
        %v1460 = vunpack.c.l.b16 %v1357
        %v1461 = vunpack.c.l.b16 %v1358
        %v1462 = vunpack.c.l.b16 %v1360
        %v1463 = vunpack.c.l.b16 %v1361
        %v1464 = vunpack.c.l.b16 %v1362
        %v1465 = vunpack.c.l.b16 %v1364
        %v1466 = vunpack.c.l.b16 %v1365
        %v1467 = vunpack.c.l.b16 %v1366
        %v1468 = vunpack.c.l.b16 %v1368
        %v1469 = vunpack.c.l.b16 %v1369
        %v1470 = vunpack.c.l.b16 %v1370
        %v1471 = vunpack.c.l.b16 %v1372
        %v1472 = vunpack.c.l.b16 %v1373
        %v1473 = vunpack.c.l.b16 %v1374
        %v1474 = vunpack.c.l.b16 %v1376
        %v1475 = vunpack.c.l.b16 %v1377
        %v1476 = vunpack.c.l.b16 %v1378
        %v1477 = vunpack.c.l.b16 %v1380
        %v1478 = vunpack.c.l.b16 %v1381
        %v1479 = vunpack.c.l.b16 %v1382
        %v1480 = vpack.c.b16 %v1433, %v1432
        %v1481 = vpack.c.b16 %v1434, %v1434
        %v1482 = vpack.c.b16 %v1436, %v1435
        %v1483 = vpack.c.b16 %v1437, %v1437
        %v1484 = vpack.c.b16 %v1439, %v1438
        %v1485 = vpack.c.b16 %v1440, %v1440
        %v1486 = vpack.c.b16 %v1442, %v1441
        %v1487 = vpack.c.b16 %v1443, %v1443
        %v1488 = vpack.c.b16 %v1445, %v1444
        %v1489 = vpack.c.b16 %v1446, %v1446
        %v1490 = vpack.c.b16 %v1448, %v1447
        %v1491 = vpack.c.b16 %v1449, %v1449
        %v1492 = vpack.c.b16 %v1451, %v1450
        %v1493 = vpack.c.b16 %v1452, %v1452
        %v1494 = vpack.c.b16 %v1454, %v1453
        %v1495 = vpack.c.b16 %v1455, %v1455
        %v1496 = vpack.c.b16 %v1457, %v1456
        %v1497 = vpack.c.b16 %v1458, %v1458
        %v1498 = vpack.c.b16 %v1460, %v1459
        %v1499 = vpack.c.b16 %v1461, %v1461
        %v1500 = vpack.c.b16 %v1463, %v1462
        %v1501 = vpack.c.b16 %v1464, %v1464
        %v1502 = vpack.c.b16 %v1466, %v1465
        %v1503 = vpack.c.b16 %v1467, %v1467
        %v1504 = vpack.c.b16 %v1469, %v1468
        %v1505 = vpack.c.b16 %v1470, %v1470
        %v1506 = vpack.c.b16 %v1472, %v1471
        %v1507 = vpack.c.b16 %v1473, %v1473
        %v1508 = vpack.c.b16 %v1475, %v1474
        %v1509 = vpack.c.b16 %v1476, %v1476
        %v1510 = vpack.c.b16 %v1478, %v1477
        %v1511 = vpack.c.b16 %v1479, %v1479
        %v1512 = vpack.c.b16 %v1434, %v1433
        %v1513 = vpack.c.b16 %v1437, %v1436
        %v1514 = vpack.c.b16 %v1440, %v1439
        %v1515 = vpack.c.b16 %v1443, %v1442
        %v1516 = vpack.c.b16 %v1446, %v1445
        %v1517 = vpack.c.b16 %v1449, %v1448
        %v1518 = vpack.c.b16 %v1452, %v1451
        %v1519 = vpack.c.b16 %v1455, %v1454
        %v1520 = vpack.c.b16 %v1458, %v1457
        %v1521 = vpack.c.b16 %v1461, %v1460
        %v1522 = vpack.c.b16 %v1464, %v1463
        %v1523 = vpack.c.b16 %v1467, %v1466
        %v1524 = vpack.c.b16 %v1470, %v1469
        %v1525 = vpack.c.b16 %v1473, %v1472
        %v1526 = vpack.c.b16 %v1476, %v1475
        %v1527 = vpack.c.b16 %v1479, %v1478
        %v1529 = vshrl.u32 %v1512, 16
        %v1531 = vrot.slane %v1529, 4
        %v1532 = vshll.u32 %v1512, 16
        %v1534 = vrot.slane %v1532, 5
        %v1535 = vor.u32 %v1531, %v1534
        %v1537 = vshrl.u32 %v1513, 16
        %v1539 = vrot.slane %v1537, 4
        %v1540 = vshll.u32 %v1513, 16
        %v1542 = vrot.slane %v1540, 5
        %v1543 = vor.u32 %v1539, %v1542
        %v1545 = vshrl.u32 %v1514, 16
        %v1547 = vrot.slane %v1545, 4
        %v1548 = vshll.u32 %v1514, 16
        %v1550 = vrot.slane %v1548, 5
        %v1551 = vor.u32 %v1547, %v1550
        %v1553 = vshrl.u32 %v1515, 16
        %v1555 = vrot.slane %v1553, 4
        %v1556 = vshll.u32 %v1515, 16
        %v1558 = vrot.slane %v1556, 5
        %v1559 = vor.u32 %v1555, %v1558
        %v1561 = vshrl.u32 %v1516, 16
        %v1563 = vrot.slane %v1561, 4
        %v1564 = vshll.u32 %v1516, 16
        %v1566 = vrot.slane %v1564, 5
        %v1567 = vor.u32 %v1563, %v1566
        %v1569 = vshrl.u32 %v1517, 16
        %v1571 = vrot.slane %v1569, 4
        %v1572 = vshll.u32 %v1517, 16
        %v1574 = vrot.slane %v1572, 5
        %v1575 = vor.u32 %v1571, %v1574
        %v1577 = vshrl.u32 %v1518, 16
        %v1579 = vrot.slane %v1577, 4
        %v1580 = vshll.u32 %v1518, 16
        %v1582 = vrot.slane %v1580, 5
        %v1583 = vor.u32 %v1579, %v1582
        %v1585 = vshrl.u32 %v1519, 16
        %v1587 = vrot.slane %v1585, 4
        %v1588 = vshll.u32 %v1519, 16
        %v1590 = vrot.slane %v1588, 5
        %v1591 = vor.u32 %v1587, %v1590
        %v1593 = vshrl.u32 %v1520, 16
        %v1595 = vrot.slane %v1593, 4
        %v1596 = vshll.u32 %v1520, 16
        %v1598 = vrot.slane %v1596, 5
        %v1599 = vor.u32 %v1595, %v1598
        %v1601 = vshrl.u32 %v1521, 16
        %v1603 = vrot.slane %v1601, 4
        %v1604 = vshll.u32 %v1521, 16
        %v1606 = vrot.slane %v1604, 5
        %v1607 = vor.u32 %v1603, %v1606
        %v1609 = vshrl.u32 %v1522, 16
        %v1611 = vrot.slane %v1609, 4
        %v1612 = vshll.u32 %v1522, 16
        %v1614 = vrot.slane %v1612, 5
        %v1615 = vor.u32 %v1611, %v1614
        %v1617 = vshrl.u32 %v1523, 16
        %v1619 = vrot.slane %v1617, 4
        %v1620 = vshll.u32 %v1523, 16
        %v1622 = vrot.slane %v1620, 5
        %v1623 = vor.u32 %v1619, %v1622
        %v1625 = vshrl.u32 %v1524, 16
        %v1627 = vrot.slane %v1625, 4
        %v1628 = vshll.u32 %v1524, 16
        %v1630 = vrot.slane %v1628, 5
        %v1631 = vor.u32 %v1627, %v1630
        %v1633 = vshrl.u32 %v1525, 16
        %v1635 = vrot.slane %v1633, 4
        %v1636 = vshll.u32 %v1525, 16
        %v1638 = vrot.slane %v1636, 5
        %v1639 = vor.u32 %v1635, %v1638
        %v1641 = vshrl.u32 %v1526, 16
        %v1643 = vrot.slane %v1641, 4
        %v1644 = vshll.u32 %v1526, 16
        %v1646 = vrot.slane %v1644, 5
        %v1647 = vor.u32 %v1643, %v1646
        %v1649 = vshrl.u32 %v1527, 16
        %v1651 = vrot.slane %v1649, 4
        %v1652 = vshll.u32 %v1527, 16
        %v1654 = vrot.slane %v1652, 5
        %v1655 = vor.u32 %v1651, %v1654
        %v1672 = vunpack.c.l.b16 %v1323
        %v1673 = vunpack.c.l.b16 %v1327
        %v1674 = vunpack.c.l.b16 %v1331
        %v1675 = vunpack.c.l.b16 %v1335
        %v1676 = vunpack.c.l.b16 %v1339
        %v1677 = vunpack.c.l.b16 %v1343
        %v1678 = vunpack.c.l.b16 %v1347
        %v1679 = vunpack.c.l.b16 %v1351
        %v1680 = vunpack.c.l.b16 %v1355
        %v1681 = vunpack.c.l.b16 %v1359
        %v1682 = vunpack.c.l.b16 %v1363
        %v1683 = vunpack.c.l.b16 %v1367
        %v1684 = vunpack.c.l.b16 %v1371
        %v1685 = vunpack.c.l.b16 %v1375
        %v1686 = vunpack.c.l.b16 %v1379
        %v1687 = vunpack.c.l.b16 %v1383
        %v1688 = vpack.c.b16 %v1672, %v1672
        %v1689 = vpack.c.b16 %v1673, %v1673
        %v1690 = vpack.c.b16 %v1674, %v1674
        %v1691 = vpack.c.b16 %v1675, %v1675
        %v1692 = vpack.c.b16 %v1676, %v1676
        %v1693 = vpack.c.b16 %v1677, %v1677
        %v1694 = vpack.c.b16 %v1678, %v1678
        %v1695 = vpack.c.b16 %v1679, %v1679
        %v1696 = vpack.c.b16 %v1680, %v1680
        %v1697 = vpack.c.b16 %v1681, %v1681
        %v1698 = vpack.c.b16 %v1682, %v1682
        %v1699 = vpack.c.b16 %v1683, %v1683
        %v1700 = vpack.c.b16 %v1684, %v1684
        %v1701 = vpack.c.b16 %v1685, %v1685
        %v1702 = vpack.c.b16 %v1686, %v1686
        %v1703 = vpack.c.b16 %v1687, %v1687
        %vm1704 = vcmask 1042432
        %v1705 = vrot.slane %v1512, 5
        %v1706 = vrot.slane %v1688, 5
        %v1707 = vsel %vm1704, %v1705, %v1706
        %v1708 = vrot.slane %v1513, 5
        %v1709 = vrot.slane %v1689, 5
        %v1710 = vsel %vm1704, %v1708, %v1709
        %v1711 = vrot.slane %v1514, 5
        %v1712 = vrot.slane %v1690, 5
        %v1713 = vsel %vm1704, %v1711, %v1712
        %v1714 = vrot.slane %v1515, 5
        %v1715 = vrot.slane %v1691, 5
        %v1716 = vsel %vm1704, %v1714, %v1715
        %v1717 = vrot.slane %v1516, 5
        %v1718 = vrot.slane %v1692, 5
        %v1719 = vsel %vm1704, %v1717, %v1718
        %v1720 = vrot.slane %v1517, 5
        %v1721 = vrot.slane %v1693, 5
        %v1722 = vsel %vm1704, %v1720, %v1721
        %v1723 = vrot.slane %v1518, 5
        %v1724 = vrot.slane %v1694, 5
        %v1725 = vsel %vm1704, %v1723, %v1724
        %v1726 = vrot.slane %v1519, 5
        %v1727 = vrot.slane %v1695, 5
        %v1728 = vsel %vm1704, %v1726, %v1727
        %v1729 = vrot.slane %v1520, 5
        %v1730 = vrot.slane %v1696, 5
        %v1731 = vsel %vm1704, %v1729, %v1730
        %v1732 = vrot.slane %v1521, 5
        %v1733 = vrot.slane %v1697, 5
        %v1734 = vsel %vm1704, %v1732, %v1733
        %v1735 = vrot.slane %v1522, 5
        %v1736 = vrot.slane %v1698, 5
        %v1737 = vsel %vm1704, %v1735, %v1736
        %v1738 = vrot.slane %v1523, 5
        %v1739 = vrot.slane %v1699, 5
        %v1740 = vsel %vm1704, %v1738, %v1739
        %v1741 = vrot.slane %v1524, 5
        %v1742 = vrot.slane %v1700, 5
        %v1743 = vsel %vm1704, %v1741, %v1742
        %v1744 = vrot.slane %v1525, 5
        %v1745 = vrot.slane %v1701, 5
        %v1746 = vsel %vm1704, %v1744, %v1745
        %v1747 = vrot.slane %v1526, 5
        %v1748 = vrot.slane %v1702, 5
        %v1749 = vsel %vm1704, %v1747, %v1748
        %v1750 = vrot.slane %v1527, 5
        %v1751 = vrot.slane %v1703, 5
        %v1752 = vsel %vm1704, %v1750, %v1751
        %vm1753 = vsmask.f32 4352
        %v1755 = vshrl.u32 %v1480, 16
        %v1757 = vrot.slane %v1755, 3
        %v1758 = vshll.u32 %v1480, 16
        %v1760 = vrot.slane %v1758, 4
        %v1761 = vor.u32 %v1757, %v1760
        %v1763 = vshrl.u32 %v1481, 16
        %v1765 = vrot.slane %v1763, 3
        %v1766 = vshll.u32 %v1481, 16
        %v1768 = vrot.slane %v1766, 4
        %v1769 = vor.u32 %v1765, %v1768
        %v1770 = vsel %vm1753, %v1761, %v1769
        %v1772 = vshrl.u32 %v1535, 16
        %v1774 = vrot.slane %v1772, 3
        %v1775 = vshll.u32 %v1535, 16
        %v1777 = vrot.slane %v1775, 4
        %v1778 = vor.u32 %v1774, %v1777
        %v1779 = vsel %vm1753, %v1778, %v1778
        %v1781 = vshrl.u32 %v1705, 16
        %v1783 = vrot.slane %v1781, 3
        %v1784 = vshll.u32 %v1705, 16
        %v1786 = vrot.slane %v1784, 4
        %v1787 = vor.u32 %v1783, %v1786
        %v1789 = vshrl.u32 %v1707, 16
        %v1791 = vrot.slane %v1789, 3
        %v1792 = vshll.u32 %v1707, 16
        %v1794 = vrot.slane %v1792, 4
        %v1795 = vor.u32 %v1791, %v1794
        %v1796 = vsel %vm1753, %v1787, %v1795
        %v1798 = vshrl.u32 %v1482, 16
        %v1800 = vrot.slane %v1798, 3
        %v1801 = vshll.u32 %v1482, 16
        %v1803 = vrot.slane %v1801, 4
        %v1804 = vor.u32 %v1800, %v1803
        %v1806 = vshrl.u32 %v1483, 16
        %v1808 = vrot.slane %v1806, 3
        %v1809 = vshll.u32 %v1483, 16
        %v1811 = vrot.slane %v1809, 4
        %v1812 = vor.u32 %v1808, %v1811
        %v1813 = vsel %vm1753, %v1804, %v1812
        %v1815 = vshrl.u32 %v1543, 16
        %v1817 = vrot.slane %v1815, 3
        %v1818 = vshll.u32 %v1543, 16
        %v1820 = vrot.slane %v1818, 4
        %v1821 = vor.u32 %v1817, %v1820
        %v1822 = vsel %vm1753, %v1821, %v1821
        %v1824 = vshrl.u32 %v1708, 16
        %v1826 = vrot.slane %v1824, 3
        %v1827 = vshll.u32 %v1708, 16
        %v1829 = vrot.slane %v1827, 4
        %v1830 = vor.u32 %v1826, %v1829
        %v1832 = vshrl.u32 %v1710, 16
        %v1834 = vrot.slane %v1832, 3
        %v1835 = vshll.u32 %v1710, 16
        %v1837 = vrot.slane %v1835, 4
        %v1838 = vor.u32 %v1834, %v1837
        %v1839 = vsel %vm1753, %v1830, %v1838
        %v1841 = vshrl.u32 %v1484, 16
        %v1843 = vrot.slane %v1841, 3
        %v1844 = vshll.u32 %v1484, 16
        %v1846 = vrot.slane %v1844, 4
        %v1847 = vor.u32 %v1843, %v1846
        %v1849 = vshrl.u32 %v1485, 16
        %v1851 = vrot.slane %v1849, 3
        %v1852 = vshll.u32 %v1485, 16
        %v1854 = vrot.slane %v1852, 4
        %v1855 = vor.u32 %v1851, %v1854
        %v1856 = vsel %vm1753, %v1847, %v1855
        %v1858 = vshrl.u32 %v1551, 16
        %v1860 = vrot.slane %v1858, 3
        %v1861 = vshll.u32 %v1551, 16
        %v1863 = vrot.slane %v1861, 4
        %v1864 = vor.u32 %v1860, %v1863
        %v1865 = vsel %vm1753, %v1864, %v1864
        %v1867 = vshrl.u32 %v1711, 16
        %v1869 = vrot.slane %v1867, 3
        %v1870 = vshll.u32 %v1711, 16
        %v1872 = vrot.slane %v1870, 4
        %v1873 = vor.u32 %v1869, %v1872
        %v1875 = vshrl.u32 %v1713, 16
        %v1877 = vrot.slane %v1875, 3
        %v1878 = vshll.u32 %v1713, 16
        %v1880 = vrot.slane %v1878, 4
        %v1881 = vor.u32 %v1877, %v1880
        %v1882 = vsel %vm1753, %v1873, %v1881
        %v1884 = vshrl.u32 %v1486, 16
        %v1886 = vrot.slane %v1884, 3
        %v1887 = vshll.u32 %v1486, 16
        %v1889 = vrot.slane %v1887, 4
        %v1890 = vor.u32 %v1886, %v1889
        %v1892 = vshrl.u32 %v1487, 16
        %v1894 = vrot.slane %v1892, 3
        %v1895 = vshll.u32 %v1487, 16
        %v1897 = vrot.slane %v1895, 4
        %v1898 = vor.u32 %v1894, %v1897
        %v1899 = vsel %vm1753, %v1890, %v1898
        %v1901 = vshrl.u32 %v1559, 16
        %v1903 = vrot.slane %v1901, 3
        %v1904 = vshll.u32 %v1559, 16
        %v1906 = vrot.slane %v1904, 4
        %v1907 = vor.u32 %v1903, %v1906
        %v1908 = vsel %vm1753, %v1907, %v1907
        %v1910 = vshrl.u32 %v1714, 16
        %v1912 = vrot.slane %v1910, 3
        %v1913 = vshll.u32 %v1714, 16
        %v1915 = vrot.slane %v1913, 4
        %v1916 = vor.u32 %v1912, %v1915
        %v1918 = vshrl.u32 %v1716, 16
        %v1920 = vrot.slane %v1918, 3
        %v1921 = vshll.u32 %v1716, 16
        %v1923 = vrot.slane %v1921, 4
        %v1924 = vor.u32 %v1920, %v1923
        %v1925 = vsel %vm1753, %v1916, %v1924
        %v1927 = vshrl.u32 %v1488, 16
        %v1929 = vrot.slane %v1927, 3
        %v1930 = vshll.u32 %v1488, 16
        %v1932 = vrot.slane %v1930, 4
        %v1933 = vor.u32 %v1929, %v1932
        %v1935 = vshrl.u32 %v1489, 16
        %v1937 = vrot.slane %v1935, 3
        %v1938 = vshll.u32 %v1489, 16
        %v1940 = vrot.slane %v1938, 4
        %v1941 = vor.u32 %v1937, %v1940
        %v1942 = vsel %vm1753, %v1933, %v1941
        %v1944 = vshrl.u32 %v1567, 16
        %v1946 = vrot.slane %v1944, 3
        %v1947 = vshll.u32 %v1567, 16
        %v1949 = vrot.slane %v1947, 4
        %v1950 = vor.u32 %v1946, %v1949
        %v1951 = vsel %vm1753, %v1950, %v1950
        %v1953 = vshrl.u32 %v1717, 16
        %v1955 = vrot.slane %v1953, 3
        %v1956 = vshll.u32 %v1717, 16
        %v1958 = vrot.slane %v1956, 4
        %v1959 = vor.u32 %v1955, %v1958
        %v1961 = vshrl.u32 %v1719, 16
        %v1963 = vrot.slane %v1961, 3
        %v1964 = vshll.u32 %v1719, 16
        %v1966 = vrot.slane %v1964, 4
        %v1967 = vor.u32 %v1963, %v1966
        %v1968 = vsel %vm1753, %v1959, %v1967
        %v1970 = vshrl.u32 %v1490, 16
        %v1972 = vrot.slane %v1970, 3
        %v1973 = vshll.u32 %v1490, 16
        %v1975 = vrot.slane %v1973, 4
        %v1976 = vor.u32 %v1972, %v1975
        %v1978 = vshrl.u32 %v1491, 16
        %v1980 = vrot.slane %v1978, 3
        %v1981 = vshll.u32 %v1491, 16
        %v1983 = vrot.slane %v1981, 4
        %v1984 = vor.u32 %v1980, %v1983
        %v1985 = vsel %vm1753, %v1976, %v1984
        %v1987 = vshrl.u32 %v1575, 16
        %v1989 = vrot.slane %v1987, 3
        %v1990 = vshll.u32 %v1575, 16
        %v1992 = vrot.slane %v1990, 4
        %v1993 = vor.u32 %v1989, %v1992
        %v1994 = vsel %vm1753, %v1993, %v1993
        %v1996 = vshrl.u32 %v1720, 16
        %v1998 = vrot.slane %v1996, 3
        %v1999 = vshll.u32 %v1720, 16
        %v2001 = vrot.slane %v1999, 4
        %v2002 = vor.u32 %v1998, %v2001
        %v2004 = vshrl.u32 %v1722, 16
        %v2006 = vrot.slane %v2004, 3
        %v2007 = vshll.u32 %v1722, 16
        %v2009 = vrot.slane %v2007, 4
        %v2010 = vor.u32 %v2006, %v2009
        %v2011 = vsel %vm1753, %v2002, %v2010
        %v2013 = vshrl.u32 %v1492, 16
        %v2015 = vrot.slane %v2013, 3
        %v2016 = vshll.u32 %v1492, 16
        %v2018 = vrot.slane %v2016, 4
        %v2019 = vor.u32 %v2015, %v2018
        %v2021 = vshrl.u32 %v1493, 16
        %v2023 = vrot.slane %v2021, 3
        %v2024 = vshll.u32 %v1493, 16
        %v2026 = vrot.slane %v2024, 4
        %v2027 = vor.u32 %v2023, %v2026
        %v2028 = vsel %vm1753, %v2019, %v2027
        %v2030 = vshrl.u32 %v1583, 16
        %v2032 = vrot.slane %v2030, 3
        %v2033 = vshll.u32 %v1583, 16
        %v2035 = vrot.slane %v2033, 4
        %v2036 = vor.u32 %v2032, %v2035
        %v2037 = vsel %vm1753, %v2036, %v2036
        %v2039 = vshrl.u32 %v1723, 16
        %v2041 = vrot.slane %v2039, 3
        %v2042 = vshll.u32 %v1723, 16
        %v2044 = vrot.slane %v2042, 4
        %v2045 = vor.u32 %v2041, %v2044
        %v2047 = vshrl.u32 %v1725, 16
        %v2049 = vrot.slane %v2047, 3
        %v2050 = vshll.u32 %v1725, 16
        %v2052 = vrot.slane %v2050, 4
        %v2053 = vor.u32 %v2049, %v2052
        %v2054 = vsel %vm1753, %v2045, %v2053
        %v2056 = vshrl.u32 %v1494, 16
        %v2058 = vrot.slane %v2056, 3
        %v2059 = vshll.u32 %v1494, 16
        %v2061 = vrot.slane %v2059, 4
        %v2062 = vor.u32 %v2058, %v2061
        %v2064 = vshrl.u32 %v1495, 16
        %v2066 = vrot.slane %v2064, 3
        %v2067 = vshll.u32 %v1495, 16
        %v2069 = vrot.slane %v2067, 4
        %v2070 = vor.u32 %v2066, %v2069
        %v2071 = vsel %vm1753, %v2062, %v2070
        %v2073 = vshrl.u32 %v1591, 16
        %v2075 = vrot.slane %v2073, 3
        %v2076 = vshll.u32 %v1591, 16
        %v2078 = vrot.slane %v2076, 4
        %v2079 = vor.u32 %v2075, %v2078
        %v2080 = vsel %vm1753, %v2079, %v2079
        %v2082 = vshrl.u32 %v1726, 16
        %v2084 = vrot.slane %v2082, 3
        %v2085 = vshll.u32 %v1726, 16
        %v2087 = vrot.slane %v2085, 4
        %v2088 = vor.u32 %v2084, %v2087
        %v2090 = vshrl.u32 %v1728, 16
        %v2092 = vrot.slane %v2090, 3
        %v2093 = vshll.u32 %v1728, 16
        %v2095 = vrot.slane %v2093, 4
        %v2096 = vor.u32 %v2092, %v2095
        %v2097 = vsel %vm1753, %v2088, %v2096
        %v2099 = vshrl.u32 %v1496, 16
        %v2101 = vrot.slane %v2099, 3
        %v2102 = vshll.u32 %v1496, 16
        %v2104 = vrot.slane %v2102, 4
        %v2105 = vor.u32 %v2101, %v2104
        %v2107 = vshrl.u32 %v1497, 16
        %v2109 = vrot.slane %v2107, 3
        %v2110 = vshll.u32 %v1497, 16
        %v2112 = vrot.slane %v2110, 4
        %v2113 = vor.u32 %v2109, %v2112
        %v2114 = vsel %vm1753, %v2105, %v2113
        %v2116 = vshrl.u32 %v1599, 16
        %v2118 = vrot.slane %v2116, 3
        %v2119 = vshll.u32 %v1599, 16
        %v2121 = vrot.slane %v2119, 4
        %v2122 = vor.u32 %v2118, %v2121
        %v2123 = vsel %vm1753, %v2122, %v2122
        %v2125 = vshrl.u32 %v1729, 16
        %v2127 = vrot.slane %v2125, 3
        %v2128 = vshll.u32 %v1729, 16
        %v2130 = vrot.slane %v2128, 4
        %v2131 = vor.u32 %v2127, %v2130
        %v2133 = vshrl.u32 %v1731, 16
        %v2135 = vrot.slane %v2133, 3
        %v2136 = vshll.u32 %v1731, 16
        %v2138 = vrot.slane %v2136, 4
        %v2139 = vor.u32 %v2135, %v2138
        %v2140 = vsel %vm1753, %v2131, %v2139
        %v2142 = vshrl.u32 %v1498, 16
        %v2144 = vrot.slane %v2142, 3
        %v2145 = vshll.u32 %v1498, 16
        %v2147 = vrot.slane %v2145, 4
        %v2148 = vor.u32 %v2144, %v2147
        %v2150 = vshrl.u32 %v1499, 16
        %v2152 = vrot.slane %v2150, 3
        %v2153 = vshll.u32 %v1499, 16
        %v2155 = vrot.slane %v2153, 4
        %v2156 = vor.u32 %v2152, %v2155
        %v2157 = vsel %vm1753, %v2148, %v2156
        %v2159 = vshrl.u32 %v1607, 16
        %v2161 = vrot.slane %v2159, 3
        %v2162 = vshll.u32 %v1607, 16
        %v2164 = vrot.slane %v2162, 4
        %v2165 = vor.u32 %v2161, %v2164
        %v2166 = vsel %vm1753, %v2165, %v2165
        %v2168 = vshrl.u32 %v1732, 16
        %v2170 = vrot.slane %v2168, 3
        %v2171 = vshll.u32 %v1732, 16
        %v2173 = vrot.slane %v2171, 4
        %v2174 = vor.u32 %v2170, %v2173
        %v2176 = vshrl.u32 %v1734, 16
        %v2178 = vrot.slane %v2176, 3
        %v2179 = vshll.u32 %v1734, 16
        %v2181 = vrot.slane %v2179, 4
        %v2182 = vor.u32 %v2178, %v2181
        %v2183 = vsel %vm1753, %v2174, %v2182
        %v2185 = vshrl.u32 %v1500, 16
        %v2187 = vrot.slane %v2185, 3
        %v2188 = vshll.u32 %v1500, 16
        %v2190 = vrot.slane %v2188, 4
        %v2191 = vor.u32 %v2187, %v2190
        %v2193 = vshrl.u32 %v1501, 16
        %v2195 = vrot.slane %v2193, 3
        %v2196 = vshll.u32 %v1501, 16
        %v2198 = vrot.slane %v2196, 4
        %v2199 = vor.u32 %v2195, %v2198
        %v2200 = vsel %vm1753, %v2191, %v2199
        %v2202 = vshrl.u32 %v1615, 16
        %v2204 = vrot.slane %v2202, 3
        %v2205 = vshll.u32 %v1615, 16
        %v2207 = vrot.slane %v2205, 4
        %v2208 = vor.u32 %v2204, %v2207
        %v2209 = vsel %vm1753, %v2208, %v2208
        %v2211 = vshrl.u32 %v1735, 16
        %v2213 = vrot.slane %v2211, 3
        %v2214 = vshll.u32 %v1735, 16
        %v2216 = vrot.slane %v2214, 4
        %v2217 = vor.u32 %v2213, %v2216
        %v2219 = vshrl.u32 %v1737, 16
        %v2221 = vrot.slane %v2219, 3
        %v2222 = vshll.u32 %v1737, 16
        %v2224 = vrot.slane %v2222, 4
        %v2225 = vor.u32 %v2221, %v2224
        %v2226 = vsel %vm1753, %v2217, %v2225
        %v2228 = vshrl.u32 %v1502, 16
        %v2230 = vrot.slane %v2228, 3
        %v2231 = vshll.u32 %v1502, 16
        %v2233 = vrot.slane %v2231, 4
        %v2234 = vor.u32 %v2230, %v2233
        %v2236 = vshrl.u32 %v1503, 16
        %v2238 = vrot.slane %v2236, 3
        %v2239 = vshll.u32 %v1503, 16
        %v2241 = vrot.slane %v2239, 4
        %v2242 = vor.u32 %v2238, %v2241
        %v2243 = vsel %vm1753, %v2234, %v2242
        %v2245 = vshrl.u32 %v1623, 16
        %v2247 = vrot.slane %v2245, 3
        %v2248 = vshll.u32 %v1623, 16
        %v2250 = vrot.slane %v2248, 4
        %v2251 = vor.u32 %v2247, %v2250
        %v2252 = vsel %vm1753, %v2251, %v2251
        %v2254 = vshrl.u32 %v1738, 16
        %v2256 = vrot.slane %v2254, 3
        %v2257 = vshll.u32 %v1738, 16
        %v2259 = vrot.slane %v2257, 4
        %v2260 = vor.u32 %v2256, %v2259
        %v2262 = vshrl.u32 %v1740, 16
        %v2264 = vrot.slane %v2262, 3
        %v2265 = vshll.u32 %v1740, 16
        %v2267 = vrot.slane %v2265, 4
        %v2268 = vor.u32 %v2264, %v2267
        %v2269 = vsel %vm1753, %v2260, %v2268
        %v2271 = vshrl.u32 %v1504, 16
        %v2273 = vrot.slane %v2271, 3
        %v2274 = vshll.u32 %v1504, 16
        %v2276 = vrot.slane %v2274, 4
        %v2277 = vor.u32 %v2273, %v2276
        %v2279 = vshrl.u32 %v1505, 16
        %v2281 = vrot.slane %v2279, 3
        %v2282 = vshll.u32 %v1505, 16
        %v2284 = vrot.slane %v2282, 4
        %v2285 = vor.u32 %v2281, %v2284
        %v2286 = vsel %vm1753, %v2277, %v2285
        %v2288 = vshrl.u32 %v1631, 16
        %v2290 = vrot.slane %v2288, 3
        %v2291 = vshll.u32 %v1631, 16
        %v2293 = vrot.slane %v2291, 4
        %v2294 = vor.u32 %v2290, %v2293
        %v2295 = vsel %vm1753, %v2294, %v2294
        %v2297 = vshrl.u32 %v1741, 16
        %v2299 = vrot.slane %v2297, 3
        %v2300 = vshll.u32 %v1741, 16
        %v2302 = vrot.slane %v2300, 4
        %v2303 = vor.u32 %v2299, %v2302
        %v2305 = vshrl.u32 %v1743, 16
        %v2307 = vrot.slane %v2305, 3
        %v2308 = vshll.u32 %v1743, 16
        %v2310 = vrot.slane %v2308, 4
        %v2311 = vor.u32 %v2307, %v2310
        %v2312 = vsel %vm1753, %v2303, %v2311
        %v2314 = vshrl.u32 %v1506, 16
        %v2316 = vrot.slane %v2314, 3
        %v2317 = vshll.u32 %v1506, 16
        %v2319 = vrot.slane %v2317, 4
        %v2320 = vor.u32 %v2316, %v2319
        %v2322 = vshrl.u32 %v1507, 16
        %v2324 = vrot.slane %v2322, 3
        %v2325 = vshll.u32 %v1507, 16
        %v2327 = vrot.slane %v2325, 4
        %v2328 = vor.u32 %v2324, %v2327
        %v2329 = vsel %vm1753, %v2320, %v2328
        %v2331 = vshrl.u32 %v1639, 16
        %v2333 = vrot.slane %v2331, 3
        %v2334 = vshll.u32 %v1639, 16
        %v2336 = vrot.slane %v2334, 4
        %v2337 = vor.u32 %v2333, %v2336
        %v2338 = vsel %vm1753, %v2337, %v2337
        %v2340 = vshrl.u32 %v1744, 16
        %v2342 = vrot.slane %v2340, 3
        %v2343 = vshll.u32 %v1744, 16
        %v2345 = vrot.slane %v2343, 4
        %v2346 = vor.u32 %v2342, %v2345
        %v2348 = vshrl.u32 %v1746, 16
        %v2350 = vrot.slane %v2348, 3
        %v2351 = vshll.u32 %v1746, 16
        %v2353 = vrot.slane %v2351, 4
        %v2354 = vor.u32 %v2350, %v2353
        %v2355 = vsel %vm1753, %v2346, %v2354
        %v2357 = vshrl.u32 %v1508, 16
        %v2359 = vrot.slane %v2357, 3
        %v2360 = vshll.u32 %v1508, 16
        %v2362 = vrot.slane %v2360, 4
        %v2363 = vor.u32 %v2359, %v2362
        %v2365 = vshrl.u32 %v1509, 16
        %v2367 = vrot.slane %v2365, 3
        %v2368 = vshll.u32 %v1509, 16
        %v2370 = vrot.slane %v2368, 4
        %v2371 = vor.u32 %v2367, %v2370
        %v2372 = vsel %vm1753, %v2363, %v2371
        %v2374 = vshrl.u32 %v1647, 16
        %v2376 = vrot.slane %v2374, 3
        %v2377 = vshll.u32 %v1647, 16
        %v2379 = vrot.slane %v2377, 4
        %v2380 = vor.u32 %v2376, %v2379
        %v2381 = vsel %vm1753, %v2380, %v2380
        %v2383 = vshrl.u32 %v1747, 16
        %v2385 = vrot.slane %v2383, 3
        %v2386 = vshll.u32 %v1747, 16
        %v2388 = vrot.slane %v2386, 4
        %v2389 = vor.u32 %v2385, %v2388
        %v2391 = vshrl.u32 %v1749, 16
        %v2393 = vrot.slane %v2391, 3
        %v2394 = vshll.u32 %v1749, 16
        %v2396 = vrot.slane %v2394, 4
        %v2397 = vor.u32 %v2393, %v2396
        %v2398 = vsel %vm1753, %v2389, %v2397
        %v2400 = vshrl.u32 %v1510, 16
        %v2402 = vrot.slane %v2400, 3
        %v2403 = vshll.u32 %v1510, 16
        %v2405 = vrot.slane %v2403, 4
        %v2406 = vor.u32 %v2402, %v2405
        %v2408 = vshrl.u32 %v1511, 16
        %v2410 = vrot.slane %v2408, 3
        %v2411 = vshll.u32 %v1511, 16
        %v2413 = vrot.slane %v2411, 4
        %v2414 = vor.u32 %v2410, %v2413
        %v2415 = vsel %vm1753, %v2406, %v2414
        %v2417 = vshrl.u32 %v1655, 16
        %v2419 = vrot.slane %v2417, 3
        %v2420 = vshll.u32 %v1655, 16
        %v2422 = vrot.slane %v2420, 4
        %v2423 = vor.u32 %v2419, %v2422
        %v2424 = vsel %vm1753, %v2423, %v2423
        %v2426 = vshrl.u32 %v1750, 16
        %v2428 = vrot.slane %v2426, 3
        %v2429 = vshll.u32 %v1750, 16
        %v2431 = vrot.slane %v2429, 4
        %v2432 = vor.u32 %v2428, %v2431
        %v2434 = vshrl.u32 %v1752, 16
        %v2436 = vrot.slane %v2434, 3
        %v2437 = vshll.u32 %v1752, 16
        %v2439 = vrot.slane %v2437, 4
        %v2440 = vor.u32 %v2436, %v2439
        %v2441 = vsel %vm1753, %v2432, %v2440
        %v2490 = vld [vmem:[%s5] sm:$0xf]
        %v2491 = vld [vmem:[%s5 + $0x4] sm:$0xf]
        %v2492 = vld [vmem:[%s5 + $0x8] sm:$0xf]
        %v2493 = vld [vmem:[%s5 + $0xc] sm:$0xf]
        %v2494 = vld [vmem:[%s5 + $0x10] sm:$0xf]
        %v2495 = vld [vmem:[%s5 + $0x14] sm:$0xf]
        %v2496 = vld [vmem:[%s5 + $0x18] sm:$0xf]
        %v2497 = vld [vmem:[%s5 + $0x1c] sm:$0xf]
        %v2498 = vld [vmem:[%s5 + $0x20] sm:$0xf]
        %v2499 = vld [vmem:[%s5 + $0x24] sm:$0xf]
        %v2500 = vld [vmem:[%s5 + $0x28] sm:$0xf]
        %v2501 = vld [vmem:[%s5 + $0x2c] sm:$0xf]
        %v2502 = vld [vmem:[%s5 + $0x30] sm:$0xf]
        %v2503 = vld [vmem:[%s5 + $0x34] sm:$0xf]
        %v2504 = vld [vmem:[%s5 + $0x38] sm:$0xf]
        %v2505 = vld [vmem:[%s5 + $0x3c] sm:$0xf]
        %v2506 = vld [vmem:[%s5 + $0x40] sm:$0xf]
        %v2507 = vld [vmem:[%s5 + $0x44] sm:$0xf]
        %v2508 = vld [vmem:[%s5 + $0x48] sm:$0xf]
        %v2509 = vld [vmem:[%s5 + $0x4c] sm:$0xf]
        %v2510 = vld [vmem:[%s5 + $0x50] sm:$0xf]
        %v2511 = vld [vmem:[%s5 + $0x54] sm:$0xf]
        %v2512 = vld [vmem:[%s5 + $0x58] sm:$0xf]
        %v2513 = vld [vmem:[%s5 + $0x5c] sm:$0xf]
        %v2514 = vld [vmem:[%s5 + $0x60] sm:$0xf]
        %v2515 = vld [vmem:[%s5 + $0x64] sm:$0xf]
        %v2516 = vld [vmem:[%s5 + $0x68] sm:$0xf]
        %v2517 = vld [vmem:[%s5 + $0x6c] sm:$0xf]
        %v2518 = vld [vmem:[%s5 + $0x70] sm:$0xf]
        %v2519 = vld [vmem:[%s5 + $0x74] sm:$0xf]
        %v2520 = vld [vmem:[%s5 + $0x78] sm:$0xf]
        %v2521 = vld [vmem:[%s5 + $0x7c] sm:$0xf]
        %v2522 = vld [vmem:[%s5 + $0x80] sm:$0xf]
        %v2523 = vld [vmem:[%s5 + $0x84] sm:$0xf]
        %v2524 = vld [vmem:[%s5 + $0x88] sm:$0xf]
        %v2525 = vld [vmem:[%s5 + $0x8c] sm:$0xf]
        %v2526 = vld [vmem:[%s5 + $0x90] sm:$0xf]
        %v2527 = vld [vmem:[%s5 + $0x94] sm:$0xf]
        %v2528 = vld [vmem:[%s5 + $0x98] sm:$0xf]
        %v2529 = vld [vmem:[%s5 + $0x9c] sm:$0xf]
        %v2530 = vld [vmem:[%s5 + $0xa0] sm:$0xf]
        %v2531 = vld [vmem:[%s5 + $0xa4] sm:$0xf]
        %v2532 = vld [vmem:[%s5 + $0xa8] sm:$0xf]
        %v2533 = vld [vmem:[%s5 + $0xac] sm:$0xf]
        %v2534 = vld [vmem:[%s5 + $0xb0] sm:$0xf]
        %v2535 = vld [vmem:[%s5 + $0xb4] sm:$0xf]
        %v2536 = vld [vmem:[%s5 + $0xb8] sm:$0xf]
        %v2537 = vld [vmem:[%s5 + $0xbc] sm:$0xf]
        %v2538 = vld [vmem:[#allocation3 + $0x4] sm:$0xf]
        %v2539 = vld [vmem:[#allocation3 + $0x8] sm:$0xf]
        %v2540 = vld [vmem:[#allocation3 + $0xc] sm:$0xf]
        %v2541 = vld [vmem:[#allocation3 + $0x10] sm:$0xf]
        %v2542 = vld [vmem:[#allocation3 + $0x18] sm:$0xf]
        %v2543 = vld [vmem:[#allocation3 + $0x1c] sm:$0xf]
        %v2544 = vld [vmem:[#allocation3 + $0x20] sm:$0xf]
        %v2545 = vld [vmem:[#allocation3 + $0x24] sm:$0xf]
        %v2546 = vld [vmem:[#allocation3 + $0x2c] sm:$0xf]
        %v2547 = vld [vmem:[#allocation3 + $0x30] sm:$0xf]
        %v2548 = vld [vmem:[#allocation3 + $0x34] sm:$0xf]
        %v2549 = vld [vmem:[#allocation3 + $0x38] sm:$0xf]
        %v2550 = vld [vmem:[#allocation3 + $0x40] sm:$0xf]
        %v2551 = vld [vmem:[#allocation3 + $0x44] sm:$0xf]
        %v2552 = vld [vmem:[#allocation3 + $0x48] sm:$0xf]
        %v2553 = vld [vmem:[#allocation3 + $0x4c] sm:$0xf]
        %v2554 = vld [vmem:[#allocation3 + $0x54] sm:$0xf]
        %v2555 = vld [vmem:[#allocation3 + $0x58] sm:$0xf]
        %v2556 = vld [vmem:[#allocation3 + $0x5c] sm:$0xf]
        %v2557 = vld [vmem:[#allocation3 + $0x60] sm:$0xf]
        %v2558 = vld [vmem:[#allocation3 + $0x68] sm:$0xf]
        %v2559 = vld [vmem:[#allocation3 + $0x6c] sm:$0xf]
        %v2560 = vld [vmem:[#allocation3 + $0x70] sm:$0xf]
        %v2561 = vld [vmem:[#allocation3 + $0x74] sm:$0xf]
        %v2562 = vld [vmem:[#allocation3 + $0x7c] sm:$0xf]
        %v2563 = vld [vmem:[#allocation3 + $0x80] sm:$0xf]
        %v2564 = vld [vmem:[#allocation3 + $0x84] sm:$0xf]
        %v2565 = vld [vmem:[#allocation3 + $0x88] sm:$0xf]
        %v2566 = vld [vmem:[#allocation3 + $0x90] sm:$0xf]
        %v2567 = vld [vmem:[#allocation3 + $0x94] sm:$0xf]
        %v2568 = vld [vmem:[#allocation3 + $0x98] sm:$0xf]
        %v2569 = vld [vmem:[#allocation3 + $0x9c] sm:$0xf]
        %v2570 = vld [vmem:[#allocation3 + $0xa4] sm:$0xf]
        %v2571 = vld [vmem:[#allocation3 + $0xa8] sm:$0xf]
        %v2572 = vld [vmem:[#allocation3 + $0xac] sm:$0xf]
        %v2573 = vld [vmem:[#allocation3 + $0xb0] sm:$0xf]
        %v2574 = vld [vmem:[#allocation3 + $0xb8] sm:$0xf]
        %v2575 = vld [vmem:[#allocation3 + $0xbc] sm:$0xf]
        %v2576 = vld [vmem:[#allocation3 + $0xc0] sm:$0xf]
        %v2577 = vld [vmem:[#allocation3 + $0xc4] sm:$0xf]
        %v2578 = vld [vmem:[#allocation3 + $0xcc] sm:$0xf]
        %v2579 = vld [vmem:[#allocation3 + $0xd0] sm:$0xf]
        %v2580 = vld [vmem:[#allocation3 + $0xd4] sm:$0xf]
        %v2581 = vld [vmem:[#allocation3 + $0xd8] sm:$0xf]
        %v2582 = vld [vmem:[#allocation3 + $0xe0] sm:$0xf]
        %v2583 = vld [vmem:[#allocation3 + $0xe4] sm:$0xf]
        %v2584 = vld [vmem:[#allocation3 + $0xe8] sm:$0xf]
        %v2585 = vld [vmem:[#allocation3 + $0xec] sm:$0xf]
        %v2586 = vld [vmem:[#allocation3 + $0xf4] sm:$0xf]
        %v2587 = vld [vmem:[#allocation3 + $0xf8] sm:$0xf]
        %v2588 = vld [vmem:[#allocation3 + $0xfc] sm:$0xf]
        %v2589 = vld [vmem:[#allocation3 + $0x100] sm:$0xf]
        %v2590 = vld [vmem:[#allocation3 + $0x108] sm:$0xf]
        %v2591 = vld [vmem:[#allocation3 + $0x10c] sm:$0xf]
        %v2592 = vld [vmem:[#allocation3 + $0x110] sm:$0xf]
        %v2593 = vld [vmem:[#allocation3 + $0x114] sm:$0xf]
        %v2594 = vld [vmem:[#allocation3 + $0x11c] sm:$0xf]
        %v2595 = vld [vmem:[#allocation3 + $0x120] sm:$0xf]
        %v2596 = vld [vmem:[#allocation3 + $0x124] sm:$0xf]
        %v2597 = vld [vmem:[#allocation3 + $0x128] sm:$0xf]
        %v2598 = vld [vmem:[#allocation3 + $0x130] sm:$0xf]
        %v2599 = vld [vmem:[#allocation3 + $0x134] sm:$0xf]
        %v2600 = vld [vmem:[#allocation3 + $0x138] sm:$0xf]
        %v2601 = vld [vmem:[#allocation3 + $0x13c] sm:$0xf]
        %vm2602 = vsmask.f32 256
        %vm2603 = vsmask.f32 4368
        %vm2604 = vmor %vm2602, %vm2603
        %v2606 = vshrl.u32 %v2538, 16
        %v2608 = vrot.slane %v2606, 7
        %v2609 = vrot.slane %v2608, 4
        %v2611 = vshrl.u32 %v2539, 16
        %v2613 = vrot.slane %v2611, 7
        %v2614 = vshll.u32 %v2539, 16
        %v2616 = vor.u32 %v2613, %v2614
        %v2617 = vsel %vm2604, %v2609, %v2616
        %v2618 = vrot.slane %v2613, 4
        %v2620 = vshrl.u32 %v2540, 16
        %v2622 = vrot.slane %v2620, 7
        %v2623 = vshll.u32 %v2540, 16
        %v2625 = vor.u32 %v2622, %v2623
        %v2626 = vsel %vm2604, %v2618, %v2625
        %v2628 = vshrl.u32 %v2542, 16
        %v2630 = vrot.slane %v2628, 7
        %v2631 = vrot.slane %v2630, 4
        %v2633 = vshrl.u32 %v2543, 16
        %v2635 = vrot.slane %v2633, 7
        %v2636 = vshll.u32 %v2543, 16
        %v2638 = vor.u32 %v2635, %v2636
        %v2639 = vsel %vm2604, %v2631, %v2638
        %v2640 = vrot.slane %v2635, 4
        %v2642 = vshrl.u32 %v2544, 16
        %v2644 = vrot.slane %v2642, 7
        %v2645 = vshll.u32 %v2544, 16
        %v2647 = vor.u32 %v2644, %v2645
        %v2648 = vsel %vm2604, %v2640, %v2647
        %v2650 = vshrl.u32 %v2546, 16
        %v2652 = vrot.slane %v2650, 7
        %v2653 = vrot.slane %v2652, 4
        %v2655 = vshrl.u32 %v2547, 16
        %v2657 = vrot.slane %v2655, 7
        %v2658 = vshll.u32 %v2547, 16
        %v2660 = vor.u32 %v2657, %v2658
        %v2661 = vsel %vm2604, %v2653, %v2660
        %v2662 = vrot.slane %v2657, 4
        %v2664 = vshrl.u32 %v2548, 16
        %v2666 = vrot.slane %v2664, 7
        %v2667 = vshll.u32 %v2548, 16
        %v2669 = vor.u32 %v2666, %v2667
        %v2670 = vsel %vm2604, %v2662, %v2669
        %v2672 = vshrl.u32 %v2550, 16
        %v2674 = vrot.slane %v2672, 7
        %v2675 = vrot.slane %v2674, 4
        %v2677 = vshrl.u32 %v2551, 16
        %v2679 = vrot.slane %v2677, 7
        %v2680 = vshll.u32 %v2551, 16
        %v2682 = vor.u32 %v2679, %v2680
        %v2683 = vsel %vm2604, %v2675, %v2682
        %v2684 = vrot.slane %v2679, 4
        %v2686 = vshrl.u32 %v2552, 16
        %v2688 = vrot.slane %v2686, 7
        %v2689 = vshll.u32 %v2552, 16
        %v2691 = vor.u32 %v2688, %v2689
        %v2692 = vsel %vm2604, %v2684, %v2691
        %v2694 = vshrl.u32 %v2554, 16
        %v2696 = vrot.slane %v2694, 7
        %v2697 = vrot.slane %v2696, 4
        %v2699 = vshrl.u32 %v2555, 16
        %v2701 = vrot.slane %v2699, 7
        %v2702 = vshll.u32 %v2555, 16
        %v2704 = vor.u32 %v2701, %v2702
        %v2705 = vsel %vm2604, %v2697, %v2704
        %v2706 = vrot.slane %v2701, 4
        %v2708 = vshrl.u32 %v2556, 16
        %v2710 = vrot.slane %v2708, 7
        %v2711 = vshll.u32 %v2556, 16
        %v2713 = vor.u32 %v2710, %v2711
        %v2714 = vsel %vm2604, %v2706, %v2713
        %v2716 = vshrl.u32 %v2558, 16
        %v2718 = vrot.slane %v2716, 7
        %v2719 = vrot.slane %v2718, 4
        %v2721 = vshrl.u32 %v2559, 16
        %v2723 = vrot.slane %v2721, 7
        %v2724 = vshll.u32 %v2559, 16
        %v2726 = vor.u32 %v2723, %v2724
        %v2727 = vsel %vm2604, %v2719, %v2726
        %v2728 = vrot.slane %v2723, 4
        %v2730 = vshrl.u32 %v2560, 16
        %v2732 = vrot.slane %v2730, 7
        %v2733 = vshll.u32 %v2560, 16
        %v2735 = vor.u32 %v2732, %v2733
        %v2736 = vsel %vm2604, %v2728, %v2735
        %v2738 = vshrl.u32 %v2562, 16
        %v2740 = vrot.slane %v2738, 7
        %v2741 = vrot.slane %v2740, 4
        %v2743 = vshrl.u32 %v2563, 16
        %v2745 = vrot.slane %v2743, 7
        %v2746 = vshll.u32 %v2563, 16
        %v2748 = vor.u32 %v2745, %v2746
        %v2749 = vsel %vm2604, %v2741, %v2748
        %v2750 = vrot.slane %v2745, 4
        %v2752 = vshrl.u32 %v2564, 16
        %v2754 = vrot.slane %v2752, 7
        %v2755 = vshll.u32 %v2564, 16
        %v2757 = vor.u32 %v2754, %v2755
        %v2758 = vsel %vm2604, %v2750, %v2757
        %v2760 = vshrl.u32 %v2566, 16
        %v2762 = vrot.slane %v2760, 7
        %v2763 = vrot.slane %v2762, 4
        %v2765 = vshrl.u32 %v2567, 16
        %v2767 = vrot.slane %v2765, 7
        %v2768 = vshll.u32 %v2567, 16
        %v2770 = vor.u32 %v2767, %v2768
        %v2771 = vsel %vm2604, %v2763, %v2770
        %v2772 = vrot.slane %v2767, 4
        %v2774 = vshrl.u32 %v2568, 16
        %v2776 = vrot.slane %v2774, 7
        %v2777 = vshll.u32 %v2568, 16
        %v2779 = vor.u32 %v2776, %v2777
        %v2780 = vsel %vm2604, %v2772, %v2779
        %v2782 = vshrl.u32 %v2570, 16
        %v2784 = vrot.slane %v2782, 7
        %v2785 = vrot.slane %v2784, 4
        %v2787 = vshrl.u32 %v2571, 16
        %v2789 = vrot.slane %v2787, 7
        %v2790 = vshll.u32 %v2571, 16
        %v2792 = vor.u32 %v2789, %v2790
        %v2793 = vsel %vm2604, %v2785, %v2792
        %v2794 = vrot.slane %v2789, 4
        %v2796 = vshrl.u32 %v2572, 16
        %v2798 = vrot.slane %v2796, 7
        %v2799 = vshll.u32 %v2572, 16
        %v2801 = vor.u32 %v2798, %v2799
        %v2802 = vsel %vm2604, %v2794, %v2801
        %v2804 = vshrl.u32 %v2574, 16
        %v2806 = vrot.slane %v2804, 7
        %v2807 = vrot.slane %v2806, 4
        %v2809 = vshrl.u32 %v2575, 16
        %v2811 = vrot.slane %v2809, 7
        %v2812 = vshll.u32 %v2575, 16
        %v2814 = vor.u32 %v2811, %v2812
        %v2815 = vsel %vm2604, %v2807, %v2814
        %v2816 = vrot.slane %v2811, 4
        %v2818 = vshrl.u32 %v2576, 16
        %v2820 = vrot.slane %v2818, 7
        %v2821 = vshll.u32 %v2576, 16
        %v2823 = vor.u32 %v2820, %v2821
        %v2824 = vsel %vm2604, %v2816, %v2823
        %v2826 = vshrl.u32 %v2578, 16
        %v2828 = vrot.slane %v2826, 7
        %v2829 = vrot.slane %v2828, 4
        %v2831 = vshrl.u32 %v2579, 16
        %v2833 = vrot.slane %v2831, 7
        %v2834 = vshll.u32 %v2579, 16
        %v2836 = vor.u32 %v2833, %v2834
        %v2837 = vsel %vm2604, %v2829, %v2836
        %v2838 = vrot.slane %v2833, 4
        %v2840 = vshrl.u32 %v2580, 16
        %v2842 = vrot.slane %v2840, 7
        %v2843 = vshll.u32 %v2580, 16
        %v2845 = vor.u32 %v2842, %v2843
        %v2846 = vsel %vm2604, %v2838, %v2845
        %v2848 = vshrl.u32 %v2582, 16
        %v2850 = vrot.slane %v2848, 7
        %v2851 = vrot.slane %v2850, 4
        %v2853 = vshrl.u32 %v2583, 16
        %v2855 = vrot.slane %v2853, 7
        %v2856 = vshll.u32 %v2583, 16
        %v2858 = vor.u32 %v2855, %v2856
        %v2859 = vsel %vm2604, %v2851, %v2858
        %v2860 = vrot.slane %v2855, 4
        %v2862 = vshrl.u32 %v2584, 16
        %v2864 = vrot.slane %v2862, 7
        %v2865 = vshll.u32 %v2584, 16
        %v2867 = vor.u32 %v2864, %v2865
        %v2868 = vsel %vm2604, %v2860, %v2867
        %v2870 = vshrl.u32 %v2586, 16
        %v2872 = vrot.slane %v2870, 7
        %v2873 = vrot.slane %v2872, 4
        %v2875 = vshrl.u32 %v2587, 16
        %v2877 = vrot.slane %v2875, 7
        %v2878 = vshll.u32 %v2587, 16
        %v2880 = vor.u32 %v2877, %v2878
        %v2881 = vsel %vm2604, %v2873, %v2880
        %v2882 = vrot.slane %v2877, 4
        %v2884 = vshrl.u32 %v2588, 16
        %v2886 = vrot.slane %v2884, 7
        %v2887 = vshll.u32 %v2588, 16
        %v2889 = vor.u32 %v2886, %v2887
        %v2890 = vsel %vm2604, %v2882, %v2889
        %v2892 = vshrl.u32 %v2590, 16
        %v2894 = vrot.slane %v2892, 7
        %v2895 = vrot.slane %v2894, 4
        %v2897 = vshrl.u32 %v2591, 16
        %v2899 = vrot.slane %v2897, 7
        %v2900 = vshll.u32 %v2591, 16
        %v2902 = vor.u32 %v2899, %v2900
        %v2903 = vsel %vm2604, %v2895, %v2902
        %v2904 = vrot.slane %v2899, 4
        %v2906 = vshrl.u32 %v2592, 16
        %v2908 = vrot.slane %v2906, 7
        %v2909 = vshll.u32 %v2592, 16
        %v2911 = vor.u32 %v2908, %v2909
        %v2912 = vsel %vm2604, %v2904, %v2911
        %v2914 = vshrl.u32 %v2594, 16
        %v2916 = vrot.slane %v2914, 7
        %v2917 = vrot.slane %v2916, 4
        %v2919 = vshrl.u32 %v2595, 16
        %v2921 = vrot.slane %v2919, 7
        %v2922 = vshll.u32 %v2595, 16
        %v2924 = vor.u32 %v2921, %v2922
        %v2925 = vsel %vm2604, %v2917, %v2924
        %v2926 = vrot.slane %v2921, 4
        %v2928 = vshrl.u32 %v2596, 16
        %v2930 = vrot.slane %v2928, 7
        %v2931 = vshll.u32 %v2596, 16
        %v2933 = vor.u32 %v2930, %v2931
        %v2934 = vsel %vm2604, %v2926, %v2933
        %v2936 = vshrl.u32 %v2598, 16
        %v2938 = vrot.slane %v2936, 7
        %v2939 = vrot.slane %v2938, 4
        %v2941 = vshrl.u32 %v2599, 16
        %v2943 = vrot.slane %v2941, 7
        %v2944 = vshll.u32 %v2599, 16
        %v2946 = vor.u32 %v2943, %v2944
        %v2947 = vsel %vm2604, %v2939, %v2946
        %v2948 = vrot.slane %v2943, 4
        %v2950 = vshrl.u32 %v2600, 16
        %v2952 = vrot.slane %v2950, 7
        %v2953 = vshll.u32 %v2600, 16
        %v2955 = vor.u32 %v2952, %v2953
        %v2956 = vsel %vm2604, %v2948, %v2955
        %v2957 = vld [vmem:[%s6] sm:$0x3]
        %s2958 = scalar_lea.vmem %s6, 2
        %v2959 = vld [vmem:[%s2958] sm:$0x3]
        %v2992 = vunpack.c.l.b16 %v2539
        %v2993 = vunpack.c.l.b16 %v2540
        %v2994 = vunpack.c.l.b16 %v2543
        %v2995 = vunpack.c.l.b16 %v2544
        %v2996 = vunpack.c.l.b16 %v2547
        %v2997 = vunpack.c.l.b16 %v2548
        %v2998 = vunpack.c.l.b16 %v2551
        %v2999 = vunpack.c.l.b16 %v2552
        %v3000 = vunpack.c.l.b16 %v2555
        %v3001 = vunpack.c.l.b16 %v2556
        %v3002 = vunpack.c.l.b16 %v2559
        %v3003 = vunpack.c.l.b16 %v2560
        %v3004 = vunpack.c.l.b16 %v2563
        %v3005 = vunpack.c.l.b16 %v2564
        %v3006 = vunpack.c.l.b16 %v2567
        %v3007 = vunpack.c.l.b16 %v2568
        %v3008 = vunpack.c.l.b16 %v2571
        %v3009 = vunpack.c.l.b16 %v2572
        %v3010 = vunpack.c.l.b16 %v2575
        %v3011 = vunpack.c.l.b16 %v2576
        %v3012 = vunpack.c.l.b16 %v2579
        %v3013 = vunpack.c.l.b16 %v2580
        %v3014 = vunpack.c.l.b16 %v2583
        %v3015 = vunpack.c.l.b16 %v2584
        %v3016 = vunpack.c.l.b16 %v2587
        %v3017 = vunpack.c.l.b16 %v2588
        %v3018 = vunpack.c.l.b16 %v2591
        %v3019 = vunpack.c.l.b16 %v2592
        %v3020 = vunpack.c.l.b16 %v2595
        %v3021 = vunpack.c.l.b16 %v2596
        %v3022 = vunpack.c.l.b16 %v2599
        %v3023 = vunpack.c.l.b16 %v2600
        %v3024 = vpack.c.b16 %v2993, %v2992
        %v3025 = vpack.c.b16 %v2995, %v2994
        %v3026 = vpack.c.b16 %v2997, %v2996
        %v3027 = vpack.c.b16 %v2999, %v2998
        %v3028 = vpack.c.b16 %v3001, %v3000
        %v3029 = vpack.c.b16 %v3003, %v3002
        %v3030 = vpack.c.b16 %v3005, %v3004
        %v3031 = vpack.c.b16 %v3007, %v3006
        %v3032 = vpack.c.b16 %v3009, %v3008
        %v3033 = vpack.c.b16 %v3011, %v3010
        %v3034 = vpack.c.b16 %v3013, %v3012
        %v3035 = vpack.c.b16 %v3015, %v3014
        %v3036 = vpack.c.b16 %v3017, %v3016
        %v3037 = vpack.c.b16 %v3019, %v3018
        %v3038 = vpack.c.b16 %v3021, %v3020
        %v3039 = vpack.c.b16 %v3023, %v3022
        %v3041 = vsel %vm700, %v3024, 0
        %v3044 = vsel %vm700, %v3025, 0
        %v3047 = vsel %vm700, %v3026, 0
        %v3050 = vsel %vm700, %v3027, 0
        %v3053 = vsel %vm700, %v3028, 0
        %v3056 = vsel %vm700, %v3029, 0
        %v3059 = vsel %vm700, %v3030, 0
        %v3062 = vsel %vm700, %v3031, 0
        %v3065 = vsel %vm700, %v3032, 0
        %v3068 = vsel %vm700, %v3033, 0
        %v3071 = vsel %vm700, %v3034, 0
        %v3074 = vsel %vm700, %v3035, 0
        %v3077 = vsel %vm700, %v3036, 0
        %v3080 = vsel %vm700, %v3037, 0
        %v3083 = vsel %vm700, %v3038, 0
        %v3086 = vsel %vm700, %v3039, 0
        %v3089 = vsel %vm713, %v2959, 0
        %3091 = vmatprep.subr.bf16.mxu0 0
        %3092 = vmatpush1.bf16.msra.mxu0 %v3089
        %3093 = vmatprep.subr.bf16.mxu0 0
        %3094 = vmatpush1.bf16.msra.mxu0 0
        %3095 = vmatprep.subr.bf16.mxu0 0
        %3096 = vmatpush1.bf16.msra.mxu0 0
        %3097 = vmatprep.subr.bf16.mxu0 0
        %3098 = vmatpush1.bf16.msra.mxu0 0
        %3099 = vmatprep.subr.bf16.mxu0 0
        %3100 = vmatpush1.bf16.msra.mxu0 0
        %3101 = vmatprep.subr.bf16.mxu0 0
        %3102 = vmatpush1.bf16.msra.mxu0 0
        %3103 = vmatprep.subr.bf16.mxu0 0
        %3104 = vmatpush1.bf16.msra.mxu0 0
        %3105 = vmatprep.subr.bf16.mxu0 0
        %3106 = vmatpush1.bf16.msra.mxu0 0
        %3107 = vmatprep.subr.bf16.mxu0 0
        %3108 = vmatpush1.bf16.msra.mxu0 0
        %3109 = vmatprep.subr.bf16.mxu0 0
        %3110 = vmatpush1.bf16.msra.mxu0 0
        %3111 = vmatprep.subr.bf16.mxu0 0
        %3112 = vmatpush1.bf16.msra.mxu0 0
        %3113 = vmatprep.subr.bf16.mxu0 0
        %3114 = vmatpush1.bf16.msra.mxu0 0
        %3115 = vmatprep.subr.bf16.mxu0 0
        %3116 = vmatpush1.bf16.msra.mxu0 0
        %3117 = vmatprep.subr.bf16.mxu0 0
        %3118 = vmatpush1.bf16.msra.mxu0 0
        %3119 = vmatprep.subr.bf16.mxu0 0
        %3120 = vmatpush1.bf16.msra.mxu0 0
        %3121 = vmatprep.subr.bf16.mxu0 0
        %3122 = vmatpush1.bf16.msra.mxu0 0
        %3123 = vmatprep.mubr.bf16.mxu0 0
        %3124 = vmatmul.mubr.bf16.gmra.mrb[0].mxu0 %v3041
        %v3125 = vpop.f32.mrb[0].mxu0
        %v3126 = vadd.f32 0.0, %v3125
        %v3127 = vpop.f32.mrb[0].mxu0
        %v3128 = vpop.f32.mrb[0].mxu0
        %v3129 = vadd.f32 0.0, %v3128
        %v3130 = vpop.f32.mrb[0].mxu0
        %3131 = vmatprep.mubr.bf16.mxu0 0
        %3132 = vmatmul.mubr.bf16.gmra.mrb[0].mxu0 %v3044
        %v3133 = vpop.f32.mrb[0].mxu0
        %v3134 = vadd.f32 0.0, %v3133
        %v3135 = vpop.f32.mrb[0].mxu0
        %v3136 = vpop.f32.mrb[0].mxu0
        %v3137 = vadd.f32 0.0, %v3136
        %v3138 = vpop.f32.mrb[0].mxu0
        %3139 = vmatprep.mubr.bf16.mxu0 0
        %3140 = vmatmul.mubr.bf16.gmra.mrb[0].mxu0 %v3047
        %v3141 = vpop.f32.mrb[0].mxu0
        %v3142 = vadd.f32 0.0, %v3141
        %v3143 = vpop.f32.mrb[0].mxu0
        %v3144 = vpop.f32.mrb[0].mxu0
        %v3145 = vadd.f32 0.0, %v3144
        %v3146 = vpop.f32.mrb[0].mxu0
        %3147 = vmatprep.mubr.bf16.mxu0 0
        %3148 = vmatmul.mubr.bf16.gmra.mrb[0].mxu0 %v3050
        %v3149 = vpop.f32.mrb[0].mxu0
        %v3150 = vadd.f32 0.0, %v3149
        %v3151 = vpop.f32.mrb[0].mxu0
        %v3152 = vpop.f32.mrb[0].mxu0
        %v3153 = vadd.f32 0.0, %v3152
        %v3154 = vpop.f32.mrb[0].mxu0
        %3155 = vmatprep.mubr.bf16.mxu0 0
        %3156 = vmatmul.mubr.bf16.gmra.mrb[0].mxu0 %v3053
        %v3157 = vpop.f32.mrb[0].mxu0
        %v3158 = vadd.f32 0.0, %v3157
        %v3159 = vpop.f32.mrb[0].mxu0
        %v3160 = vpop.f32.mrb[0].mxu0
        %v3161 = vadd.f32 0.0, %v3160
        %v3162 = vpop.f32.mrb[0].mxu0
        %3163 = vmatprep.mubr.bf16.mxu0 0
        %3164 = vmatmul.mubr.bf16.gmra.mrb[0].mxu0 %v3056
        %v3165 = vpop.f32.mrb[0].mxu0
        %v3166 = vadd.f32 0.0, %v3165
        %v3167 = vpop.f32.mrb[0].mxu0
        %v3168 = vpop.f32.mrb[0].mxu0
        %v3169 = vadd.f32 0.0, %v3168
        %v3170 = vpop.f32.mrb[0].mxu0
        %3171 = vmatprep.mubr.bf16.mxu0 0
        %3172 = vmatmul.mubr.bf16.gmra.mrb[0].mxu0 %v3059
        %v3173 = vpop.f32.mrb[0].mxu0
        %v3174 = vadd.f32 0.0, %v3173
        %v3175 = vpop.f32.mrb[0].mxu0
        %v3176 = vpop.f32.mrb[0].mxu0
        %v3177 = vadd.f32 0.0, %v3176
        %v3178 = vpop.f32.mrb[0].mxu0
        %3179 = vmatprep.mubr.bf16.mxu0 0
        %3180 = vmatmul.mubr.bf16.gmra.mrb[0].mxu0 %v3062
        %v3181 = vpop.f32.mrb[0].mxu0
        %v3182 = vadd.f32 0.0, %v3181
        %v3183 = vpop.f32.mrb[0].mxu0
        %v3184 = vpop.f32.mrb[0].mxu0
        %v3185 = vadd.f32 0.0, %v3184
        %v3186 = vpop.f32.mrb[0].mxu0
        %3187 = vmatprep.mubr.bf16.mxu0 0
        %3188 = vmatmul.mubr.bf16.gmra.mrb[0].mxu0 %v3065
        %v3189 = vpop.f32.mrb[0].mxu0
        %v3190 = vadd.f32 0.0, %v3189
        %v3191 = vpop.f32.mrb[0].mxu0
        %v3192 = vpop.f32.mrb[0].mxu0
        %v3193 = vadd.f32 0.0, %v3192
        %v3194 = vpop.f32.mrb[0].mxu0
        %3195 = vmatprep.mubr.bf16.mxu0 0
        %3196 = vmatmul.mubr.bf16.gmra.mrb[0].mxu0 %v3068
        %v3197 = vpop.f32.mrb[0].mxu0
        %v3198 = vadd.f32 0.0, %v3197
        %v3199 = vpop.f32.mrb[0].mxu0
        %v3200 = vpop.f32.mrb[0].mxu0
        %v3201 = vadd.f32 0.0, %v3200
        %v3202 = vpop.f32.mrb[0].mxu0
        %3203 = vmatprep.mubr.bf16.mxu0 0
        %3204 = vmatmul.mubr.bf16.gmra.mrb[0].mxu0 %v3071
        %v3205 = vpop.f32.mrb[0].mxu0
        %v3206 = vadd.f32 0.0, %v3205
        %v3207 = vpop.f32.mrb[0].mxu0
        %v3208 = vpop.f32.mrb[0].mxu0
        %v3209 = vadd.f32 0.0, %v3208
        %v3210 = vpop.f32.mrb[0].mxu0
        %3211 = vmatprep.mubr.bf16.mxu0 0
        %3212 = vmatmul.mubr.bf16.gmra.mrb[0].mxu0 %v3074
        %v3213 = vpop.f32.mrb[0].mxu0
        %v3214 = vadd.f32 0.0, %v3213
        %v3215 = vpop.f32.mrb[0].mxu0
        %v3216 = vpop.f32.mrb[0].mxu0
        %v3217 = vadd.f32 0.0, %v3216
        %v3218 = vpop.f32.mrb[0].mxu0
        %3219 = vmatprep.mubr.bf16.mxu0 0
        %3220 = vmatmul.mubr.bf16.gmra.mrb[0].mxu0 %v3077
        %v3221 = vpop.f32.mrb[0].mxu0
        %v3222 = vadd.f32 0.0, %v3221
        %v3223 = vpop.f32.mrb[0].mxu0
        %v3224 = vpop.f32.mrb[0].mxu0
        %v3225 = vadd.f32 0.0, %v3224
        %v3226 = vpop.f32.mrb[0].mxu0
        %3227 = vmatprep.mubr.bf16.mxu0 0
        %3228 = vmatmul.mubr.bf16.gmra.mrb[0].mxu0 %v3080
        %v3229 = vpop.f32.mrb[0].mxu0
        %v3230 = vadd.f32 0.0, %v3229
        %v3231 = vpop.f32.mrb[0].mxu0
        %v3232 = vpop.f32.mrb[0].mxu0
        %v3233 = vadd.f32 0.0, %v3232
        %v3234 = vpop.f32.mrb[0].mxu0
        %3235 = vmatprep.mubr.bf16.mxu0 0
        %3236 = vmatmul.mubr.bf16.gmra.mrb[0].mxu0 %v3083
        %v3237 = vpop.f32.mrb[0].mxu0
        %v3238 = vadd.f32 0.0, %v3237
        %v3239 = vpop.f32.mrb[0].mxu0
        %v3240 = vpop.f32.mrb[0].mxu0
        %v3241 = vadd.f32 0.0, %v3240
        %v3242 = vpop.f32.mrb[0].mxu0
        %3243 = vmatprep.mubr.bf16.mxu0 0
        %3244 = vmatmul.mubr.bf16.gmra.mrb[0].mxu0 %v3086
        %v3245 = vpop.f32.mrb[0].mxu0
        %v3246 = vadd.f32 0.0, %v3245
        %v3247 = vpop.f32.mrb[0].mxu0
        %v3248 = vpop.f32.mrb[0].mxu0
        %v3249 = vadd.f32 0.0, %v3248
        %v3250 = vpop.f32.mrb[0].mxu0
        %3251 = vdwg.mxu0
        %v3252 = vunpack.c.l.b16 %v2617
        %v3253 = vunpack.c.l.b16 %v2626
        %v3254 = vunpack.c.l.b16 %v2639
        %v3255 = vunpack.c.l.b16 %v2648
        %v3256 = vunpack.c.l.b16 %v2661
        %v3257 = vunpack.c.l.b16 %v2670
        %v3258 = vunpack.c.l.b16 %v2683
        %v3259 = vunpack.c.l.b16 %v2692
        %v3260 = vunpack.c.l.b16 %v2705
        %v3261 = vunpack.c.l.b16 %v2714
        %v3262 = vunpack.c.l.b16 %v2727
        %v3263 = vunpack.c.l.b16 %v2736
        %v3264 = vunpack.c.l.b16 %v2749
        %v3265 = vunpack.c.l.b16 %v2758
        %v3266 = vunpack.c.l.b16 %v2771
        %v3267 = vunpack.c.l.b16 %v2780
        %v3268 = vunpack.c.l.b16 %v2793
        %v3269 = vunpack.c.l.b16 %v2802
        %v3270 = vunpack.c.l.b16 %v2815
        %v3271 = vunpack.c.l.b16 %v2824
        %v3272 = vunpack.c.l.b16 %v2837
        %v3273 = vunpack.c.l.b16 %v2846
        %v3274 = vunpack.c.l.b16 %v2859
        %v3275 = vunpack.c.l.b16 %v2868
        %v3276 = vunpack.c.l.b16 %v2881
        %v3277 = vunpack.c.l.b16 %v2890
        %v3278 = vunpack.c.l.b16 %v2903
        %v3279 = vunpack.c.l.b16 %v2912
        %v3280 = vunpack.c.l.b16 %v2925
        %v3281 = vunpack.c.l.b16 %v2934
        %v3282 = vunpack.c.l.b16 %v2947
        %v3283 = vunpack.c.l.b16 %v2956
        %v3284 = vpack.c.b16 %v3253, %v3252
        %v3285 = vpack.c.b16 %v3255, %v3254
        %v3286 = vpack.c.b16 %v3257, %v3256
        %v3287 = vpack.c.b16 %v3259, %v3258
        %v3288 = vpack.c.b16 %v3261, %v3260
        %v3289 = vpack.c.b16 %v3263, %v3262
        %v3290 = vpack.c.b16 %v3265, %v3264
        %v3291 = vpack.c.b16 %v3267, %v3266
        %v3292 = vpack.c.b16 %v3269, %v3268
        %v3293 = vpack.c.b16 %v3271, %v3270
        %v3294 = vpack.c.b16 %v3273, %v3272
        %v3295 = vpack.c.b16 %v3275, %v3274
        %v3296 = vpack.c.b16 %v3277, %v3276
        %v3297 = vpack.c.b16 %v3279, %v3278
        %v3298 = vpack.c.b16 %v3281, %v3280
        %v3299 = vpack.c.b16 %v3283, %v3282
        %v3301 = vsel %vm700, %v3284, 0
        %v3304 = vsel %vm700, %v3285, 0
        %v3307 = vsel %vm700, %v3286, 0
        %v3310 = vsel %vm700, %v3287, 0
        %v3313 = vsel %vm700, %v3288, 0
        %v3316 = vsel %vm700, %v3289, 0
        %v3319 = vsel %vm700, %v3290, 0
        %v3322 = vsel %vm700, %v3291, 0
        %v3325 = vsel %vm700, %v3292, 0
        %v3328 = vsel %vm700, %v3293, 0
        %v3331 = vsel %vm700, %v3294, 0
        %v3334 = vsel %vm700, %v3295, 0
        %v3337 = vsel %vm700, %v3296, 0
        %v3340 = vsel %vm700, %v3297, 0
        %v3343 = vsel %vm700, %v3298, 0
        %v3346 = vsel %vm700, %v3299, 0
        %v3349 = vsel %vm713, %v2957, 0
        %3351 = vmatprep.subr.bf16.mxu0 0
        %3352 = vmatpush1.bf16.msra.mxu0 %v3349
        %3353 = vmatprep.subr.bf16.mxu0 0
        %3354 = vmatpush1.bf16.msra.mxu0 0
        %3355 = vmatprep.subr.bf16.mxu0 0
        %3356 = vmatpush1.bf16.msra.mxu0 0
        %3357 = vmatprep.subr.bf16.mxu0 0
        %3358 = vmatpush1.bf16.msra.mxu0 0
        %3359 = vmatprep.subr.bf16.mxu0 0
        %3360 = vmatpush1.bf16.msra.mxu0 0
        %3361 = vmatprep.subr.bf16.mxu0 0
        %3362 = vmatpush1.bf16.msra.mxu0 0
        %3363 = vmatprep.subr.bf16.mxu0 0
        %3364 = vmatpush1.bf16.msra.mxu0 0
        %3365 = vmatprep.subr.bf16.mxu0 0
        %3366 = vmatpush1.bf16.msra.mxu0 0
        %3367 = vmatprep.subr.bf16.mxu0 0
        %3368 = vmatpush1.bf16.msra.mxu0 0
        %3369 = vmatprep.subr.bf16.mxu0 0
        %3370 = vmatpush1.bf16.msra.mxu0 0
        %3371 = vmatprep.subr.bf16.mxu0 0
        %3372 = vmatpush1.bf16.msra.mxu0 0
        %3373 = vmatprep.subr.bf16.mxu0 0
        %3374 = vmatpush1.bf16.msra.mxu0 0
        %3375 = vmatprep.subr.bf16.mxu0 0
        %3376 = vmatpush1.bf16.msra.mxu0 0
        %3377 = vmatprep.subr.bf16.mxu0 0
        %3378 = vmatpush1.bf16.msra.mxu0 0
        %3379 = vmatprep.subr.bf16.mxu0 0
        %3380 = vmatpush1.bf16.msra.mxu0 0
        %3381 = vmatprep.subr.bf16.mxu0 0
        %3382 = vmatpush1.bf16.msra.mxu0 0
        %3383 = vmatprep.mubr.bf16.mxu0 0
        %3384 = vmatmul.mubr.bf16.gmra.mrb[0].mxu0 %v3301
        %v3385 = vpop.f32.mrb[0].mxu0
        %v3386 = vadd.f32 %v3126, %v3385
        %v3387 = vpop.f32.mrb[0].mxu0
        %v3388 = vpop.f32.mrb[0].mxu0
        %v3389 = vadd.f32 %v3129, %v3388
        %v3390 = vpop.f32.mrb[0].mxu0
        %3391 = vmatprep.mubr.bf16.mxu0 0
        %3392 = vmatmul.mubr.bf16.gmra.mrb[0].mxu0 %v3304
        %v3393 = vpop.f32.mrb[0].mxu0
        %v3394 = vadd.f32 %v3134, %v3393
        %v3395 = vpop.f32.mrb[0].mxu0
        %v3396 = vpop.f32.mrb[0].mxu0
        %v3397 = vadd.f32 %v3137, %v3396
        %v3398 = vpop.f32.mrb[0].mxu0
        %3399 = vmatprep.mubr.bf16.mxu0 0
        %3400 = vmatmul.mubr.bf16.gmra.mrb[0].mxu0 %v3307
        %v3401 = vpop.f32.mrb[0].mxu0
        %v3402 = vadd.f32 %v3142, %v3401
        %v3403 = vpop.f32.mrb[0].mxu0
        %v3404 = vpop.f32.mrb[0].mxu0
        %v3405 = vadd.f32 %v3145, %v3404
        %v3406 = vpop.f32.mrb[0].mxu0
        %3407 = vmatprep.mubr.bf16.mxu0 0
        %3408 = vmatmul.mubr.bf16.gmra.mrb[0].mxu0 %v3310
        %v3409 = vpop.f32.mrb[0].mxu0
        %v3410 = vadd.f32 %v3150, %v3409
        %v3411 = vpop.f32.mrb[0].mxu0
        %v3412 = vpop.f32.mrb[0].mxu0
        %v3413 = vadd.f32 %v3153, %v3412
        %v3414 = vpop.f32.mrb[0].mxu0
        %3415 = vmatprep.mubr.bf16.mxu0 0
        %3416 = vmatmul.mubr.bf16.gmra.mrb[0].mxu0 %v3313
        %v3417 = vpop.f32.mrb[0].mxu0
        %v3418 = vadd.f32 %v3158, %v3417
        %v3419 = vpop.f32.mrb[0].mxu0
        %v3420 = vpop.f32.mrb[0].mxu0
        %v3421 = vadd.f32 %v3161, %v3420
        %v3422 = vpop.f32.mrb[0].mxu0
        %3423 = vmatprep.mubr.bf16.mxu0 0
        %3424 = vmatmul.mubr.bf16.gmra.mrb[0].mxu0 %v3316
        %v3425 = vpop.f32.mrb[0].mxu0
        %v3426 = vadd.f32 %v3166, %v3425
        %v3427 = vpop.f32.mrb[0].mxu0
        %v3428 = vpop.f32.mrb[0].mxu0
        %v3429 = vadd.f32 %v3169, %v3428
        %v3430 = vpop.f32.mrb[0].mxu0
        %3431 = vmatprep.mubr.bf16.mxu0 0
        %3432 = vmatmul.mubr.bf16.gmra.mrb[0].mxu0 %v3319
        %v3433 = vpop.f32.mrb[0].mxu0
        %v3434 = vadd.f32 %v3174, %v3433
        %v3435 = vpop.f32.mrb[0].mxu0
        %v3436 = vpop.f32.mrb[0].mxu0
        %v3437 = vadd.f32 %v3177, %v3436
        %v3438 = vpop.f32.mrb[0].mxu0
        %3439 = vmatprep.mubr.bf16.mxu0 0
        %3440 = vmatmul.mubr.bf16.gmra.mrb[0].mxu0 %v3322
        %v3441 = vpop.f32.mrb[0].mxu0
        %v3442 = vadd.f32 %v3182, %v3441
        %v3443 = vpop.f32.mrb[0].mxu0
        %v3444 = vpop.f32.mrb[0].mxu0
        %v3445 = vadd.f32 %v3185, %v3444
        %v3446 = vpop.f32.mrb[0].mxu0
        %3447 = vmatprep.mubr.bf16.mxu0 0
        %3448 = vmatmul.mubr.bf16.gmra.mrb[0].mxu0 %v3325
        %v3449 = vpop.f32.mrb[0].mxu0
        %v3450 = vadd.f32 %v3190, %v3449
        %v3451 = vpop.f32.mrb[0].mxu0
        %v3452 = vpop.f32.mrb[0].mxu0
        %v3453 = vadd.f32 %v3193, %v3452
        %v3454 = vpop.f32.mrb[0].mxu0
        %3455 = vmatprep.mubr.bf16.mxu0 0
        %3456 = vmatmul.mubr.bf16.gmra.mrb[0].mxu0 %v3328
        %v3457 = vpop.f32.mrb[0].mxu0
        %v3458 = vadd.f32 %v3198, %v3457
        %v3459 = vpop.f32.mrb[0].mxu0
        %v3460 = vpop.f32.mrb[0].mxu0
        %v3461 = vadd.f32 %v3201, %v3460
        %v3462 = vpop.f32.mrb[0].mxu0
        %3463 = vmatprep.mubr.bf16.mxu0 0
        %3464 = vmatmul.mubr.bf16.gmra.mrb[0].mxu0 %v3331
        %v3465 = vpop.f32.mrb[0].mxu0
        %v3466 = vadd.f32 %v3206, %v3465
        %v3467 = vpop.f32.mrb[0].mxu0
        %v3468 = vpop.f32.mrb[0].mxu0
        %v3469 = vadd.f32 %v3209, %v3468
        %v3470 = vpop.f32.mrb[0].mxu0
        %3471 = vmatprep.mubr.bf16.mxu0 0
        %3472 = vmatmul.mubr.bf16.gmra.mrb[0].mxu0 %v3334
        %v3473 = vpop.f32.mrb[0].mxu0
        %v3474 = vadd.f32 %v3214, %v3473
        %v3475 = vpop.f32.mrb[0].mxu0
        %v3476 = vpop.f32.mrb[0].mxu0
        %v3477 = vadd.f32 %v3217, %v3476
        %v3478 = vpop.f32.mrb[0].mxu0
        %3479 = vmatprep.mubr.bf16.mxu0 0
        %3480 = vmatmul.mubr.bf16.gmra.mrb[0].mxu0 %v3337
        %v3481 = vpop.f32.mrb[0].mxu0
        %v3482 = vadd.f32 %v3222, %v3481
        %v3483 = vpop.f32.mrb[0].mxu0
        %v3484 = vpop.f32.mrb[0].mxu0
        %v3485 = vadd.f32 %v3225, %v3484
        %v3486 = vpop.f32.mrb[0].mxu0
        %3487 = vmatprep.mubr.bf16.mxu0 0
        %3488 = vmatmul.mubr.bf16.gmra.mrb[0].mxu0 %v3340
        %v3489 = vpop.f32.mrb[0].mxu0
        %v3490 = vadd.f32 %v3230, %v3489
        %v3491 = vpop.f32.mrb[0].mxu0
        %v3492 = vpop.f32.mrb[0].mxu0
        %v3493 = vadd.f32 %v3233, %v3492
        %v3494 = vpop.f32.mrb[0].mxu0
        %3495 = vmatprep.mubr.bf16.mxu0 0
        %3496 = vmatmul.mubr.bf16.gmra.mrb[0].mxu0 %v3343
        %v3497 = vpop.f32.mrb[0].mxu0
        %v3498 = vadd.f32 %v3238, %v3497
        %v3499 = vpop.f32.mrb[0].mxu0
        %v3500 = vpop.f32.mrb[0].mxu0
        %v3501 = vadd.f32 %v3241, %v3500
        %v3502 = vpop.f32.mrb[0].mxu0
        %3503 = vmatprep.mubr.bf16.mxu0 0
        %3504 = vmatmul.mubr.bf16.gmra.mrb[0].mxu0 %v3346
        %v3505 = vpop.f32.mrb[0].mxu0
        %v3506 = vadd.f32 %v3246, %v3505
        %v3507 = vpop.f32.mrb[0].mxu0
        %v3508 = vpop.f32.mrb[0].mxu0
        %v3509 = vadd.f32 %v3249, %v3508
        %v3510 = vpop.f32.mrb[0].mxu0
        %3511 = vdwg.mxu0
        %vm3512 = vsmask.f32 3328
        %vm3513 = vsmask.f32 7440
        %vm3514 = vmor %vm3512, %vm3513
        %v3515 = vrot.slane %v2611, 4
        %v3516 = vrot.slane %v2614, 5
        %v3517 = vor.u32 %v3515, %v3516
        %v3518 = vrot.slane %v3517, 4
        %v3519 = vrot.slane %v2623, 5
        %v3520 = vsel %vm3514, %v3518, %v3519
        %v3521 = vrot.slane %v2620, 4
        %v3522 = vor.u32 %v3521, %v3519
        %v3523 = vrot.slane %v3522, 4
        %v3525 = vshll.u32 %v2541, 16
        %v3527 = vrot.slane %v3525, 5
        %v3528 = vsel %vm3514, %v3523, %v3527
        %v3529 = vrot.slane %v2633, 4
        %v3530 = vrot.slane %v2636, 5
        %v3531 = vor.u32 %v3529, %v3530
        %v3532 = vrot.slane %v3531, 4
        %v3533 = vrot.slane %v2645, 5
        %v3534 = vsel %vm3514, %v3532, %v3533
        %v3535 = vrot.slane %v2642, 4
        %v3536 = vor.u32 %v3535, %v3533
        %v3537 = vrot.slane %v3536, 4
        %v3539 = vshll.u32 %v2545, 16
        %v3541 = vrot.slane %v3539, 5
        %v3542 = vsel %vm3514, %v3537, %v3541
        %v3543 = vrot.slane %v2655, 4
        %v3544 = vrot.slane %v2658, 5
        %v3545 = vor.u32 %v3543, %v3544
        %v3546 = vrot.slane %v3545, 4
        %v3547 = vrot.slane %v2667, 5
        %v3548 = vsel %vm3514, %v3546, %v3547
        %v3549 = vrot.slane %v2664, 4
        %v3550 = vor.u32 %v3549, %v3547
        %v3551 = vrot.slane %v3550, 4
        %v3553 = vshll.u32 %v2549, 16
        %v3555 = vrot.slane %v3553, 5
        %v3556 = vsel %vm3514, %v3551, %v3555
        %v3557 = vrot.slane %v2677, 4
        %v3558 = vrot.slane %v2680, 5
        %v3559 = vor.u32 %v3557, %v3558
        %v3560 = vrot.slane %v3559, 4
        %v3561 = vrot.slane %v2689, 5
        %v3562 = vsel %vm3514, %v3560, %v3561
        %v3563 = vrot.slane %v2686, 4
        %v3564 = vor.u32 %v3563, %v3561
        %v3565 = vrot.slane %v3564, 4
        %v3567 = vshll.u32 %v2553, 16
        %v3569 = vrot.slane %v3567, 5
        %v3570 = vsel %vm3514, %v3565, %v3569
        %v3571 = vrot.slane %v2699, 4
        %v3572 = vrot.slane %v2702, 5
        %v3573 = vor.u32 %v3571, %v3572
        %v3574 = vrot.slane %v3573, 4
        %v3575 = vrot.slane %v2711, 5
        %v3576 = vsel %vm3514, %v3574, %v3575
        %v3577 = vrot.slane %v2708, 4
        %v3578 = vor.u32 %v3577, %v3575
        %v3579 = vrot.slane %v3578, 4
        %v3581 = vshll.u32 %v2557, 16
        %v3583 = vrot.slane %v3581, 5
        %v3584 = vsel %vm3514, %v3579, %v3583
        %v3585 = vrot.slane %v2721, 4
        %v3586 = vrot.slane %v2724, 5
        %v3587 = vor.u32 %v3585, %v3586
        %v3588 = vrot.slane %v3587, 4
        %v3589 = vrot.slane %v2733, 5
        %v3590 = vsel %vm3514, %v3588, %v3589
        %v3591 = vrot.slane %v2730, 4
        %v3592 = vor.u32 %v3591, %v3589
        %v3593 = vrot.slane %v3592, 4
        %v3595 = vshll.u32 %v2561, 16
        %v3597 = vrot.slane %v3595, 5
        %v3598 = vsel %vm3514, %v3593, %v3597
        %v3599 = vrot.slane %v2743, 4
        %v3600 = vrot.slane %v2746, 5
        %v3601 = vor.u32 %v3599, %v3600
        %v3602 = vrot.slane %v3601, 4
        %v3603 = vrot.slane %v2755, 5
        %v3604 = vsel %vm3514, %v3602, %v3603
        %v3605 = vrot.slane %v2752, 4
        %v3606 = vor.u32 %v3605, %v3603
        %v3607 = vrot.slane %v3606, 4
        %v3609 = vshll.u32 %v2565, 16
        %v3611 = vrot.slane %v3609, 5
        %v3612 = vsel %vm3514, %v3607, %v3611
        %v3613 = vrot.slane %v2765, 4
        %v3614 = vrot.slane %v2768, 5
        %v3615 = vor.u32 %v3613, %v3614
        %v3616 = vrot.slane %v3615, 4
        %v3617 = vrot.slane %v2777, 5
        %v3618 = vsel %vm3514, %v3616, %v3617
        %v3619 = vrot.slane %v2774, 4
        %v3620 = vor.u32 %v3619, %v3617
        %v3621 = vrot.slane %v3620, 4
        %v3623 = vshll.u32 %v2569, 16
        %v3625 = vrot.slane %v3623, 5
        %v3626 = vsel %vm3514, %v3621, %v3625
        %v3627 = vrot.slane %v2787, 4
        %v3628 = vrot.slane %v2790, 5
        %v3629 = vor.u32 %v3627, %v3628
        %v3630 = vrot.slane %v3629, 4
        %v3631 = vrot.slane %v2799, 5
        %v3632 = vsel %vm3514, %v3630, %v3631
        %v3633 = vrot.slane %v2796, 4
        %v3634 = vor.u32 %v3633, %v3631
        %v3635 = vrot.slane %v3634, 4
        %v3637 = vshll.u32 %v2573, 16
        %v3639 = vrot.slane %v3637, 5
        %v3640 = vsel %vm3514, %v3635, %v3639
        %v3641 = vrot.slane %v2809, 4
        %v3642 = vrot.slane %v2812, 5
        %v3643 = vor.u32 %v3641, %v3642
        %v3644 = vrot.slane %v3643, 4
        %v3645 = vrot.slane %v2821, 5
        %v3646 = vsel %vm3514, %v3644, %v3645
        %v3647 = vrot.slane %v2818, 4
        %v3648 = vor.u32 %v3647, %v3645
        %v3649 = vrot.slane %v3648, 4
        %v3651 = vshll.u32 %v2577, 16
        %v3653 = vrot.slane %v3651, 5
        %v3654 = vsel %vm3514, %v3649, %v3653
        %v3655 = vrot.slane %v2831, 4
        %v3656 = vrot.slane %v2834, 5
        %v3657 = vor.u32 %v3655, %v3656
        %v3658 = vrot.slane %v3657, 4
        %v3659 = vrot.slane %v2843, 5
        %v3660 = vsel %vm3514, %v3658, %v3659
        %v3661 = vrot.slane %v2840, 4
        %v3662 = vor.u32 %v3661, %v3659
        %v3663 = vrot.slane %v3662, 4
        %v3665 = vshll.u32 %v2581, 16
        %v3667 = vrot.slane %v3665, 5
        %v3668 = vsel %vm3514, %v3663, %v3667
        %v3669 = vrot.slane %v2853, 4
        %v3670 = vrot.slane %v2856, 5
        %v3671 = vor.u32 %v3669, %v3670
        %v3672 = vrot.slane %v3671, 4
        %v3673 = vrot.slane %v2865, 5
        %v3674 = vsel %vm3514, %v3672, %v3673
        %v3675 = vrot.slane %v2862, 4
        %v3676 = vor.u32 %v3675, %v3673
        %v3677 = vrot.slane %v3676, 4
        %v3679 = vshll.u32 %v2585, 16
        %v3681 = vrot.slane %v3679, 5
        %v3682 = vsel %vm3514, %v3677, %v3681
        %v3683 = vrot.slane %v2875, 4
        %v3684 = vrot.slane %v2878, 5
        %v3685 = vor.u32 %v3683, %v3684
        %v3686 = vrot.slane %v3685, 4
        %v3687 = vrot.slane %v2887, 5
        %v3688 = vsel %vm3514, %v3686, %v3687
        %v3689 = vrot.slane %v2884, 4
        %v3690 = vor.u32 %v3689, %v3687
        %v3691 = vrot.slane %v3690, 4
        %v3693 = vshll.u32 %v2589, 16
        %v3695 = vrot.slane %v3693, 5
        %v3696 = vsel %vm3514, %v3691, %v3695
        %v3697 = vrot.slane %v2897, 4
        %v3698 = vrot.slane %v2900, 5
        %v3699 = vor.u32 %v3697, %v3698
        %v3700 = vrot.slane %v3699, 4
        %v3701 = vrot.slane %v2909, 5
        %v3702 = vsel %vm3514, %v3700, %v3701
        %v3703 = vrot.slane %v2906, 4
        %v3704 = vor.u32 %v3703, %v3701
        %v3705 = vrot.slane %v3704, 4
        %v3707 = vshll.u32 %v2593, 16
        %v3709 = vrot.slane %v3707, 5
        %v3710 = vsel %vm3514, %v3705, %v3709
        %v3711 = vrot.slane %v2919, 4
        %v3712 = vrot.slane %v2922, 5
        %v3713 = vor.u32 %v3711, %v3712
        %v3714 = vrot.slane %v3713, 4
        %v3715 = vrot.slane %v2931, 5
        %v3716 = vsel %vm3514, %v3714, %v3715
        %v3717 = vrot.slane %v2928, 4
        %v3718 = vor.u32 %v3717, %v3715
        %v3719 = vrot.slane %v3718, 4
        %v3721 = vshll.u32 %v2597, 16
        %v3723 = vrot.slane %v3721, 5
        %v3724 = vsel %vm3514, %v3719, %v3723
        %v3725 = vrot.slane %v2941, 4
        %v3726 = vrot.slane %v2944, 5
        %v3727 = vor.u32 %v3725, %v3726
        %v3728 = vrot.slane %v3727, 4
        %v3729 = vrot.slane %v2953, 5
        %v3730 = vsel %vm3514, %v3728, %v3729
        %v3731 = vrot.slane %v2950, 4
        %v3732 = vor.u32 %v3731, %v3729
        %v3733 = vrot.slane %v3732, 4
        %v3735 = vshll.u32 %v2601, 16
        %v3737 = vrot.slane %v3735, 5
        %v3738 = vsel %vm3514, %v3733, %v3737
        %s3739 = scalar_lea.vmem %s6, 4
        %v3740 = vld [vmem:[%s3739] sm:$0x3]
        %v3741 = vunpack.c.l.b16 %v3520
        %v3742 = vunpack.c.l.b16 %v3528
        %v3743 = vunpack.c.l.b16 %v3534
        %v3744 = vunpack.c.l.b16 %v3542
        %v3745 = vunpack.c.l.b16 %v3548
        %v3746 = vunpack.c.l.b16 %v3556
        %v3747 = vunpack.c.l.b16 %v3562
        %v3748 = vunpack.c.l.b16 %v3570
        %v3749 = vunpack.c.l.b16 %v3576
        %v3750 = vunpack.c.l.b16 %v3584
        %v3751 = vunpack.c.l.b16 %v3590
        %v3752 = vunpack.c.l.b16 %v3598
        %v3753 = vunpack.c.l.b16 %v3604
        %v3754 = vunpack.c.l.b16 %v3612
        %v3755 = vunpack.c.l.b16 %v3618
        %v3756 = vunpack.c.l.b16 %v3626
        %v3757 = vunpack.c.l.b16 %v3632
        %v3758 = vunpack.c.l.b16 %v3640
        %v3759 = vunpack.c.l.b16 %v3646
        %v3760 = vunpack.c.l.b16 %v3654
        %v3761 = vunpack.c.l.b16 %v3660
        %v3762 = vunpack.c.l.b16 %v3668
        %v3763 = vunpack.c.l.b16 %v3674
        %v3764 = vunpack.c.l.b16 %v3682
        %v3765 = vunpack.c.l.b16 %v3688
        %v3766 = vunpack.c.l.b16 %v3696
        %v3767 = vunpack.c.l.b16 %v3702
        %v3768 = vunpack.c.l.b16 %v3710
        %v3769 = vunpack.c.l.b16 %v3716
        %v3770 = vunpack.c.l.b16 %v3724
        %v3771 = vunpack.c.l.b16 %v3730
        %v3772 = vunpack.c.l.b16 %v3738
        %v3773 = vpack.c.b16 %v3742, %v3741
        %v3774 = vpack.c.b16 %v3744, %v3743
        %v3775 = vpack.c.b16 %v3746, %v3745
        %v3776 = vpack.c.b16 %v3748, %v3747
        %v3777 = vpack.c.b16 %v3750, %v3749
        %v3778 = vpack.c.b16 %v3752, %v3751
        %v3779 = vpack.c.b16 %v3754, %v3753
        %v3780 = vpack.c.b16 %v3756, %v3755
        %v3781 = vpack.c.b16 %v3758, %v3757
        %v3782 = vpack.c.b16 %v3760, %v3759
        %v3783 = vpack.c.b16 %v3762, %v3761
        %v3784 = vpack.c.b16 %v3764, %v3763
        %v3785 = vpack.c.b16 %v3766, %v3765
        %v3786 = vpack.c.b16 %v3768, %v3767
        %v3787 = vpack.c.b16 %v3770, %v3769
        %v3788 = vpack.c.b16 %v3772, %v3771
        %v3790 = vsel %vm700, %v3773, 0
        %v3793 = vsel %vm700, %v3774, 0
        %v3796 = vsel %vm700, %v3775, 0
        %v3799 = vsel %vm700, %v3776, 0
        %v3802 = vsel %vm700, %v3777, 0
        %v3805 = vsel %vm700, %v3778, 0
        %v3808 = vsel %vm700, %v3779, 0
        %v3811 = vsel %vm700, %v3780, 0
        %v3814 = vsel %vm700, %v3781, 0
        %v3817 = vsel %vm700, %v3782, 0
        %v3820 = vsel %vm700, %v3783, 0
        %v3823 = vsel %vm700, %v3784, 0
        %v3826 = vsel %vm700, %v3785, 0
        %v3829 = vsel %vm700, %v3786, 0
        %v3832 = vsel %vm700, %v3787, 0
        %v3835 = vsel %vm700, %v3788, 0
        %v3838 = vsel %vm713, %v3740, 0
        %3840 = vmatprep.subr.bf16.mxu0 0
        %3841 = vmatpush1.bf16.msra.mxu0 %v3838
        %3842 = vmatprep.subr.bf16.mxu0 0
        %3843 = vmatpush1.bf16.msra.mxu0 0
        %3844 = vmatprep.subr.bf16.mxu0 0
        %3845 = vmatpush1.bf16.msra.mxu0 0
        %3846 = vmatprep.subr.bf16.mxu0 0
        %3847 = vmatpush1.bf16.msra.mxu0 0
        %3848 = vmatprep.subr.bf16.mxu0 0
        %3849 = vmatpush1.bf16.msra.mxu0 0
        %3850 = vmatprep.subr.bf16.mxu0 0
        %3851 = vmatpush1.bf16.msra.mxu0 0
        %3852 = vmatprep.subr.bf16.mxu0 0
        %3853 = vmatpush1.bf16.msra.mxu0 0
        %3854 = vmatprep.subr.bf16.mxu0 0
        %3855 = vmatpush1.bf16.msra.mxu0 0
        %3856 = vmatprep.subr.bf16.mxu0 0
        %3857 = vmatpush1.bf16.msra.mxu0 0
        %3858 = vmatprep.subr.bf16.mxu0 0
        %3859 = vmatpush1.bf16.msra.mxu0 0
        %3860 = vmatprep.subr.bf16.mxu0 0
        %3861 = vmatpush1.bf16.msra.mxu0 0
        %3862 = vmatprep.subr.bf16.mxu0 0
        %3863 = vmatpush1.bf16.msra.mxu0 0
        %3864 = vmatprep.subr.bf16.mxu0 0
        %3865 = vmatpush1.bf16.msra.mxu0 0
        %3866 = vmatprep.subr.bf16.mxu0 0
        %3867 = vmatpush1.bf16.msra.mxu0 0
        %3868 = vmatprep.subr.bf16.mxu0 0
        %3869 = vmatpush1.bf16.msra.mxu0 0
        %3870 = vmatprep.subr.bf16.mxu0 0
        %3871 = vmatpush1.bf16.msra.mxu0 0
        %3872 = vmatprep.mubr.bf16.mxu0 0
        %3873 = vmatmul.mubr.bf16.gmra.mrb[0].mxu0 %v3790
        %v3874 = vpop.f32.mrb[0].mxu0
        %v3875 = vadd.f32 0.0, %v3874
        %v3876 = vpop.f32.mrb[0].mxu0
        %v3877 = vpop.f32.mrb[0].mxu0
        %v3878 = vadd.f32 0.0, %v3877
        %v3879 = vpop.f32.mrb[0].mxu0
        %3880 = vmatprep.mubr.bf16.mxu0 0
        %3881 = vmatmul.mubr.bf16.gmra.mrb[0].mxu0 %v3793
        %v3882 = vpop.f32.mrb[0].mxu0
        %v3883 = vadd.f32 0.0, %v3882
        %v3884 = vpop.f32.mrb[0].mxu0
        %v3885 = vpop.f32.mrb[0].mxu0
        %v3886 = vadd.f32 0.0, %v3885
        %v3887 = vpop.f32.mrb[0].mxu0
        %3888 = vmatprep.mubr.bf16.mxu0 0
        %3889 = vmatmul.mubr.bf16.gmra.mrb[0].mxu0 %v3796
        %v3890 = vpop.f32.mrb[0].mxu0
        %v3891 = vadd.f32 0.0, %v3890
        %v3892 = vpop.f32.mrb[0].mxu0
        %v3893 = vpop.f32.mrb[0].mxu0
        %v3894 = vadd.f32 0.0, %v3893
        %v3895 = vpop.f32.mrb[0].mxu0
        %3896 = vmatprep.mubr.bf16.mxu0 0
        %3897 = vmatmul.mubr.bf16.gmra.mrb[0].mxu0 %v3799
        %v3898 = vpop.f32.mrb[0].mxu0
        %v3899 = vadd.f32 0.0, %v3898
        %v3900 = vpop.f32.mrb[0].mxu0
        %v3901 = vpop.f32.mrb[0].mxu0
        %v3902 = vadd.f32 0.0, %v3901
        %v3903 = vpop.f32.mrb[0].mxu0
        %3904 = vmatprep.mubr.bf16.mxu0 0
        %3905 = vmatmul.mubr.bf16.gmra.mrb[0].mxu0 %v3802
        %v3906 = vpop.f32.mrb[0].mxu0
        %v3907 = vadd.f32 0.0, %v3906
        %v3908 = vpop.f32.mrb[0].mxu0
        %v3909 = vpop.f32.mrb[0].mxu0
        %v3910 = vadd.f32 0.0, %v3909
        %v3911 = vpop.f32.mrb[0].mxu0
        %3912 = vmatprep.mubr.bf16.mxu0 0
        %3913 = vmatmul.mubr.bf16.gmra.mrb[0].mxu0 %v3805
        %v3914 = vpop.f32.mrb[0].mxu0
        %v3915 = vadd.f32 0.0, %v3914
        %v3916 = vpop.f32.mrb[0].mxu0
        %v3917 = vpop.f32.mrb[0].mxu0
        %v3918 = vadd.f32 0.0, %v3917
        %v3919 = vpop.f32.mrb[0].mxu0
        %3920 = vmatprep.mubr.bf16.mxu0 0
        %3921 = vmatmul.mubr.bf16.gmra.mrb[0].mxu0 %v3808
        %v3922 = vpop.f32.mrb[0].mxu0
        %v3923 = vadd.f32 0.0, %v3922
        %v3924 = vpop.f32.mrb[0].mxu0
        %v3925 = vpop.f32.mrb[0].mxu0
        %v3926 = vadd.f32 0.0, %v3925
        %v3927 = vpop.f32.mrb[0].mxu0
        %3928 = vmatprep.mubr.bf16.mxu0 0
        %3929 = vmatmul.mubr.bf16.gmra.mrb[0].mxu0 %v3811
        %v3930 = vpop.f32.mrb[0].mxu0
        %v3931 = vadd.f32 0.0, %v3930
        %v3932 = vpop.f32.mrb[0].mxu0
        %v3933 = vpop.f32.mrb[0].mxu0
        %v3934 = vadd.f32 0.0, %v3933
        %v3935 = vpop.f32.mrb[0].mxu0
        %3936 = vmatprep.mubr.bf16.mxu0 0
        %3937 = vmatmul.mubr.bf16.gmra.mrb[0].mxu0 %v3814
        %v3938 = vpop.f32.mrb[0].mxu0
        %v3939 = vadd.f32 0.0, %v3938
        %v3940 = vpop.f32.mrb[0].mxu0
        %v3941 = vpop.f32.mrb[0].mxu0
        %v3942 = vadd.f32 0.0, %v3941
        %v3943 = vpop.f32.mrb[0].mxu0
        %3944 = vmatprep.mubr.bf16.mxu0 0
        %3945 = vmatmul.mubr.bf16.gmra.mrb[0].mxu0 %v3817
        %v3946 = vpop.f32.mrb[0].mxu0
        %v3947 = vadd.f32 0.0, %v3946
        %v3948 = vpop.f32.mrb[0].mxu0
        %v3949 = vpop.f32.mrb[0].mxu0
        %v3950 = vadd.f32 0.0, %v3949
        %v3951 = vpop.f32.mrb[0].mxu0
        %3952 = vmatprep.mubr.bf16.mxu0 0
        %3953 = vmatmul.mubr.bf16.gmra.mrb[0].mxu0 %v3820
        %v3954 = vpop.f32.mrb[0].mxu0
        %v3955 = vadd.f32 0.0, %v3954
        %v3956 = vpop.f32.mrb[0].mxu0
        %v3957 = vpop.f32.mrb[0].mxu0
        %v3958 = vadd.f32 0.0, %v3957
        %v3959 = vpop.f32.mrb[0].mxu0
        %3960 = vmatprep.mubr.bf16.mxu0 0
        %3961 = vmatmul.mubr.bf16.gmra.mrb[0].mxu0 %v3823
        %v3962 = vpop.f32.mrb[0].mxu0
        %v3963 = vadd.f32 0.0, %v3962
        %v3964 = vpop.f32.mrb[0].mxu0
        %v3965 = vpop.f32.mrb[0].mxu0
        %v3966 = vadd.f32 0.0, %v3965
        %v3967 = vpop.f32.mrb[0].mxu0
        %3968 = vmatprep.mubr.bf16.mxu0 0
        %3969 = vmatmul.mubr.bf16.gmra.mrb[0].mxu0 %v3826
        %v3970 = vpop.f32.mrb[0].mxu0
        %v3971 = vadd.f32 0.0, %v3970
        %v3972 = vpop.f32.mrb[0].mxu0
        %v3973 = vpop.f32.mrb[0].mxu0
        %v3974 = vadd.f32 0.0, %v3973
        %v3975 = vpop.f32.mrb[0].mxu0
        %3976 = vmatprep.mubr.bf16.mxu0 0
        %3977 = vmatmul.mubr.bf16.gmra.mrb[0].mxu0 %v3829
        %v3978 = vpop.f32.mrb[0].mxu0
        %v3979 = vadd.f32 0.0, %v3978
        %v3980 = vpop.f32.mrb[0].mxu0
        %v3981 = vpop.f32.mrb[0].mxu0
        %v3982 = vadd.f32 0.0, %v3981
        %v3983 = vpop.f32.mrb[0].mxu0
        %3984 = vmatprep.mubr.bf16.mxu0 0
        %3985 = vmatmul.mubr.bf16.gmra.mrb[0].mxu0 %v3832
        %v3986 = vpop.f32.mrb[0].mxu0
        %v3987 = vadd.f32 0.0, %v3986
        %v3988 = vpop.f32.mrb[0].mxu0
        %v3989 = vpop.f32.mrb[0].mxu0
        %v3990 = vadd.f32 0.0, %v3989
        %v3991 = vpop.f32.mrb[0].mxu0
        %3992 = vmatprep.mubr.bf16.mxu0 0
        %3993 = vmatmul.mubr.bf16.gmra.mrb[0].mxu0 %v3835
        %v3994 = vpop.f32.mrb[0].mxu0
        %v3995 = vadd.f32 0.0, %v3994
        %v3996 = vpop.f32.mrb[0].mxu0
        %v3997 = vpop.f32.mrb[0].mxu0
        %v3998 = vadd.f32 0.0, %v3997
        %v3999 = vpop.f32.mrb[0].mxu0
        %4000 = vdwg.mxu0
        %v4001 = vadd.f32 %v3386, %v3875
        %v4002 = vadd.f32 %v3389, %v3878
        %v4003 = vadd.f32 %v3394, %v3883
        %v4004 = vadd.f32 %v3397, %v3886
        %v4005 = vadd.f32 %v3402, %v3891
        %v4006 = vadd.f32 %v3405, %v3894
        %v4007 = vadd.f32 %v3410, %v3899
        %v4008 = vadd.f32 %v3413, %v3902
        %v4009 = vadd.f32 %v3418, %v3907
        %v4010 = vadd.f32 %v3421, %v3910
        %v4011 = vadd.f32 %v3426, %v3915
        %v4012 = vadd.f32 %v3429, %v3918
        %v4013 = vadd.f32 %v3434, %v3923
        %v4014 = vadd.f32 %v3437, %v3926
        %v4015 = vadd.f32 %v3442, %v3931
        %v4016 = vadd.f32 %v3445, %v3934
        %v4017 = vadd.f32 %v3450, %v3939
        %v4018 = vadd.f32 %v3453, %v3942
        %v4019 = vadd.f32 %v3458, %v3947
        %v4020 = vadd.f32 %v3461, %v3950
        %v4021 = vadd.f32 %v3466, %v3955
        %v4022 = vadd.f32 %v3469, %v3958
        %v4023 = vadd.f32 %v3474, %v3963
        %v4024 = vadd.f32 %v3477, %v3966
        %v4025 = vadd.f32 %v3482, %v3971
        %v4026 = vadd.f32 %v3485, %v3974
        %v4027 = vadd.f32 %v3490, %v3979
        %v4028 = vadd.f32 %v3493, %v3982
        %v4029 = vadd.f32 %v3498, %v3987
        %v4030 = vadd.f32 %v3501, %v3990
        %v4031 = vadd.f32 %v3506, %v3995
        %v4032 = vadd.f32 %v3509, %v3998
        %v4033 = vld [vmem:[%s1253 + $0x4] sm:$0xf]
        %v4034 = vld [vmem:[%s1253 + $0x8] sm:$0xf]
        %v4035 = vld [vmem:[%s1253 + $0xc] sm:$0xf]
        %v4036 = vld [vmem:[%s1253 + $0x10] sm:$0xf]
        %v4037 = vld [vmem:[%s1253 + $0x18] sm:$0xf]
        %v4038 = vld [vmem:[%s1253 + $0x1c] sm:$0xf]
        %v4039 = vld [vmem:[%s1253 + $0x20] sm:$0xf]
        %v4040 = vld [vmem:[%s1253 + $0x24] sm:$0xf]
        %v4041 = vld [vmem:[%s1253 + $0x2c] sm:$0xf]
        %v4042 = vld [vmem:[%s1253 + $0x30] sm:$0xf]
        %v4043 = vld [vmem:[%s1253 + $0x34] sm:$0xf]
        %v4044 = vld [vmem:[%s1253 + $0x38] sm:$0xf]
        %v4045 = vld [vmem:[%s1253 + $0x40] sm:$0xf]
        %v4046 = vld [vmem:[%s1253 + $0x44] sm:$0xf]
        %v4047 = vld [vmem:[%s1253 + $0x48] sm:$0xf]
        %v4048 = vld [vmem:[%s1253 + $0x4c] sm:$0xf]
        %v4049 = vld [vmem:[%s1253 + $0x54] sm:$0xf]
        %v4050 = vld [vmem:[%s1253 + $0x58] sm:$0xf]
        %v4051 = vld [vmem:[%s1253 + $0x5c] sm:$0xf]
        %v4052 = vld [vmem:[%s1253 + $0x60] sm:$0xf]
        %v4053 = vld [vmem:[%s1253 + $0x68] sm:$0xf]
        %v4054 = vld [vmem:[%s1253 + $0x6c] sm:$0xf]
        %v4055 = vld [vmem:[%s1253 + $0x70] sm:$0xf]
        %v4056 = vld [vmem:[%s1253 + $0x74] sm:$0xf]
        %v4057 = vld [vmem:[%s1253 + $0x7c] sm:$0xf]
        %v4058 = vld [vmem:[%s1253 + $0x80] sm:$0xf]
        %v4059 = vld [vmem:[%s1253 + $0x84] sm:$0xf]
        %v4060 = vld [vmem:[%s1253 + $0x88] sm:$0xf]
        %v4061 = vld [vmem:[%s1253 + $0x90] sm:$0xf]
        %v4062 = vld [vmem:[%s1253 + $0x94] sm:$0xf]
        %v4063 = vld [vmem:[%s1253 + $0x98] sm:$0xf]
        %v4064 = vld [vmem:[%s1253 + $0x9c] sm:$0xf]
        %v4065 = vld [vmem:[%s1253 + $0xa4] sm:$0xf]
        %v4066 = vld [vmem:[%s1253 + $0xa8] sm:$0xf]
        %v4067 = vld [vmem:[%s1253 + $0xac] sm:$0xf]
        %v4068 = vld [vmem:[%s1253 + $0xb0] sm:$0xf]
        %v4069 = vld [vmem:[%s1253 + $0xb8] sm:$0xf]
        %v4070 = vld [vmem:[%s1253 + $0xbc] sm:$0xf]
        %v4071 = vld [vmem:[%s1253 + $0xc0] sm:$0xf]
        %v4072 = vld [vmem:[%s1253 + $0xc4] sm:$0xf]
        %v4073 = vld [vmem:[%s1253 + $0xcc] sm:$0xf]
        %v4074 = vld [vmem:[%s1253 + $0xd0] sm:$0xf]
        %v4075 = vld [vmem:[%s1253 + $0xd4] sm:$0xf]
        %v4076 = vld [vmem:[%s1253 + $0xd8] sm:$0xf]
        %v4077 = vld [vmem:[%s1253 + $0xe0] sm:$0xf]
        %v4078 = vld [vmem:[%s1253 + $0xe4] sm:$0xf]
        %v4079 = vld [vmem:[%s1253 + $0xe8] sm:$0xf]
        %v4080 = vld [vmem:[%s1253 + $0xec] sm:$0xf]
        %v4081 = vld [vmem:[%s1253 + $0xf4] sm:$0xf]
        %v4082 = vld [vmem:[%s1253 + $0xf8] sm:$0xf]
        %v4083 = vld [vmem:[%s1253 + $0xfc] sm:$0xf]
        %v4084 = vld [vmem:[%s1253 + $0x100] sm:$0xf]
        %v4085 = vld [vmem:[%s1253 + $0x108] sm:$0xf]
        %v4086 = vld [vmem:[%s1253 + $0x10c] sm:$0xf]
        %v4087 = vld [vmem:[%s1253 + $0x110] sm:$0xf]
        %v4088 = vld [vmem:[%s1253 + $0x114] sm:$0xf]
        %v4089 = vld [vmem:[%s1253 + $0x11c] sm:$0xf]
        %v4090 = vld [vmem:[%s1253 + $0x120] sm:$0xf]
        %v4091 = vld [vmem:[%s1253 + $0x124] sm:$0xf]
        %v4092 = vld [vmem:[%s1253 + $0x128] sm:$0xf]
        %v4093 = vld [vmem:[%s1253 + $0x130] sm:$0xf]
        %v4094 = vld [vmem:[%s1253 + $0x134] sm:$0xf]
        %v4095 = vld [vmem:[%s1253 + $0x138] sm:$0xf]
        %v4096 = vld [vmem:[%s1253 + $0x13c] sm:$0xf]
        %v4145 = vunpack.c.l.b16 %v4033
        %v4146 = vunpack.c.l.b16 %v4034
        %v4147 = vunpack.c.l.b16 %v4035
        %v4148 = vunpack.c.l.b16 %v4037
        %v4149 = vunpack.c.l.b16 %v4038
        %v4150 = vunpack.c.l.b16 %v4039
        %v4151 = vunpack.c.l.b16 %v4041
        %v4152 = vunpack.c.l.b16 %v4042
        %v4153 = vunpack.c.l.b16 %v4043
        %v4154 = vunpack.c.l.b16 %v4045
        %v4155 = vunpack.c.l.b16 %v4046
        %v4156 = vunpack.c.l.b16 %v4047
        %v4157 = vunpack.c.l.b16 %v4049
        %v4158 = vunpack.c.l.b16 %v4050
        %v4159 = vunpack.c.l.b16 %v4051
        %v4160 = vunpack.c.l.b16 %v4053
        %v4161 = vunpack.c.l.b16 %v4054
        %v4162 = vunpack.c.l.b16 %v4055
        %v4163 = vunpack.c.l.b16 %v4057
        %v4164 = vunpack.c.l.b16 %v4058
        %v4165 = vunpack.c.l.b16 %v4059
        %v4166 = vunpack.c.l.b16 %v4061
        %v4167 = vunpack.c.l.b16 %v4062
        %v4168 = vunpack.c.l.b16 %v4063
        %v4169 = vunpack.c.l.b16 %v4065
        %v4170 = vunpack.c.l.b16 %v4066
        %v4171 = vunpack.c.l.b16 %v4067
        %v4172 = vunpack.c.l.b16 %v4069
        %v4173 = vunpack.c.l.b16 %v4070
        %v4174 = vunpack.c.l.b16 %v4071
        %v4175 = vunpack.c.l.b16 %v4073
        %v4176 = vunpack.c.l.b16 %v4074
        %v4177 = vunpack.c.l.b16 %v4075
        %v4178 = vunpack.c.l.b16 %v4077
        %v4179 = vunpack.c.l.b16 %v4078
        %v4180 = vunpack.c.l.b16 %v4079
        %v4181 = vunpack.c.l.b16 %v4081
        %v4182 = vunpack.c.l.b16 %v4082
        %v4183 = vunpack.c.l.b16 %v4083
        %v4184 = vunpack.c.l.b16 %v4085
        %v4185 = vunpack.c.l.b16 %v4086
        %v4186 = vunpack.c.l.b16 %v4087
        %v4187 = vunpack.c.l.b16 %v4089
        %v4188 = vunpack.c.l.b16 %v4090
        %v4189 = vunpack.c.l.b16 %v4091
        %v4190 = vunpack.c.l.b16 %v4093
        %v4191 = vunpack.c.l.b16 %v4094
        %v4192 = vunpack.c.l.b16 %v4095
        %v4193 = vpack.c.b16 %v4146, %v4145
        %v4194 = vpack.c.b16 %v4147, %v4147
        %v4195 = vpack.c.b16 %v4149, %v4148
        %v4196 = vpack.c.b16 %v4150, %v4150
        %v4197 = vpack.c.b16 %v4152, %v4151
        %v4198 = vpack.c.b16 %v4153, %v4153
        %v4199 = vpack.c.b16 %v4155, %v4154
        %v4200 = vpack.c.b16 %v4156, %v4156
        %v4201 = vpack.c.b16 %v4158, %v4157
        %v4202 = vpack.c.b16 %v4159, %v4159
        %v4203 = vpack.c.b16 %v4161, %v4160
        %v4204 = vpack.c.b16 %v4162, %v4162
        %v4205 = vpack.c.b16 %v4164, %v4163
        %v4206 = vpack.c.b16 %v4165, %v4165
        %v4207 = vpack.c.b16 %v4167, %v4166
        %v4208 = vpack.c.b16 %v4168, %v4168
        %v4209 = vpack.c.b16 %v4170, %v4169
        %v4210 = vpack.c.b16 %v4171, %v4171
        %v4211 = vpack.c.b16 %v4173, %v4172
        %v4212 = vpack.c.b16 %v4174, %v4174
        %v4213 = vpack.c.b16 %v4176, %v4175
        %v4214 = vpack.c.b16 %v4177, %v4177
        %v4215 = vpack.c.b16 %v4179, %v4178
        %v4216 = vpack.c.b16 %v4180, %v4180
        %v4217 = vpack.c.b16 %v4182, %v4181
        %v4218 = vpack.c.b16 %v4183, %v4183
        %v4219 = vpack.c.b16 %v4185, %v4184
        %v4220 = vpack.c.b16 %v4186, %v4186
        %v4221 = vpack.c.b16 %v4188, %v4187
        %v4222 = vpack.c.b16 %v4189, %v4189
        %v4223 = vpack.c.b16 %v4191, %v4190
        %v4224 = vpack.c.b16 %v4192, %v4192
        %v4225 = vpack.c.b16 %v4147, %v4146
        %v4226 = vpack.c.b16 %v4150, %v4149
        %v4227 = vpack.c.b16 %v4153, %v4152
        %v4228 = vpack.c.b16 %v4156, %v4155
        %v4229 = vpack.c.b16 %v4159, %v4158
        %v4230 = vpack.c.b16 %v4162, %v4161
        %v4231 = vpack.c.b16 %v4165, %v4164
        %v4232 = vpack.c.b16 %v4168, %v4167
        %v4233 = vpack.c.b16 %v4171, %v4170
        %v4234 = vpack.c.b16 %v4174, %v4173
        %v4235 = vpack.c.b16 %v4177, %v4176
        %v4236 = vpack.c.b16 %v4180, %v4179
        %v4237 = vpack.c.b16 %v4183, %v4182
        %v4238 = vpack.c.b16 %v4186, %v4185
        %v4239 = vpack.c.b16 %v4189, %v4188
        %v4240 = vpack.c.b16 %v4192, %v4191
        %v4242 = vshrl.u32 %v4225, 16
        %v4244 = vrot.slane %v4242, 4
        %v4245 = vshll.u32 %v4225, 16
        %v4247 = vrot.slane %v4245, 5
        %v4248 = vor.u32 %v4244, %v4247
        %v4250 = vshrl.u32 %v4226, 16
        %v4252 = vrot.slane %v4250, 4
        %v4253 = vshll.u32 %v4226, 16
        %v4255 = vrot.slane %v4253, 5
        %v4256 = vor.u32 %v4252, %v4255
        %v4258 = vshrl.u32 %v4227, 16
        %v4260 = vrot.slane %v4258, 4
        %v4261 = vshll.u32 %v4227, 16
        %v4263 = vrot.slane %v4261, 5
        %v4264 = vor.u32 %v4260, %v4263
        %v4266 = vshrl.u32 %v4228, 16
        %v4268 = vrot.slane %v4266, 4
        %v4269 = vshll.u32 %v4228, 16
        %v4271 = vrot.slane %v4269, 5
        %v4272 = vor.u32 %v4268, %v4271
        %v4274 = vshrl.u32 %v4229, 16
        %v4276 = vrot.slane %v4274, 4
        %v4277 = vshll.u32 %v4229, 16
        %v4279 = vrot.slane %v4277, 5
        %v4280 = vor.u32 %v4276, %v4279
        %v4282 = vshrl.u32 %v4230, 16
        %v4284 = vrot.slane %v4282, 4
        %v4285 = vshll.u32 %v4230, 16
        %v4287 = vrot.slane %v4285, 5
        %v4288 = vor.u32 %v4284, %v4287
        %v4290 = vshrl.u32 %v4231, 16
        %v4292 = vrot.slane %v4290, 4
        %v4293 = vshll.u32 %v4231, 16
        %v4295 = vrot.slane %v4293, 5
        %v4296 = vor.u32 %v4292, %v4295
        %v4298 = vshrl.u32 %v4232, 16
        %v4300 = vrot.slane %v4298, 4
        %v4301 = vshll.u32 %v4232, 16
        %v4303 = vrot.slane %v4301, 5
        %v4304 = vor.u32 %v4300, %v4303
        %v4306 = vshrl.u32 %v4233, 16
        %v4308 = vrot.slane %v4306, 4
        %v4309 = vshll.u32 %v4233, 16
        %v4311 = vrot.slane %v4309, 5
        %v4312 = vor.u32 %v4308, %v4311
        %v4314 = vshrl.u32 %v4234, 16
        %v4316 = vrot.slane %v4314, 4
        %v4317 = vshll.u32 %v4234, 16
        %v4319 = vrot.slane %v4317, 5
        %v4320 = vor.u32 %v4316, %v4319
        %v4322 = vshrl.u32 %v4235, 16
        %v4324 = vrot.slane %v4322, 4
        %v4325 = vshll.u32 %v4235, 16
        %v4327 = vrot.slane %v4325, 5
        %v4328 = vor.u32 %v4324, %v4327
        %v4330 = vshrl.u32 %v4236, 16
        %v4332 = vrot.slane %v4330, 4
        %v4333 = vshll.u32 %v4236, 16
        %v4335 = vrot.slane %v4333, 5
        %v4336 = vor.u32 %v4332, %v4335
        %v4338 = vshrl.u32 %v4237, 16
        %v4340 = vrot.slane %v4338, 4
        %v4341 = vshll.u32 %v4237, 16
        %v4343 = vrot.slane %v4341, 5
        %v4344 = vor.u32 %v4340, %v4343
        %v4346 = vshrl.u32 %v4238, 16
        %v4348 = vrot.slane %v4346, 4
        %v4349 = vshll.u32 %v4238, 16
        %v4351 = vrot.slane %v4349, 5
        %v4352 = vor.u32 %v4348, %v4351
        %v4354 = vshrl.u32 %v4239, 16
        %v4356 = vrot.slane %v4354, 4
        %v4357 = vshll.u32 %v4239, 16
        %v4359 = vrot.slane %v4357, 5
        %v4360 = vor.u32 %v4356, %v4359
        %v4362 = vshrl.u32 %v4240, 16
        %v4364 = vrot.slane %v4362, 4
        %v4365 = vshll.u32 %v4240, 16
        %v4367 = vrot.slane %v4365, 5
        %v4368 = vor.u32 %v4364, %v4367
        %v4385 = vunpack.c.l.b16 %v4036
        %v4386 = vunpack.c.l.b16 %v4040
        %v4387 = vunpack.c.l.b16 %v4044
        %v4388 = vunpack.c.l.b16 %v4048
        %v4389 = vunpack.c.l.b16 %v4052
        %v4390 = vunpack.c.l.b16 %v4056
        %v4391 = vunpack.c.l.b16 %v4060
        %v4392 = vunpack.c.l.b16 %v4064
        %v4393 = vunpack.c.l.b16 %v4068
        %v4394 = vunpack.c.l.b16 %v4072
        %v4395 = vunpack.c.l.b16 %v4076
        %v4396 = vunpack.c.l.b16 %v4080
        %v4397 = vunpack.c.l.b16 %v4084
        %v4398 = vunpack.c.l.b16 %v4088
        %v4399 = vunpack.c.l.b16 %v4092
        %v4400 = vunpack.c.l.b16 %v4096
        %v4401 = vpack.c.b16 %v4385, %v4385
        %v4402 = vpack.c.b16 %v4386, %v4386
        %v4403 = vpack.c.b16 %v4387, %v4387
        %v4404 = vpack.c.b16 %v4388, %v4388
        %v4405 = vpack.c.b16 %v4389, %v4389
        %v4406 = vpack.c.b16 %v4390, %v4390
        %v4407 = vpack.c.b16 %v4391, %v4391
        %v4408 = vpack.c.b16 %v4392, %v4392
        %v4409 = vpack.c.b16 %v4393, %v4393
        %v4410 = vpack.c.b16 %v4394, %v4394
        %v4411 = vpack.c.b16 %v4395, %v4395
        %v4412 = vpack.c.b16 %v4396, %v4396
        %v4413 = vpack.c.b16 %v4397, %v4397
        %v4414 = vpack.c.b16 %v4398, %v4398
        %v4415 = vpack.c.b16 %v4399, %v4399
        %v4416 = vpack.c.b16 %v4400, %v4400
        %v4417 = vrot.slane %v4225, 5
        %v4418 = vrot.slane %v4401, 5
        %v4419 = vsel %vm1704, %v4417, %v4418
        %v4420 = vrot.slane %v4226, 5
        %v4421 = vrot.slane %v4402, 5
        %v4422 = vsel %vm1704, %v4420, %v4421
        %v4423 = vrot.slane %v4227, 5
        %v4424 = vrot.slane %v4403, 5
        %v4425 = vsel %vm1704, %v4423, %v4424
        %v4426 = vrot.slane %v4228, 5
        %v4427 = vrot.slane %v4404, 5
        %v4428 = vsel %vm1704, %v4426, %v4427
        %v4429 = vrot.slane %v4229, 5
        %v4430 = vrot.slane %v4405, 5
        %v4431 = vsel %vm1704, %v4429, %v4430
        %v4432 = vrot.slane %v4230, 5
        %v4433 = vrot.slane %v4406, 5
        %v4434 = vsel %vm1704, %v4432, %v4433
        %v4435 = vrot.slane %v4231, 5
        %v4436 = vrot.slane %v4407, 5
        %v4437 = vsel %vm1704, %v4435, %v4436
        %v4438 = vrot.slane %v4232, 5
        %v4439 = vrot.slane %v4408, 5
        %v4440 = vsel %vm1704, %v4438, %v4439
        %v4441 = vrot.slane %v4233, 5
        %v4442 = vrot.slane %v4409, 5
        %v4443 = vsel %vm1704, %v4441, %v4442
        %v4444 = vrot.slane %v4234, 5
        %v4445 = vrot.slane %v4410, 5
        %v4446 = vsel %vm1704, %v4444, %v4445
        %v4447 = vrot.slane %v4235, 5
        %v4448 = vrot.slane %v4411, 5
        %v4449 = vsel %vm1704, %v4447, %v4448
        %v4450 = vrot.slane %v4236, 5
        %v4451 = vrot.slane %v4412, 5
        %v4452 = vsel %vm1704, %v4450, %v4451
        %v4453 = vrot.slane %v4237, 5
        %v4454 = vrot.slane %v4413, 5
        %v4455 = vsel %vm1704, %v4453, %v4454
        %v4456 = vrot.slane %v4238, 5
        %v4457 = vrot.slane %v4414, 5
        %v4458 = vsel %vm1704, %v4456, %v4457
        %v4459 = vrot.slane %v4239, 5
        %v4460 = vrot.slane %v4415, 5
        %v4461 = vsel %vm1704, %v4459, %v4460
        %v4462 = vrot.slane %v4240, 5
        %v4463 = vrot.slane %v4416, 5
        %v4464 = vsel %vm1704, %v4462, %v4463
        %v4466 = vshrl.u32 %v4193, 16
        %v4468 = vrot.slane %v4466, 3
        %v4469 = vshll.u32 %v4193, 16
        %v4471 = vrot.slane %v4469, 4
        %v4472 = vor.u32 %v4468, %v4471
        %v4474 = vshrl.u32 %v4194, 16
        %v4476 = vrot.slane %v4474, 3
        %v4477 = vshll.u32 %v4194, 16
        %v4479 = vrot.slane %v4477, 4
        %v4480 = vor.u32 %v4476, %v4479
        %v4481 = vsel %vm1753, %v4472, %v4480
        %v4483 = vshrl.u32 %v4248, 16
        %v4485 = vrot.slane %v4483, 3
        %v4486 = vshll.u32 %v4248, 16
        %v4488 = vrot.slane %v4486, 4
        %v4489 = vor.u32 %v4485, %v4488
        %v4490 = vsel %vm1753, %v4489, %v4489
        %v4492 = vshrl.u32 %v4417, 16
        %v4494 = vrot.slane %v4492, 3
        %v4495 = vshll.u32 %v4417, 16
        %v4497 = vrot.slane %v4495, 4
        %v4498 = vor.u32 %v4494, %v4497
        %v4500 = vshrl.u32 %v4419, 16
        %v4502 = vrot.slane %v4500, 3
        %v4503 = vshll.u32 %v4419, 16
        %v4505 = vrot.slane %v4503, 4
        %v4506 = vor.u32 %v4502, %v4505
        %v4507 = vsel %vm1753, %v4498, %v4506
        %v4509 = vshrl.u32 %v4195, 16
        %v4511 = vrot.slane %v4509, 3
        %v4512 = vshll.u32 %v4195, 16
        %v4514 = vrot.slane %v4512, 4
        %v4515 = vor.u32 %v4511, %v4514
        %v4517 = vshrl.u32 %v4196, 16
        %v4519 = vrot.slane %v4517, 3
        %v4520 = vshll.u32 %v4196, 16
        %v4522 = vrot.slane %v4520, 4
        %v4523 = vor.u32 %v4519, %v4522
        %v4524 = vsel %vm1753, %v4515, %v4523
        %v4526 = vshrl.u32 %v4256, 16
        %v4528 = vrot.slane %v4526, 3
        %v4529 = vshll.u32 %v4256, 16
        %v4531 = vrot.slane %v4529, 4
        %v4532 = vor.u32 %v4528, %v4531
        %v4533 = vsel %vm1753, %v4532, %v4532
        %v4535 = vshrl.u32 %v4420, 16
        %v4537 = vrot.slane %v4535, 3
        %v4538 = vshll.u32 %v4420, 16
        %v4540 = vrot.slane %v4538, 4
        %v4541 = vor.u32 %v4537, %v4540
        %v4543 = vshrl.u32 %v4422, 16
        %v4545 = vrot.slane %v4543, 3
        %v4546 = vshll.u32 %v4422, 16
        %v4548 = vrot.slane %v4546, 4
        %v4549 = vor.u32 %v4545, %v4548
        %v4550 = vsel %vm1753, %v4541, %v4549
        %v4552 = vshrl.u32 %v4197, 16
        %v4554 = vrot.slane %v4552, 3
        %v4555 = vshll.u32 %v4197, 16
        %v4557 = vrot.slane %v4555, 4
        %v4558 = vor.u32 %v4554, %v4557
        %v4560 = vshrl.u32 %v4198, 16
        %v4562 = vrot.slane %v4560, 3
        %v4563 = vshll.u32 %v4198, 16
        %v4565 = vrot.slane %v4563, 4
        %v4566 = vor.u32 %v4562, %v4565
        %v4567 = vsel %vm1753, %v4558, %v4566
        %v4569 = vshrl.u32 %v4264, 16
        %v4571 = vrot.slane %v4569, 3
        %v4572 = vshll.u32 %v4264, 16
        %v4574 = vrot.slane %v4572, 4
        %v4575 = vor.u32 %v4571, %v4574
        %v4576 = vsel %vm1753, %v4575, %v4575
        %v4578 = vshrl.u32 %v4423, 16
        %v4580 = vrot.slane %v4578, 3
        %v4581 = vshll.u32 %v4423, 16
        %v4583 = vrot.slane %v4581, 4
        %v4584 = vor.u32 %v4580, %v4583
        %v4586 = vshrl.u32 %v4425, 16
        %v4588 = vrot.slane %v4586, 3
        %v4589 = vshll.u32 %v4425, 16
        %v4591 = vrot.slane %v4589, 4
        %v4592 = vor.u32 %v4588, %v4591
        %v4593 = vsel %vm1753, %v4584, %v4592
        %v4595 = vshrl.u32 %v4199, 16
        %v4597 = vrot.slane %v4595, 3
        %v4598 = vshll.u32 %v4199, 16
        %v4600 = vrot.slane %v4598, 4
        %v4601 = vor.u32 %v4597, %v4600
        %v4603 = vshrl.u32 %v4200, 16
        %v4605 = vrot.slane %v4603, 3
        %v4606 = vshll.u32 %v4200, 16
        %v4608 = vrot.slane %v4606, 4
        %v4609 = vor.u32 %v4605, %v4608
        %v4610 = vsel %vm1753, %v4601, %v4609
        %v4612 = vshrl.u32 %v4272, 16
        %v4614 = vrot.slane %v4612, 3
        %v4615 = vshll.u32 %v4272, 16
        %v4617 = vrot.slane %v4615, 4
        %v4618 = vor.u32 %v4614, %v4617
        %v4619 = vsel %vm1753, %v4618, %v4618
        %v4621 = vshrl.u32 %v4426, 16
        %v4623 = vrot.slane %v4621, 3
        %v4624 = vshll.u32 %v4426, 16
        %v4626 = vrot.slane %v4624, 4
        %v4627 = vor.u32 %v4623, %v4626
        %v4629 = vshrl.u32 %v4428, 16
        %v4631 = vrot.slane %v4629, 3
        %v4632 = vshll.u32 %v4428, 16
        %v4634 = vrot.slane %v4632, 4
        %v4635 = vor.u32 %v4631, %v4634
        %v4636 = vsel %vm1753, %v4627, %v4635
        %v4638 = vshrl.u32 %v4201, 16
        %v4640 = vrot.slane %v4638, 3
        %v4641 = vshll.u32 %v4201, 16
        %v4643 = vrot.slane %v4641, 4
        %v4644 = vor.u32 %v4640, %v4643
        %v4646 = vshrl.u32 %v4202, 16
        %v4648 = vrot.slane %v4646, 3
        %v4649 = vshll.u32 %v4202, 16
        %v4651 = vrot.slane %v4649, 4
        %v4652 = vor.u32 %v4648, %v4651
        %v4653 = vsel %vm1753, %v4644, %v4652
        %v4655 = vshrl.u32 %v4280, 16
        %v4657 = vrot.slane %v4655, 3
        %v4658 = vshll.u32 %v4280, 16
        %v4660 = vrot.slane %v4658, 4
        %v4661 = vor.u32 %v4657, %v4660
        %v4662 = vsel %vm1753, %v4661, %v4661
        %v4664 = vshrl.u32 %v4429, 16
        %v4666 = vrot.slane %v4664, 3
        %v4667 = vshll.u32 %v4429, 16
        %v4669 = vrot.slane %v4667, 4
        %v4670 = vor.u32 %v4666, %v4669
        %v4672 = vshrl.u32 %v4431, 16
        %v4674 = vrot.slane %v4672, 3
        %v4675 = vshll.u32 %v4431, 16
        %v4677 = vrot.slane %v4675, 4
        %v4678 = vor.u32 %v4674, %v4677
        %v4679 = vsel %vm1753, %v4670, %v4678
        %v4681 = vshrl.u32 %v4203, 16
        %v4683 = vrot.slane %v4681, 3
        %v4684 = vshll.u32 %v4203, 16
        %v4686 = vrot.slane %v4684, 4
        %v4687 = vor.u32 %v4683, %v4686
        %v4689 = vshrl.u32 %v4204, 16
        %v4691 = vrot.slane %v4689, 3
        %v4692 = vshll.u32 %v4204, 16
        %v4694 = vrot.slane %v4692, 4
        %v4695 = vor.u32 %v4691, %v4694
        %v4696 = vsel %vm1753, %v4687, %v4695
        %v4698 = vshrl.u32 %v4288, 16
        %v4700 = vrot.slane %v4698, 3
        %v4701 = vshll.u32 %v4288, 16
        %v4703 = vrot.slane %v4701, 4
        %v4704 = vor.u32 %v4700, %v4703
        %v4705 = vsel %vm1753, %v4704, %v4704
        %v4707 = vshrl.u32 %v4432, 16
        %v4709 = vrot.slane %v4707, 3
        %v4710 = vshll.u32 %v4432, 16
        %v4712 = vrot.slane %v4710, 4
        %v4713 = vor.u32 %v4709, %v4712
        %v4715 = vshrl.u32 %v4434, 16
        %v4717 = vrot.slane %v4715, 3
        %v4718 = vshll.u32 %v4434, 16
        %v4720 = vrot.slane %v4718, 4
        %v4721 = vor.u32 %v4717, %v4720
        %v4722 = vsel %vm1753, %v4713, %v4721
        %v4724 = vshrl.u32 %v4205, 16
        %v4726 = vrot.slane %v4724, 3
        %v4727 = vshll.u32 %v4205, 16
        %v4729 = vrot.slane %v4727, 4
        %v4730 = vor.u32 %v4726, %v4729
        %v4732 = vshrl.u32 %v4206, 16
        %v4734 = vrot.slane %v4732, 3
        %v4735 = vshll.u32 %v4206, 16
        %v4737 = vrot.slane %v4735, 4
        %v4738 = vor.u32 %v4734, %v4737
        %v4739 = vsel %vm1753, %v4730, %v4738
        %v4741 = vshrl.u32 %v4296, 16
        %v4743 = vrot.slane %v4741, 3
        %v4744 = vshll.u32 %v4296, 16
        %v4746 = vrot.slane %v4744, 4
        %v4747 = vor.u32 %v4743, %v4746
        %v4748 = vsel %vm1753, %v4747, %v4747
        %v4750 = vshrl.u32 %v4435, 16
        %v4752 = vrot.slane %v4750, 3
        %v4753 = vshll.u32 %v4435, 16
        %v4755 = vrot.slane %v4753, 4
        %v4756 = vor.u32 %v4752, %v4755
        %v4758 = vshrl.u32 %v4437, 16
        %v4760 = vrot.slane %v4758, 3
        %v4761 = vshll.u32 %v4437, 16
        %v4763 = vrot.slane %v4761, 4
        %v4764 = vor.u32 %v4760, %v4763
        %v4765 = vsel %vm1753, %v4756, %v4764
        %v4767 = vshrl.u32 %v4207, 16
        %v4769 = vrot.slane %v4767, 3
        %v4770 = vshll.u32 %v4207, 16
        %v4772 = vrot.slane %v4770, 4
        %v4773 = vor.u32 %v4769, %v4772
        %v4775 = vshrl.u32 %v4208, 16
        %v4777 = vrot.slane %v4775, 3
        %v4778 = vshll.u32 %v4208, 16
        %v4780 = vrot.slane %v4778, 4
        %v4781 = vor.u32 %v4777, %v4780
        %v4782 = vsel %vm1753, %v4773, %v4781
        %v4784 = vshrl.u32 %v4304, 16
        %v4786 = vrot.slane %v4784, 3
        %v4787 = vshll.u32 %v4304, 16
        %v4789 = vrot.slane %v4787, 4
        %v4790 = vor.u32 %v4786, %v4789
        %v4791 = vsel %vm1753, %v4790, %v4790
        %v4793 = vshrl.u32 %v4438, 16
        %v4795 = vrot.slane %v4793, 3
        %v4796 = vshll.u32 %v4438, 16
        %v4798 = vrot.slane %v4796, 4
        %v4799 = vor.u32 %v4795, %v4798
        %v4801 = vshrl.u32 %v4440, 16
        %v4803 = vrot.slane %v4801, 3
        %v4804 = vshll.u32 %v4440, 16
        %v4806 = vrot.slane %v4804, 4
        %v4807 = vor.u32 %v4803, %v4806
        %v4808 = vsel %vm1753, %v4799, %v4807
        %v4810 = vshrl.u32 %v4209, 16
        %v4812 = vrot.slane %v4810, 3
        %v4813 = vshll.u32 %v4209, 16
        %v4815 = vrot.slane %v4813, 4
        %v4816 = vor.u32 %v4812, %v4815
        %v4818 = vshrl.u32 %v4210, 16
        %v4820 = vrot.slane %v4818, 3
        %v4821 = vshll.u32 %v4210, 16
        %v4823 = vrot.slane %v4821, 4
        %v4824 = vor.u32 %v4820, %v4823
        %v4825 = vsel %vm1753, %v4816, %v4824
        %v4827 = vshrl.u32 %v4312, 16
        %v4829 = vrot.slane %v4827, 3
        %v4830 = vshll.u32 %v4312, 16
        %v4832 = vrot.slane %v4830, 4
        %v4833 = vor.u32 %v4829, %v4832
        %v4834 = vsel %vm1753, %v4833, %v4833
        %v4836 = vshrl.u32 %v4441, 16
        %v4838 = vrot.slane %v4836, 3
        %v4839 = vshll.u32 %v4441, 16
        %v4841 = vrot.slane %v4839, 4
        %v4842 = vor.u32 %v4838, %v4841
        %v4844 = vshrl.u32 %v4443, 16
        %v4846 = vrot.slane %v4844, 3
        %v4847 = vshll.u32 %v4443, 16
        %v4849 = vrot.slane %v4847, 4
        %v4850 = vor.u32 %v4846, %v4849
        %v4851 = vsel %vm1753, %v4842, %v4850
        %v4853 = vshrl.u32 %v4211, 16
        %v4855 = vrot.slane %v4853, 3
        %v4856 = vshll.u32 %v4211, 16
        %v4858 = vrot.slane %v4856, 4
        %v4859 = vor.u32 %v4855, %v4858
        %v4861 = vshrl.u32 %v4212, 16
        %v4863 = vrot.slane %v4861, 3
        %v4864 = vshll.u32 %v4212, 16
        %v4866 = vrot.slane %v4864, 4
        %v4867 = vor.u32 %v4863, %v4866
        %v4868 = vsel %vm1753, %v4859, %v4867
        %v4870 = vshrl.u32 %v4320, 16
        %v4872 = vrot.slane %v4870, 3
        %v4873 = vshll.u32 %v4320, 16
        %v4875 = vrot.slane %v4873, 4
        %v4876 = vor.u32 %v4872, %v4875
        %v4877 = vsel %vm1753, %v4876, %v4876
        %v4879 = vshrl.u32 %v4444, 16
        %v4881 = vrot.slane %v4879, 3
        %v4882 = vshll.u32 %v4444, 16
        %v4884 = vrot.slane %v4882, 4
        %v4885 = vor.u32 %v4881, %v4884
        %v4887 = vshrl.u32 %v4446, 16
        %v4889 = vrot.slane %v4887, 3
        %v4890 = vshll.u32 %v4446, 16
        %v4892 = vrot.slane %v4890, 4
        %v4893 = vor.u32 %v4889, %v4892
        %v4894 = vsel %vm1753, %v4885, %v4893
        %v4896 = vshrl.u32 %v4213, 16
        %v4898 = vrot.slane %v4896, 3
        %v4899 = vshll.u32 %v4213, 16
        %v4901 = vrot.slane %v4899, 4
        %v4902 = vor.u32 %v4898, %v4901
        %v4904 = vshrl.u32 %v4214, 16
        %v4906 = vrot.slane %v4904, 3
        %v4907 = vshll.u32 %v4214, 16
        %v4909 = vrot.slane %v4907, 4
        %v4910 = vor.u32 %v4906, %v4909
        %v4911 = vsel %vm1753, %v4902, %v4910
        %v4913 = vshrl.u32 %v4328, 16
        %v4915 = vrot.slane %v4913, 3
        %v4916 = vshll.u32 %v4328, 16
        %v4918 = vrot.slane %v4916, 4
        %v4919 = vor.u32 %v4915, %v4918
        %v4920 = vsel %vm1753, %v4919, %v4919
        %v4922 = vshrl.u32 %v4447, 16
        %v4924 = vrot.slane %v4922, 3
        %v4925 = vshll.u32 %v4447, 16
        %v4927 = vrot.slane %v4925, 4
        %v4928 = vor.u32 %v4924, %v4927
        %v4930 = vshrl.u32 %v4449, 16
        %v4932 = vrot.slane %v4930, 3
        %v4933 = vshll.u32 %v4449, 16
        %v4935 = vrot.slane %v4933, 4
        %v4936 = vor.u32 %v4932, %v4935
        %v4937 = vsel %vm1753, %v4928, %v4936
        %v4939 = vshrl.u32 %v4215, 16
        %v4941 = vrot.slane %v4939, 3
        %v4942 = vshll.u32 %v4215, 16
        %v4944 = vrot.slane %v4942, 4
        %v4945 = vor.u32 %v4941, %v4944
        %v4947 = vshrl.u32 %v4216, 16
        %v4949 = vrot.slane %v4947, 3
        %v4950 = vshll.u32 %v4216, 16
        %v4952 = vrot.slane %v4950, 4
        %v4953 = vor.u32 %v4949, %v4952
        %v4954 = vsel %vm1753, %v4945, %v4953
        %v4956 = vshrl.u32 %v4336, 16
        %v4958 = vrot.slane %v4956, 3
        %v4959 = vshll.u32 %v4336, 16
        %v4961 = vrot.slane %v4959, 4
        %v4962 = vor.u32 %v4958, %v4961
        %v4963 = vsel %vm1753, %v4962, %v4962
        %v4965 = vshrl.u32 %v4450, 16
        %v4967 = vrot.slane %v4965, 3
        %v4968 = vshll.u32 %v4450, 16
        %v4970 = vrot.slane %v4968, 4
        %v4971 = vor.u32 %v4967, %v4970
        %v4973 = vshrl.u32 %v4452, 16
        %v4975 = vrot.slane %v4973, 3
        %v4976 = vshll.u32 %v4452, 16
        %v4978 = vrot.slane %v4976, 4
        %v4979 = vor.u32 %v4975, %v4978
        %v4980 = vsel %vm1753, %v4971, %v4979
        %v4982 = vshrl.u32 %v4217, 16
        %v4984 = vrot.slane %v4982, 3
        %v4985 = vshll.u32 %v4217, 16
        %v4987 = vrot.slane %v4985, 4
        %v4988 = vor.u32 %v4984, %v4987
        %v4990 = vshrl.u32 %v4218, 16
        %v4992 = vrot.slane %v4990, 3
        %v4993 = vshll.u32 %v4218, 16
        %v4995 = vrot.slane %v4993, 4
        %v4996 = vor.u32 %v4992, %v4995
        %v4997 = vsel %vm1753, %v4988, %v4996
        %v4999 = vshrl.u32 %v4344, 16
        %v5001 = vrot.slane %v4999, 3
        %v5002 = vshll.u32 %v4344, 16
        %v5004 = vrot.slane %v5002, 4
        %v5005 = vor.u32 %v5001, %v5004
        %v5006 = vsel %vm1753, %v5005, %v5005
        %v5008 = vshrl.u32 %v4453, 16
        %v5010 = vrot.slane %v5008, 3
        %v5011 = vshll.u32 %v4453, 16
        %v5013 = vrot.slane %v5011, 4
        %v5014 = vor.u32 %v5010, %v5013
        %v5016 = vshrl.u32 %v4455, 16
        %v5018 = vrot.slane %v5016, 3
        %v5019 = vshll.u32 %v4455, 16
        %v5021 = vrot.slane %v5019, 4
        %v5022 = vor.u32 %v5018, %v5021
        %v5023 = vsel %vm1753, %v5014, %v5022
        %v5025 = vshrl.u32 %v4219, 16
        %v5027 = vrot.slane %v5025, 3
        %v5028 = vshll.u32 %v4219, 16
        %v5030 = vrot.slane %v5028, 4
        %v5031 = vor.u32 %v5027, %v5030
        %v5033 = vshrl.u32 %v4220, 16
        %v5035 = vrot.slane %v5033, 3
        %v5036 = vshll.u32 %v4220, 16
        %v5038 = vrot.slane %v5036, 4
        %v5039 = vor.u32 %v5035, %v5038
        %v5040 = vsel %vm1753, %v5031, %v5039
        %v5042 = vshrl.u32 %v4352, 16
        %v5044 = vrot.slane %v5042, 3
        %v5045 = vshll.u32 %v4352, 16
        %v5047 = vrot.slane %v5045, 4
        %v5048 = vor.u32 %v5044, %v5047
        %v5049 = vsel %vm1753, %v5048, %v5048
        %v5051 = vshrl.u32 %v4456, 16
        %v5053 = vrot.slane %v5051, 3
        %v5054 = vshll.u32 %v4456, 16
        %v5056 = vrot.slane %v5054, 4
        %v5057 = vor.u32 %v5053, %v5056
        %v5059 = vshrl.u32 %v4458, 16
        %v5061 = vrot.slane %v5059, 3
        %v5062 = vshll.u32 %v4458, 16
        %v5064 = vrot.slane %v5062, 4
        %v5065 = vor.u32 %v5061, %v5064
        %v5066 = vsel %vm1753, %v5057, %v5065
        %v5068 = vshrl.u32 %v4221, 16
        %v5070 = vrot.slane %v5068, 3
        %v5071 = vshll.u32 %v4221, 16
        %v5073 = vrot.slane %v5071, 4
        %v5074 = vor.u32 %v5070, %v5073
        %v5076 = vshrl.u32 %v4222, 16
        %v5078 = vrot.slane %v5076, 3
        %v5079 = vshll.u32 %v4222, 16
        %v5081 = vrot.slane %v5079, 4
        %v5082 = vor.u32 %v5078, %v5081
        %v5083 = vsel %vm1753, %v5074, %v5082
        %v5085 = vshrl.u32 %v4360, 16
        %v5087 = vrot.slane %v5085, 3
        %v5088 = vshll.u32 %v4360, 16
        %v5090 = vrot.slane %v5088, 4
        %v5091 = vor.u32 %v5087, %v5090
        %v5092 = vsel %vm1753, %v5091, %v5091
        %v5094 = vshrl.u32 %v4459, 16
        %v5096 = vrot.slane %v5094, 3
        %v5097 = vshll.u32 %v4459, 16
        %v5099 = vrot.slane %v5097, 4
        %v5100 = vor.u32 %v5096, %v5099
        %v5102 = vshrl.u32 %v4461, 16
        %v5104 = vrot.slane %v5102, 3
        %v5105 = vshll.u32 %v4461, 16
        %v5107 = vrot.slane %v5105, 4
        %v5108 = vor.u32 %v5104, %v5107
        %v5109 = vsel %vm1753, %v5100, %v5108
        %v5111 = vshrl.u32 %v4223, 16
        %v5113 = vrot.slane %v5111, 3
        %v5114 = vshll.u32 %v4223, 16
        %v5116 = vrot.slane %v5114, 4
        %v5117 = vor.u32 %v5113, %v5116
        %v5119 = vshrl.u32 %v4224, 16
        %v5121 = vrot.slane %v5119, 3
        %v5122 = vshll.u32 %v4224, 16
        %v5124 = vrot.slane %v5122, 4
        %v5125 = vor.u32 %v5121, %v5124
        %v5126 = vsel %vm1753, %v5117, %v5125
        %v5128 = vshrl.u32 %v4368, 16
        %v5130 = vrot.slane %v5128, 3
        %v5131 = vshll.u32 %v4368, 16
        %v5133 = vrot.slane %v5131, 4
        %v5134 = vor.u32 %v5130, %v5133
        %v5135 = vsel %vm1753, %v5134, %v5134
        %v5137 = vshrl.u32 %v4462, 16
        %v5139 = vrot.slane %v5137, 3
        %v5140 = vshll.u32 %v4462, 16
        %v5142 = vrot.slane %v5140, 4
        %v5143 = vor.u32 %v5139, %v5142
        %v5145 = vshrl.u32 %v4464, 16
        %v5147 = vrot.slane %v5145, 3
        %v5148 = vshll.u32 %v4464, 16
        %v5150 = vrot.slane %v5148, 4
        %v5151 = vor.u32 %v5147, %v5150
        %v5152 = vsel %vm1753, %v5143, %v5151
        %s5201 = scalar_lea.vmem %s5, 192
        %v5202 = vld [vmem:[%s5201] sm:$0xf]
        %v5203 = vld [vmem:[%s5201 + $0x4] sm:$0xf]
        %v5204 = vld [vmem:[%s5201 + $0x8] sm:$0xf]
        %v5205 = vld [vmem:[%s5201 + $0xc] sm:$0xf]
        %v5206 = vld [vmem:[%s5201 + $0x10] sm:$0xf]
        %v5207 = vld [vmem:[%s5201 + $0x14] sm:$0xf]
        %v5208 = vld [vmem:[%s5201 + $0x18] sm:$0xf]
        %v5209 = vld [vmem:[%s5201 + $0x1c] sm:$0xf]
        %v5210 = vld [vmem:[%s5201 + $0x20] sm:$0xf]
        %v5211 = vld [vmem:[%s5201 + $0x24] sm:$0xf]
        %v5212 = vld [vmem:[%s5201 + $0x28] sm:$0xf]
        %v5213 = vld [vmem:[%s5201 + $0x2c] sm:$0xf]
        %v5214 = vld [vmem:[%s5201 + $0x30] sm:$0xf]
        %v5215 = vld [vmem:[%s5201 + $0x34] sm:$0xf]
        %v5216 = vld [vmem:[%s5201 + $0x38] sm:$0xf]
        %v5217 = vld [vmem:[%s5201 + $0x3c] sm:$0xf]
        %v5218 = vld [vmem:[%s5201 + $0x40] sm:$0xf]
        %v5219 = vld [vmem:[%s5201 + $0x44] sm:$0xf]
        %v5220 = vld [vmem:[%s5201 + $0x48] sm:$0xf]
        %v5221 = vld [vmem:[%s5201 + $0x4c] sm:$0xf]
        %v5222 = vld [vmem:[%s5201 + $0x50] sm:$0xf]
        %v5223 = vld [vmem:[%s5201 + $0x54] sm:$0xf]
        %v5224 = vld [vmem:[%s5201 + $0x58] sm:$0xf]
        %v5225 = vld [vmem:[%s5201 + $0x5c] sm:$0xf]
        %v5226 = vld [vmem:[%s5201 + $0x60] sm:$0xf]
        %v5227 = vld [vmem:[%s5201 + $0x64] sm:$0xf]
        %v5228 = vld [vmem:[%s5201 + $0x68] sm:$0xf]
        %v5229 = vld [vmem:[%s5201 + $0x6c] sm:$0xf]
        %v5230 = vld [vmem:[%s5201 + $0x70] sm:$0xf]
        %v5231 = vld [vmem:[%s5201 + $0x74] sm:$0xf]
        %v5232 = vld [vmem:[%s5201 + $0x78] sm:$0xf]
        %v5233 = vld [vmem:[%s5201 + $0x7c] sm:$0xf]
        %v5234 = vld [vmem:[%s5201 + $0x80] sm:$0xf]
        %v5235 = vld [vmem:[%s5201 + $0x84] sm:$0xf]
        %v5236 = vld [vmem:[%s5201 + $0x88] sm:$0xf]
        %v5237 = vld [vmem:[%s5201 + $0x8c] sm:$0xf]
        %v5238 = vld [vmem:[%s5201 + $0x90] sm:$0xf]
        %v5239 = vld [vmem:[%s5201 + $0x94] sm:$0xf]
        %v5240 = vld [vmem:[%s5201 + $0x98] sm:$0xf]
        %v5241 = vld [vmem:[%s5201 + $0x9c] sm:$0xf]
        %v5242 = vld [vmem:[%s5201 + $0xa0] sm:$0xf]
        %v5243 = vld [vmem:[%s5201 + $0xa4] sm:$0xf]
        %v5244 = vld [vmem:[%s5201 + $0xa8] sm:$0xf]
        %v5245 = vld [vmem:[%s5201 + $0xac] sm:$0xf]
        %v5246 = vld [vmem:[%s5201 + $0xb0] sm:$0xf]
        %v5247 = vld [vmem:[%s5201 + $0xb4] sm:$0xf]
        %v5248 = vld [vmem:[%s5201 + $0xb8] sm:$0xf]
        %v5249 = vld [vmem:[%s5201 + $0xbc] sm:$0xf]
        %v5298 = vunpack.c.l.b16 %v5202
        %v5299 = vunpack.c.l.b16 %v5203
        %v5300 = vunpack.c.l.b16 %v5204
        %v5301 = vunpack.c.l.b16 %v5205
        %v5302 = vunpack.c.l.b16 %v5206
        %v5303 = vunpack.c.l.b16 %v5207
        %v5304 = vunpack.c.l.b16 %v5208
        %v5305 = vunpack.c.l.b16 %v5209
        %v5306 = vunpack.c.l.b16 %v5210
        %v5307 = vunpack.c.l.b16 %v5211
        %v5308 = vunpack.c.l.b16 %v5212
        %v5309 = vunpack.c.l.b16 %v5213
        %v5310 = vunpack.c.l.b16 %v5214
        %v5311 = vunpack.c.l.b16 %v5215
        %v5312 = vunpack.c.l.b16 %v5216
        %v5313 = vunpack.c.l.b16 %v5217
        %v5314 = vunpack.c.l.b16 %v5218
        %v5315 = vunpack.c.l.b16 %v5219
        %v5316 = vunpack.c.l.b16 %v5220
        %v5317 = vunpack.c.l.b16 %v5221
        %v5318 = vunpack.c.l.b16 %v5222
        %v5319 = vunpack.c.l.b16 %v5223
        %v5320 = vunpack.c.l.b16 %v5224
        %v5321 = vunpack.c.l.b16 %v5225
        %v5322 = vunpack.c.l.b16 %v5226
        %v5323 = vunpack.c.l.b16 %v5227
        %v5324 = vunpack.c.l.b16 %v5228
        %v5325 = vunpack.c.l.b16 %v5229
        %v5326 = vunpack.c.l.b16 %v5230
        %v5327 = vunpack.c.l.b16 %v5231
        %v5328 = vunpack.c.l.b16 %v5232
        %v5329 = vunpack.c.l.b16 %v5233
        %v5330 = vunpack.c.l.b16 %v5234
        %v5331 = vunpack.c.l.b16 %v5235
        %v5332 = vunpack.c.l.b16 %v5236
        %v5333 = vunpack.c.l.b16 %v5237
        %v5334 = vunpack.c.l.b16 %v5238
        %v5335 = vunpack.c.l.b16 %v5239
        %v5336 = vunpack.c.l.b16 %v5240
        %v5337 = vunpack.c.l.b16 %v5241
        %v5338 = vunpack.c.l.b16 %v5242
        %v5339 = vunpack.c.l.b16 %v5243
        %v5340 = vunpack.c.l.b16 %v5244
        %v5341 = vunpack.c.l.b16 %v5245
        %v5342 = vunpack.c.l.b16 %v5246
        %v5343 = vunpack.c.l.b16 %v5247
        %v5344 = vunpack.c.l.b16 %v5248
        %v5345 = vunpack.c.l.b16 %v5249
        %v5346 = vpack.c.b16 %v5299, %v5298
        %v5347 = vpack.c.b16 %v5301, %v5300
        %v5348 = vpack.c.b16 %v5303, %v5302
        %v5349 = vpack.c.b16 %v5305, %v5304
        %v5350 = vpack.c.b16 %v5307, %v5306
        %v5351 = vpack.c.b16 %v5309, %v5308
        %v5352 = vpack.c.b16 %v5311, %v5310
        %v5353 = vpack.c.b16 %v5313, %v5312
        %v5354 = vpack.c.b16 %v5315, %v5314
        %v5355 = vpack.c.b16 %v5317, %v5316
        %v5356 = vpack.c.b16 %v5319, %v5318
        %v5357 = vpack.c.b16 %v5321, %v5320
        %v5358 = vpack.c.b16 %v5323, %v5322
        %v5359 = vpack.c.b16 %v5325, %v5324
        %v5360 = vpack.c.b16 %v5327, %v5326
        %v5361 = vpack.c.b16 %v5329, %v5328
        %v5362 = vpack.c.b16 %v5331, %v5330
        %v5363 = vpack.c.b16 %v5333, %v5332
        %v5364 = vpack.c.b16 %v5335, %v5334
        %v5365 = vpack.c.b16 %v5337, %v5336
        %v5366 = vpack.c.b16 %v5339, %v5338
        %v5367 = vpack.c.b16 %v5341, %v5340
        %v5368 = vpack.c.b16 %v5343, %v5342
        %v5369 = vpack.c.b16 %v5345, %v5344
        %5394 = vmatprep.subr.bf16.mxu0 0
        %5395 = vmatpush1.bf16.msra.mxu0 %v5346
        %5396 = vmatprep.subr.bf16.mxu0 0
        %5397 = vmatpush1.bf16.msra.mxu0 %v5347
        %5398 = vmatprep.subr.bf16.mxu0 0
        %5399 = vmatpush1.bf16.msra.mxu0 %v5348
        %5400 = vmatprep.subr.bf16.mxu0 0
        %5401 = vmatpush1.bf16.msra.mxu0 %v5349
        %5402 = vmatprep.subr.bf16.mxu0 0
        %5403 = vmatpush1.bf16.msra.mxu0 %v5350
        %5404 = vmatprep.subr.bf16.mxu0 0
        %5405 = vmatpush1.bf16.msra.mxu0 %v5351
        %5406 = vmatprep.subr.bf16.mxu0 0
        %5407 = vmatpush1.bf16.msra.mxu0 %v5352
        %5408 = vmatprep.subr.bf16.mxu0 0
        %5409 = vmatpush1.bf16.msra.mxu0 %v5353
        %5410 = vmatprep.subr.bf16.mxu0 0
        %5411 = vmatpush1.bf16.msra.mxu0 %v5354
        %5412 = vmatprep.subr.bf16.mxu0 0
        %5413 = vmatpush1.bf16.msra.mxu0 %v5355
        %5414 = vmatprep.subr.bf16.mxu0 0
        %5415 = vmatpush1.bf16.msra.mxu0 %v5356
        %5416 = vmatprep.subr.bf16.mxu0 0
        %5417 = vmatpush1.bf16.msra.mxu0 %v5357
        %5418 = vmatprep.subr.bf16.mxu0 0
        %5419 = vmatpush1.bf16.msra.mxu0 %v5358
        %5420 = vmatprep.subr.bf16.mxu0 0
        %5421 = vmatpush1.bf16.msra.mxu0 %v5359
        %5422 = vmatprep.subr.bf16.mxu0 0
        %5423 = vmatpush1.bf16.msra.mxu0 %v5360
        %5424 = vmatprep.subr.bf16.mxu0 0
        %5425 = vmatpush1.bf16.msra.mxu0 %v5361
        %5426 = vmatprep.mubr.bf16.mxu0 %v4490
        %5427 = vmatmul.mubr.bf16.gmra.mrb[0].mxu0 %v4481
        %v5428 = vpop.f32.mrb[0].mxu0
        %v5429 = vadd.f32 0.0, %v5428
        %v5430 = vpop.f32.mrb[0].mxu0
        %v5431 = vpop.f32.mrb[0].mxu0
        %v5432 = vadd.f32 0.0, %v5431
        %v5433 = vpop.f32.mrb[0].mxu0
        %5434 = vmatprep.mubr.bf16.mxu0 %v4533
        %5435 = vmatmul.mubr.bf16.gmra.mrb[0].mxu0 %v4524
        %v5436 = vpop.f32.mrb[0].mxu0
        %v5437 = vadd.f32 0.0, %v5436
        %v5438 = vpop.f32.mrb[0].mxu0
        %v5439 = vpop.f32.mrb[0].mxu0
        %v5440 = vadd.f32 0.0, %v5439
        %v5441 = vpop.f32.mrb[0].mxu0
        %5442 = vmatprep.mubr.bf16.mxu0 %v4576
        %5443 = vmatmul.mubr.bf16.gmra.mrb[0].mxu0 %v4567
        %v5444 = vpop.f32.mrb[0].mxu0
        %v5445 = vadd.f32 0.0, %v5444
        %v5446 = vpop.f32.mrb[0].mxu0
        %v5447 = vpop.f32.mrb[0].mxu0
        %v5448 = vadd.f32 0.0, %v5447
        %v5449 = vpop.f32.mrb[0].mxu0
        %5450 = vmatprep.mubr.bf16.mxu0 %v4619
        %5451 = vmatmul.mubr.bf16.gmra.mrb[0].mxu0 %v4610
        %v5452 = vpop.f32.mrb[0].mxu0
        %v5453 = vadd.f32 0.0, %v5452
        %v5454 = vpop.f32.mrb[0].mxu0
        %v5455 = vpop.f32.mrb[0].mxu0
        %v5456 = vadd.f32 0.0, %v5455
        %v5457 = vpop.f32.mrb[0].mxu0
        %5458 = vmatprep.mubr.bf16.mxu0 %v4662
        %5459 = vmatmul.mubr.bf16.gmra.mrb[0].mxu0 %v4653
        %v5460 = vpop.f32.mrb[0].mxu0
        %v5461 = vadd.f32 0.0, %v5460
        %v5462 = vpop.f32.mrb[0].mxu0
        %v5463 = vpop.f32.mrb[0].mxu0
        %v5464 = vadd.f32 0.0, %v5463
        %v5465 = vpop.f32.mrb[0].mxu0
        %5466 = vmatprep.mubr.bf16.mxu0 %v4705
        %5467 = vmatmul.mubr.bf16.gmra.mrb[0].mxu0 %v4696
        %v5468 = vpop.f32.mrb[0].mxu0
        %v5469 = vadd.f32 0.0, %v5468
        %v5470 = vpop.f32.mrb[0].mxu0
        %v5471 = vpop.f32.mrb[0].mxu0
        %v5472 = vadd.f32 0.0, %v5471
        %v5473 = vpop.f32.mrb[0].mxu0
        %5474 = vmatprep.mubr.bf16.mxu0 %v4748
        %5475 = vmatmul.mubr.bf16.gmra.mrb[0].mxu0 %v4739
        %v5476 = vpop.f32.mrb[0].mxu0
        %v5477 = vadd.f32 0.0, %v5476
        %v5478 = vpop.f32.mrb[0].mxu0
        %v5479 = vpop.f32.mrb[0].mxu0
        %v5480 = vadd.f32 0.0, %v5479
        %v5481 = vpop.f32.mrb[0].mxu0
        %5482 = vmatprep.mubr.bf16.mxu0 %v4791
        %5483 = vmatmul.mubr.bf16.gmra.mrb[0].mxu0 %v4782
        %v5484 = vpop.f32.mrb[0].mxu0
        %v5485 = vadd.f32 0.0, %v5484
        %v5486 = vpop.f32.mrb[0].mxu0
        %v5487 = vpop.f32.mrb[0].mxu0
        %v5488 = vadd.f32 0.0, %v5487
        %v5489 = vpop.f32.mrb[0].mxu0
        %5490 = vmatprep.mubr.bf16.mxu0 %v4834
        %5491 = vmatmul.mubr.bf16.gmra.mrb[0].mxu0 %v4825
        %v5492 = vpop.f32.mrb[0].mxu0
        %v5493 = vadd.f32 0.0, %v5492
        %v5494 = vpop.f32.mrb[0].mxu0
        %v5495 = vpop.f32.mrb[0].mxu0
        %v5496 = vadd.f32 0.0, %v5495
        %v5497 = vpop.f32.mrb[0].mxu0
        %5498 = vmatprep.mubr.bf16.mxu0 %v4877
        %5499 = vmatmul.mubr.bf16.gmra.mrb[0].mxu0 %v4868
        %v5500 = vpop.f32.mrb[0].mxu0
        %v5501 = vadd.f32 0.0, %v5500
        %v5502 = vpop.f32.mrb[0].mxu0
        %v5503 = vpop.f32.mrb[0].mxu0
        %v5504 = vadd.f32 0.0, %v5503
        %v5505 = vpop.f32.mrb[0].mxu0
        %5506 = vmatprep.mubr.bf16.mxu0 %v4920
        %5507 = vmatmul.mubr.bf16.gmra.mrb[0].mxu0 %v4911
        %v5508 = vpop.f32.mrb[0].mxu0
        %v5509 = vadd.f32 0.0, %v5508
        %v5510 = vpop.f32.mrb[0].mxu0
        %v5511 = vpop.f32.mrb[0].mxu0
        %v5512 = vadd.f32 0.0, %v5511
        %v5513 = vpop.f32.mrb[0].mxu0
        %5514 = vmatprep.mubr.bf16.mxu0 %v4963
        %5515 = vmatmul.mubr.bf16.gmra.mrb[0].mxu0 %v4954
        %v5516 = vpop.f32.mrb[0].mxu0
        %v5517 = vadd.f32 0.0, %v5516
        %v5518 = vpop.f32.mrb[0].mxu0
        %v5519 = vpop.f32.mrb[0].mxu0
        %v5520 = vadd.f32 0.0, %v5519
        %v5521 = vpop.f32.mrb[0].mxu0
        %5522 = vmatprep.mubr.bf16.mxu0 %v5006
        %5523 = vmatmul.mubr.bf16.gmra.mrb[0].mxu0 %v4997
        %v5524 = vpop.f32.mrb[0].mxu0
        %v5525 = vadd.f32 0.0, %v5524
        %v5526 = vpop.f32.mrb[0].mxu0
        %v5527 = vpop.f32.mrb[0].mxu0
        %v5528 = vadd.f32 0.0, %v5527
        %v5529 = vpop.f32.mrb[0].mxu0
        %5530 = vmatprep.mubr.bf16.mxu0 %v5049
        %5531 = vmatmul.mubr.bf16.gmra.mrb[0].mxu0 %v5040
        %v5532 = vpop.f32.mrb[0].mxu0
        %v5533 = vadd.f32 0.0, %v5532
        %v5534 = vpop.f32.mrb[0].mxu0
        %v5535 = vpop.f32.mrb[0].mxu0
        %v5536 = vadd.f32 0.0, %v5535
        %v5537 = vpop.f32.mrb[0].mxu0
        %5538 = vmatprep.mubr.bf16.mxu0 %v5092
        %5539 = vmatmul.mubr.bf16.gmra.mrb[0].mxu0 %v5083
        %v5540 = vpop.f32.mrb[0].mxu0
        %v5541 = vadd.f32 0.0, %v5540
        %v5542 = vpop.f32.mrb[0].mxu0
        %v5543 = vpop.f32.mrb[0].mxu0
        %v5544 = vadd.f32 0.0, %v5543
        %v5545 = vpop.f32.mrb[0].mxu0
        %5546 = vmatprep.mubr.bf16.mxu0 %v5135
        %5547 = vmatmul.mubr.bf16.gmra.mrb[0].mxu0 %v5126
        %v5548 = vpop.f32.mrb[0].mxu0
        %v5549 = vadd.f32 0.0, %v5548
        %v5550 = vpop.f32.mrb[0].mxu0
        %v5551 = vpop.f32.mrb[0].mxu0
        %v5552 = vadd.f32 0.0, %v5551
        %v5553 = vpop.f32.mrb[0].mxu0
        %5554 = vdwg.mxu0
        %5555 = vmatprep.subr.bf16.mxu0 0
        %5556 = vmatpush1.bf16.msra.mxu0 %v5362
        %5557 = vmatprep.subr.bf16.mxu0 0
        %5558 = vmatpush1.bf16.msra.mxu0 %v5363
        %5559 = vmatprep.subr.bf16.mxu0 0
        %5560 = vmatpush1.bf16.msra.mxu0 %v5364
        %5561 = vmatprep.subr.bf16.mxu0 0
        %5562 = vmatpush1.bf16.msra.mxu0 %v5365
        %5563 = vmatprep.subr.bf16.mxu0 0
        %5564 = vmatpush1.bf16.msra.mxu0 %v5366
        %5565 = vmatprep.subr.bf16.mxu0 0
        %5566 = vmatpush1.bf16.msra.mxu0 %v5367
        %5567 = vmatprep.subr.bf16.mxu0 0
        %5568 = vmatpush1.bf16.msra.mxu0 %v5368
        %5569 = vmatprep.subr.bf16.mxu0 0
        %5570 = vmatpush1.bf16.msra.mxu0 %v5369
        %5571 = vmatprep.subr.bf16.mxu0 0
        %5572 = vmatpush1.bf16.msra.mxu0 0
        %5573 = vmatprep.subr.bf16.mxu0 0
        %5574 = vmatpush1.bf16.msra.mxu0 0
        %5575 = vmatprep.subr.bf16.mxu0 0
        %5576 = vmatpush1.bf16.msra.mxu0 0
        %5577 = vmatprep.subr.bf16.mxu0 0
        %5578 = vmatpush1.bf16.msra.mxu0 0
        %5579 = vmatprep.subr.bf16.mxu0 0
        %5580 = vmatpush1.bf16.msra.mxu0 0
        %5581 = vmatprep.subr.bf16.mxu0 0
        %5582 = vmatpush1.bf16.msra.mxu0 0
        %5583 = vmatprep.subr.bf16.mxu0 0
        %5584 = vmatpush1.bf16.msra.mxu0 0
        %5585 = vmatprep.subr.bf16.mxu0 0
        %5586 = vmatpush1.bf16.msra.mxu0 0
        %5587 = vmatprep.mubr.bf16.mxu0 0
        %5588 = vmatmul.mubr.bf16.gmra.mrb[0].mxu0 %v4507
        %v5589 = vpop.f32.mrb[0].mxu0
        %v5590 = vadd.f32 %v5429, %v5589
        %v5591 = vpop.f32.mrb[0].mxu0
        %v5592 = vpop.f32.mrb[0].mxu0
        %v5593 = vadd.f32 %v5432, %v5592
        %v5594 = vpop.f32.mrb[0].mxu0
        %5595 = vmatprep.mubr.bf16.mxu0 0
        %5596 = vmatmul.mubr.bf16.gmra.mrb[0].mxu0 %v4550
        %v5597 = vpop.f32.mrb[0].mxu0
        %v5598 = vadd.f32 %v5437, %v5597
        %v5599 = vpop.f32.mrb[0].mxu0
        %v5600 = vpop.f32.mrb[0].mxu0
        %v5601 = vadd.f32 %v5440, %v5600
        %v5602 = vpop.f32.mrb[0].mxu0
        %5603 = vmatprep.mubr.bf16.mxu0 0
        %5604 = vmatmul.mubr.bf16.gmra.mrb[0].mxu0 %v4593
        %v5605 = vpop.f32.mrb[0].mxu0
        %v5606 = vadd.f32 %v5445, %v5605
        %v5607 = vpop.f32.mrb[0].mxu0
        %v5608 = vpop.f32.mrb[0].mxu0
        %v5609 = vadd.f32 %v5448, %v5608
        %v5610 = vpop.f32.mrb[0].mxu0
        %5611 = vmatprep.mubr.bf16.mxu0 0
        %5612 = vmatmul.mubr.bf16.gmra.mrb[0].mxu0 %v4636
        %v5613 = vpop.f32.mrb[0].mxu0
        %v5614 = vadd.f32 %v5453, %v5613
        %v5615 = vpop.f32.mrb[0].mxu0
        %v5616 = vpop.f32.mrb[0].mxu0
        %v5617 = vadd.f32 %v5456, %v5616
        %v5618 = vpop.f32.mrb[0].mxu0
        %5619 = vmatprep.mubr.bf16.mxu0 0
        %5620 = vmatmul.mubr.bf16.gmra.mrb[0].mxu0 %v4679
        %v5621 = vpop.f32.mrb[0].mxu0
        %v5622 = vadd.f32 %v5461, %v5621
        %v5623 = vpop.f32.mrb[0].mxu0
        %v5624 = vpop.f32.mrb[0].mxu0
        %v5625 = vadd.f32 %v5464, %v5624
        %v5626 = vpop.f32.mrb[0].mxu0
        %5627 = vmatprep.mubr.bf16.mxu0 0
        %5628 = vmatmul.mubr.bf16.gmra.mrb[0].mxu0 %v4722
        %v5629 = vpop.f32.mrb[0].mxu0
        %v5630 = vadd.f32 %v5469, %v5629
        %v5631 = vpop.f32.mrb[0].mxu0
        %v5632 = vpop.f32.mrb[0].mxu0
        %v5633 = vadd.f32 %v5472, %v5632
        %v5634 = vpop.f32.mrb[0].mxu0
        %5635 = vmatprep.mubr.bf16.mxu0 0
        %5636 = vmatmul.mubr.bf16.gmra.mrb[0].mxu0 %v4765
        %v5637 = vpop.f32.mrb[0].mxu0
        %v5638 = vadd.f32 %v5477, %v5637
        %v5639 = vpop.f32.mrb[0].mxu0
        %v5640 = vpop.f32.mrb[0].mxu0
        %v5641 = vadd.f32 %v5480, %v5640
        %v5642 = vpop.f32.mrb[0].mxu0
        %5643 = vmatprep.mubr.bf16.mxu0 0
        %5644 = vmatmul.mubr.bf16.gmra.mrb[0].mxu0 %v4808
        %v5645 = vpop.f32.mrb[0].mxu0
        %v5646 = vadd.f32 %v5485, %v5645
        %v5647 = vpop.f32.mrb[0].mxu0
        %v5648 = vpop.f32.mrb[0].mxu0
        %v5649 = vadd.f32 %v5488, %v5648
        %v5650 = vpop.f32.mrb[0].mxu0
        %5651 = vmatprep.mubr.bf16.mxu0 0
        %5652 = vmatmul.mubr.bf16.gmra.mrb[0].mxu0 %v4851
        %v5653 = vpop.f32.mrb[0].mxu0
        %v5654 = vadd.f32 %v5493, %v5653
        %v5655 = vpop.f32.mrb[0].mxu0
        %v5656 = vpop.f32.mrb[0].mxu0
        %v5657 = vadd.f32 %v5496, %v5656
        %v5658 = vpop.f32.mrb[0].mxu0
        %5659 = vmatprep.mubr.bf16.mxu0 0
        %5660 = vmatmul.mubr.bf16.gmra.mrb[0].mxu0 %v4894
        %v5661 = vpop.f32.mrb[0].mxu0
        %v5662 = vadd.f32 %v5501, %v5661
        %v5663 = vpop.f32.mrb[0].mxu0
        %v5664 = vpop.f32.mrb[0].mxu0
        %v5665 = vadd.f32 %v5504, %v5664
        %v5666 = vpop.f32.mrb[0].mxu0
        %5667 = vmatprep.mubr.bf16.mxu0 0
        %5668 = vmatmul.mubr.bf16.gmra.mrb[0].mxu0 %v4937
        %v5669 = vpop.f32.mrb[0].mxu0
        %v5670 = vadd.f32 %v5509, %v5669
        %v5671 = vpop.f32.mrb[0].mxu0
        %v5672 = vpop.f32.mrb[0].mxu0
        %v5673 = vadd.f32 %v5512, %v5672
        %v5674 = vpop.f32.mrb[0].mxu0
        %5675 = vmatprep.mubr.bf16.mxu0 0
        %5676 = vmatmul.mubr.bf16.gmra.mrb[0].mxu0 %v4980
        %v5677 = vpop.f32.mrb[0].mxu0
        %v5678 = vadd.f32 %v5517, %v5677
        %v5679 = vpop.f32.mrb[0].mxu0
        %v5680 = vpop.f32.mrb[0].mxu0
        %v5681 = vadd.f32 %v5520, %v5680
        %v5682 = vpop.f32.mrb[0].mxu0
        %5683 = vmatprep.mubr.bf16.mxu0 0
        %5684 = vmatmul.mubr.bf16.gmra.mrb[0].mxu0 %v5023
        %v5685 = vpop.f32.mrb[0].mxu0
        %v5686 = vadd.f32 %v5525, %v5685
        %v5687 = vpop.f32.mrb[0].mxu0
        %v5688 = vpop.f32.mrb[0].mxu0
        %v5689 = vadd.f32 %v5528, %v5688
        %v5690 = vpop.f32.mrb[0].mxu0
        %5691 = vmatprep.mubr.bf16.mxu0 0
        %5692 = vmatmul.mubr.bf16.gmra.mrb[0].mxu0 %v5066
        %v5693 = vpop.f32.mrb[0].mxu0
        %v5694 = vadd.f32 %v5533, %v5693
        %v5695 = vpop.f32.mrb[0].mxu0
        %v5696 = vpop.f32.mrb[0].mxu0
        %v5697 = vadd.f32 %v5536, %v5696
        %v5698 = vpop.f32.mrb[0].mxu0
        %5699 = vmatprep.mubr.bf16.mxu0 0
        %5700 = vmatmul.mubr.bf16.gmra.mrb[0].mxu0 %v5109
        %v5701 = vpop.f32.mrb[0].mxu0
        %v5702 = vadd.f32 %v5541, %v5701
        %v5703 = vpop.f32.mrb[0].mxu0
        %v5704 = vpop.f32.mrb[0].mxu0
        %v5705 = vadd.f32 %v5544, %v5704
        %v5706 = vpop.f32.mrb[0].mxu0
        %5707 = vmatprep.mubr.bf16.mxu0 0
        %5708 = vmatmul.mubr.bf16.gmra.mrb[0].mxu0 %v5152
        %v5709 = vpop.f32.mrb[0].mxu0
        %v5710 = vadd.f32 %v5549, %v5709
        %v5711 = vpop.f32.mrb[0].mxu0
        %v5712 = vpop.f32.mrb[0].mxu0
        %v5713 = vadd.f32 %v5552, %v5712
        %v5714 = vpop.f32.mrb[0].mxu0
        %5715 = vdwg.mxu0
        %v5764 = vunpack.c.l.b16 %v2490
        %v5765 = vunpack.c.l.b16 %v2491
        %v5766 = vunpack.c.l.b16 %v2492
        %v5767 = vunpack.c.l.b16 %v2493
        %v5768 = vunpack.c.l.b16 %v2494
        %v5769 = vunpack.c.l.b16 %v2495
        %v5770 = vunpack.c.l.b16 %v2496
        %v5771 = vunpack.c.l.b16 %v2497
        %v5772 = vunpack.c.l.b16 %v2498
        %v5773 = vunpack.c.l.b16 %v2499
        %v5774 = vunpack.c.l.b16 %v2500
        %v5775 = vunpack.c.l.b16 %v2501
        %v5776 = vunpack.c.l.b16 %v2502
        %v5777 = vunpack.c.l.b16 %v2503
        %v5778 = vunpack.c.l.b16 %v2504
        %v5779 = vunpack.c.l.b16 %v2505
        %v5780 = vunpack.c.l.b16 %v2506
        %v5781 = vunpack.c.l.b16 %v2507
        %v5782 = vunpack.c.l.b16 %v2508
        %v5783 = vunpack.c.l.b16 %v2509
        %v5784 = vunpack.c.l.b16 %v2510
        %v5785 = vunpack.c.l.b16 %v2511
        %v5786 = vunpack.c.l.b16 %v2512
        %v5787 = vunpack.c.l.b16 %v2513
        %v5788 = vunpack.c.l.b16 %v2514
        %v5789 = vunpack.c.l.b16 %v2515
        %v5790 = vunpack.c.l.b16 %v2516
        %v5791 = vunpack.c.l.b16 %v2517
        %v5792 = vunpack.c.l.b16 %v2518
        %v5793 = vunpack.c.l.b16 %v2519
        %v5794 = vunpack.c.l.b16 %v2520
        %v5795 = vunpack.c.l.b16 %v2521
        %v5796 = vunpack.c.l.b16 %v2522
        %v5797 = vunpack.c.l.b16 %v2523
        %v5798 = vunpack.c.l.b16 %v2524
        %v5799 = vunpack.c.l.b16 %v2525
        %v5800 = vunpack.c.l.b16 %v2526
        %v5801 = vunpack.c.l.b16 %v2527
        %v5802 = vunpack.c.l.b16 %v2528
        %v5803 = vunpack.c.l.b16 %v2529
        %v5804 = vunpack.c.l.b16 %v2530
        %v5805 = vunpack.c.l.b16 %v2531
        %v5806 = vunpack.c.l.b16 %v2532
        %v5807 = vunpack.c.l.b16 %v2533
        %v5808 = vunpack.c.l.b16 %v2534
        %v5809 = vunpack.c.l.b16 %v2535
        %v5810 = vunpack.c.l.b16 %v2536
        %v5811 = vunpack.c.l.b16 %v2537
        %v5812 = vpack.c.b16 %v5765, %v5764
        %v5813 = vpack.c.b16 %v5767, %v5766
        %v5814 = vpack.c.b16 %v5769, %v5768
        %v5815 = vpack.c.b16 %v5771, %v5770
        %v5816 = vpack.c.b16 %v5773, %v5772
        %v5817 = vpack.c.b16 %v5775, %v5774
        %v5818 = vpack.c.b16 %v5777, %v5776
        %v5819 = vpack.c.b16 %v5779, %v5778
        %v5820 = vpack.c.b16 %v5781, %v5780
        %v5821 = vpack.c.b16 %v5783, %v5782
        %v5822 = vpack.c.b16 %v5785, %v5784
        %v5823 = vpack.c.b16 %v5787, %v5786
        %v5824 = vpack.c.b16 %v5789, %v5788
        %v5825 = vpack.c.b16 %v5791, %v5790
        %v5826 = vpack.c.b16 %v5793, %v5792
        %v5827 = vpack.c.b16 %v5795, %v5794
        %v5828 = vpack.c.b16 %v5797, %v5796
        %v5829 = vpack.c.b16 %v5799, %v5798
        %v5830 = vpack.c.b16 %v5801, %v5800
        %v5831 = vpack.c.b16 %v5803, %v5802
        %v5832 = vpack.c.b16 %v5805, %v5804
        %v5833 = vpack.c.b16 %v5807, %v5806
        %v5834 = vpack.c.b16 %v5809, %v5808
        %v5835 = vpack.c.b16 %v5811, %v5810
        %5860 = vmatprep.subr.bf16.mxu0 0
        %5861 = vmatpush1.bf16.msra.mxu0 %v5812
        %5862 = vmatprep.subr.bf16.mxu0 0
        %5863 = vmatpush1.bf16.msra.mxu0 %v5813
        %5864 = vmatprep.subr.bf16.mxu0 0
        %5865 = vmatpush1.bf16.msra.mxu0 %v5814
        %5866 = vmatprep.subr.bf16.mxu0 0
        %5867 = vmatpush1.bf16.msra.mxu0 %v5815
        %5868 = vmatprep.subr.bf16.mxu0 0
        %5869 = vmatpush1.bf16.msra.mxu0 %v5816
        %5870 = vmatprep.subr.bf16.mxu0 0
        %5871 = vmatpush1.bf16.msra.mxu0 %v5817
        %5872 = vmatprep.subr.bf16.mxu0 0
        %5873 = vmatpush1.bf16.msra.mxu0 %v5818
        %5874 = vmatprep.subr.bf16.mxu0 0
        %5875 = vmatpush1.bf16.msra.mxu0 %v5819
        %5876 = vmatprep.subr.bf16.mxu0 0
        %5877 = vmatpush1.bf16.msra.mxu0 %v5820
        %5878 = vmatprep.subr.bf16.mxu0 0
        %5879 = vmatpush1.bf16.msra.mxu0 %v5821
        %5880 = vmatprep.subr.bf16.mxu0 0
        %5881 = vmatpush1.bf16.msra.mxu0 %v5822
        %5882 = vmatprep.subr.bf16.mxu0 0
        %5883 = vmatpush1.bf16.msra.mxu0 %v5823
        %5884 = vmatprep.subr.bf16.mxu0 0
        %5885 = vmatpush1.bf16.msra.mxu0 %v5824
        %5886 = vmatprep.subr.bf16.mxu0 0
        %5887 = vmatpush1.bf16.msra.mxu0 %v5825
        %5888 = vmatprep.subr.bf16.mxu0 0
        %5889 = vmatpush1.bf16.msra.mxu0 %v5826
        %5890 = vmatprep.subr.bf16.mxu0 0
        %5891 = vmatpush1.bf16.msra.mxu0 %v5827
        %5892 = vmatprep.mubr.bf16.mxu0 %v1779
        %5893 = vmatmul.mubr.bf16.gmra.mrb[0].mxu0 %v1770
        %v5894 = vpop.f32.mrb[0].mxu0
        %v5895 = vadd.f32 %v5590, %v5894
        %v5896 = vpop.f32.mrb[0].mxu0
        %v5897 = vpop.f32.mrb[0].mxu0
        %v5898 = vadd.f32 %v5593, %v5897
        %v5899 = vpop.f32.mrb[0].mxu0
        %5900 = vmatprep.mubr.bf16.mxu0 %v1822
        %5901 = vmatmul.mubr.bf16.gmra.mrb[0].mxu0 %v1813
        %v5902 = vpop.f32.mrb[0].mxu0
        %v5903 = vadd.f32 %v5598, %v5902
        %v5904 = vpop.f32.mrb[0].mxu0
        %v5905 = vpop.f32.mrb[0].mxu0
        %v5906 = vadd.f32 %v5601, %v5905
        %v5907 = vpop.f32.mrb[0].mxu0
        %5908 = vmatprep.mubr.bf16.mxu0 %v1865
        %5909 = vmatmul.mubr.bf16.gmra.mrb[0].mxu0 %v1856
        %v5910 = vpop.f32.mrb[0].mxu0
        %v5911 = vadd.f32 %v5606, %v5910
        %v5912 = vpop.f32.mrb[0].mxu0
        %v5913 = vpop.f32.mrb[0].mxu0
        %v5914 = vadd.f32 %v5609, %v5913
        %v5915 = vpop.f32.mrb[0].mxu0
        %5916 = vmatprep.mubr.bf16.mxu0 %v1908
        %5917 = vmatmul.mubr.bf16.gmra.mrb[0].mxu0 %v1899
        %v5918 = vpop.f32.mrb[0].mxu0
        %v5919 = vadd.f32 %v5614, %v5918
        %v5920 = vpop.f32.mrb[0].mxu0
        %v5921 = vpop.f32.mrb[0].mxu0
        %v5922 = vadd.f32 %v5617, %v5921
        %v5923 = vpop.f32.mrb[0].mxu0
        %5924 = vmatprep.mubr.bf16.mxu0 %v1951
        %5925 = vmatmul.mubr.bf16.gmra.mrb[0].mxu0 %v1942
        %v5926 = vpop.f32.mrb[0].mxu0
        %v5927 = vadd.f32 %v5622, %v5926
        %v5928 = vpop.f32.mrb[0].mxu0
        %v5929 = vpop.f32.mrb[0].mxu0
        %v5930 = vadd.f32 %v5625, %v5929
        %v5931 = vpop.f32.mrb[0].mxu0
        %5932 = vmatprep.mubr.bf16.mxu0 %v1994
        %5933 = vmatmul.mubr.bf16.gmra.mrb[0].mxu0 %v1985
        %v5934 = vpop.f32.mrb[0].mxu0
        %v5935 = vadd.f32 %v5630, %v5934
        %v5936 = vpop.f32.mrb[0].mxu0
        %v5937 = vpop.f32.mrb[0].mxu0
        %v5938 = vadd.f32 %v5633, %v5937
        %v5939 = vpop.f32.mrb[0].mxu0
        %5940 = vmatprep.mubr.bf16.mxu0 %v2037
        %5941 = vmatmul.mubr.bf16.gmra.mrb[0].mxu0 %v2028
        %v5942 = vpop.f32.mrb[0].mxu0
        %v5943 = vadd.f32 %v5638, %v5942
        %v5944 = vpop.f32.mrb[0].mxu0
        %v5945 = vpop.f32.mrb[0].mxu0
        %v5946 = vadd.f32 %v5641, %v5945
        %v5947 = vpop.f32.mrb[0].mxu0
        %5948 = vmatprep.mubr.bf16.mxu0 %v2080
        %5949 = vmatmul.mubr.bf16.gmra.mrb[0].mxu0 %v2071
        %v5950 = vpop.f32.mrb[0].mxu0
        %v5951 = vadd.f32 %v5646, %v5950
        %v5952 = vpop.f32.mrb[0].mxu0
        %v5953 = vpop.f32.mrb[0].mxu0
        %v5954 = vadd.f32 %v5649, %v5953
        %v5955 = vpop.f32.mrb[0].mxu0
        %5956 = vmatprep.mubr.bf16.mxu0 %v2123
        %5957 = vmatmul.mubr.bf16.gmra.mrb[0].mxu0 %v2114
        %v5958 = vpop.f32.mrb[0].mxu0
        %v5959 = vadd.f32 %v5654, %v5958
        %v5960 = vpop.f32.mrb[0].mxu0
        %v5961 = vpop.f32.mrb[0].mxu0
        %v5962 = vadd.f32 %v5657, %v5961
        %v5963 = vpop.f32.mrb[0].mxu0
        %5964 = vmatprep.mubr.bf16.mxu0 %v2166
        %5965 = vmatmul.mubr.bf16.gmra.mrb[0].mxu0 %v2157
        %v5966 = vpop.f32.mrb[0].mxu0
        %v5967 = vadd.f32 %v5662, %v5966
        %v5968 = vpop.f32.mrb[0].mxu0
        %v5969 = vpop.f32.mrb[0].mxu0
        %v5970 = vadd.f32 %v5665, %v5969
        %v5971 = vpop.f32.mrb[0].mxu0
        %5972 = vmatprep.mubr.bf16.mxu0 %v2209
        %5973 = vmatmul.mubr.bf16.gmra.mrb[0].mxu0 %v2200
        %v5974 = vpop.f32.mrb[0].mxu0
        %v5975 = vadd.f32 %v5670, %v5974
        %v5976 = vpop.f32.mrb[0].mxu0
        %v5977 = vpop.f32.mrb[0].mxu0
        %v5978 = vadd.f32 %v5673, %v5977
        %v5979 = vpop.f32.mrb[0].mxu0
        %5980 = vmatprep.mubr.bf16.mxu0 %v2252
        %5981 = vmatmul.mubr.bf16.gmra.mrb[0].mxu0 %v2243
        %v5982 = vpop.f32.mrb[0].mxu0
        %v5983 = vadd.f32 %v5678, %v5982
        %v5984 = vpop.f32.mrb[0].mxu0
        %v5985 = vpop.f32.mrb[0].mxu0
        %v5986 = vadd.f32 %v5681, %v5985
        %v5987 = vpop.f32.mrb[0].mxu0
        %5988 = vmatprep.mubr.bf16.mxu0 %v2295
        %5989 = vmatmul.mubr.bf16.gmra.mrb[0].mxu0 %v2286
        %v5990 = vpop.f32.mrb[0].mxu0
        %v5991 = vadd.f32 %v5686, %v5990
        %v5992 = vpop.f32.mrb[0].mxu0
        %v5993 = vpop.f32.mrb[0].mxu0
        %v5994 = vadd.f32 %v5689, %v5993
        %v5995 = vpop.f32.mrb[0].mxu0
        %5996 = vmatprep.mubr.bf16.mxu0 %v2338
        %5997 = vmatmul.mubr.bf16.gmra.mrb[0].mxu0 %v2329
        %v5998 = vpop.f32.mrb[0].mxu0
        %v5999 = vadd.f32 %v5694, %v5998
        %v6000 = vpop.f32.mrb[0].mxu0
        %v6001 = vpop.f32.mrb[0].mxu0
        %v6002 = vadd.f32 %v5697, %v6001
        %v6003 = vpop.f32.mrb[0].mxu0
        %6004 = vmatprep.mubr.bf16.mxu0 %v2381
        %6005 = vmatmul.mubr.bf16.gmra.mrb[0].mxu0 %v2372
        %v6006 = vpop.f32.mrb[0].mxu0
        %v6007 = vadd.f32 %v5702, %v6006
        %v6008 = vpop.f32.mrb[0].mxu0
        %v6009 = vpop.f32.mrb[0].mxu0
        %v6010 = vadd.f32 %v5705, %v6009
        %v6011 = vpop.f32.mrb[0].mxu0
        %6012 = vmatprep.mubr.bf16.mxu0 %v2424
        %6013 = vmatmul.mubr.bf16.gmra.mrb[0].mxu0 %v2415
        %v6014 = vpop.f32.mrb[0].mxu0
        %v6015 = vadd.f32 %v5710, %v6014
        %v6016 = vpop.f32.mrb[0].mxu0
        %v6017 = vpop.f32.mrb[0].mxu0
        %v6018 = vadd.f32 %v5713, %v6017
        %v6019 = vpop.f32.mrb[0].mxu0
        %6020 = vdwg.mxu0
        %6021 = vmatprep.subr.bf16.mxu0 0
        %6022 = vmatpush1.bf16.msra.mxu0 %v5828
        %6023 = vmatprep.subr.bf16.mxu0 0
        %6024 = vmatpush1.bf16.msra.mxu0 %v5829
        %6025 = vmatprep.subr.bf16.mxu0 0
        %6026 = vmatpush1.bf16.msra.mxu0 %v5830
        %6027 = vmatprep.subr.bf16.mxu0 0
        %6028 = vmatpush1.bf16.msra.mxu0 %v5831
        %6029 = vmatprep.subr.bf16.mxu0 0
        %6030 = vmatpush1.bf16.msra.mxu0 %v5832
        %6031 = vmatprep.subr.bf16.mxu0 0
        %6032 = vmatpush1.bf16.msra.mxu0 %v5833
        %6033 = vmatprep.subr.bf16.mxu0 0
        %6034 = vmatpush1.bf16.msra.mxu0 %v5834
        %6035 = vmatprep.subr.bf16.mxu0 0
        %6036 = vmatpush1.bf16.msra.mxu0 %v5835
        %6037 = vmatprep.subr.bf16.mxu0 0
        %6038 = vmatpush1.bf16.msra.mxu0 0
        %6039 = vmatprep.subr.bf16.mxu0 0
        %6040 = vmatpush1.bf16.msra.mxu0 0
        %6041 = vmatprep.subr.bf16.mxu0 0
        %6042 = vmatpush1.bf16.msra.mxu0 0
        %6043 = vmatprep.subr.bf16.mxu0 0
        %6044 = vmatpush1.bf16.msra.mxu0 0
        %6045 = vmatprep.subr.bf16.mxu0 0
        %6046 = vmatpush1.bf16.msra.mxu0 0
        %6047 = vmatprep.subr.bf16.mxu0 0
        %6048 = vmatpush1.bf16.msra.mxu0 0
        %6049 = vmatprep.subr.bf16.mxu0 0
        %6050 = vmatpush1.bf16.msra.mxu0 0
        %6051 = vmatprep.subr.bf16.mxu0 0
        %6052 = vmatpush1.bf16.msra.mxu0 0
        %6053 = vmatprep.mubr.bf16.mxu0 0
        %6054 = vmatmul.mubr.bf16.gmra.mrb[0].mxu0 %v1796
        %v6055 = vpop.f32.mrb[0].mxu0
        %v6056 = vadd.f32 %v5895, %v6055
        %v6057 = vpop.f32.mrb[0].mxu0
        %v6058 = vpop.f32.mrb[0].mxu0
        %v6059 = vadd.f32 %v5898, %v6058
        %v6060 = vpop.f32.mrb[0].mxu0
        %6061 = vmatprep.mubr.bf16.mxu0 0
        %6062 = vmatmul.mubr.bf16.gmra.mrb[0].mxu0 %v1839
        %v6063 = vpop.f32.mrb[0].mxu0
        %v6064 = vadd.f32 %v5903, %v6063
        %v6065 = vpop.f32.mrb[0].mxu0
        %v6066 = vpop.f32.mrb[0].mxu0
        %v6067 = vadd.f32 %v5906, %v6066
        %v6068 = vpop.f32.mrb[0].mxu0
        %6069 = vmatprep.mubr.bf16.mxu0 0
        %6070 = vmatmul.mubr.bf16.gmra.mrb[0].mxu0 %v1882
        %v6071 = vpop.f32.mrb[0].mxu0
        %v6072 = vadd.f32 %v5911, %v6071
        %v6073 = vpop.f32.mrb[0].mxu0
        %v6074 = vpop.f32.mrb[0].mxu0
        %v6075 = vadd.f32 %v5914, %v6074
        %v6076 = vpop.f32.mrb[0].mxu0
        %6077 = vmatprep.mubr.bf16.mxu0 0
        %6078 = vmatmul.mubr.bf16.gmra.mrb[0].mxu0 %v1925
        %v6079 = vpop.f32.mrb[0].mxu0
        %v6080 = vadd.f32 %v5919, %v6079
        %v6081 = vpop.f32.mrb[0].mxu0
        %v6082 = vpop.f32.mrb[0].mxu0
        %v6083 = vadd.f32 %v5922, %v6082
        %v6084 = vpop.f32.mrb[0].mxu0
        %6085 = vmatprep.mubr.bf16.mxu0 0
        %6086 = vmatmul.mubr.bf16.gmra.mrb[0].mxu0 %v1968
        %v6087 = vpop.f32.mrb[0].mxu0
        %v6088 = vadd.f32 %v5927, %v6087
        %v6089 = vpop.f32.mrb[0].mxu0
        %v6090 = vpop.f32.mrb[0].mxu0
        %v6091 = vadd.f32 %v5930, %v6090
        %v6092 = vpop.f32.mrb[0].mxu0
        %6093 = vmatprep.mubr.bf16.mxu0 0
        %6094 = vmatmul.mubr.bf16.gmra.mrb[0].mxu0 %v2011
        %v6095 = vpop.f32.mrb[0].mxu0
        %v6096 = vadd.f32 %v5935, %v6095
        %v6097 = vpop.f32.mrb[0].mxu0
        %v6098 = vpop.f32.mrb[0].mxu0
        %v6099 = vadd.f32 %v5938, %v6098
        %v6100 = vpop.f32.mrb[0].mxu0
        %6101 = vmatprep.mubr.bf16.mxu0 0
        %6102 = vmatmul.mubr.bf16.gmra.mrb[0].mxu0 %v2054
        %v6103 = vpop.f32.mrb[0].mxu0
        %v6104 = vadd.f32 %v5943, %v6103
        %v6105 = vpop.f32.mrb[0].mxu0
        %v6106 = vpop.f32.mrb[0].mxu0
        %v6107 = vadd.f32 %v5946, %v6106
        %v6108 = vpop.f32.mrb[0].mxu0
        %6109 = vmatprep.mubr.bf16.mxu0 0
        %6110 = vmatmul.mubr.bf16.gmra.mrb[0].mxu0 %v2097
        %v6111 = vpop.f32.mrb[0].mxu0
        %v6112 = vadd.f32 %v5951, %v6111
        %v6113 = vpop.f32.mrb[0].mxu0
        %v6114 = vpop.f32.mrb[0].mxu0
        %v6115 = vadd.f32 %v5954, %v6114
        %v6116 = vpop.f32.mrb[0].mxu0
        %6117 = vmatprep.mubr.bf16.mxu0 0
        %6118 = vmatmul.mubr.bf16.gmra.mrb[0].mxu0 %v2140
        %v6119 = vpop.f32.mrb[0].mxu0
        %v6120 = vadd.f32 %v5959, %v6119
        %v6121 = vpop.f32.mrb[0].mxu0
        %v6122 = vpop.f32.mrb[0].mxu0
        %v6123 = vadd.f32 %v5962, %v6122
        %v6124 = vpop.f32.mrb[0].mxu0
        %6125 = vmatprep.mubr.bf16.mxu0 0
        %6126 = vmatmul.mubr.bf16.gmra.mrb[0].mxu0 %v2183
        %v6127 = vpop.f32.mrb[0].mxu0
        %v6128 = vadd.f32 %v5967, %v6127
        %v6129 = vpop.f32.mrb[0].mxu0
        %v6130 = vpop.f32.mrb[0].mxu0
        %v6131 = vadd.f32 %v5970, %v6130
        %v6132 = vpop.f32.mrb[0].mxu0
        %6133 = vmatprep.mubr.bf16.mxu0 0
        %6134 = vmatmul.mubr.bf16.gmra.mrb[0].mxu0 %v2226
        %v6135 = vpop.f32.mrb[0].mxu0
        %v6136 = vadd.f32 %v5975, %v6135
        %v6137 = vpop.f32.mrb[0].mxu0
        %v6138 = vpop.f32.mrb[0].mxu0
        %v6139 = vadd.f32 %v5978, %v6138
        %v6140 = vpop.f32.mrb[0].mxu0
        %6141 = vmatprep.mubr.bf16.mxu0 0
        %6142 = vmatmul.mubr.bf16.gmra.mrb[0].mxu0 %v2269
        %v6143 = vpop.f32.mrb[0].mxu0
        %v6144 = vadd.f32 %v5983, %v6143
        %v6145 = vpop.f32.mrb[0].mxu0
        %v6146 = vpop.f32.mrb[0].mxu0
        %v6147 = vadd.f32 %v5986, %v6146
        %v6148 = vpop.f32.mrb[0].mxu0
        %6149 = vmatprep.mubr.bf16.mxu0 0
        %6150 = vmatmul.mubr.bf16.gmra.mrb[0].mxu0 %v2312
        %v6151 = vpop.f32.mrb[0].mxu0
        %v6152 = vadd.f32 %v5991, %v6151
        %v6153 = vpop.f32.mrb[0].mxu0
        %v6154 = vpop.f32.mrb[0].mxu0
        %v6155 = vadd.f32 %v5994, %v6154
        %v6156 = vpop.f32.mrb[0].mxu0
        %6157 = vmatprep.mubr.bf16.mxu0 0
        %6158 = vmatmul.mubr.bf16.gmra.mrb[0].mxu0 %v2355
        %v6159 = vpop.f32.mrb[0].mxu0
        %v6160 = vadd.f32 %v5999, %v6159
        %v6161 = vpop.f32.mrb[0].mxu0
        %v6162 = vpop.f32.mrb[0].mxu0
        %v6163 = vadd.f32 %v6002, %v6162
        %v6164 = vpop.f32.mrb[0].mxu0
        %6165 = vmatprep.mubr.bf16.mxu0 0
        %6166 = vmatmul.mubr.bf16.gmra.mrb[0].mxu0 %v2398
        %v6167 = vpop.f32.mrb[0].mxu0
        %v6168 = vadd.f32 %v6007, %v6167
        %v6169 = vpop.f32.mrb[0].mxu0
        %v6170 = vpop.f32.mrb[0].mxu0
        %v6171 = vadd.f32 %v6010, %v6170
        %v6172 = vpop.f32.mrb[0].mxu0
        %6173 = vmatprep.mubr.bf16.mxu0 0
        %6174 = vmatmul.mubr.bf16.gmra.mrb[0].mxu0 %v2441
        %v6175 = vpop.f32.mrb[0].mxu0
        %v6176 = vadd.f32 %v6015, %v6175
        %v6177 = vpop.f32.mrb[0].mxu0
        %v6178 = vpop.f32.mrb[0].mxu0
        %v6179 = vadd.f32 %v6018, %v6178
        %v6180 = vpop.f32.mrb[0].mxu0
        %6181 = vdwg.mxu0
        %v6182 = vld [vmem:[%s1286 + $0x4] sm:$0xf]
        %v6183 = vld [vmem:[%s1286 + $0x8] sm:$0xf]
        %v6184 = vld [vmem:[%s1286 + $0xc] sm:$0xf]
        %v6185 = vld [vmem:[%s1286 + $0x10] sm:$0xf]
        %v6186 = vld [vmem:[%s1286 + $0x18] sm:$0xf]
        %v6187 = vld [vmem:[%s1286 + $0x1c] sm:$0xf]
        %v6188 = vld [vmem:[%s1286 + $0x20] sm:$0xf]
        %v6189 = vld [vmem:[%s1286 + $0x24] sm:$0xf]
        %v6190 = vld [vmem:[%s1286 + $0x2c] sm:$0xf]
        %v6191 = vld [vmem:[%s1286 + $0x30] sm:$0xf]
        %v6192 = vld [vmem:[%s1286 + $0x34] sm:$0xf]
        %v6193 = vld [vmem:[%s1286 + $0x38] sm:$0xf]
        %v6194 = vld [vmem:[%s1286 + $0x40] sm:$0xf]
        %v6195 = vld [vmem:[%s1286 + $0x44] sm:$0xf]
        %v6196 = vld [vmem:[%s1286 + $0x48] sm:$0xf]
        %v6197 = vld [vmem:[%s1286 + $0x4c] sm:$0xf]
        %v6198 = vld [vmem:[%s1286 + $0x54] sm:$0xf]
        %v6199 = vld [vmem:[%s1286 + $0x58] sm:$0xf]
        %v6200 = vld [vmem:[%s1286 + $0x5c] sm:$0xf]
        %v6201 = vld [vmem:[%s1286 + $0x60] sm:$0xf]
        %v6202 = vld [vmem:[%s1286 + $0x68] sm:$0xf]
        %v6203 = vld [vmem:[%s1286 + $0x6c] sm:$0xf]
        %v6204 = vld [vmem:[%s1286 + $0x70] sm:$0xf]
        %v6205 = vld [vmem:[%s1286 + $0x74] sm:$0xf]
        %v6206 = vld [vmem:[%s1286 + $0x7c] sm:$0xf]
        %v6207 = vld [vmem:[%s1286 + $0x80] sm:$0xf]
        %v6208 = vld [vmem:[%s1286 + $0x84] sm:$0xf]
        %v6209 = vld [vmem:[%s1286 + $0x88] sm:$0xf]
        %v6210 = vld [vmem:[%s1286 + $0x90] sm:$0xf]
        %v6211 = vld [vmem:[%s1286 + $0x94] sm:$0xf]
        %v6212 = vld [vmem:[%s1286 + $0x98] sm:$0xf]
        %v6213 = vld [vmem:[%s1286 + $0x9c] sm:$0xf]
        %v6214 = vld [vmem:[%s1286 + $0xa4] sm:$0xf]
        %v6215 = vld [vmem:[%s1286 + $0xa8] sm:$0xf]
        %v6216 = vld [vmem:[%s1286 + $0xac] sm:$0xf]
        %v6217 = vld [vmem:[%s1286 + $0xb0] sm:$0xf]
        %v6218 = vld [vmem:[%s1286 + $0xb8] sm:$0xf]
        %v6219 = vld [vmem:[%s1286 + $0xbc] sm:$0xf]
        %v6220 = vld [vmem:[%s1286 + $0xc0] sm:$0xf]
        %v6221 = vld [vmem:[%s1286 + $0xc4] sm:$0xf]
        %v6222 = vld [vmem:[%s1286 + $0xcc] sm:$0xf]
        %v6223 = vld [vmem:[%s1286 + $0xd0] sm:$0xf]
        %v6224 = vld [vmem:[%s1286 + $0xd4] sm:$0xf]
        %v6225 = vld [vmem:[%s1286 + $0xd8] sm:$0xf]
        %v6226 = vld [vmem:[%s1286 + $0xe0] sm:$0xf]
        %v6227 = vld [vmem:[%s1286 + $0xe4] sm:$0xf]
        %v6228 = vld [vmem:[%s1286 + $0xe8] sm:$0xf]
        %v6229 = vld [vmem:[%s1286 + $0xec] sm:$0xf]
        %v6230 = vld [vmem:[%s1286 + $0xf4] sm:$0xf]
        %v6231 = vld [vmem:[%s1286 + $0xf8] sm:$0xf]
        %v6232 = vld [vmem:[%s1286 + $0xfc] sm:$0xf]
        %v6233 = vld [vmem:[%s1286 + $0x100] sm:$0xf]
        %v6234 = vld [vmem:[%s1286 + $0x108] sm:$0xf]
        %v6235 = vld [vmem:[%s1286 + $0x10c] sm:$0xf]
        %v6236 = vld [vmem:[%s1286 + $0x110] sm:$0xf]
        %v6237 = vld [vmem:[%s1286 + $0x114] sm:$0xf]
        %v6238 = vld [vmem:[%s1286 + $0x11c] sm:$0xf]
        %v6239 = vld [vmem:[%s1286 + $0x120] sm:$0xf]
        %v6240 = vld [vmem:[%s1286 + $0x124] sm:$0xf]
        %v6241 = vld [vmem:[%s1286 + $0x128] sm:$0xf]
        %v6242 = vld [vmem:[%s1286 + $0x130] sm:$0xf]
        %v6243 = vld [vmem:[%s1286 + $0x134] sm:$0xf]
        %v6244 = vld [vmem:[%s1286 + $0x138] sm:$0xf]
        %v6245 = vld [vmem:[%s1286 + $0x13c] sm:$0xf]
        %v6247 = vshrl.u32 %v6182, 16
        %v6249 = vrot.slane %v6247, 7
        %v6250 = vrot.slane %v6249, 4
        %v6252 = vshrl.u32 %v6183, 16
        %v6254 = vrot.slane %v6252, 7
        %v6255 = vshll.u32 %v6183, 16
        %v6257 = vor.u32 %v6254, %v6255
        %v6258 = vsel %vm2604, %v6250, %v6257
        %v6259 = vrot.slane %v6254, 4
        %v6261 = vshrl.u32 %v6184, 16
        %v6263 = vrot.slane %v6261, 7
        %v6264 = vshll.u32 %v6184, 16
        %v6266 = vor.u32 %v6263, %v6264
        %v6267 = vsel %vm2604, %v6259, %v6266
        %v6269 = vshrl.u32 %v6186, 16
        %v6271 = vrot.slane %v6269, 7
        %v6272 = vrot.slane %v6271, 4
        %v6274 = vshrl.u32 %v6187, 16
        %v6276 = vrot.slane %v6274, 7
        %v6277 = vshll.u32 %v6187, 16
        %v6279 = vor.u32 %v6276, %v6277
        %v6280 = vsel %vm2604, %v6272, %v6279
        %v6281 = vrot.slane %v6276, 4
        %v6283 = vshrl.u32 %v6188, 16
        %v6285 = vrot.slane %v6283, 7
        %v6286 = vshll.u32 %v6188, 16
        %v6288 = vor.u32 %v6285, %v6286
        %v6289 = vsel %vm2604, %v6281, %v6288
        %v6291 = vshrl.u32 %v6190, 16
        %v6293 = vrot.slane %v6291, 7
        %v6294 = vrot.slane %v6293, 4
        %v6296 = vshrl.u32 %v6191, 16
        %v6298 = vrot.slane %v6296, 7
        %v6299 = vshll.u32 %v6191, 16
        %v6301 = vor.u32 %v6298, %v6299
        %v6302 = vsel %vm2604, %v6294, %v6301
        %v6303 = vrot.slane %v6298, 4
        %v6305 = vshrl.u32 %v6192, 16
        %v6307 = vrot.slane %v6305, 7
        %v6308 = vshll.u32 %v6192, 16
        %v6310 = vor.u32 %v6307, %v6308
        %v6311 = vsel %vm2604, %v6303, %v6310
        %v6313 = vshrl.u32 %v6194, 16
        %v6315 = vrot.slane %v6313, 7
        %v6316 = vrot.slane %v6315, 4
        %v6318 = vshrl.u32 %v6195, 16
        %v6320 = vrot.slane %v6318, 7
        %v6321 = vshll.u32 %v6195, 16
        %v6323 = vor.u32 %v6320, %v6321
        %v6324 = vsel %vm2604, %v6316, %v6323
        %v6325 = vrot.slane %v6320, 4
        %v6327 = vshrl.u32 %v6196, 16
        %v6329 = vrot.slane %v6327, 7
        %v6330 = vshll.u32 %v6196, 16
        %v6332 = vor.u32 %v6329, %v6330
        %v6333 = vsel %vm2604, %v6325, %v6332
        %v6335 = vshrl.u32 %v6198, 16
        %v6337 = vrot.slane %v6335, 7
        %v6338 = vrot.slane %v6337, 4
        %v6340 = vshrl.u32 %v6199, 16
        %v6342 = vrot.slane %v6340, 7
        %v6343 = vshll.u32 %v6199, 16
        %v6345 = vor.u32 %v6342, %v6343
        %v6346 = vsel %vm2604, %v6338, %v6345
        %v6347 = vrot.slane %v6342, 4
        %v6349 = vshrl.u32 %v6200, 16
        %v6351 = vrot.slane %v6349, 7
        %v6352 = vshll.u32 %v6200, 16
        %v6354 = vor.u32 %v6351, %v6352
        %v6355 = vsel %vm2604, %v6347, %v6354
        %v6357 = vshrl.u32 %v6202, 16
        %v6359 = vrot.slane %v6357, 7
        %v6360 = vrot.slane %v6359, 4
        %v6362 = vshrl.u32 %v6203, 16
        %v6364 = vrot.slane %v6362, 7
        %v6365 = vshll.u32 %v6203, 16
        %v6367 = vor.u32 %v6364, %v6365
        %v6368 = vsel %vm2604, %v6360, %v6367
        %v6369 = vrot.slane %v6364, 4
        %v6371 = vshrl.u32 %v6204, 16
        %v6373 = vrot.slane %v6371, 7
        %v6374 = vshll.u32 %v6204, 16
        %v6376 = vor.u32 %v6373, %v6374
        %v6377 = vsel %vm2604, %v6369, %v6376
        %v6379 = vshrl.u32 %v6206, 16
        %v6381 = vrot.slane %v6379, 7
        %v6382 = vrot.slane %v6381, 4
        %v6384 = vshrl.u32 %v6207, 16
        %v6386 = vrot.slane %v6384, 7
        %v6387 = vshll.u32 %v6207, 16
        %v6389 = vor.u32 %v6386, %v6387
        %v6390 = vsel %vm2604, %v6382, %v6389
        %v6391 = vrot.slane %v6386, 4
        %v6393 = vshrl.u32 %v6208, 16
        %v6395 = vrot.slane %v6393, 7
        %v6396 = vshll.u32 %v6208, 16
        %v6398 = vor.u32 %v6395, %v6396
        %v6399 = vsel %vm2604, %v6391, %v6398
        %v6401 = vshrl.u32 %v6210, 16
        %v6403 = vrot.slane %v6401, 7
        %v6404 = vrot.slane %v6403, 4
        %v6406 = vshrl.u32 %v6211, 16
        %v6408 = vrot.slane %v6406, 7
        %v6409 = vshll.u32 %v6211, 16
        %v6411 = vor.u32 %v6408, %v6409
        %v6412 = vsel %vm2604, %v6404, %v6411
        %v6413 = vrot.slane %v6408, 4
        %v6415 = vshrl.u32 %v6212, 16
        %v6417 = vrot.slane %v6415, 7
        %v6418 = vshll.u32 %v6212, 16
        %v6420 = vor.u32 %v6417, %v6418
        %v6421 = vsel %vm2604, %v6413, %v6420
        %v6423 = vshrl.u32 %v6214, 16
        %v6425 = vrot.slane %v6423, 7
        %v6426 = vrot.slane %v6425, 4
        %v6428 = vshrl.u32 %v6215, 16
        %v6430 = vrot.slane %v6428, 7
        %v6431 = vshll.u32 %v6215, 16
        %v6433 = vor.u32 %v6430, %v6431
        %v6434 = vsel %vm2604, %v6426, %v6433
        %v6435 = vrot.slane %v6430, 4
        %v6437 = vshrl.u32 %v6216, 16
        %v6439 = vrot.slane %v6437, 7
        %v6440 = vshll.u32 %v6216, 16
        %v6442 = vor.u32 %v6439, %v6440
        %v6443 = vsel %vm2604, %v6435, %v6442
        %v6445 = vshrl.u32 %v6218, 16
        %v6447 = vrot.slane %v6445, 7
        %v6448 = vrot.slane %v6447, 4
        %v6450 = vshrl.u32 %v6219, 16
        %v6452 = vrot.slane %v6450, 7
        %v6453 = vshll.u32 %v6219, 16
        %v6455 = vor.u32 %v6452, %v6453
        %v6456 = vsel %vm2604, %v6448, %v6455
        %v6457 = vrot.slane %v6452, 4
        %v6459 = vshrl.u32 %v6220, 16
        %v6461 = vrot.slane %v6459, 7
        %v6462 = vshll.u32 %v6220, 16
        %v6464 = vor.u32 %v6461, %v6462
        %v6465 = vsel %vm2604, %v6457, %v6464
        %v6467 = vshrl.u32 %v6222, 16
        %v6469 = vrot.slane %v6467, 7
        %v6470 = vrot.slane %v6469, 4
        %v6472 = vshrl.u32 %v6223, 16
        %v6474 = vrot.slane %v6472, 7
        %v6475 = vshll.u32 %v6223, 16
        %v6477 = vor.u32 %v6474, %v6475
        %v6478 = vsel %vm2604, %v6470, %v6477
        %v6479 = vrot.slane %v6474, 4
        %v6481 = vshrl.u32 %v6224, 16
        %v6483 = vrot.slane %v6481, 7
        %v6484 = vshll.u32 %v6224, 16
        %v6486 = vor.u32 %v6483, %v6484
        %v6487 = vsel %vm2604, %v6479, %v6486
        %v6489 = vshrl.u32 %v6226, 16
        %v6491 = vrot.slane %v6489, 7
        %v6492 = vrot.slane %v6491, 4
        %v6494 = vshrl.u32 %v6227, 16
        %v6496 = vrot.slane %v6494, 7
        %v6497 = vshll.u32 %v6227, 16
        %v6499 = vor.u32 %v6496, %v6497
        %v6500 = vsel %vm2604, %v6492, %v6499
        %v6501 = vrot.slane %v6496, 4
        %v6503 = vshrl.u32 %v6228, 16
        %v6505 = vrot.slane %v6503, 7
        %v6506 = vshll.u32 %v6228, 16
        %v6508 = vor.u32 %v6505, %v6506
        %v6509 = vsel %vm2604, %v6501, %v6508
        %v6511 = vshrl.u32 %v6230, 16
        %v6513 = vrot.slane %v6511, 7
        %v6514 = vrot.slane %v6513, 4
        %v6516 = vshrl.u32 %v6231, 16
        %v6518 = vrot.slane %v6516, 7
        %v6519 = vshll.u32 %v6231, 16
        %v6521 = vor.u32 %v6518, %v6519
        %v6522 = vsel %vm2604, %v6514, %v6521
        %v6523 = vrot.slane %v6518, 4
        %v6525 = vshrl.u32 %v6232, 16
        %v6527 = vrot.slane %v6525, 7
        %v6528 = vshll.u32 %v6232, 16
        %v6530 = vor.u32 %v6527, %v6528
        %v6531 = vsel %vm2604, %v6523, %v6530
        %v6533 = vshrl.u32 %v6234, 16
        %v6535 = vrot.slane %v6533, 7
        %v6536 = vrot.slane %v6535, 4
        %v6538 = vshrl.u32 %v6235, 16
        %v6540 = vrot.slane %v6538, 7
        %v6541 = vshll.u32 %v6235, 16
        %v6543 = vor.u32 %v6540, %v6541
        %v6544 = vsel %vm2604, %v6536, %v6543
        %v6545 = vrot.slane %v6540, 4
        %v6547 = vshrl.u32 %v6236, 16
        %v6549 = vrot.slane %v6547, 7
        %v6550 = vshll.u32 %v6236, 16
        %v6552 = vor.u32 %v6549, %v6550
        %v6553 = vsel %vm2604, %v6545, %v6552
        %v6555 = vshrl.u32 %v6238, 16
        %v6557 = vrot.slane %v6555, 7
        %v6558 = vrot.slane %v6557, 4
        %v6560 = vshrl.u32 %v6239, 16
        %v6562 = vrot.slane %v6560, 7
        %v6563 = vshll.u32 %v6239, 16
        %v6565 = vor.u32 %v6562, %v6563
        %v6566 = vsel %vm2604, %v6558, %v6565
        %v6567 = vrot.slane %v6562, 4
        %v6569 = vshrl.u32 %v6240, 16
        %v6571 = vrot.slane %v6569, 7
        %v6572 = vshll.u32 %v6240, 16
        %v6574 = vor.u32 %v6571, %v6572
        %v6575 = vsel %vm2604, %v6567, %v6574
        %v6577 = vshrl.u32 %v6242, 16
        %v6579 = vrot.slane %v6577, 7
        %v6580 = vrot.slane %v6579, 4
        %v6582 = vshrl.u32 %v6243, 16
        %v6584 = vrot.slane %v6582, 7
        %v6585 = vshll.u32 %v6243, 16
        %v6587 = vor.u32 %v6584, %v6585
        %v6588 = vsel %vm2604, %v6580, %v6587
        %v6589 = vrot.slane %v6584, 4
        %v6591 = vshrl.u32 %v6244, 16
        %v6593 = vrot.slane %v6591, 7
        %v6594 = vshll.u32 %v6244, 16
        %v6596 = vor.u32 %v6593, %v6594
        %v6597 = vsel %vm2604, %v6589, %v6596
        %s6598 = scalar_lea.vmem %s6, 6
        %v6599 = vld [vmem:[%s6598] sm:$0x3]
        %v6600 = vunpack.c.l.b16 %v6258
        %v6601 = vunpack.c.l.b16 %v6267
        %v6602 = vunpack.c.l.b16 %v6280
        %v6603 = vunpack.c.l.b16 %v6289
        %v6604 = vunpack.c.l.b16 %v6302
        %v6605 = vunpack.c.l.b16 %v6311
        %v6606 = vunpack.c.l.b16 %v6324
        %v6607 = vunpack.c.l.b16 %v6333
        %v6608 = vunpack.c.l.b16 %v6346
        %v6609 = vunpack.c.l.b16 %v6355
        %v6610 = vunpack.c.l.b16 %v6368
        %v6611 = vunpack.c.l.b16 %v6377
        %v6612 = vunpack.c.l.b16 %v6390
        %v6613 = vunpack.c.l.b16 %v6399
        %v6614 = vunpack.c.l.b16 %v6412
        %v6615 = vunpack.c.l.b16 %v6421
        %v6616 = vunpack.c.l.b16 %v6434
        %v6617 = vunpack.c.l.b16 %v6443
        %v6618 = vunpack.c.l.b16 %v6456
        %v6619 = vunpack.c.l.b16 %v6465
        %v6620 = vunpack.c.l.b16 %v6478
        %v6621 = vunpack.c.l.b16 %v6487
        %v6622 = vunpack.c.l.b16 %v6500
        %v6623 = vunpack.c.l.b16 %v6509
        %v6624 = vunpack.c.l.b16 %v6522
        %v6625 = vunpack.c.l.b16 %v6531
        %v6626 = vunpack.c.l.b16 %v6544
        %v6627 = vunpack.c.l.b16 %v6553
        %v6628 = vunpack.c.l.b16 %v6566
        %v6629 = vunpack.c.l.b16 %v6575
        %v6630 = vunpack.c.l.b16 %v6588
        %v6631 = vunpack.c.l.b16 %v6597
        %v6632 = vpack.c.b16 %v6601, %v6600
        %v6633 = vpack.c.b16 %v6603, %v6602
        %v6634 = vpack.c.b16 %v6605, %v6604
        %v6635 = vpack.c.b16 %v6607, %v6606
        %v6636 = vpack.c.b16 %v6609, %v6608
        %v6637 = vpack.c.b16 %v6611, %v6610
        %v6638 = vpack.c.b16 %v6613, %v6612
        %v6639 = vpack.c.b16 %v6615, %v6614
        %v6640 = vpack.c.b16 %v6617, %v6616
        %v6641 = vpack.c.b16 %v6619, %v6618
        %v6642 = vpack.c.b16 %v6621, %v6620
        %v6643 = vpack.c.b16 %v6623, %v6622
        %v6644 = vpack.c.b16 %v6625, %v6624
        %v6645 = vpack.c.b16 %v6627, %v6626
        %v6646 = vpack.c.b16 %v6629, %v6628
        %v6647 = vpack.c.b16 %v6631, %v6630
        %v6649 = vsel %vm700, %v6632, 0
        %v6652 = vsel %vm700, %v6633, 0
        %v6655 = vsel %vm700, %v6634, 0
        %v6658 = vsel %vm700, %v6635, 0
        %v6661 = vsel %vm700, %v6636, 0
        %v6664 = vsel %vm700, %v6637, 0
        %v6667 = vsel %vm700, %v6638, 0
        %v6670 = vsel %vm700, %v6639, 0
        %v6673 = vsel %vm700, %v6640, 0
        %v6676 = vsel %vm700, %v6641, 0
        %v6679 = vsel %vm700, %v6642, 0
        %v6682 = vsel %vm700, %v6643, 0
        %v6685 = vsel %vm700, %v6644, 0
        %v6688 = vsel %vm700, %v6645, 0
        %v6691 = vsel %vm700, %v6646, 0
        %v6694 = vsel %vm700, %v6647, 0
        %v6697 = vsel %vm713, %v6599, 0
        %6699 = vmatprep.subr.bf16.mxu0 0
        %6700 = vmatpush1.bf16.msra.mxu0 %v6697
        %6701 = vmatprep.subr.bf16.mxu0 0
        %6702 = vmatpush1.bf16.msra.mxu0 0
        %6703 = vmatprep.subr.bf16.mxu0 0
        %6704 = vmatpush1.bf16.msra.mxu0 0
        %6705 = vmatprep.subr.bf16.mxu0 0
        %6706 = vmatpush1.bf16.msra.mxu0 0
        %6707 = vmatprep.subr.bf16.mxu0 0
        %6708 = vmatpush1.bf16.msra.mxu0 0
        %6709 = vmatprep.subr.bf16.mxu0 0
        %6710 = vmatpush1.bf16.msra.mxu0 0
        %6711 = vmatprep.subr.bf16.mxu0 0
        %6712 = vmatpush1.bf16.msra.mxu0 0
        %6713 = vmatprep.subr.bf16.mxu0 0
        %6714 = vmatpush1.bf16.msra.mxu0 0
        %6715 = vmatprep.subr.bf16.mxu0 0
        %6716 = vmatpush1.bf16.msra.mxu0 0
        %6717 = vmatprep.subr.bf16.mxu0 0
        %6718 = vmatpush1.bf16.msra.mxu0 0
        %6719 = vmatprep.subr.bf16.mxu0 0
        %6720 = vmatpush1.bf16.msra.mxu0 0
        %6721 = vmatprep.subr.bf16.mxu0 0
        %6722 = vmatpush1.bf16.msra.mxu0 0
        %6723 = vmatprep.subr.bf16.mxu0 0
        %6724 = vmatpush1.bf16.msra.mxu0 0
        %6725 = vmatprep.subr.bf16.mxu0 0
        %6726 = vmatpush1.bf16.msra.mxu0 0
        %6727 = vmatprep.subr.bf16.mxu0 0
        %6728 = vmatpush1.bf16.msra.mxu0 0
        %6729 = vmatprep.subr.bf16.mxu0 0
        %6730 = vmatpush1.bf16.msra.mxu0 0
        %6731 = vmatprep.mubr.bf16.mxu0 0
        %6732 = vmatmul.mubr.bf16.gmra.mrb[0].mxu0 %v6649
        %v6733 = vpop.f32.mrb[0].mxu0
        %v6734 = vadd.f32 0.0, %v6733
        %v6735 = vpop.f32.mrb[0].mxu0
        %v6736 = vpop.f32.mrb[0].mxu0
        %v6737 = vadd.f32 0.0, %v6736
        %v6738 = vpop.f32.mrb[0].mxu0
        %6739 = vmatprep.mubr.bf16.mxu0 0
        %6740 = vmatmul.mubr.bf16.gmra.mrb[0].mxu0 %v6652
        %v6741 = vpop.f32.mrb[0].mxu0
        %v6742 = vadd.f32 0.0, %v6741
        %v6743 = vpop.f32.mrb[0].mxu0
        %v6744 = vpop.f32.mrb[0].mxu0
        %v6745 = vadd.f32 0.0, %v6744
        %v6746 = vpop.f32.mrb[0].mxu0
        %6747 = vmatprep.mubr.bf16.mxu0 0
        %6748 = vmatmul.mubr.bf16.gmra.mrb[0].mxu0 %v6655
        %v6749 = vpop.f32.mrb[0].mxu0
        %v6750 = vadd.f32 0.0, %v6749
        %v6751 = vpop.f32.mrb[0].mxu0
        %v6752 = vpop.f32.mrb[0].mxu0
        %v6753 = vadd.f32 0.0, %v6752
        %v6754 = vpop.f32.mrb[0].mxu0
        %6755 = vmatprep.mubr.bf16.mxu0 0
        %6756 = vmatmul.mubr.bf16.gmra.mrb[0].mxu0 %v6658
        %v6757 = vpop.f32.mrb[0].mxu0
        %v6758 = vadd.f32 0.0, %v6757
        %v6759 = vpop.f32.mrb[0].mxu0
        %v6760 = vpop.f32.mrb[0].mxu0
        %v6761 = vadd.f32 0.0, %v6760
        %v6762 = vpop.f32.mrb[0].mxu0
        %6763 = vmatprep.mubr.bf16.mxu0 0
        %6764 = vmatmul.mubr.bf16.gmra.mrb[0].mxu0 %v6661
        %v6765 = vpop.f32.mrb[0].mxu0
        %v6766 = vadd.f32 0.0, %v6765
        %v6767 = vpop.f32.mrb[0].mxu0
        %v6768 = vpop.f32.mrb[0].mxu0
        %v6769 = vadd.f32 0.0, %v6768
        %v6770 = vpop.f32.mrb[0].mxu0
        %6771 = vmatprep.mubr.bf16.mxu0 0
        %6772 = vmatmul.mubr.bf16.gmra.mrb[0].mxu0 %v6664
        %v6773 = vpop.f32.mrb[0].mxu0
        %v6774 = vadd.f32 0.0, %v6773
        %v6775 = vpop.f32.mrb[0].mxu0
        %v6776 = vpop.f32.mrb[0].mxu0
        %v6777 = vadd.f32 0.0, %v6776
        %v6778 = vpop.f32.mrb[0].mxu0
        %6779 = vmatprep.mubr.bf16.mxu0 0
        %6780 = vmatmul.mubr.bf16.gmra.mrb[0].mxu0 %v6667
        %v6781 = vpop.f32.mrb[0].mxu0
        %v6782 = vadd.f32 0.0, %v6781
        %v6783 = vpop.f32.mrb[0].mxu0
        %v6784 = vpop.f32.mrb[0].mxu0
        %v6785 = vadd.f32 0.0, %v6784
        %v6786 = vpop.f32.mrb[0].mxu0
        %6787 = vmatprep.mubr.bf16.mxu0 0
        %6788 = vmatmul.mubr.bf16.gmra.mrb[0].mxu0 %v6670
        %v6789 = vpop.f32.mrb[0].mxu0
        %v6790 = vadd.f32 0.0, %v6789
        %v6791 = vpop.f32.mrb[0].mxu0
        %v6792 = vpop.f32.mrb[0].mxu0
        %v6793 = vadd.f32 0.0, %v6792
        %v6794 = vpop.f32.mrb[0].mxu0
        %6795 = vmatprep.mubr.bf16.mxu0 0
        %6796 = vmatmul.mubr.bf16.gmra.mrb[0].mxu0 %v6673
        %v6797 = vpop.f32.mrb[0].mxu0
        %v6798 = vadd.f32 0.0, %v6797
        %v6799 = vpop.f32.mrb[0].mxu0
        %v6800 = vpop.f32.mrb[0].mxu0
        %v6801 = vadd.f32 0.0, %v6800
        %v6802 = vpop.f32.mrb[0].mxu0
        %6803 = vmatprep.mubr.bf16.mxu0 0
        %6804 = vmatmul.mubr.bf16.gmra.mrb[0].mxu0 %v6676
        %v6805 = vpop.f32.mrb[0].mxu0
        %v6806 = vadd.f32 0.0, %v6805
        %v6807 = vpop.f32.mrb[0].mxu0
        %v6808 = vpop.f32.mrb[0].mxu0
        %v6809 = vadd.f32 0.0, %v6808
        %v6810 = vpop.f32.mrb[0].mxu0
        %6811 = vmatprep.mubr.bf16.mxu0 0
        %6812 = vmatmul.mubr.bf16.gmra.mrb[0].mxu0 %v6679
        %v6813 = vpop.f32.mrb[0].mxu0
        %v6814 = vadd.f32 0.0, %v6813
        %v6815 = vpop.f32.mrb[0].mxu0
        %v6816 = vpop.f32.mrb[0].mxu0
        %v6817 = vadd.f32 0.0, %v6816
        %v6818 = vpop.f32.mrb[0].mxu0
        %6819 = vmatprep.mubr.bf16.mxu0 0
        %6820 = vmatmul.mubr.bf16.gmra.mrb[0].mxu0 %v6682
        %v6821 = vpop.f32.mrb[0].mxu0
        %v6822 = vadd.f32 0.0, %v6821
        %v6823 = vpop.f32.mrb[0].mxu0
        %v6824 = vpop.f32.mrb[0].mxu0
        %v6825 = vadd.f32 0.0, %v6824
        %v6826 = vpop.f32.mrb[0].mxu0
        %6827 = vmatprep.mubr.bf16.mxu0 0
        %6828 = vmatmul.mubr.bf16.gmra.mrb[0].mxu0 %v6685
        %v6829 = vpop.f32.mrb[0].mxu0
        %v6830 = vadd.f32 0.0, %v6829
        %v6831 = vpop.f32.mrb[0].mxu0
        %v6832 = vpop.f32.mrb[0].mxu0
        %v6833 = vadd.f32 0.0, %v6832
        %v6834 = vpop.f32.mrb[0].mxu0
        %6835 = vmatprep.mubr.bf16.mxu0 0
        %6836 = vmatmul.mubr.bf16.gmra.mrb[0].mxu0 %v6688
        %v6837 = vpop.f32.mrb[0].mxu0
        %v6838 = vadd.f32 0.0, %v6837
        %v6839 = vpop.f32.mrb[0].mxu0
        %v6840 = vpop.f32.mrb[0].mxu0
        %v6841 = vadd.f32 0.0, %v6840
        %v6842 = vpop.f32.mrb[0].mxu0
        %6843 = vmatprep.mubr.bf16.mxu0 0
        %6844 = vmatmul.mubr.bf16.gmra.mrb[0].mxu0 %v6691
        %v6845 = vpop.f32.mrb[0].mxu0
        %v6846 = vadd.f32 0.0, %v6845
        %v6847 = vpop.f32.mrb[0].mxu0
        %v6848 = vpop.f32.mrb[0].mxu0
        %v6849 = vadd.f32 0.0, %v6848
        %v6850 = vpop.f32.mrb[0].mxu0
        %6851 = vmatprep.mubr.bf16.mxu0 0
        %6852 = vmatmul.mubr.bf16.gmra.mrb[0].mxu0 %v6694
        %v6853 = vpop.f32.mrb[0].mxu0
        %v6854 = vadd.f32 0.0, %v6853
        %v6855 = vpop.f32.mrb[0].mxu0
        %v6856 = vpop.f32.mrb[0].mxu0
        %v6857 = vadd.f32 0.0, %v6856
        %v6858 = vpop.f32.mrb[0].mxu0
        %6859 = vdwg.mxu0
        %v6860 = vadd.f32 %v4001, %v6734
        %v6861 = vadd.f32 %v4002, %v6737
        %v6862 = vadd.f32 %v4003, %v6742
        %v6863 = vadd.f32 %v4004, %v6745
        %v6864 = vadd.f32 %v4005, %v6750
        %v6865 = vadd.f32 %v4006, %v6753
        %v6866 = vadd.f32 %v4007, %v6758
        %v6867 = vadd.f32 %v4008, %v6761
        %v6868 = vadd.f32 %v4009, %v6766
        %v6869 = vadd.f32 %v4010, %v6769
        %v6870 = vadd.f32 %v4011, %v6774
        %v6871 = vadd.f32 %v4012, %v6777
        %v6872 = vadd.f32 %v4013, %v6782
        %v6873 = vadd.f32 %v4014, %v6785
        %v6874 = vadd.f32 %v4015, %v6790
        %v6875 = vadd.f32 %v4016, %v6793
        %v6876 = vadd.f32 %v4017, %v6798
        %v6877 = vadd.f32 %v4018, %v6801
        %v6878 = vadd.f32 %v4019, %v6806
        %v6879 = vadd.f32 %v4020, %v6809
        %v6880 = vadd.f32 %v4021, %v6814
        %v6881 = vadd.f32 %v4022, %v6817
        %v6882 = vadd.f32 %v4023, %v6822
        %v6883 = vadd.f32 %v4024, %v6825
        %v6884 = vadd.f32 %v4025, %v6830
        %v6885 = vadd.f32 %v4026, %v6833
        %v6886 = vadd.f32 %v4027, %v6838
        %v6887 = vadd.f32 %v4028, %v6841
        %v6888 = vadd.f32 %v4029, %v6846
        %v6889 = vadd.f32 %v4030, %v6849
        %v6890 = vadd.f32 %v4031, %v6854
        %v6891 = vadd.f32 %v4032, %v6857
        %s6892 = scalar_lea.vmem %s6, 8
        %v6893 = vld [vmem:[%s6892] sm:$0x3]
        %v6926 = vunpack.c.l.b16 %v6183
        %v6927 = vunpack.c.l.b16 %v6184
        %v6928 = vunpack.c.l.b16 %v6187
        %v6929 = vunpack.c.l.b16 %v6188
        %v6930 = vunpack.c.l.b16 %v6191
        %v6931 = vunpack.c.l.b16 %v6192
        %v6932 = vunpack.c.l.b16 %v6195
        %v6933 = vunpack.c.l.b16 %v6196
        %v6934 = vunpack.c.l.b16 %v6199
        %v6935 = vunpack.c.l.b16 %v6200
        %v6936 = vunpack.c.l.b16 %v6203
        %v6937 = vunpack.c.l.b16 %v6204
        %v6938 = vunpack.c.l.b16 %v6207
        %v6939 = vunpack.c.l.b16 %v6208
        %v6940 = vunpack.c.l.b16 %v6211
        %v6941 = vunpack.c.l.b16 %v6212
        %v6942 = vunpack.c.l.b16 %v6215
        %v6943 = vunpack.c.l.b16 %v6216
        %v6944 = vunpack.c.l.b16 %v6219
        %v6945 = vunpack.c.l.b16 %v6220
        %v6946 = vunpack.c.l.b16 %v6223
        %v6947 = vunpack.c.l.b16 %v6224
        %v6948 = vunpack.c.l.b16 %v6227
        %v6949 = vunpack.c.l.b16 %v6228
        %v6950 = vunpack.c.l.b16 %v6231
        %v6951 = vunpack.c.l.b16 %v6232
        %v6952 = vunpack.c.l.b16 %v6235
        %v6953 = vunpack.c.l.b16 %v6236
        %v6954 = vunpack.c.l.b16 %v6239
        %v6955 = vunpack.c.l.b16 %v6240
        %v6956 = vunpack.c.l.b16 %v6243
        %v6957 = vunpack.c.l.b16 %v6244
        %v6958 = vpack.c.b16 %v6927, %v6926
        %v6959 = vpack.c.b16 %v6929, %v6928
        %v6960 = vpack.c.b16 %v6931, %v6930
        %v6961 = vpack.c.b16 %v6933, %v6932
        %v6962 = vpack.c.b16 %v6935, %v6934
        %v6963 = vpack.c.b16 %v6937, %v6936
        %v6964 = vpack.c.b16 %v6939, %v6938
        %v6965 = vpack.c.b16 %v6941, %v6940
        %v6966 = vpack.c.b16 %v6943, %v6942
        %v6967 = vpack.c.b16 %v6945, %v6944
        %v6968 = vpack.c.b16 %v6947, %v6946
        %v6969 = vpack.c.b16 %v6949, %v6948
        %v6970 = vpack.c.b16 %v6951, %v6950
        %v6971 = vpack.c.b16 %v6953, %v6952
        %v6972 = vpack.c.b16 %v6955, %v6954
        %v6973 = vpack.c.b16 %v6957, %v6956
        %v6975 = vsel %vm700, %v6958, 0
        %v6978 = vsel %vm700, %v6959, 0
        %v6981 = vsel %vm700, %v6960, 0
        %v6984 = vsel %vm700, %v6961, 0
        %v6987 = vsel %vm700, %v6962, 0
        %v6990 = vsel %vm700, %v6963, 0
        %v6993 = vsel %vm700, %v6964, 0
        %v6996 = vsel %vm700, %v6965, 0
        %v6999 = vsel %vm700, %v6966, 0
        %v7002 = vsel %vm700, %v6967, 0
        %v7005 = vsel %vm700, %v6968, 0
        %v7008 = vsel %vm700, %v6969, 0
        %v7011 = vsel %vm700, %v6970, 0
        %v7014 = vsel %vm700, %v6971, 0
        %v7017 = vsel %vm700, %v6972, 0
        %v7020 = vsel %vm700, %v6973, 0
        %v7023 = vsel %vm713, %v6893, 0
        %7025 = vmatprep.subr.bf16.mxu0 0
        %7026 = vmatpush1.bf16.msra.mxu0 %v7023
        %7027 = vmatprep.subr.bf16.mxu0 0
        %7028 = vmatpush1.bf16.msra.mxu0 0
        %7029 = vmatprep.subr.bf16.mxu0 0
        %7030 = vmatpush1.bf16.msra.mxu0 0
        %7031 = vmatprep.subr.bf16.mxu0 0
        %7032 = vmatpush1.bf16.msra.mxu0 0
        %7033 = vmatprep.subr.bf16.mxu0 0
        %7034 = vmatpush1.bf16.msra.mxu0 0
        %7035 = vmatprep.subr.bf16.mxu0 0
        %7036 = vmatpush1.bf16.msra.mxu0 0
        %7037 = vmatprep.subr.bf16.mxu0 0
        %7038 = vmatpush1.bf16.msra.mxu0 0
        %7039 = vmatprep.subr.bf16.mxu0 0
        %7040 = vmatpush1.bf16.msra.mxu0 0
        %7041 = vmatprep.subr.bf16.mxu0 0
        %7042 = vmatpush1.bf16.msra.mxu0 0
        %7043 = vmatprep.subr.bf16.mxu0 0
        %7044 = vmatpush1.bf16.msra.mxu0 0
        %7045 = vmatprep.subr.bf16.mxu0 0
        %7046 = vmatpush1.bf16.msra.mxu0 0
        %7047 = vmatprep.subr.bf16.mxu0 0
        %7048 = vmatpush1.bf16.msra.mxu0 0
        %7049 = vmatprep.subr.bf16.mxu0 0
        %7050 = vmatpush1.bf16.msra.mxu0 0
        %7051 = vmatprep.subr.bf16.mxu0 0
        %7052 = vmatpush1.bf16.msra.mxu0 0
        %7053 = vmatprep.subr.bf16.mxu0 0
        %7054 = vmatpush1.bf16.msra.mxu0 0
        %7055 = vmatprep.subr.bf16.mxu0 0
        %7056 = vmatpush1.bf16.msra.mxu0 0
        %7057 = vmatprep.mubr.bf16.mxu0 0
        %7058 = vmatmul.mubr.bf16.gmra.mrb[0].mxu0 %v6975
        %v7059 = vpop.f32.mrb[0].mxu0
        %v7060 = vadd.f32 0.0, %v7059
        %v7061 = vpop.f32.mrb[0].mxu0
        %v7062 = vpop.f32.mrb[0].mxu0
        %v7063 = vadd.f32 0.0, %v7062
        %v7064 = vpop.f32.mrb[0].mxu0
        %7065 = vmatprep.mubr.bf16.mxu0 0
        %7066 = vmatmul.mubr.bf16.gmra.mrb[0].mxu0 %v6978
        %v7067 = vpop.f32.mrb[0].mxu0
        %v7068 = vadd.f32 0.0, %v7067
        %v7069 = vpop.f32.mrb[0].mxu0
        %v7070 = vpop.f32.mrb[0].mxu0
        %v7071 = vadd.f32 0.0, %v7070
        %v7072 = vpop.f32.mrb[0].mxu0
        %7073 = vmatprep.mubr.bf16.mxu0 0
        %7074 = vmatmul.mubr.bf16.gmra.mrb[0].mxu0 %v6981
        %v7075 = vpop.f32.mrb[0].mxu0
        %v7076 = vadd.f32 0.0, %v7075
        %v7077 = vpop.f32.mrb[0].mxu0
        %v7078 = vpop.f32.mrb[0].mxu0
        %v7079 = vadd.f32 0.0, %v7078
        %v7080 = vpop.f32.mrb[0].mxu0
        %7081 = vmatprep.mubr.bf16.mxu0 0
        %7082 = vmatmul.mubr.bf16.gmra.mrb[0].mxu0 %v6984
        %v7083 = vpop.f32.mrb[0].mxu0
        %v7084 = vadd.f32 0.0, %v7083
        %v7085 = vpop.f32.mrb[0].mxu0
        %v7086 = vpop.f32.mrb[0].mxu0
        %v7087 = vadd.f32 0.0, %v7086
        %v7088 = vpop.f32.mrb[0].mxu0
        %7089 = vmatprep.mubr.bf16.mxu0 0
        %7090 = vmatmul.mubr.bf16.gmra.mrb[0].mxu0 %v6987
        %v7091 = vpop.f32.mrb[0].mxu0
        %v7092 = vadd.f32 0.0, %v7091
        %v7093 = vpop.f32.mrb[0].mxu0
        %v7094 = vpop.f32.mrb[0].mxu0
        %v7095 = vadd.f32 0.0, %v7094
        %v7096 = vpop.f32.mrb[0].mxu0
        %7097 = vmatprep.mubr.bf16.mxu0 0
        %7098 = vmatmul.mubr.bf16.gmra.mrb[0].mxu0 %v6990
        %v7099 = vpop.f32.mrb[0].mxu0
        %v7100 = vadd.f32 0.0, %v7099
        %v7101 = vpop.f32.mrb[0].mxu0
        %v7102 = vpop.f32.mrb[0].mxu0
        %v7103 = vadd.f32 0.0, %v7102
        %v7104 = vpop.f32.mrb[0].mxu0
        %7105 = vmatprep.mubr.bf16.mxu0 0
        %7106 = vmatmul.mubr.bf16.gmra.mrb[0].mxu0 %v6993
        %v7107 = vpop.f32.mrb[0].mxu0
        %v7108 = vadd.f32 0.0, %v7107
        %v7109 = vpop.f32.mrb[0].mxu0
        %v7110 = vpop.f32.mrb[0].mxu0
        %v7111 = vadd.f32 0.0, %v7110
        %v7112 = vpop.f32.mrb[0].mxu0
        %7113 = vmatprep.mubr.bf16.mxu0 0
        %7114 = vmatmul.mubr.bf16.gmra.mrb[0].mxu0 %v6996
        %v7115 = vpop.f32.mrb[0].mxu0
        %v7116 = vadd.f32 0.0, %v7115
        %v7117 = vpop.f32.mrb[0].mxu0
        %v7118 = vpop.f32.mrb[0].mxu0
        %v7119 = vadd.f32 0.0, %v7118
        %v7120 = vpop.f32.mrb[0].mxu0
        %7121 = vmatprep.mubr.bf16.mxu0 0
        %7122 = vmatmul.mubr.bf16.gmra.mrb[0].mxu0 %v6999
        %v7123 = vpop.f32.mrb[0].mxu0
        %v7124 = vadd.f32 0.0, %v7123
        %v7125 = vpop.f32.mrb[0].mxu0
        %v7126 = vpop.f32.mrb[0].mxu0
        %v7127 = vadd.f32 0.0, %v7126
        %v7128 = vpop.f32.mrb[0].mxu0
        %7129 = vmatprep.mubr.bf16.mxu0 0
        %7130 = vmatmul.mubr.bf16.gmra.mrb[0].mxu0 %v7002
        %v7131 = vpop.f32.mrb[0].mxu0
        %v7132 = vadd.f32 0.0, %v7131
        %v7133 = vpop.f32.mrb[0].mxu0
        %v7134 = vpop.f32.mrb[0].mxu0
        %v7135 = vadd.f32 0.0, %v7134
        %v7136 = vpop.f32.mrb[0].mxu0
        %7137 = vmatprep.mubr.bf16.mxu0 0
        %7138 = vmatmul.mubr.bf16.gmra.mrb[0].mxu0 %v7005
        %v7139 = vpop.f32.mrb[0].mxu0
        %v7140 = vadd.f32 0.0, %v7139
        %v7141 = vpop.f32.mrb[0].mxu0
        %v7142 = vpop.f32.mrb[0].mxu0
        %v7143 = vadd.f32 0.0, %v7142
        %v7144 = vpop.f32.mrb[0].mxu0
        %7145 = vmatprep.mubr.bf16.mxu0 0
        %7146 = vmatmul.mubr.bf16.gmra.mrb[0].mxu0 %v7008
        %v7147 = vpop.f32.mrb[0].mxu0
        %v7148 = vadd.f32 0.0, %v7147
        %v7149 = vpop.f32.mrb[0].mxu0
        %v7150 = vpop.f32.mrb[0].mxu0
        %v7151 = vadd.f32 0.0, %v7150
        %v7152 = vpop.f32.mrb[0].mxu0
        %7153 = vmatprep.mubr.bf16.mxu0 0
        %7154 = vmatmul.mubr.bf16.gmra.mrb[0].mxu0 %v7011
        %v7155 = vpop.f32.mrb[0].mxu0
        %v7156 = vadd.f32 0.0, %v7155
        %v7157 = vpop.f32.mrb[0].mxu0
        %v7158 = vpop.f32.mrb[0].mxu0
        %v7159 = vadd.f32 0.0, %v7158
        %v7160 = vpop.f32.mrb[0].mxu0
        %7161 = vmatprep.mubr.bf16.mxu0 0
        %7162 = vmatmul.mubr.bf16.gmra.mrb[0].mxu0 %v7014
        %v7163 = vpop.f32.mrb[0].mxu0
        %v7164 = vadd.f32 0.0, %v7163
        %v7165 = vpop.f32.mrb[0].mxu0
        %v7166 = vpop.f32.mrb[0].mxu0
        %v7167 = vadd.f32 0.0, %v7166
        %v7168 = vpop.f32.mrb[0].mxu0
        %7169 = vmatprep.mubr.bf16.mxu0 0
        %7170 = vmatmul.mubr.bf16.gmra.mrb[0].mxu0 %v7017
        %v7171 = vpop.f32.mrb[0].mxu0
        %v7172 = vadd.f32 0.0, %v7171
        %v7173 = vpop.f32.mrb[0].mxu0
        %v7174 = vpop.f32.mrb[0].mxu0
        %v7175 = vadd.f32 0.0, %v7174
        %v7176 = vpop.f32.mrb[0].mxu0
        %7177 = vmatprep.mubr.bf16.mxu0 0
        %7178 = vmatmul.mubr.bf16.gmra.mrb[0].mxu0 %v7020
        %v7179 = vpop.f32.mrb[0].mxu0
        %v7180 = vadd.f32 0.0, %v7179
        %v7181 = vpop.f32.mrb[0].mxu0
        %v7182 = vpop.f32.mrb[0].mxu0
        %v7183 = vadd.f32 0.0, %v7182
        %v7184 = vpop.f32.mrb[0].mxu0
        %7185 = vdwg.mxu0
        %v7186 = vadd.f32 %v6860, %v7060
        %v7187 = vadd.f32 %v6861, %v7063
        %v7188 = vadd.f32 %v6862, %v7068
        %v7189 = vadd.f32 %v6863, %v7071
        %v7190 = vadd.f32 %v6864, %v7076
        %v7191 = vadd.f32 %v6865, %v7079
        %v7192 = vadd.f32 %v6866, %v7084
        %v7193 = vadd.f32 %v6867, %v7087
        %v7194 = vadd.f32 %v6868, %v7092
        %v7195 = vadd.f32 %v6869, %v7095
        %v7196 = vadd.f32 %v6870, %v7100
        %v7197 = vadd.f32 %v6871, %v7103
        %v7198 = vadd.f32 %v6872, %v7108
        %v7199 = vadd.f32 %v6873, %v7111
        %v7200 = vadd.f32 %v6874, %v7116
        %v7201 = vadd.f32 %v6875, %v7119
        %v7202 = vadd.f32 %v6876, %v7124
        %v7203 = vadd.f32 %v6877, %v7127
        %v7204 = vadd.f32 %v6878, %v7132
        %v7205 = vadd.f32 %v6879, %v7135
        %v7206 = vadd.f32 %v6880, %v7140
        %v7207 = vadd.f32 %v6881, %v7143
        %v7208 = vadd.f32 %v6882, %v7148
        %v7209 = vadd.f32 %v6883, %v7151
        %v7210 = vadd.f32 %v6884, %v7156
        %v7211 = vadd.f32 %v6885, %v7159
        %v7212 = vadd.f32 %v6886, %v7164
        %v7213 = vadd.f32 %v6887, %v7167
        %v7214 = vadd.f32 %v6888, %v7172
        %v7215 = vadd.f32 %v6889, %v7175
        %v7216 = vadd.f32 %v6890, %v7180
        %v7217 = vadd.f32 %v6891, %v7183
        %v7218 = vrot.slane %v6252, 4
        %v7219 = vrot.slane %v6255, 5
        %v7220 = vor.u32 %v7218, %v7219
        %v7221 = vrot.slane %v7220, 4
        %v7222 = vrot.slane %v6264, 5
        %v7223 = vsel %vm3514, %v7221, %v7222
        %v7224 = vrot.slane %v6261, 4
        %v7225 = vor.u32 %v7224, %v7222
        %v7226 = vrot.slane %v7225, 4
        %v7228 = vshll.u32 %v6185, 16
        %v7230 = vrot.slane %v7228, 5
        %v7231 = vsel %vm3514, %v7226, %v7230
        %v7232 = vrot.slane %v6274, 4
        %v7233 = vrot.slane %v6277, 5
        %v7234 = vor.u32 %v7232, %v7233
        %v7235 = vrot.slane %v7234, 4
        %v7236 = vrot.slane %v6286, 5
        %v7237 = vsel %vm3514, %v7235, %v7236
        %v7238 = vrot.slane %v6283, 4
        %v7239 = vor.u32 %v7238, %v7236
        %v7240 = vrot.slane %v7239, 4
        %v7242 = vshll.u32 %v6189, 16
        %v7244 = vrot.slane %v7242, 5
        %v7245 = vsel %vm3514, %v7240, %v7244
        %v7246 = vrot.slane %v6296, 4
        %v7247 = vrot.slane %v6299, 5
        %v7248 = vor.u32 %v7246, %v7247
        %v7249 = vrot.slane %v7248, 4
        %v7250 = vrot.slane %v6308, 5
        %v7251 = vsel %vm3514, %v7249, %v7250
        %v7252 = vrot.slane %v6305, 4
        %v7253 = vor.u32 %v7252, %v7250
        %v7254 = vrot.slane %v7253, 4
        %v7256 = vshll.u32 %v6193, 16
        %v7258 = vrot.slane %v7256, 5
        %v7259 = vsel %vm3514, %v7254, %v7258
        %v7260 = vrot.slane %v6318, 4
        %v7261 = vrot.slane %v6321, 5
        %v7262 = vor.u32 %v7260, %v7261
        %v7263 = vrot.slane %v7262, 4
        %v7264 = vrot.slane %v6330, 5
        %v7265 = vsel %vm3514, %v7263, %v7264
        %v7266 = vrot.slane %v6327, 4
        %v7267 = vor.u32 %v7266, %v7264
        %v7268 = vrot.slane %v7267, 4
        %v7270 = vshll.u32 %v6197, 16
        %v7272 = vrot.slane %v7270, 5
        %v7273 = vsel %vm3514, %v7268, %v7272
        %v7274 = vrot.slane %v6340, 4
        %v7275 = vrot.slane %v6343, 5
        %v7276 = vor.u32 %v7274, %v7275
        %v7277 = vrot.slane %v7276, 4
        %v7278 = vrot.slane %v6352, 5
        %v7279 = vsel %vm3514, %v7277, %v7278
        %v7280 = vrot.slane %v6349, 4
        %v7281 = vor.u32 %v7280, %v7278
        %v7282 = vrot.slane %v7281, 4
        %v7284 = vshll.u32 %v6201, 16
        %v7286 = vrot.slane %v7284, 5
        %v7287 = vsel %vm3514, %v7282, %v7286
        %v7288 = vrot.slane %v6362, 4
        %v7289 = vrot.slane %v6365, 5
        %v7290 = vor.u32 %v7288, %v7289
        %v7291 = vrot.slane %v7290, 4
        %v7292 = vrot.slane %v6374, 5
        %v7293 = vsel %vm3514, %v7291, %v7292
        %v7294 = vrot.slane %v6371, 4
        %v7295 = vor.u32 %v7294, %v7292
        %v7296 = vrot.slane %v7295, 4
        %v7298 = vshll.u32 %v6205, 16
        %v7300 = vrot.slane %v7298, 5
        %v7301 = vsel %vm3514, %v7296, %v7300
        %v7302 = vrot.slane %v6384, 4
        %v7303 = vrot.slane %v6387, 5
        %v7304 = vor.u32 %v7302, %v7303
        %v7305 = vrot.slane %v7304, 4
        %v7306 = vrot.slane %v6396, 5
        %v7307 = vsel %vm3514, %v7305, %v7306
        %v7308 = vrot.slane %v6393, 4
        %v7309 = vor.u32 %v7308, %v7306
        %v7310 = vrot.slane %v7309, 4
        %v7312 = vshll.u32 %v6209, 16
        %v7314 = vrot.slane %v7312, 5
        %v7315 = vsel %vm3514, %v7310, %v7314
        %v7316 = vrot.slane %v6406, 4
        %v7317 = vrot.slane %v6409, 5
        %v7318 = vor.u32 %v7316, %v7317
        %v7319 = vrot.slane %v7318, 4
        %v7320 = vrot.slane %v6418, 5
        %v7321 = vsel %vm3514, %v7319, %v7320
        %v7322 = vrot.slane %v6415, 4
        %v7323 = vor.u32 %v7322, %v7320
        %v7324 = vrot.slane %v7323, 4
        %v7326 = vshll.u32 %v6213, 16
        %v7328 = vrot.slane %v7326, 5
        %v7329 = vsel %vm3514, %v7324, %v7328
        %v7330 = vrot.slane %v6428, 4
        %v7331 = vrot.slane %v6431, 5
        %v7332 = vor.u32 %v7330, %v7331
        %v7333 = vrot.slane %v7332, 4
        %v7334 = vrot.slane %v6440, 5
        %v7335 = vsel %vm3514, %v7333, %v7334
        %v7336 = vrot.slane %v6437, 4
        %v7337 = vor.u32 %v7336, %v7334
        %v7338 = vrot.slane %v7337, 4
        %v7340 = vshll.u32 %v6217, 16
        %v7342 = vrot.slane %v7340, 5
        %v7343 = vsel %vm3514, %v7338, %v7342
        %v7344 = vrot.slane %v6450, 4
        %v7345 = vrot.slane %v6453, 5
        %v7346 = vor.u32 %v7344, %v7345
        %v7347 = vrot.slane %v7346, 4
        %v7348 = vrot.slane %v6462, 5
        %v7349 = vsel %vm3514, %v7347, %v7348
        %v7350 = vrot.slane %v6459, 4
        %v7351 = vor.u32 %v7350, %v7348
        %v7352 = vrot.slane %v7351, 4
        %v7354 = vshll.u32 %v6221, 16
        %v7356 = vrot.slane %v7354, 5
        %v7357 = vsel %vm3514, %v7352, %v7356
        %v7358 = vrot.slane %v6472, 4
        %v7359 = vrot.slane %v6475, 5
        %v7360 = vor.u32 %v7358, %v7359
        %v7361 = vrot.slane %v7360, 4
        %v7362 = vrot.slane %v6484, 5
        %v7363 = vsel %vm3514, %v7361, %v7362
        %v7364 = vrot.slane %v6481, 4
        %v7365 = vor.u32 %v7364, %v7362
        %v7366 = vrot.slane %v7365, 4
        %v7368 = vshll.u32 %v6225, 16
        %v7370 = vrot.slane %v7368, 5
        %v7371 = vsel %vm3514, %v7366, %v7370
        %v7372 = vrot.slane %v6494, 4
        %v7373 = vrot.slane %v6497, 5
        %v7374 = vor.u32 %v7372, %v7373
        %v7375 = vrot.slane %v7374, 4
        %v7376 = vrot.slane %v6506, 5
        %v7377 = vsel %vm3514, %v7375, %v7376
        %v7378 = vrot.slane %v6503, 4
        %v7379 = vor.u32 %v7378, %v7376
        %v7380 = vrot.slane %v7379, 4
        %v7382 = vshll.u32 %v6229, 16
        %v7384 = vrot.slane %v7382, 5
        %v7385 = vsel %vm3514, %v7380, %v7384
        %v7386 = vrot.slane %v6516, 4
        %v7387 = vrot.slane %v6519, 5
        %v7388 = vor.u32 %v7386, %v7387
        %v7389 = vrot.slane %v7388, 4
        %v7390 = vrot.slane %v6528, 5
        %v7391 = vsel %vm3514, %v7389, %v7390
        %v7392 = vrot.slane %v6525, 4
        %v7393 = vor.u32 %v7392, %v7390
        %v7394 = vrot.slane %v7393, 4
        %v7396 = vshll.u32 %v6233, 16
        %v7398 = vrot.slane %v7396, 5
        %v7399 = vsel %vm3514, %v7394, %v7398
        %v7400 = vrot.slane %v6538, 4
        %v7401 = vrot.slane %v6541, 5
        %v7402 = vor.u32 %v7400, %v7401
        %v7403 = vrot.slane %v7402, 4
        %v7404 = vrot.slane %v6550, 5
        %v7405 = vsel %vm3514, %v7403, %v7404
        %v7406 = vrot.slane %v6547, 4
        %v7407 = vor.u32 %v7406, %v7404
        %v7408 = vrot.slane %v7407, 4
        %v7410 = vshll.u32 %v6237, 16
        %v7412 = vrot.slane %v7410, 5
        %v7413 = vsel %vm3514, %v7408, %v7412
        %v7414 = vrot.slane %v6560, 4
        %v7415 = vrot.slane %v6563, 5
        %v7416 = vor.u32 %v7414, %v7415
        %v7417 = vrot.slane %v7416, 4
        %v7418 = vrot.slane %v6572, 5
        %v7419 = vsel %vm3514, %v7417, %v7418
        %v7420 = vrot.slane %v6569, 4
        %v7421 = vor.u32 %v7420, %v7418
        %v7422 = vrot.slane %v7421, 4
        %v7424 = vshll.u32 %v6241, 16
        %v7426 = vrot.slane %v7424, 5
        %v7427 = vsel %vm3514, %v7422, %v7426
        %v7428 = vrot.slane %v6582, 4
        %v7429 = vrot.slane %v6585, 5
        %v7430 = vor.u32 %v7428, %v7429
        %v7431 = vrot.slane %v7430, 4
        %v7432 = vrot.slane %v6594, 5
        %v7433 = vsel %vm3514, %v7431, %v7432
        %v7434 = vrot.slane %v6591, 4
        %v7435 = vor.u32 %v7434, %v7432
        %v7436 = vrot.slane %v7435, 4
        %v7438 = vshll.u32 %v6245, 16
        %v7440 = vrot.slane %v7438, 5
        %v7441 = vsel %vm3514, %v7436, %v7440
        %s7442 = scalar_lea.vmem %s6, 10
        %v7443 = vld [vmem:[%s7442] sm:$0x3]
        %v7444 = vunpack.c.l.b16 %v7223
        %v7445 = vunpack.c.l.b16 %v7231
        %v7446 = vunpack.c.l.b16 %v7237
        %v7447 = vunpack.c.l.b16 %v7245
        %v7448 = vunpack.c.l.b16 %v7251
        %v7449 = vunpack.c.l.b16 %v7259
        %v7450 = vunpack.c.l.b16 %v7265
        %v7451 = vunpack.c.l.b16 %v7273
        %v7452 = vunpack.c.l.b16 %v7279
        %v7453 = vunpack.c.l.b16 %v7287
        %v7454 = vunpack.c.l.b16 %v7293
        %v7455 = vunpack.c.l.b16 %v7301
        %v7456 = vunpack.c.l.b16 %v7307
        %v7457 = vunpack.c.l.b16 %v7315
        %v7458 = vunpack.c.l.b16 %v7321
        %v7459 = vunpack.c.l.b16 %v7329
        %v7460 = vunpack.c.l.b16 %v7335
        %v7461 = vunpack.c.l.b16 %v7343
        %v7462 = vunpack.c.l.b16 %v7349
        %v7463 = vunpack.c.l.b16 %v7357
        %v7464 = vunpack.c.l.b16 %v7363
        %v7465 = vunpack.c.l.b16 %v7371
        %v7466 = vunpack.c.l.b16 %v7377
        %v7467 = vunpack.c.l.b16 %v7385
        %v7468 = vunpack.c.l.b16 %v7391
        %v7469 = vunpack.c.l.b16 %v7399
        %v7470 = vunpack.c.l.b16 %v7405
        %v7471 = vunpack.c.l.b16 %v7413
        %v7472 = vunpack.c.l.b16 %v7419
        %v7473 = vunpack.c.l.b16 %v7427
        %v7474 = vunpack.c.l.b16 %v7433
        %v7475 = vunpack.c.l.b16 %v7441
        %v7476 = vpack.c.b16 %v7445, %v7444
        %v7477 = vpack.c.b16 %v7447, %v7446
        %v7478 = vpack.c.b16 %v7449, %v7448
        %v7479 = vpack.c.b16 %v7451, %v7450
        %v7480 = vpack.c.b16 %v7453, %v7452
        %v7481 = vpack.c.b16 %v7455, %v7454
        %v7482 = vpack.c.b16 %v7457, %v7456
        %v7483 = vpack.c.b16 %v7459, %v7458
        %v7484 = vpack.c.b16 %v7461, %v7460
        %v7485 = vpack.c.b16 %v7463, %v7462
        %v7486 = vpack.c.b16 %v7465, %v7464
        %v7487 = vpack.c.b16 %v7467, %v7466
        %v7488 = vpack.c.b16 %v7469, %v7468
        %v7489 = vpack.c.b16 %v7471, %v7470
        %v7490 = vpack.c.b16 %v7473, %v7472
        %v7491 = vpack.c.b16 %v7475, %v7474
        %v7493 = vsel %vm700, %v7476, 0
        %v7496 = vsel %vm700, %v7477, 0
        %v7499 = vsel %vm700, %v7478, 0
        %v7502 = vsel %vm700, %v7479, 0
        %v7505 = vsel %vm700, %v7480, 0
        %v7508 = vsel %vm700, %v7481, 0
        %v7511 = vsel %vm700, %v7482, 0
        %v7514 = vsel %vm700, %v7483, 0
        %v7517 = vsel %vm700, %v7484, 0
        %v7520 = vsel %vm700, %v7485, 0
        %v7523 = vsel %vm700, %v7486, 0
        %v7526 = vsel %vm700, %v7487, 0
        %v7529 = vsel %vm700, %v7488, 0
        %v7532 = vsel %vm700, %v7489, 0
        %v7535 = vsel %vm700, %v7490, 0
        %v7538 = vsel %vm700, %v7491, 0
        %v7541 = vsel %vm713, %v7443, 0
        %7543 = vmatprep.subr.bf16.mxu0 0
        %7544 = vmatpush1.bf16.msra.mxu0 %v7541
        %7545 = vmatprep.subr.bf16.mxu0 0
        %7546 = vmatpush1.bf16.msra.mxu0 0
        %7547 = vmatprep.subr.bf16.mxu0 0
        %7548 = vmatpush1.bf16.msra.mxu0 0
        %7549 = vmatprep.subr.bf16.mxu0 0
        %7550 = vmatpush1.bf16.msra.mxu0 0
        %7551 = vmatprep.subr.bf16.mxu0 0
        %7552 = vmatpush1.bf16.msra.mxu0 0
        %7553 = vmatprep.subr.bf16.mxu0 0
        %7554 = vmatpush1.bf16.msra.mxu0 0
        %7555 = vmatprep.subr.bf16.mxu0 0
        %7556 = vmatpush1.bf16.msra.mxu0 0
        %7557 = vmatprep.subr.bf16.mxu0 0
        %7558 = vmatpush1.bf16.msra.mxu0 0
        %7559 = vmatprep.subr.bf16.mxu0 0
        %7560 = vmatpush1.bf16.msra.mxu0 0
        %7561 = vmatprep.subr.bf16.mxu0 0
        %7562 = vmatpush1.bf16.msra.mxu0 0
        %7563 = vmatprep.subr.bf16.mxu0 0
        %7564 = vmatpush1.bf16.msra.mxu0 0
        %7565 = vmatprep.subr.bf16.mxu0 0
        %7566 = vmatpush1.bf16.msra.mxu0 0
        %7567 = vmatprep.subr.bf16.mxu0 0
        %7568 = vmatpush1.bf16.msra.mxu0 0
        %7569 = vmatprep.subr.bf16.mxu0 0
        %7570 = vmatpush1.bf16.msra.mxu0 0
        %7571 = vmatprep.subr.bf16.mxu0 0
        %7572 = vmatpush1.bf16.msra.mxu0 0
        %7573 = vmatprep.subr.bf16.mxu0 0
        %7574 = vmatpush1.bf16.msra.mxu0 0
        %7575 = vmatprep.mubr.bf16.mxu0 0
        %7576 = vmatmul.mubr.bf16.gmra.mrb[0].mxu0 %v7493
        %v7577 = vpop.f32.mrb[0].mxu0
        %v7578 = vadd.f32 0.0, %v7577
        %v7579 = vpop.f32.mrb[0].mxu0
        %v7580 = vpop.f32.mrb[0].mxu0
        %v7581 = vadd.f32 0.0, %v7580
        %v7582 = vpop.f32.mrb[0].mxu0
        %7583 = vmatprep.mubr.bf16.mxu0 0
        %7584 = vmatmul.mubr.bf16.gmra.mrb[0].mxu0 %v7496
        %v7585 = vpop.f32.mrb[0].mxu0
        %v7586 = vadd.f32 0.0, %v7585
        %v7587 = vpop.f32.mrb[0].mxu0
        %v7588 = vpop.f32.mrb[0].mxu0
        %v7589 = vadd.f32 0.0, %v7588
        %v7590 = vpop.f32.mrb[0].mxu0
        %7591 = vmatprep.mubr.bf16.mxu0 0
        %7592 = vmatmul.mubr.bf16.gmra.mrb[0].mxu0 %v7499
        %v7593 = vpop.f32.mrb[0].mxu0
        %v7594 = vadd.f32 0.0, %v7593
        %v7595 = vpop.f32.mrb[0].mxu0
        %v7596 = vpop.f32.mrb[0].mxu0
        %v7597 = vadd.f32 0.0, %v7596
        %v7598 = vpop.f32.mrb[0].mxu0
        %7599 = vmatprep.mubr.bf16.mxu0 0
        %7600 = vmatmul.mubr.bf16.gmra.mrb[0].mxu0 %v7502
        %v7601 = vpop.f32.mrb[0].mxu0
        %v7602 = vadd.f32 0.0, %v7601
        %v7603 = vpop.f32.mrb[0].mxu0
        %v7604 = vpop.f32.mrb[0].mxu0
        %v7605 = vadd.f32 0.0, %v7604
        %v7606 = vpop.f32.mrb[0].mxu0
        %7607 = vmatprep.mubr.bf16.mxu0 0
        %7608 = vmatmul.mubr.bf16.gmra.mrb[0].mxu0 %v7505
        %v7609 = vpop.f32.mrb[0].mxu0
        %v7610 = vadd.f32 0.0, %v7609
        %v7611 = vpop.f32.mrb[0].mxu0
        %v7612 = vpop.f32.mrb[0].mxu0
        %v7613 = vadd.f32 0.0, %v7612
        %v7614 = vpop.f32.mrb[0].mxu0
        %7615 = vmatprep.mubr.bf16.mxu0 0
        %7616 = vmatmul.mubr.bf16.gmra.mrb[0].mxu0 %v7508
        %v7617 = vpop.f32.mrb[0].mxu0
        %v7618 = vadd.f32 0.0, %v7617
        %v7619 = vpop.f32.mrb[0].mxu0
        %v7620 = vpop.f32.mrb[0].mxu0
        %v7621 = vadd.f32 0.0, %v7620
        %v7622 = vpop.f32.mrb[0].mxu0
        %7623 = vmatprep.mubr.bf16.mxu0 0
        %7624 = vmatmul.mubr.bf16.gmra.mrb[0].mxu0 %v7511
        %v7625 = vpop.f32.mrb[0].mxu0
        %v7626 = vadd.f32 0.0, %v7625
        %v7627 = vpop.f32.mrb[0].mxu0
        %v7628 = vpop.f32.mrb[0].mxu0
        %v7629 = vadd.f32 0.0, %v7628
        %v7630 = vpop.f32.mrb[0].mxu0
        %7631 = vmatprep.mubr.bf16.mxu0 0
        %7632 = vmatmul.mubr.bf16.gmra.mrb[0].mxu0 %v7514
        %v7633 = vpop.f32.mrb[0].mxu0
        %v7634 = vadd.f32 0.0, %v7633
        %v7635 = vpop.f32.mrb[0].mxu0
        %v7636 = vpop.f32.mrb[0].mxu0
        %v7637 = vadd.f32 0.0, %v7636
        %v7638 = vpop.f32.mrb[0].mxu0
        %7639 = vmatprep.mubr.bf16.mxu0 0
        %7640 = vmatmul.mubr.bf16.gmra.mrb[0].mxu0 %v7517
        %v7641 = vpop.f32.mrb[0].mxu0
        %v7642 = vadd.f32 0.0, %v7641
        %v7643 = vpop.f32.mrb[0].mxu0
        %v7644 = vpop.f32.mrb[0].mxu0
        %v7645 = vadd.f32 0.0, %v7644
        %v7646 = vpop.f32.mrb[0].mxu0
        %7647 = vmatprep.mubr.bf16.mxu0 0
        %7648 = vmatmul.mubr.bf16.gmra.mrb[0].mxu0 %v7520
        %v7649 = vpop.f32.mrb[0].mxu0
        %v7650 = vadd.f32 0.0, %v7649
        %v7651 = vpop.f32.mrb[0].mxu0
        %v7652 = vpop.f32.mrb[0].mxu0
        %v7653 = vadd.f32 0.0, %v7652
        %v7654 = vpop.f32.mrb[0].mxu0
        %7655 = vmatprep.mubr.bf16.mxu0 0
        %7656 = vmatmul.mubr.bf16.gmra.mrb[0].mxu0 %v7523
        %v7657 = vpop.f32.mrb[0].mxu0
        %v7658 = vadd.f32 0.0, %v7657
        %v7659 = vpop.f32.mrb[0].mxu0
        %v7660 = vpop.f32.mrb[0].mxu0
        %v7661 = vadd.f32 0.0, %v7660
        %v7662 = vpop.f32.mrb[0].mxu0
        %7663 = vmatprep.mubr.bf16.mxu0 0
        %7664 = vmatmul.mubr.bf16.gmra.mrb[0].mxu0 %v7526
        %v7665 = vpop.f32.mrb[0].mxu0
        %v7666 = vadd.f32 0.0, %v7665
        %v7667 = vpop.f32.mrb[0].mxu0
        %v7668 = vpop.f32.mrb[0].mxu0
        %v7669 = vadd.f32 0.0, %v7668
        %v7670 = vpop.f32.mrb[0].mxu0
        %7671 = vmatprep.mubr.bf16.mxu0 0
        %7672 = vmatmul.mubr.bf16.gmra.mrb[0].mxu0 %v7529
        %v7673 = vpop.f32.mrb[0].mxu0
        %v7674 = vadd.f32 0.0, %v7673
        %v7675 = vpop.f32.mrb[0].mxu0
        %v7676 = vpop.f32.mrb[0].mxu0
        %v7677 = vadd.f32 0.0, %v7676
        %v7678 = vpop.f32.mrb[0].mxu0
        %7679 = vmatprep.mubr.bf16.mxu0 0
        %7680 = vmatmul.mubr.bf16.gmra.mrb[0].mxu0 %v7532
        %v7681 = vpop.f32.mrb[0].mxu0
        %v7682 = vadd.f32 0.0, %v7681
        %v7683 = vpop.f32.mrb[0].mxu0
        %v7684 = vpop.f32.mrb[0].mxu0
        %v7685 = vadd.f32 0.0, %v7684
        %v7686 = vpop.f32.mrb[0].mxu0
        %7687 = vmatprep.mubr.bf16.mxu0 0
        %7688 = vmatmul.mubr.bf16.gmra.mrb[0].mxu0 %v7535
        %v7689 = vpop.f32.mrb[0].mxu0
        %v7690 = vadd.f32 0.0, %v7689
        %v7691 = vpop.f32.mrb[0].mxu0
        %v7692 = vpop.f32.mrb[0].mxu0
        %v7693 = vadd.f32 0.0, %v7692
        %v7694 = vpop.f32.mrb[0].mxu0
        %7695 = vmatprep.mubr.bf16.mxu0 0
        %7696 = vmatmul.mubr.bf16.gmra.mrb[0].mxu0 %v7538
        %v7697 = vpop.f32.mrb[0].mxu0
        %v7698 = vadd.f32 0.0, %v7697
        %v7699 = vpop.f32.mrb[0].mxu0
        %v7700 = vpop.f32.mrb[0].mxu0
        %v7701 = vadd.f32 0.0, %v7700
        %v7702 = vpop.f32.mrb[0].mxu0
        %7703 = vdwg.mxu0
        %v7704 = vadd.f32 %v7186, %v7578
        %v7705 = vadd.f32 %v7187, %v7581
        %v7706 = vadd.f32 %v7188, %v7586
        %v7707 = vadd.f32 %v7189, %v7589
        %v7708 = vadd.f32 %v7190, %v7594
        %v7709 = vadd.f32 %v7191, %v7597
        %v7710 = vadd.f32 %v7192, %v7602
        %v7711 = vadd.f32 %v7193, %v7605
        %v7712 = vadd.f32 %v7194, %v7610
        %v7713 = vadd.f32 %v7195, %v7613
        %v7714 = vadd.f32 %v7196, %v7618
        %v7715 = vadd.f32 %v7197, %v7621
        %v7716 = vadd.f32 %v7198, %v7626
        %v7717 = vadd.f32 %v7199, %v7629
        %v7718 = vadd.f32 %v7200, %v7634
        %v7719 = vadd.f32 %v7201, %v7637
        %v7720 = vadd.f32 %v7202, %v7642
        %v7721 = vadd.f32 %v7203, %v7645
        %v7722 = vadd.f32 %v7204, %v7650
        %v7723 = vadd.f32 %v7205, %v7653
        %v7724 = vadd.f32 %v7206, %v7658
        %v7725 = vadd.f32 %v7207, %v7661
        %v7726 = vadd.f32 %v7208, %v7666
        %v7727 = vadd.f32 %v7209, %v7669
        %v7728 = vadd.f32 %v7210, %v7674
        %v7729 = vadd.f32 %v7211, %v7677
        %v7730 = vadd.f32 %v7212, %v7682
        %v7731 = vadd.f32 %v7213, %v7685
        %v7732 = vadd.f32 %v7214, %v7690
        %v7733 = vadd.f32 %v7215, %v7693
        %v7734 = vadd.f32 %v7216, %v7698
        %v7735 = vadd.f32 %v7217, %v7701
        %s7736 = scalar_lea.vmem [#allocation2], 40
        %v7737 = vld [vmem:[%s7736 + $0x4] sm:$0xf]
        %v7738 = vld [vmem:[%s7736 + $0x8] sm:$0xf]
        %v7739 = vld [vmem:[%s7736 + $0xc] sm:$0xf]
        %v7740 = vld [vmem:[%s7736 + $0x10] sm:$0xf]
        %v7741 = vld [vmem:[%s7736 + $0x18] sm:$0xf]
        %v7742 = vld [vmem:[%s7736 + $0x1c] sm:$0xf]
        %v7743 = vld [vmem:[%s7736 + $0x20] sm:$0xf]
        %v7744 = vld [vmem:[%s7736 + $0x24] sm:$0xf]
        %v7745 = vld [vmem:[%s7736 + $0x2c] sm:$0xf]
        %v7746 = vld [vmem:[%s7736 + $0x30] sm:$0xf]
        %v7747 = vld [vmem:[%s7736 + $0x34] sm:$0xf]
        %v7748 = vld [vmem:[%s7736 + $0x38] sm:$0xf]
        %v7749 = vld [vmem:[%s7736 + $0x40] sm:$0xf]
        %v7750 = vld [vmem:[%s7736 + $0x44] sm:$0xf]
        %v7751 = vld [vmem:[%s7736 + $0x48] sm:$0xf]
        %v7752 = vld [vmem:[%s7736 + $0x4c] sm:$0xf]
        %v7753 = vld [vmem:[%s7736 + $0x54] sm:$0xf]
        %v7754 = vld [vmem:[%s7736 + $0x58] sm:$0xf]
        %v7755 = vld [vmem:[%s7736 + $0x5c] sm:$0xf]
        %v7756 = vld [vmem:[%s7736 + $0x60] sm:$0xf]
        %v7757 = vld [vmem:[%s7736 + $0x68] sm:$0xf]
        %v7758 = vld [vmem:[%s7736 + $0x6c] sm:$0xf]
        %v7759 = vld [vmem:[%s7736 + $0x70] sm:$0xf]
        %v7760 = vld [vmem:[%s7736 + $0x74] sm:$0xf]
        %v7761 = vld [vmem:[%s7736 + $0x7c] sm:$0xf]
        %v7762 = vld [vmem:[%s7736 + $0x80] sm:$0xf]
        %v7763 = vld [vmem:[%s7736 + $0x84] sm:$0xf]
        %v7764 = vld [vmem:[%s7736 + $0x88] sm:$0xf]
        %v7765 = vld [vmem:[%s7736 + $0x90] sm:$0xf]
        %v7766 = vld [vmem:[%s7736 + $0x94] sm:$0xf]
        %v7767 = vld [vmem:[%s7736 + $0x98] sm:$0xf]
        %v7768 = vld [vmem:[%s7736 + $0x9c] sm:$0xf]
        %v7769 = vld [vmem:[%s7736 + $0xa4] sm:$0xf]
        %v7770 = vld [vmem:[%s7736 + $0xa8] sm:$0xf]
        %v7771 = vld [vmem:[%s7736 + $0xac] sm:$0xf]
        %v7772 = vld [vmem:[%s7736 + $0xb0] sm:$0xf]
        %v7773 = vld [vmem:[%s7736 + $0xb8] sm:$0xf]
        %v7774 = vld [vmem:[%s7736 + $0xbc] sm:$0xf]
        %v7775 = vld [vmem:[%s7736 + $0xc0] sm:$0xf]
        %v7776 = vld [vmem:[%s7736 + $0xc4] sm:$0xf]
        %v7777 = vld [vmem:[%s7736 + $0xcc] sm:$0xf]
        %v7778 = vld [vmem:[%s7736 + $0xd0] sm:$0xf]
        %v7779 = vld [vmem:[%s7736 + $0xd4] sm:$0xf]
        %v7780 = vld [vmem:[%s7736 + $0xd8] sm:$0xf]
        %v7781 = vld [vmem:[%s7736 + $0xe0] sm:$0xf]
        %v7782 = vld [vmem:[%s7736 + $0xe4] sm:$0xf]
        %v7783 = vld [vmem:[%s7736 + $0xe8] sm:$0xf]
        %v7784 = vld [vmem:[%s7736 + $0xec] sm:$0xf]
        %v7785 = vld [vmem:[%s7736 + $0xf4] sm:$0xf]
        %v7786 = vld [vmem:[%s7736 + $0xf8] sm:$0xf]
        %v7787 = vld [vmem:[%s7736 + $0xfc] sm:$0xf]
        %v7788 = vld [vmem:[%s7736 + $0x100] sm:$0xf]
        %v7789 = vld [vmem:[%s7736 + $0x108] sm:$0xf]
        %v7790 = vld [vmem:[%s7736 + $0x10c] sm:$0xf]
        %v7791 = vld [vmem:[%s7736 + $0x110] sm:$0xf]
        %v7792 = vld [vmem:[%s7736 + $0x114] sm:$0xf]
        %v7793 = vld [vmem:[%s7736 + $0x11c] sm:$0xf]
        %v7794 = vld [vmem:[%s7736 + $0x120] sm:$0xf]
        %v7795 = vld [vmem:[%s7736 + $0x124] sm:$0xf]
        %v7796 = vld [vmem:[%s7736 + $0x128] sm:$0xf]
        %v7797 = vld [vmem:[%s7736 + $0x130] sm:$0xf]
        %v7798 = vld [vmem:[%s7736 + $0x134] sm:$0xf]
        %v7799 = vld [vmem:[%s7736 + $0x138] sm:$0xf]
        %v7800 = vld [vmem:[%s7736 + $0x13c] sm:$0xf]
        %v7849 = vunpack.c.l.b16 %v7737
        %v7850 = vunpack.c.l.b16 %v7738
        %v7851 = vunpack.c.l.b16 %v7739
        %v7852 = vunpack.c.l.b16 %v7741
        %v7853 = vunpack.c.l.b16 %v7742
        %v7854 = vunpack.c.l.b16 %v7743
        %v7855 = vunpack.c.l.b16 %v7745
        %v7856 = vunpack.c.l.b16 %v7746
        %v7857 = vunpack.c.l.b16 %v7747
        %v7858 = vunpack.c.l.b16 %v7749
        %v7859 = vunpack.c.l.b16 %v7750
        %v7860 = vunpack.c.l.b16 %v7751
        %v7861 = vunpack.c.l.b16 %v7753
        %v7862 = vunpack.c.l.b16 %v7754
        %v7863 = vunpack.c.l.b16 %v7755
        %v7864 = vunpack.c.l.b16 %v7757
        %v7865 = vunpack.c.l.b16 %v7758
        %v7866 = vunpack.c.l.b16 %v7759
        %v7867 = vunpack.c.l.b16 %v7761
        %v7868 = vunpack.c.l.b16 %v7762
        %v7869 = vunpack.c.l.b16 %v7763
        %v7870 = vunpack.c.l.b16 %v7765
        %v7871 = vunpack.c.l.b16 %v7766
        %v7872 = vunpack.c.l.b16 %v7767
        %v7873 = vunpack.c.l.b16 %v7769
        %v7874 = vunpack.c.l.b16 %v7770
        %v7875 = vunpack.c.l.b16 %v7771
        %v7876 = vunpack.c.l.b16 %v7773
        %v7877 = vunpack.c.l.b16 %v7774
        %v7878 = vunpack.c.l.b16 %v7775
        %v7879 = vunpack.c.l.b16 %v7777
        %v7880 = vunpack.c.l.b16 %v7778
        %v7881 = vunpack.c.l.b16 %v7779
        %v7882 = vunpack.c.l.b16 %v7781
        %v7883 = vunpack.c.l.b16 %v7782
        %v7884 = vunpack.c.l.b16 %v7783
        %v7885 = vunpack.c.l.b16 %v7785
        %v7886 = vunpack.c.l.b16 %v7786
        %v7887 = vunpack.c.l.b16 %v7787
        %v7888 = vunpack.c.l.b16 %v7789
        %v7889 = vunpack.c.l.b16 %v7790
        %v7890 = vunpack.c.l.b16 %v7791
        %v7891 = vunpack.c.l.b16 %v7793
        %v7892 = vunpack.c.l.b16 %v7794
        %v7893 = vunpack.c.l.b16 %v7795
        %v7894 = vunpack.c.l.b16 %v7797
        %v7895 = vunpack.c.l.b16 %v7798
        %v7896 = vunpack.c.l.b16 %v7799
        %v7897 = vpack.c.b16 %v7850, %v7849
        %v7898 = vpack.c.b16 %v7851, %v7851
        %v7899 = vpack.c.b16 %v7853, %v7852
        %v7900 = vpack.c.b16 %v7854, %v7854
        %v7901 = vpack.c.b16 %v7856, %v7855
        %v7902 = vpack.c.b16 %v7857, %v7857
        %v7903 = vpack.c.b16 %v7859, %v7858
        %v7904 = vpack.c.b16 %v7860, %v7860
        %v7905 = vpack.c.b16 %v7862, %v7861
        %v7906 = vpack.c.b16 %v7863, %v7863
        %v7907 = vpack.c.b16 %v7865, %v7864
        %v7908 = vpack.c.b16 %v7866, %v7866
        %v7909 = vpack.c.b16 %v7868, %v7867
        %v7910 = vpack.c.b16 %v7869, %v7869
        %v7911 = vpack.c.b16 %v7871, %v7870
        %v7912 = vpack.c.b16 %v7872, %v7872
        %v7913 = vpack.c.b16 %v7874, %v7873
        %v7914 = vpack.c.b16 %v7875, %v7875
        %v7915 = vpack.c.b16 %v7877, %v7876
        %v7916 = vpack.c.b16 %v7878, %v7878
        %v7917 = vpack.c.b16 %v7880, %v7879
        %v7918 = vpack.c.b16 %v7881, %v7881
        %v7919 = vpack.c.b16 %v7883, %v7882
        %v7920 = vpack.c.b16 %v7884, %v7884
        %v7921 = vpack.c.b16 %v7886, %v7885
        %v7922 = vpack.c.b16 %v7887, %v7887
        %v7923 = vpack.c.b16 %v7889, %v7888
        %v7924 = vpack.c.b16 %v7890, %v7890
        %v7925 = vpack.c.b16 %v7892, %v7891
        %v7926 = vpack.c.b16 %v7893, %v7893
        %v7927 = vpack.c.b16 %v7895, %v7894
        %v7928 = vpack.c.b16 %v7896, %v7896
        %v7929 = vpack.c.b16 %v7851, %v7850
        %v7930 = vpack.c.b16 %v7854, %v7853
        %v7931 = vpack.c.b16 %v7857, %v7856
        %v7932 = vpack.c.b16 %v7860, %v7859
        %v7933 = vpack.c.b16 %v7863, %v7862
        %v7934 = vpack.c.b16 %v7866, %v7865
        %v7935 = vpack.c.b16 %v7869, %v7868
        %v7936 = vpack.c.b16 %v7872, %v7871
        %v7937 = vpack.c.b16 %v7875, %v7874
        %v7938 = vpack.c.b16 %v7878, %v7877
        %v7939 = vpack.c.b16 %v7881, %v7880
        %v7940 = vpack.c.b16 %v7884, %v7883
        %v7941 = vpack.c.b16 %v7887, %v7886
        %v7942 = vpack.c.b16 %v7890, %v7889
        %v7943 = vpack.c.b16 %v7893, %v7892
        %v7944 = vpack.c.b16 %v7896, %v7895
        %v7946 = vshrl.u32 %v7929, 16
        %v7948 = vrot.slane %v7946, 4
        %v7949 = vshll.u32 %v7929, 16
        %v7951 = vrot.slane %v7949, 5
        %v7952 = vor.u32 %v7948, %v7951
        %v7954 = vshrl.u32 %v7930, 16
        %v7956 = vrot.slane %v7954, 4
        %v7957 = vshll.u32 %v7930, 16
        %v7959 = vrot.slane %v7957, 5
        %v7960 = vor.u32 %v7956, %v7959
        %v7962 = vshrl.u32 %v7931, 16
        %v7964 = vrot.slane %v7962, 4
        %v7965 = vshll.u32 %v7931, 16
        %v7967 = vrot.slane %v7965, 5
        %v7968 = vor.u32 %v7964, %v7967
        %v7970 = vshrl.u32 %v7932, 16
        %v7972 = vrot.slane %v7970, 4
        %v7973 = vshll.u32 %v7932, 16
        %v7975 = vrot.slane %v7973, 5
        %v7976 = vor.u32 %v7972, %v7975
        %v7978 = vshrl.u32 %v7933, 16
        %v7980 = vrot.slane %v7978, 4
        %v7981 = vshll.u32 %v7933, 16
        %v7983 = vrot.slane %v7981, 5
        %v7984 = vor.u32 %v7980, %v7983
        %v7986 = vshrl.u32 %v7934, 16
        %v7988 = vrot.slane %v7986, 4
        %v7989 = vshll.u32 %v7934, 16
        %v7991 = vrot.slane %v7989, 5
        %v7992 = vor.u32 %v7988, %v7991
        %v7994 = vshrl.u32 %v7935, 16
        %v7996 = vrot.slane %v7994, 4
        %v7997 = vshll.u32 %v7935, 16
        %v7999 = vrot.slane %v7997, 5
        %v8000 = vor.u32 %v7996, %v7999
        %v8002 = vshrl.u32 %v7936, 16
        %v8004 = vrot.slane %v8002, 4
        %v8005 = vshll.u32 %v7936, 16
        %v8007 = vrot.slane %v8005, 5
        %v8008 = vor.u32 %v8004, %v8007
        %v8010 = vshrl.u32 %v7937, 16
        %v8012 = vrot.slane %v8010, 4
        %v8013 = vshll.u32 %v7937, 16
        %v8015 = vrot.slane %v8013, 5
        %v8016 = vor.u32 %v8012, %v8015
        %v8018 = vshrl.u32 %v7938, 16
        %v8020 = vrot.slane %v8018, 4
        %v8021 = vshll.u32 %v7938, 16
        %v8023 = vrot.slane %v8021, 5
        %v8024 = vor.u32 %v8020, %v8023
        %v8026 = vshrl.u32 %v7939, 16
        %v8028 = vrot.slane %v8026, 4
        %v8029 = vshll.u32 %v7939, 16
        %v8031 = vrot.slane %v8029, 5
        %v8032 = vor.u32 %v8028, %v8031
        %v8034 = vshrl.u32 %v7940, 16
        %v8036 = vrot.slane %v8034, 4
        %v8037 = vshll.u32 %v7940, 16
        %v8039 = vrot.slane %v8037, 5
        %v8040 = vor.u32 %v8036, %v8039
        %v8042 = vshrl.u32 %v7941, 16
        %v8044 = vrot.slane %v8042, 4
        %v8045 = vshll.u32 %v7941, 16
        %v8047 = vrot.slane %v8045, 5
        %v8048 = vor.u32 %v8044, %v8047
        %v8050 = vshrl.u32 %v7942, 16
        %v8052 = vrot.slane %v8050, 4
        %v8053 = vshll.u32 %v7942, 16
        %v8055 = vrot.slane %v8053, 5
        %v8056 = vor.u32 %v8052, %v8055
        %v8058 = vshrl.u32 %v7943, 16
        %v8060 = vrot.slane %v8058, 4
        %v8061 = vshll.u32 %v7943, 16
        %v8063 = vrot.slane %v8061, 5
        %v8064 = vor.u32 %v8060, %v8063
        %v8066 = vshrl.u32 %v7944, 16
        %v8068 = vrot.slane %v8066, 4
        %v8069 = vshll.u32 %v7944, 16
        %v8071 = vrot.slane %v8069, 5
        %v8072 = vor.u32 %v8068, %v8071
        %v8089 = vunpack.c.l.b16 %v7740
        %v8090 = vunpack.c.l.b16 %v7744
        %v8091 = vunpack.c.l.b16 %v7748
        %v8092 = vunpack.c.l.b16 %v7752
        %v8093 = vunpack.c.l.b16 %v7756
        %v8094 = vunpack.c.l.b16 %v7760
        %v8095 = vunpack.c.l.b16 %v7764
        %v8096 = vunpack.c.l.b16 %v7768
        %v8097 = vunpack.c.l.b16 %v7772
        %v8098 = vunpack.c.l.b16 %v7776
        %v8099 = vunpack.c.l.b16 %v7780
        %v8100 = vunpack.c.l.b16 %v7784
        %v8101 = vunpack.c.l.b16 %v7788
        %v8102 = vunpack.c.l.b16 %v7792
        %v8103 = vunpack.c.l.b16 %v7796
        %v8104 = vunpack.c.l.b16 %v7800
        %v8105 = vpack.c.b16 %v8089, %v8089
        %v8106 = vpack.c.b16 %v8090, %v8090
        %v8107 = vpack.c.b16 %v8091, %v8091
        %v8108 = vpack.c.b16 %v8092, %v8092
        %v8109 = vpack.c.b16 %v8093, %v8093
        %v8110 = vpack.c.b16 %v8094, %v8094
        %v8111 = vpack.c.b16 %v8095, %v8095
        %v8112 = vpack.c.b16 %v8096, %v8096
        %v8113 = vpack.c.b16 %v8097, %v8097
        %v8114 = vpack.c.b16 %v8098, %v8098
        %v8115 = vpack.c.b16 %v8099, %v8099
        %v8116 = vpack.c.b16 %v8100, %v8100
        %v8117 = vpack.c.b16 %v8101, %v8101
        %v8118 = vpack.c.b16 %v8102, %v8102
        %v8119 = vpack.c.b16 %v8103, %v8103
        %v8120 = vpack.c.b16 %v8104, %v8104
        %v8121 = vrot.slane %v7929, 5
        %v8122 = vrot.slane %v8105, 5
        %v8123 = vsel %vm1704, %v8121, %v8122
        %v8124 = vrot.slane %v7930, 5
        %v8125 = vrot.slane %v8106, 5
        %v8126 = vsel %vm1704, %v8124, %v8125
        %v8127 = vrot.slane %v7931, 5
        %v8128 = vrot.slane %v8107, 5
        %v8129 = vsel %vm1704, %v8127, %v8128
        %v8130 = vrot.slane %v7932, 5
        %v8131 = vrot.slane %v8108, 5
        %v8132 = vsel %vm1704, %v8130, %v8131
        %v8133 = vrot.slane %v7933, 5
        %v8134 = vrot.slane %v8109, 5
        %v8135 = vsel %vm1704, %v8133, %v8134
        %v8136 = vrot.slane %v7934, 5
        %v8137 = vrot.slane %v8110, 5
        %v8138 = vsel %vm1704, %v8136, %v8137
        %v8139 = vrot.slane %v7935, 5
        %v8140 = vrot.slane %v8111, 5
        %v8141 = vsel %vm1704, %v8139, %v8140
        %v8142 = vrot.slane %v7936, 5
        %v8143 = vrot.slane %v8112, 5
        %v8144 = vsel %vm1704, %v8142, %v8143
        %v8145 = vrot.slane %v7937, 5
        %v8146 = vrot.slane %v8113, 5
        %v8147 = vsel %vm1704, %v8145, %v8146
        %v8148 = vrot.slane %v7938, 5
        %v8149 = vrot.slane %v8114, 5
        %v8150 = vsel %vm1704, %v8148, %v8149
        %v8151 = vrot.slane %v7939, 5
        %v8152 = vrot.slane %v8115, 5
        %v8153 = vsel %vm1704, %v8151, %v8152
        %v8154 = vrot.slane %v7940, 5
        %v8155 = vrot.slane %v8116, 5
        %v8156 = vsel %vm1704, %v8154, %v8155
        %v8157 = vrot.slane %v7941, 5
        %v8158 = vrot.slane %v8117, 5
        %v8159 = vsel %vm1704, %v8157, %v8158
        %v8160 = vrot.slane %v7942, 5
        %v8161 = vrot.slane %v8118, 5
        %v8162 = vsel %vm1704, %v8160, %v8161
        %v8163 = vrot.slane %v7943, 5
        %v8164 = vrot.slane %v8119, 5
        %v8165 = vsel %vm1704, %v8163, %v8164
        %v8166 = vrot.slane %v7944, 5
        %v8167 = vrot.slane %v8120, 5
        %v8168 = vsel %vm1704, %v8166, %v8167
        %v8170 = vshrl.u32 %v7897, 16
        %v8172 = vrot.slane %v8170, 3
        %v8173 = vshll.u32 %v7897, 16
        %v8175 = vrot.slane %v8173, 4
        %v8176 = vor.u32 %v8172, %v8175
        %v8178 = vshrl.u32 %v7898, 16
        %v8180 = vrot.slane %v8178, 3
        %v8181 = vshll.u32 %v7898, 16
        %v8183 = vrot.slane %v8181, 4
        %v8184 = vor.u32 %v8180, %v8183
        %v8185 = vsel %vm1753, %v8176, %v8184
        %v8187 = vshrl.u32 %v7952, 16
        %v8189 = vrot.slane %v8187, 3
        %v8190 = vshll.u32 %v7952, 16
        %v8192 = vrot.slane %v8190, 4
        %v8193 = vor.u32 %v8189, %v8192
        %v8194 = vsel %vm1753, %v8193, %v8193
        %v8196 = vshrl.u32 %v8121, 16
        %v8198 = vrot.slane %v8196, 3
        %v8199 = vshll.u32 %v8121, 16
        %v8201 = vrot.slane %v8199, 4
        %v8202 = vor.u32 %v8198, %v8201
        %v8204 = vshrl.u32 %v8123, 16
        %v8206 = vrot.slane %v8204, 3
        %v8207 = vshll.u32 %v8123, 16
        %v8209 = vrot.slane %v8207, 4
        %v8210 = vor.u32 %v8206, %v8209
        %v8211 = vsel %vm1753, %v8202, %v8210
        %v8213 = vshrl.u32 %v7899, 16
        %v8215 = vrot.slane %v8213, 3
        %v8216 = vshll.u32 %v7899, 16
        %v8218 = vrot.slane %v8216, 4
        %v8219 = vor.u32 %v8215, %v8218
        %v8221 = vshrl.u32 %v7900, 16
        %v8223 = vrot.slane %v8221, 3
        %v8224 = vshll.u32 %v7900, 16
        %v8226 = vrot.slane %v8224, 4
        %v8227 = vor.u32 %v8223, %v8226
        %v8228 = vsel %vm1753, %v8219, %v8227
        %v8230 = vshrl.u32 %v7960, 16
        %v8232 = vrot.slane %v8230, 3
        %v8233 = vshll.u32 %v7960, 16
        %v8235 = vrot.slane %v8233, 4
        %v8236 = vor.u32 %v8232, %v8235
        %v8237 = vsel %vm1753, %v8236, %v8236
        %v8239 = vshrl.u32 %v8124, 16
        %v8241 = vrot.slane %v8239, 3
        %v8242 = vshll.u32 %v8124, 16
        %v8244 = vrot.slane %v8242, 4
        %v8245 = vor.u32 %v8241, %v8244
        %v8247 = vshrl.u32 %v8126, 16
        %v8249 = vrot.slane %v8247, 3
        %v8250 = vshll.u32 %v8126, 16
        %v8252 = vrot.slane %v8250, 4
        %v8253 = vor.u32 %v8249, %v8252
        %v8254 = vsel %vm1753, %v8245, %v8253
        %v8256 = vshrl.u32 %v7901, 16
        %v8258 = vrot.slane %v8256, 3
        %v8259 = vshll.u32 %v7901, 16
        %v8261 = vrot.slane %v8259, 4
        %v8262 = vor.u32 %v8258, %v8261
        %v8264 = vshrl.u32 %v7902, 16
        %v8266 = vrot.slane %v8264, 3
        %v8267 = vshll.u32 %v7902, 16
        %v8269 = vrot.slane %v8267, 4
        %v8270 = vor.u32 %v8266, %v8269
        %v8271 = vsel %vm1753, %v8262, %v8270
        %v8273 = vshrl.u32 %v7968, 16
        %v8275 = vrot.slane %v8273, 3
        %v8276 = vshll.u32 %v7968, 16
        %v8278 = vrot.slane %v8276, 4
        %v8279 = vor.u32 %v8275, %v8278
        %v8280 = vsel %vm1753, %v8279, %v8279
        %v8282 = vshrl.u32 %v8127, 16
        %v8284 = vrot.slane %v8282, 3
        %v8285 = vshll.u32 %v8127, 16
        %v8287 = vrot.slane %v8285, 4
        %v8288 = vor.u32 %v8284, %v8287
        %v8290 = vshrl.u32 %v8129, 16
        %v8292 = vrot.slane %v8290, 3
        %v8293 = vshll.u32 %v8129, 16
        %v8295 = vrot.slane %v8293, 4
        %v8296 = vor.u32 %v8292, %v8295
        %v8297 = vsel %vm1753, %v8288, %v8296
        %v8299 = vshrl.u32 %v7903, 16
        %v8301 = vrot.slane %v8299, 3
        %v8302 = vshll.u32 %v7903, 16
        %v8304 = vrot.slane %v8302, 4
        %v8305 = vor.u32 %v8301, %v8304
        %v8307 = vshrl.u32 %v7904, 16
        %v8309 = vrot.slane %v8307, 3
        %v8310 = vshll.u32 %v7904, 16
        %v8312 = vrot.slane %v8310, 4
        %v8313 = vor.u32 %v8309, %v8312
        %v8314 = vsel %vm1753, %v8305, %v8313
        %v8316 = vshrl.u32 %v7976, 16
        %v8318 = vrot.slane %v8316, 3
        %v8319 = vshll.u32 %v7976, 16
        %v8321 = vrot.slane %v8319, 4
        %v8322 = vor.u32 %v8318, %v8321
        %v8323 = vsel %vm1753, %v8322, %v8322
        %v8325 = vshrl.u32 %v8130, 16
        %v8327 = vrot.slane %v8325, 3
        %v8328 = vshll.u32 %v8130, 16
        %v8330 = vrot.slane %v8328, 4
        %v8331 = vor.u32 %v8327, %v8330
        %v8333 = vshrl.u32 %v8132, 16
        %v8335 = vrot.slane %v8333, 3
        %v8336 = vshll.u32 %v8132, 16
        %v8338 = vrot.slane %v8336, 4
        %v8339 = vor.u32 %v8335, %v8338
        %v8340 = vsel %vm1753, %v8331, %v8339
        %v8342 = vshrl.u32 %v7905, 16
        %v8344 = vrot.slane %v8342, 3
        %v8345 = vshll.u32 %v7905, 16
        %v8347 = vrot.slane %v8345, 4
        %v8348 = vor.u32 %v8344, %v8347
        %v8350 = vshrl.u32 %v7906, 16
        %v8352 = vrot.slane %v8350, 3
        %v8353 = vshll.u32 %v7906, 16
        %v8355 = vrot.slane %v8353, 4
        %v8356 = vor.u32 %v8352, %v8355
        %v8357 = vsel %vm1753, %v8348, %v8356
        %v8359 = vshrl.u32 %v7984, 16
        %v8361 = vrot.slane %v8359, 3
        %v8362 = vshll.u32 %v7984, 16
        %v8364 = vrot.slane %v8362, 4
        %v8365 = vor.u32 %v8361, %v8364
        %v8366 = vsel %vm1753, %v8365, %v8365
        %v8368 = vshrl.u32 %v8133, 16
        %v8370 = vrot.slane %v8368, 3
        %v8371 = vshll.u32 %v8133, 16
        %v8373 = vrot.slane %v8371, 4
        %v8374 = vor.u32 %v8370, %v8373
        %v8376 = vshrl.u32 %v8135, 16
        %v8378 = vrot.slane %v8376, 3
        %v8379 = vshll.u32 %v8135, 16
        %v8381 = vrot.slane %v8379, 4
        %v8382 = vor.u32 %v8378, %v8381
        %v8383 = vsel %vm1753, %v8374, %v8382
        %v8385 = vshrl.u32 %v7907, 16
        %v8387 = vrot.slane %v8385, 3
        %v8388 = vshll.u32 %v7907, 16
        %v8390 = vrot.slane %v8388, 4
        %v8391 = vor.u32 %v8387, %v8390
        %v8393 = vshrl.u32 %v7908, 16
        %v8395 = vrot.slane %v8393, 3
        %v8396 = vshll.u32 %v7908, 16
        %v8398 = vrot.slane %v8396, 4
        %v8399 = vor.u32 %v8395, %v8398
        %v8400 = vsel %vm1753, %v8391, %v8399
        %v8402 = vshrl.u32 %v7992, 16
        %v8404 = vrot.slane %v8402, 3
        %v8405 = vshll.u32 %v7992, 16
        %v8407 = vrot.slane %v8405, 4
        %v8408 = vor.u32 %v8404, %v8407
        %v8409 = vsel %vm1753, %v8408, %v8408
        %v8411 = vshrl.u32 %v8136, 16
        %v8413 = vrot.slane %v8411, 3
        %v8414 = vshll.u32 %v8136, 16
        %v8416 = vrot.slane %v8414, 4
        %v8417 = vor.u32 %v8413, %v8416
        %v8419 = vshrl.u32 %v8138, 16
        %v8421 = vrot.slane %v8419, 3
        %v8422 = vshll.u32 %v8138, 16
        %v8424 = vrot.slane %v8422, 4
        %v8425 = vor.u32 %v8421, %v8424
        %v8426 = vsel %vm1753, %v8417, %v8425
        %v8428 = vshrl.u32 %v7909, 16
        %v8430 = vrot.slane %v8428, 3
        %v8431 = vshll.u32 %v7909, 16
        %v8433 = vrot.slane %v8431, 4
        %v8434 = vor.u32 %v8430, %v8433
        %v8436 = vshrl.u32 %v7910, 16
        %v8438 = vrot.slane %v8436, 3
        %v8439 = vshll.u32 %v7910, 16
        %v8441 = vrot.slane %v8439, 4
        %v8442 = vor.u32 %v8438, %v8441
        %v8443 = vsel %vm1753, %v8434, %v8442
        %v8445 = vshrl.u32 %v8000, 16
        %v8447 = vrot.slane %v8445, 3
        %v8448 = vshll.u32 %v8000, 16
        %v8450 = vrot.slane %v8448, 4
        %v8451 = vor.u32 %v8447, %v8450
        %v8452 = vsel %vm1753, %v8451, %v8451
        %v8454 = vshrl.u32 %v8139, 16
        %v8456 = vrot.slane %v8454, 3
        %v8457 = vshll.u32 %v8139, 16
        %v8459 = vrot.slane %v8457, 4
        %v8460 = vor.u32 %v8456, %v8459
        %v8462 = vshrl.u32 %v8141, 16
        %v8464 = vrot.slane %v8462, 3
        %v8465 = vshll.u32 %v8141, 16
        %v8467 = vrot.slane %v8465, 4
        %v8468 = vor.u32 %v8464, %v8467
        %v8469 = vsel %vm1753, %v8460, %v8468
        %v8471 = vshrl.u32 %v7911, 16
        %v8473 = vrot.slane %v8471, 3
        %v8474 = vshll.u32 %v7911, 16
        %v8476 = vrot.slane %v8474, 4
        %v8477 = vor.u32 %v8473, %v8476
        %v8479 = vshrl.u32 %v7912, 16
        %v8481 = vrot.slane %v8479, 3
        %v8482 = vshll.u32 %v7912, 16
        %v8484 = vrot.slane %v8482, 4
        %v8485 = vor.u32 %v8481, %v8484
        %v8486 = vsel %vm1753, %v8477, %v8485
        %v8488 = vshrl.u32 %v8008, 16
        %v8490 = vrot.slane %v8488, 3
        %v8491 = vshll.u32 %v8008, 16
        %v8493 = vrot.slane %v8491, 4
        %v8494 = vor.u32 %v8490, %v8493
        %v8495 = vsel %vm1753, %v8494, %v8494
        %v8497 = vshrl.u32 %v8142, 16
        %v8499 = vrot.slane %v8497, 3
        %v8500 = vshll.u32 %v8142, 16
        %v8502 = vrot.slane %v8500, 4
        %v8503 = vor.u32 %v8499, %v8502
        %v8505 = vshrl.u32 %v8144, 16
        %v8507 = vrot.slane %v8505, 3
        %v8508 = vshll.u32 %v8144, 16
        %v8510 = vrot.slane %v8508, 4
        %v8511 = vor.u32 %v8507, %v8510
        %v8512 = vsel %vm1753, %v8503, %v8511
        %v8514 = vshrl.u32 %v7913, 16
        %v8516 = vrot.slane %v8514, 3
        %v8517 = vshll.u32 %v7913, 16
        %v8519 = vrot.slane %v8517, 4
        %v8520 = vor.u32 %v8516, %v8519
        %v8522 = vshrl.u32 %v7914, 16
        %v8524 = vrot.slane %v8522, 3
        %v8525 = vshll.u32 %v7914, 16
        %v8527 = vrot.slane %v8525, 4
        %v8528 = vor.u32 %v8524, %v8527
        %v8529 = vsel %vm1753, %v8520, %v8528
        %v8531 = vshrl.u32 %v8016, 16
        %v8533 = vrot.slane %v8531, 3
        %v8534 = vshll.u32 %v8016, 16
        %v8536 = vrot.slane %v8534, 4
        %v8537 = vor.u32 %v8533, %v8536
        %v8538 = vsel %vm1753, %v8537, %v8537
        %v8540 = vshrl.u32 %v8145, 16
        %v8542 = vrot.slane %v8540, 3
        %v8543 = vshll.u32 %v8145, 16
        %v8545 = vrot.slane %v8543, 4
        %v8546 = vor.u32 %v8542, %v8545
        %v8548 = vshrl.u32 %v8147, 16
        %v8550 = vrot.slane %v8548, 3
        %v8551 = vshll.u32 %v8147, 16
        %v8553 = vrot.slane %v8551, 4
        %v8554 = vor.u32 %v8550, %v8553
        %v8555 = vsel %vm1753, %v8546, %v8554
        %v8557 = vshrl.u32 %v7915, 16
        %v8559 = vrot.slane %v8557, 3
        %v8560 = vshll.u32 %v7915, 16
        %v8562 = vrot.slane %v8560, 4
        %v8563 = vor.u32 %v8559, %v8562
        %v8565 = vshrl.u32 %v7916, 16
        %v8567 = vrot.slane %v8565, 3
        %v8568 = vshll.u32 %v7916, 16
        %v8570 = vrot.slane %v8568, 4
        %v8571 = vor.u32 %v8567, %v8570
        %v8572 = vsel %vm1753, %v8563, %v8571
        %v8574 = vshrl.u32 %v8024, 16
        %v8576 = vrot.slane %v8574, 3
        %v8577 = vshll.u32 %v8024, 16
        %v8579 = vrot.slane %v8577, 4
        %v8580 = vor.u32 %v8576, %v8579
        %v8581 = vsel %vm1753, %v8580, %v8580
        %v8583 = vshrl.u32 %v8148, 16
        %v8585 = vrot.slane %v8583, 3
        %v8586 = vshll.u32 %v8148, 16
        %v8588 = vrot.slane %v8586, 4
        %v8589 = vor.u32 %v8585, %v8588
        %v8591 = vshrl.u32 %v8150, 16
        %v8593 = vrot.slane %v8591, 3
        %v8594 = vshll.u32 %v8150, 16
        %v8596 = vrot.slane %v8594, 4
        %v8597 = vor.u32 %v8593, %v8596
        %v8598 = vsel %vm1753, %v8589, %v8597
        %v8600 = vshrl.u32 %v7917, 16
        %v8602 = vrot.slane %v8600, 3
        %v8603 = vshll.u32 %v7917, 16
        %v8605 = vrot.slane %v8603, 4
        %v8606 = vor.u32 %v8602, %v8605
        %v8608 = vshrl.u32 %v7918, 16
        %v8610 = vrot.slane %v8608, 3
        %v8611 = vshll.u32 %v7918, 16
        %v8613 = vrot.slane %v8611, 4
        %v8614 = vor.u32 %v8610, %v8613
        %v8615 = vsel %vm1753, %v8606, %v8614
        %v8617 = vshrl.u32 %v8032, 16
        %v8619 = vrot.slane %v8617, 3
        %v8620 = vshll.u32 %v8032, 16
        %v8622 = vrot.slane %v8620, 4
        %v8623 = vor.u32 %v8619, %v8622
        %v8624 = vsel %vm1753, %v8623, %v8623
        %v8626 = vshrl.u32 %v8151, 16
        %v8628 = vrot.slane %v8626, 3
        %v8629 = vshll.u32 %v8151, 16
        %v8631 = vrot.slane %v8629, 4
        %v8632 = vor.u32 %v8628, %v8631
        %v8634 = vshrl.u32 %v8153, 16
        %v8636 = vrot.slane %v8634, 3
        %v8637 = vshll.u32 %v8153, 16
        %v8639 = vrot.slane %v8637, 4
        %v8640 = vor.u32 %v8636, %v8639
        %v8641 = vsel %vm1753, %v8632, %v8640
        %v8643 = vshrl.u32 %v7919, 16
        %v8645 = vrot.slane %v8643, 3
        %v8646 = vshll.u32 %v7919, 16
        %v8648 = vrot.slane %v8646, 4
        %v8649 = vor.u32 %v8645, %v8648
        %v8651 = vshrl.u32 %v7920, 16
        %v8653 = vrot.slane %v8651, 3
        %v8654 = vshll.u32 %v7920, 16
        %v8656 = vrot.slane %v8654, 4
        %v8657 = vor.u32 %v8653, %v8656
        %v8658 = vsel %vm1753, %v8649, %v8657
        %v8660 = vshrl.u32 %v8040, 16
        %v8662 = vrot.slane %v8660, 3
        %v8663 = vshll.u32 %v8040, 16
        %v8665 = vrot.slane %v8663, 4
        %v8666 = vor.u32 %v8662, %v8665
        %v8667 = vsel %vm1753, %v8666, %v8666
        %v8669 = vshrl.u32 %v8154, 16
        %v8671 = vrot.slane %v8669, 3
        %v8672 = vshll.u32 %v8154, 16
        %v8674 = vrot.slane %v8672, 4
        %v8675 = vor.u32 %v8671, %v8674
        %v8677 = vshrl.u32 %v8156, 16
        %v8679 = vrot.slane %v8677, 3
        %v8680 = vshll.u32 %v8156, 16
        %v8682 = vrot.slane %v8680, 4
        %v8683 = vor.u32 %v8679, %v8682
        %v8684 = vsel %vm1753, %v8675, %v8683
        %v8686 = vshrl.u32 %v7921, 16
        %v8688 = vrot.slane %v8686, 3
        %v8689 = vshll.u32 %v7921, 16
        %v8691 = vrot.slane %v8689, 4
        %v8692 = vor.u32 %v8688, %v8691
        %v8694 = vshrl.u32 %v7922, 16
        %v8696 = vrot.slane %v8694, 3
        %v8697 = vshll.u32 %v7922, 16
        %v8699 = vrot.slane %v8697, 4
        %v8700 = vor.u32 %v8696, %v8699
        %v8701 = vsel %vm1753, %v8692, %v8700
        %v8703 = vshrl.u32 %v8048, 16
        %v8705 = vrot.slane %v8703, 3
        %v8706 = vshll.u32 %v8048, 16
        %v8708 = vrot.slane %v8706, 4
        %v8709 = vor.u32 %v8705, %v8708
        %v8710 = vsel %vm1753, %v8709, %v8709
        %v8712 = vshrl.u32 %v8157, 16
        %v8714 = vrot.slane %v8712, 3
        %v8715 = vshll.u32 %v8157, 16
        %v8717 = vrot.slane %v8715, 4
        %v8718 = vor.u32 %v8714, %v8717
        %v8720 = vshrl.u32 %v8159, 16
        %v8722 = vrot.slane %v8720, 3
        %v8723 = vshll.u32 %v8159, 16
        %v8725 = vrot.slane %v8723, 4
        %v8726 = vor.u32 %v8722, %v8725
        %v8727 = vsel %vm1753, %v8718, %v8726
        %v8729 = vshrl.u32 %v7923, 16
        %v8731 = vrot.slane %v8729, 3
        %v8732 = vshll.u32 %v7923, 16
        %v8734 = vrot.slane %v8732, 4
        %v8735 = vor.u32 %v8731, %v8734
        %v8737 = vshrl.u32 %v7924, 16
        %v8739 = vrot.slane %v8737, 3
        %v8740 = vshll.u32 %v7924, 16
        %v8742 = vrot.slane %v8740, 4
        %v8743 = vor.u32 %v8739, %v8742
        %v8744 = vsel %vm1753, %v8735, %v8743
        %v8746 = vshrl.u32 %v8056, 16
        %v8748 = vrot.slane %v8746, 3
        %v8749 = vshll.u32 %v8056, 16
        %v8751 = vrot.slane %v8749, 4
        %v8752 = vor.u32 %v8748, %v8751
        %v8753 = vsel %vm1753, %v8752, %v8752
        %v8755 = vshrl.u32 %v8160, 16
        %v8757 = vrot.slane %v8755, 3
        %v8758 = vshll.u32 %v8160, 16
        %v8760 = vrot.slane %v8758, 4
        %v8761 = vor.u32 %v8757, %v8760
        %v8763 = vshrl.u32 %v8162, 16
        %v8765 = vrot.slane %v8763, 3
        %v8766 = vshll.u32 %v8162, 16
        %v8768 = vrot.slane %v8766, 4
        %v8769 = vor.u32 %v8765, %v8768
        %v8770 = vsel %vm1753, %v8761, %v8769
        %v8772 = vshrl.u32 %v7925, 16
        %v8774 = vrot.slane %v8772, 3
        %v8775 = vshll.u32 %v7925, 16
        %v8777 = vrot.slane %v8775, 4
        %v8778 = vor.u32 %v8774, %v8777
        %v8780 = vshrl.u32 %v7926, 16
        %v8782 = vrot.slane %v8780, 3
        %v8783 = vshll.u32 %v7926, 16
        %v8785 = vrot.slane %v8783, 4
        %v8786 = vor.u32 %v8782, %v8785
        %v8787 = vsel %vm1753, %v8778, %v8786
        %v8789 = vshrl.u32 %v8064, 16
        %v8791 = vrot.slane %v8789, 3
        %v8792 = vshll.u32 %v8064, 16
        %v8794 = vrot.slane %v8792, 4
        %v8795 = vor.u32 %v8791, %v8794
        %v8796 = vsel %vm1753, %v8795, %v8795
        %v8798 = vshrl.u32 %v8163, 16
        %v8800 = vrot.slane %v8798, 3
        %v8801 = vshll.u32 %v8163, 16
        %v8803 = vrot.slane %v8801, 4
        %v8804 = vor.u32 %v8800, %v8803
        %v8806 = vshrl.u32 %v8165, 16
        %v8808 = vrot.slane %v8806, 3
        %v8809 = vshll.u32 %v8165, 16
        %v8811 = vrot.slane %v8809, 4
        %v8812 = vor.u32 %v8808, %v8811
        %v8813 = vsel %vm1753, %v8804, %v8812
        %v8815 = vshrl.u32 %v7927, 16
        %v8817 = vrot.slane %v8815, 3
        %v8818 = vshll.u32 %v7927, 16
        %v8820 = vrot.slane %v8818, 4
        %v8821 = vor.u32 %v8817, %v8820
        %v8823 = vshrl.u32 %v7928, 16
        %v8825 = vrot.slane %v8823, 3
        %v8826 = vshll.u32 %v7928, 16
        %v8828 = vrot.slane %v8826, 4
        %v8829 = vor.u32 %v8825, %v8828
        %v8830 = vsel %vm1753, %v8821, %v8829
        %v8832 = vshrl.u32 %v8072, 16
        %v8834 = vrot.slane %v8832, 3
        %v8835 = vshll.u32 %v8072, 16
        %v8837 = vrot.slane %v8835, 4
        %v8838 = vor.u32 %v8834, %v8837
        %v8839 = vsel %vm1753, %v8838, %v8838
        %v8841 = vshrl.u32 %v8166, 16
        %v8843 = vrot.slane %v8841, 3
        %v8844 = vshll.u32 %v8166, 16
        %v8846 = vrot.slane %v8844, 4
        %v8847 = vor.u32 %v8843, %v8846
        %v8849 = vshrl.u32 %v8168, 16
        %v8851 = vrot.slane %v8849, 3
        %v8852 = vshll.u32 %v8168, 16
        %v8854 = vrot.slane %v8852, 4
        %v8855 = vor.u32 %v8851, %v8854
        %v8856 = vsel %vm1753, %v8847, %v8855
        %s8905 = scalar_lea.vmem %s5, 384
        %v8906 = vld [vmem:[%s8905] sm:$0xf]
        %v8907 = vld [vmem:[%s8905 + $0x4] sm:$0xf]
        %v8908 = vld [vmem:[%s8905 + $0x8] sm:$0xf]
        %v8909 = vld [vmem:[%s8905 + $0xc] sm:$0xf]
        %v8910 = vld [vmem:[%s8905 + $0x10] sm:$0xf]
        %v8911 = vld [vmem:[%s8905 + $0x14] sm:$0xf]
        %v8912 = vld [vmem:[%s8905 + $0x18] sm:$0xf]
        %v8913 = vld [vmem:[%s8905 + $0x1c] sm:$0xf]
        %v8914 = vld [vmem:[%s8905 + $0x20] sm:$0xf]
        %v8915 = vld [vmem:[%s8905 + $0x24] sm:$0xf]
        %v8916 = vld [vmem:[%s8905 + $0x28] sm:$0xf]
        %v8917 = vld [vmem:[%s8905 + $0x2c] sm:$0xf]
        %v8918 = vld [vmem:[%s8905 + $0x30] sm:$0xf]
        %v8919 = vld [vmem:[%s8905 + $0x34] sm:$0xf]
        %v8920 = vld [vmem:[%s8905 + $0x38] sm:$0xf]
        %v8921 = vld [vmem:[%s8905 + $0x3c] sm:$0xf]
        %v8922 = vld [vmem:[%s8905 + $0x40] sm:$0xf]
        %v8923 = vld [vmem:[%s8905 + $0x44] sm:$0xf]
        %v8924 = vld [vmem:[%s8905 + $0x48] sm:$0xf]
        %v8925 = vld [vmem:[%s8905 + $0x4c] sm:$0xf]
        %v8926 = vld [vmem:[%s8905 + $0x50] sm:$0xf]
        %v8927 = vld [vmem:[%s8905 + $0x54] sm:$0xf]
        %v8928 = vld [vmem:[%s8905 + $0x58] sm:$0xf]
        %v8929 = vld [vmem:[%s8905 + $0x5c] sm:$0xf]
        %v8930 = vld [vmem:[%s8905 + $0x60] sm:$0xf]
        %v8931 = vld [vmem:[%s8905 + $0x64] sm:$0xf]
        %v8932 = vld [vmem:[%s8905 + $0x68] sm:$0xf]
        %v8933 = vld [vmem:[%s8905 + $0x6c] sm:$0xf]
        %v8934 = vld [vmem:[%s8905 + $0x70] sm:$0xf]
        %v8935 = vld [vmem:[%s8905 + $0x74] sm:$0xf]
        %v8936 = vld [vmem:[%s8905 + $0x78] sm:$0xf]
        %v8937 = vld [vmem:[%s8905 + $0x7c] sm:$0xf]
        %v8938 = vld [vmem:[%s8905 + $0x80] sm:$0xf]
        %v8939 = vld [vmem:[%s8905 + $0x84] sm:$0xf]
        %v8940 = vld [vmem:[%s8905 + $0x88] sm:$0xf]
        %v8941 = vld [vmem:[%s8905 + $0x8c] sm:$0xf]
        %v8942 = vld [vmem:[%s8905 + $0x90] sm:$0xf]
        %v8943 = vld [vmem:[%s8905 + $0x94] sm:$0xf]
        %v8944 = vld [vmem:[%s8905 + $0x98] sm:$0xf]
        %v8945 = vld [vmem:[%s8905 + $0x9c] sm:$0xf]
        %v8946 = vld [vmem:[%s8905 + $0xa0] sm:$0xf]
        %v8947 = vld [vmem:[%s8905 + $0xa4] sm:$0xf]
        %v8948 = vld [vmem:[%s8905 + $0xa8] sm:$0xf]
        %v8949 = vld [vmem:[%s8905 + $0xac] sm:$0xf]
        %v8950 = vld [vmem:[%s8905 + $0xb0] sm:$0xf]
        %v8951 = vld [vmem:[%s8905 + $0xb4] sm:$0xf]
        %v8952 = vld [vmem:[%s8905 + $0xb8] sm:$0xf]
        %v8953 = vld [vmem:[%s8905 + $0xbc] sm:$0xf]
        %v9002 = vunpack.c.l.b16 %v8906
        %v9003 = vunpack.c.l.b16 %v8907
        %v9004 = vunpack.c.l.b16 %v8908
        %v9005 = vunpack.c.l.b16 %v8909
        %v9006 = vunpack.c.l.b16 %v8910
        %v9007 = vunpack.c.l.b16 %v8911
        %v9008 = vunpack.c.l.b16 %v8912
        %v9009 = vunpack.c.l.b16 %v8913
        %v9010 = vunpack.c.l.b16 %v8914
        %v9011 = vunpack.c.l.b16 %v8915
        %v9012 = vunpack.c.l.b16 %v8916
        %v9013 = vunpack.c.l.b16 %v8917
        %v9014 = vunpack.c.l.b16 %v8918
        %v9015 = vunpack.c.l.b16 %v8919
        %v9016 = vunpack.c.l.b16 %v8920
        %v9017 = vunpack.c.l.b16 %v8921
        %v9018 = vunpack.c.l.b16 %v8922
        %v9019 = vunpack.c.l.b16 %v8923
        %v9020 = vunpack.c.l.b16 %v8924
        %v9021 = vunpack.c.l.b16 %v8925
        %v9022 = vunpack.c.l.b16 %v8926
        %v9023 = vunpack.c.l.b16 %v8927
        %v9024 = vunpack.c.l.b16 %v8928
        %v9025 = vunpack.c.l.b16 %v8929
        %v9026 = vunpack.c.l.b16 %v8930
        %v9027 = vunpack.c.l.b16 %v8931
        %v9028 = vunpack.c.l.b16 %v8932
        %v9029 = vunpack.c.l.b16 %v8933
        %v9030 = vunpack.c.l.b16 %v8934
        %v9031 = vunpack.c.l.b16 %v8935
        %v9032 = vunpack.c.l.b16 %v8936
        %v9033 = vunpack.c.l.b16 %v8937
        %v9034 = vunpack.c.l.b16 %v8938
        %v9035 = vunpack.c.l.b16 %v8939
        %v9036 = vunpack.c.l.b16 %v8940
        %v9037 = vunpack.c.l.b16 %v8941
        %v9038 = vunpack.c.l.b16 %v8942
        %v9039 = vunpack.c.l.b16 %v8943
        %v9040 = vunpack.c.l.b16 %v8944
        %v9041 = vunpack.c.l.b16 %v8945
        %v9042 = vunpack.c.l.b16 %v8946
        %v9043 = vunpack.c.l.b16 %v8947
        %v9044 = vunpack.c.l.b16 %v8948
        %v9045 = vunpack.c.l.b16 %v8949
        %v9046 = vunpack.c.l.b16 %v8950
        %v9047 = vunpack.c.l.b16 %v8951
        %v9048 = vunpack.c.l.b16 %v8952
        %v9049 = vunpack.c.l.b16 %v8953
        %v9050 = vpack.c.b16 %v9003, %v9002
        %v9051 = vpack.c.b16 %v9005, %v9004
        %v9052 = vpack.c.b16 %v9007, %v9006
        %v9053 = vpack.c.b16 %v9009, %v9008
        %v9054 = vpack.c.b16 %v9011, %v9010
        %v9055 = vpack.c.b16 %v9013, %v9012
        %v9056 = vpack.c.b16 %v9015, %v9014
        %v9057 = vpack.c.b16 %v9017, %v9016
        %v9058 = vpack.c.b16 %v9019, %v9018
        %v9059 = vpack.c.b16 %v9021, %v9020
        %v9060 = vpack.c.b16 %v9023, %v9022
        %v9061 = vpack.c.b16 %v9025, %v9024
        %v9062 = vpack.c.b16 %v9027, %v9026
        %v9063 = vpack.c.b16 %v9029, %v9028
        %v9064 = vpack.c.b16 %v9031, %v9030
        %v9065 = vpack.c.b16 %v9033, %v9032
        %v9066 = vpack.c.b16 %v9035, %v9034
        %v9067 = vpack.c.b16 %v9037, %v9036
        %v9068 = vpack.c.b16 %v9039, %v9038
        %v9069 = vpack.c.b16 %v9041, %v9040
        %v9070 = vpack.c.b16 %v9043, %v9042
        %v9071 = vpack.c.b16 %v9045, %v9044
        %v9072 = vpack.c.b16 %v9047, %v9046
        %v9073 = vpack.c.b16 %v9049, %v9048
        %9098 = vmatprep.subr.bf16.mxu0 0
        %9099 = vmatpush1.bf16.msra.mxu0 %v9050
        %9100 = vmatprep.subr.bf16.mxu0 0
        %9101 = vmatpush1.bf16.msra.mxu0 %v9051
        %9102 = vmatprep.subr.bf16.mxu0 0
        %9103 = vmatpush1.bf16.msra.mxu0 %v9052
        %9104 = vmatprep.subr.bf16.mxu0 0
        %9105 = vmatpush1.bf16.msra.mxu0 %v9053
        %9106 = vmatprep.subr.bf16.mxu0 0
        %9107 = vmatpush1.bf16.msra.mxu0 %v9054
        %9108 = vmatprep.subr.bf16.mxu0 0
        %9109 = vmatpush1.bf16.msra.mxu0 %v9055
        %9110 = vmatprep.subr.bf16.mxu0 0
        %9111 = vmatpush1.bf16.msra.mxu0 %v9056
        %9112 = vmatprep.subr.bf16.mxu0 0
        %9113 = vmatpush1.bf16.msra.mxu0 %v9057
        %9114 = vmatprep.subr.bf16.mxu0 0
        %9115 = vmatpush1.bf16.msra.mxu0 %v9058
        %9116 = vmatprep.subr.bf16.mxu0 0
        %9117 = vmatpush1.bf16.msra.mxu0 %v9059
        %9118 = vmatprep.subr.bf16.mxu0 0
        %9119 = vmatpush1.bf16.msra.mxu0 %v9060
        %9120 = vmatprep.subr.bf16.mxu0 0
        %9121 = vmatpush1.bf16.msra.mxu0 %v9061
        %9122 = vmatprep.subr.bf16.mxu0 0
        %9123 = vmatpush1.bf16.msra.mxu0 %v9062
        %9124 = vmatprep.subr.bf16.mxu0 0
        %9125 = vmatpush1.bf16.msra.mxu0 %v9063
        %9126 = vmatprep.subr.bf16.mxu0 0
        %9127 = vmatpush1.bf16.msra.mxu0 %v9064
        %9128 = vmatprep.subr.bf16.mxu0 0
        %9129 = vmatpush1.bf16.msra.mxu0 %v9065
        %9130 = vmatprep.mubr.bf16.mxu0 %v8194
        %9131 = vmatmul.mubr.bf16.gmra.mrb[0].mxu0 %v8185
        %v9132 = vpop.f32.mrb[0].mxu0
        %v9133 = vadd.f32 0.0, %v9132
        %v9134 = vpop.f32.mrb[0].mxu0
        %v9135 = vpop.f32.mrb[0].mxu0
        %v9136 = vadd.f32 0.0, %v9135
        %v9137 = vpop.f32.mrb[0].mxu0
        %9138 = vmatprep.mubr.bf16.mxu0 %v8237
        %9139 = vmatmul.mubr.bf16.gmra.mrb[0].mxu0 %v8228
        %v9140 = vpop.f32.mrb[0].mxu0
        %v9141 = vadd.f32 0.0, %v9140
        %v9142 = vpop.f32.mrb[0].mxu0
        %v9143 = vpop.f32.mrb[0].mxu0
        %v9144 = vadd.f32 0.0, %v9143
        %v9145 = vpop.f32.mrb[0].mxu0
        %9146 = vmatprep.mubr.bf16.mxu0 %v8280
        %9147 = vmatmul.mubr.bf16.gmra.mrb[0].mxu0 %v8271
        %v9148 = vpop.f32.mrb[0].mxu0
        %v9149 = vadd.f32 0.0, %v9148
        %v9150 = vpop.f32.mrb[0].mxu0
        %v9151 = vpop.f32.mrb[0].mxu0
        %v9152 = vadd.f32 0.0, %v9151
        %v9153 = vpop.f32.mrb[0].mxu0
        %9154 = vmatprep.mubr.bf16.mxu0 %v8323
        %9155 = vmatmul.mubr.bf16.gmra.mrb[0].mxu0 %v8314
        %v9156 = vpop.f32.mrb[0].mxu0
        %v9157 = vadd.f32 0.0, %v9156
        %v9158 = vpop.f32.mrb[0].mxu0
        %v9159 = vpop.f32.mrb[0].mxu0
        %v9160 = vadd.f32 0.0, %v9159
        %v9161 = vpop.f32.mrb[0].mxu0
        %9162 = vmatprep.mubr.bf16.mxu0 %v8366
        %9163 = vmatmul.mubr.bf16.gmra.mrb[0].mxu0 %v8357
        %v9164 = vpop.f32.mrb[0].mxu0
        %v9165 = vadd.f32 0.0, %v9164
        %v9166 = vpop.f32.mrb[0].mxu0
        %v9167 = vpop.f32.mrb[0].mxu0
        %v9168 = vadd.f32 0.0, %v9167
        %v9169 = vpop.f32.mrb[0].mxu0
        %9170 = vmatprep.mubr.bf16.mxu0 %v8409
        %9171 = vmatmul.mubr.bf16.gmra.mrb[0].mxu0 %v8400
        %v9172 = vpop.f32.mrb[0].mxu0
        %v9173 = vadd.f32 0.0, %v9172
        %v9174 = vpop.f32.mrb[0].mxu0
        %v9175 = vpop.f32.mrb[0].mxu0
        %v9176 = vadd.f32 0.0, %v9175
        %v9177 = vpop.f32.mrb[0].mxu0
        %9178 = vmatprep.mubr.bf16.mxu0 %v8452
        %9179 = vmatmul.mubr.bf16.gmra.mrb[0].mxu0 %v8443
        %v9180 = vpop.f32.mrb[0].mxu0
        %v9181 = vadd.f32 0.0, %v9180
        %v9182 = vpop.f32.mrb[0].mxu0
        %v9183 = vpop.f32.mrb[0].mxu0
        %v9184 = vadd.f32 0.0, %v9183
        %v9185 = vpop.f32.mrb[0].mxu0
        %9186 = vmatprep.mubr.bf16.mxu0 %v8495
        %9187 = vmatmul.mubr.bf16.gmra.mrb[0].mxu0 %v8486
        %v9188 = vpop.f32.mrb[0].mxu0
        %v9189 = vadd.f32 0.0, %v9188
        %v9190 = vpop.f32.mrb[0].mxu0
        %v9191 = vpop.f32.mrb[0].mxu0
        %v9192 = vadd.f32 0.0, %v9191
        %v9193 = vpop.f32.mrb[0].mxu0
        %9194 = vmatprep.mubr.bf16.mxu0 %v8538
        %9195 = vmatmul.mubr.bf16.gmra.mrb[0].mxu0 %v8529
        %v9196 = vpop.f32.mrb[0].mxu0
        %v9197 = vadd.f32 0.0, %v9196
        %v9198 = vpop.f32.mrb[0].mxu0
        %v9199 = vpop.f32.mrb[0].mxu0
        %v9200 = vadd.f32 0.0, %v9199
        %v9201 = vpop.f32.mrb[0].mxu0
        %9202 = vmatprep.mubr.bf16.mxu0 %v8581
        %9203 = vmatmul.mubr.bf16.gmra.mrb[0].mxu0 %v8572
        %v9204 = vpop.f32.mrb[0].mxu0
        %v9205 = vadd.f32 0.0, %v9204
        %v9206 = vpop.f32.mrb[0].mxu0
        %v9207 = vpop.f32.mrb[0].mxu0
        %v9208 = vadd.f32 0.0, %v9207
        %v9209 = vpop.f32.mrb[0].mxu0
        %9210 = vmatprep.mubr.bf16.mxu0 %v8624
        %9211 = vmatmul.mubr.bf16.gmra.mrb[0].mxu0 %v8615
        %v9212 = vpop.f32.mrb[0].mxu0
        %v9213 = vadd.f32 0.0, %v9212
        %v9214 = vpop.f32.mrb[0].mxu0
        %v9215 = vpop.f32.mrb[0].mxu0
        %v9216 = vadd.f32 0.0, %v9215
        %v9217 = vpop.f32.mrb[0].mxu0
        %9218 = vmatprep.mubr.bf16.mxu0 %v8667
        %9219 = vmatmul.mubr.bf16.gmra.mrb[0].mxu0 %v8658
        %v9220 = vpop.f32.mrb[0].mxu0
        %v9221 = vadd.f32 0.0, %v9220
        %v9222 = vpop.f32.mrb[0].mxu0
        %v9223 = vpop.f32.mrb[0].mxu0
        %v9224 = vadd.f32 0.0, %v9223
        %v9225 = vpop.f32.mrb[0].mxu0
        %9226 = vmatprep.mubr.bf16.mxu0 %v8710
        %9227 = vmatmul.mubr.bf16.gmra.mrb[0].mxu0 %v8701
        %v9228 = vpop.f32.mrb[0].mxu0
        %v9229 = vadd.f32 0.0, %v9228
        %v9230 = vpop.f32.mrb[0].mxu0
        %v9231 = vpop.f32.mrb[0].mxu0
        %v9232 = vadd.f32 0.0, %v9231
        %v9233 = vpop.f32.mrb[0].mxu0
        %9234 = vmatprep.mubr.bf16.mxu0 %v8753
        %9235 = vmatmul.mubr.bf16.gmra.mrb[0].mxu0 %v8744
        %v9236 = vpop.f32.mrb[0].mxu0
        %v9237 = vadd.f32 0.0, %v9236
        %v9238 = vpop.f32.mrb[0].mxu0
        %v9239 = vpop.f32.mrb[0].mxu0
        %v9240 = vadd.f32 0.0, %v9239
        %v9241 = vpop.f32.mrb[0].mxu0
        %9242 = vmatprep.mubr.bf16.mxu0 %v8796
        %9243 = vmatmul.mubr.bf16.gmra.mrb[0].mxu0 %v8787
        %v9244 = vpop.f32.mrb[0].mxu0
        %v9245 = vadd.f32 0.0, %v9244
        %v9246 = vpop.f32.mrb[0].mxu0
        %v9247 = vpop.f32.mrb[0].mxu0
        %v9248 = vadd.f32 0.0, %v9247
        %v9249 = vpop.f32.mrb[0].mxu0
        %9250 = vmatprep.mubr.bf16.mxu0 %v8839
        %9251 = vmatmul.mubr.bf16.gmra.mrb[0].mxu0 %v8830
        %v9252 = vpop.f32.mrb[0].mxu0
        %v9253 = vadd.f32 0.0, %v9252
        %v9254 = vpop.f32.mrb[0].mxu0
        %v9255 = vpop.f32.mrb[0].mxu0
        %v9256 = vadd.f32 0.0, %v9255
        %v9257 = vpop.f32.mrb[0].mxu0
        %9258 = vdwg.mxu0
        %9259 = vmatprep.subr.bf16.mxu0 0
        %9260 = vmatpush1.bf16.msra.mxu0 %v9066
        %9261 = vmatprep.subr.bf16.mxu0 0
        %9262 = vmatpush1.bf16.msra.mxu0 %v9067
        %9263 = vmatprep.subr.bf16.mxu0 0
        %9264 = vmatpush1.bf16.msra.mxu0 %v9068
        %9265 = vmatprep.subr.bf16.mxu0 0
        %9266 = vmatpush1.bf16.msra.mxu0 %v9069
        %9267 = vmatprep.subr.bf16.mxu0 0
        %9268 = vmatpush1.bf16.msra.mxu0 %v9070
        %9269 = vmatprep.subr.bf16.mxu0 0
        %9270 = vmatpush1.bf16.msra.mxu0 %v9071
        %9271 = vmatprep.subr.bf16.mxu0 0
        %9272 = vmatpush1.bf16.msra.mxu0 %v9072
        %9273 = vmatprep.subr.bf16.mxu0 0
        %9274 = vmatpush1.bf16.msra.mxu0 %v9073
        %9275 = vmatprep.subr.bf16.mxu0 0
        %9276 = vmatpush1.bf16.msra.mxu0 0
        %9277 = vmatprep.subr.bf16.mxu0 0
        %9278 = vmatpush1.bf16.msra.mxu0 0
        %9279 = vmatprep.subr.bf16.mxu0 0
        %9280 = vmatpush1.bf16.msra.mxu0 0
        %9281 = vmatprep.subr.bf16.mxu0 0
        %9282 = vmatpush1.bf16.msra.mxu0 0
        %9283 = vmatprep.subr.bf16.mxu0 0
        %9284 = vmatpush1.bf16.msra.mxu0 0
        %9285 = vmatprep.subr.bf16.mxu0 0
        %9286 = vmatpush1.bf16.msra.mxu0 0
        %9287 = vmatprep.subr.bf16.mxu0 0
        %9288 = vmatpush1.bf16.msra.mxu0 0
        %9289 = vmatprep.subr.bf16.mxu0 0
        %9290 = vmatpush1.bf16.msra.mxu0 0
        %9291 = vmatprep.mubr.bf16.mxu0 0
        %9292 = vmatmul.mubr.bf16.gmra.mrb[0].mxu0 %v8211
        %v9293 = vpop.f32.mrb[0].mxu0
        %v9294 = vadd.f32 %v9133, %v9293
        %v9295 = vpop.f32.mrb[0].mxu0
        %v9296 = vpop.f32.mrb[0].mxu0
        %v9297 = vadd.f32 %v9136, %v9296
        %v9298 = vpop.f32.mrb[0].mxu0
        %9299 = vmatprep.mubr.bf16.mxu0 0
        %9300 = vmatmul.mubr.bf16.gmra.mrb[0].mxu0 %v8254
        %v9301 = vpop.f32.mrb[0].mxu0
        %v9302 = vadd.f32 %v9141, %v9301
        %v9303 = vpop.f32.mrb[0].mxu0
        %v9304 = vpop.f32.mrb[0].mxu0
        %v9305 = vadd.f32 %v9144, %v9304
        %v9306 = vpop.f32.mrb[0].mxu0
        %9307 = vmatprep.mubr.bf16.mxu0 0
        %9308 = vmatmul.mubr.bf16.gmra.mrb[0].mxu0 %v8297
        %v9309 = vpop.f32.mrb[0].mxu0
        %v9310 = vadd.f32 %v9149, %v9309
        %v9311 = vpop.f32.mrb[0].mxu0
        %v9312 = vpop.f32.mrb[0].mxu0
        %v9313 = vadd.f32 %v9152, %v9312
        %v9314 = vpop.f32.mrb[0].mxu0
        %9315 = vmatprep.mubr.bf16.mxu0 0
        %9316 = vmatmul.mubr.bf16.gmra.mrb[0].mxu0 %v8340
        %v9317 = vpop.f32.mrb[0].mxu0
        %v9318 = vadd.f32 %v9157, %v9317
        %v9319 = vpop.f32.mrb[0].mxu0
        %v9320 = vpop.f32.mrb[0].mxu0
        %v9321 = vadd.f32 %v9160, %v9320
        %v9322 = vpop.f32.mrb[0].mxu0
        %9323 = vmatprep.mubr.bf16.mxu0 0
        %9324 = vmatmul.mubr.bf16.gmra.mrb[0].mxu0 %v8383
        %v9325 = vpop.f32.mrb[0].mxu0
        %v9326 = vadd.f32 %v9165, %v9325
        %v9327 = vpop.f32.mrb[0].mxu0
        %v9328 = vpop.f32.mrb[0].mxu0
        %v9329 = vadd.f32 %v9168, %v9328
        %v9330 = vpop.f32.mrb[0].mxu0
        %9331 = vmatprep.mubr.bf16.mxu0 0
        %9332 = vmatmul.mubr.bf16.gmra.mrb[0].mxu0 %v8426
        %v9333 = vpop.f32.mrb[0].mxu0
        %v9334 = vadd.f32 %v9173, %v9333
        %v9335 = vpop.f32.mrb[0].mxu0
        %v9336 = vpop.f32.mrb[0].mxu0
        %v9337 = vadd.f32 %v9176, %v9336
        %v9338 = vpop.f32.mrb[0].mxu0
        %9339 = vmatprep.mubr.bf16.mxu0 0
        %9340 = vmatmul.mubr.bf16.gmra.mrb[0].mxu0 %v8469
        %v9341 = vpop.f32.mrb[0].mxu0
        %v9342 = vadd.f32 %v9181, %v9341
        %v9343 = vpop.f32.mrb[0].mxu0
        %v9344 = vpop.f32.mrb[0].mxu0
        %v9345 = vadd.f32 %v9184, %v9344
        %v9346 = vpop.f32.mrb[0].mxu0
        %9347 = vmatprep.mubr.bf16.mxu0 0
        %9348 = vmatmul.mubr.bf16.gmra.mrb[0].mxu0 %v8512
        %v9349 = vpop.f32.mrb[0].mxu0
        %v9350 = vadd.f32 %v9189, %v9349
        %v9351 = vpop.f32.mrb[0].mxu0
        %v9352 = vpop.f32.mrb[0].mxu0
        %v9353 = vadd.f32 %v9192, %v9352
        %v9354 = vpop.f32.mrb[0].mxu0
        %9355 = vmatprep.mubr.bf16.mxu0 0
        %9356 = vmatmul.mubr.bf16.gmra.mrb[0].mxu0 %v8555
        %v9357 = vpop.f32.mrb[0].mxu0
        %v9358 = vadd.f32 %v9197, %v9357
        %v9359 = vpop.f32.mrb[0].mxu0
        %v9360 = vpop.f32.mrb[0].mxu0
        %v9361 = vadd.f32 %v9200, %v9360
        %v9362 = vpop.f32.mrb[0].mxu0
        %9363 = vmatprep.mubr.bf16.mxu0 0
        %9364 = vmatmul.mubr.bf16.gmra.mrb[0].mxu0 %v8598
        %v9365 = vpop.f32.mrb[0].mxu0
        %v9366 = vadd.f32 %v9205, %v9365
        %v9367 = vpop.f32.mrb[0].mxu0
        %v9368 = vpop.f32.mrb[0].mxu0
        %v9369 = vadd.f32 %v9208, %v9368
        %v9370 = vpop.f32.mrb[0].mxu0
        %9371 = vmatprep.mubr.bf16.mxu0 0
        %9372 = vmatmul.mubr.bf16.gmra.mrb[0].mxu0 %v8641
        %v9373 = vpop.f32.mrb[0].mxu0
        %v9374 = vadd.f32 %v9213, %v9373
        %v9375 = vpop.f32.mrb[0].mxu0
        %v9376 = vpop.f32.mrb[0].mxu0
        %v9377 = vadd.f32 %v9216, %v9376
        %v9378 = vpop.f32.mrb[0].mxu0
        %9379 = vmatprep.mubr.bf16.mxu0 0
        %9380 = vmatmul.mubr.bf16.gmra.mrb[0].mxu0 %v8684
        %v9381 = vpop.f32.mrb[0].mxu0
        %v9382 = vadd.f32 %v9221, %v9381
        %v9383 = vpop.f32.mrb[0].mxu0
        %v9384 = vpop.f32.mrb[0].mxu0
        %v9385 = vadd.f32 %v9224, %v9384
        %v9386 = vpop.f32.mrb[0].mxu0
        %9387 = vmatprep.mubr.bf16.mxu0 0
        %9388 = vmatmul.mubr.bf16.gmra.mrb[0].mxu0 %v8727
        %v9389 = vpop.f32.mrb[0].mxu0
        %v9390 = vadd.f32 %v9229, %v9389
        %v9391 = vpop.f32.mrb[0].mxu0
        %v9392 = vpop.f32.mrb[0].mxu0
        %v9393 = vadd.f32 %v9232, %v9392
        %v9394 = vpop.f32.mrb[0].mxu0
        %9395 = vmatprep.mubr.bf16.mxu0 0
        %9396 = vmatmul.mubr.bf16.gmra.mrb[0].mxu0 %v8770
        %v9397 = vpop.f32.mrb[0].mxu0
        %v9398 = vadd.f32 %v9237, %v9397
        %v9399 = vpop.f32.mrb[0].mxu0
        %v9400 = vpop.f32.mrb[0].mxu0
        %v9401 = vadd.f32 %v9240, %v9400
        %v9402 = vpop.f32.mrb[0].mxu0
        %9403 = vmatprep.mubr.bf16.mxu0 0
        %9404 = vmatmul.mubr.bf16.gmra.mrb[0].mxu0 %v8813
        %v9405 = vpop.f32.mrb[0].mxu0
        %v9406 = vadd.f32 %v9245, %v9405
        %v9407 = vpop.f32.mrb[0].mxu0
        %v9408 = vpop.f32.mrb[0].mxu0
        %v9409 = vadd.f32 %v9248, %v9408
        %v9410 = vpop.f32.mrb[0].mxu0
        %9411 = vmatprep.mubr.bf16.mxu0 0
        %9412 = vmatmul.mubr.bf16.gmra.mrb[0].mxu0 %v8856
        %v9413 = vpop.f32.mrb[0].mxu0
        %v9414 = vadd.f32 %v9253, %v9413
        %v9415 = vpop.f32.mrb[0].mxu0
        %v9416 = vpop.f32.mrb[0].mxu0
        %v9417 = vadd.f32 %v9256, %v9416
        %v9418 = vpop.f32.mrb[0].mxu0
        %9419 = vdwg.mxu0
        %v9420 = vadd.f32 %v6056, %v9294
        %v9421 = vadd.f32 %v6059, %v9297
        %v9422 = vadd.f32 %v6064, %v9302
        %v9423 = vadd.f32 %v6067, %v9305
        %v9424 = vadd.f32 %v6072, %v9310
        %v9425 = vadd.f32 %v6075, %v9313
        %v9426 = vadd.f32 %v6080, %v9318
        %v9427 = vadd.f32 %v6083, %v9321
        %v9428 = vadd.f32 %v6088, %v9326
        %v9429 = vadd.f32 %v6091, %v9329
        %v9430 = vadd.f32 %v6096, %v9334
        %v9431 = vadd.f32 %v6099, %v9337
        %v9432 = vadd.f32 %v6104, %v9342
        %v9433 = vadd.f32 %v6107, %v9345
        %v9434 = vadd.f32 %v6112, %v9350
        %v9435 = vadd.f32 %v6115, %v9353
        %v9436 = vadd.f32 %v6120, %v9358
        %v9437 = vadd.f32 %v6123, %v9361
        %v9438 = vadd.f32 %v6128, %v9366
        %v9439 = vadd.f32 %v6131, %v9369
        %v9440 = vadd.f32 %v6136, %v9374
        %v9441 = vadd.f32 %v6139, %v9377
        %v9442 = vadd.f32 %v6144, %v9382
        %v9443 = vadd.f32 %v6147, %v9385
        %v9444 = vadd.f32 %v6152, %v9390
        %v9445 = vadd.f32 %v6155, %v9393
        %v9446 = vadd.f32 %v6160, %v9398
        %v9447 = vadd.f32 %v6163, %v9401
        %v9448 = vadd.f32 %v6168, %v9406
        %v9449 = vadd.f32 %v6171, %v9409
        %v9450 = vadd.f32 %v6176, %v9414
        %v9451 = vadd.f32 %v6179, %v9417
        %s9452 = scalar_lea.vmem [#allocation3], 40
        %v9453 = vld [vmem:[%s9452 + $0x4] sm:$0xf]
        %v9454 = vld [vmem:[%s9452 + $0x8] sm:$0xf]
        %v9455 = vld [vmem:[%s9452 + $0xc] sm:$0xf]
        %v9456 = vld [vmem:[%s9452 + $0x10] sm:$0xf]
        %v9457 = vld [vmem:[%s9452 + $0x18] sm:$0xf]
        %v9458 = vld [vmem:[%s9452 + $0x1c] sm:$0xf]
        %v9459 = vld [vmem:[%s9452 + $0x20] sm:$0xf]
        %v9460 = vld [vmem:[%s9452 + $0x24] sm:$0xf]
        %v9461 = vld [vmem:[%s9452 + $0x2c] sm:$0xf]
        %v9462 = vld [vmem:[%s9452 + $0x30] sm:$0xf]
        %v9463 = vld [vmem:[%s9452 + $0x34] sm:$0xf]
        %v9464 = vld [vmem:[%s9452 + $0x38] sm:$0xf]
        %v9465 = vld [vmem:[%s9452 + $0x40] sm:$0xf]
        %v9466 = vld [vmem:[%s9452 + $0x44] sm:$0xf]
        %v9467 = vld [vmem:[%s9452 + $0x48] sm:$0xf]
        %v9468 = vld [vmem:[%s9452 + $0x4c] sm:$0xf]
        %v9469 = vld [vmem:[%s9452 + $0x54] sm:$0xf]
        %v9470 = vld [vmem:[%s9452 + $0x58] sm:$0xf]
        %v9471 = vld [vmem:[%s9452 + $0x5c] sm:$0xf]
        %v9472 = vld [vmem:[%s9452 + $0x60] sm:$0xf]
        %v9473 = vld [vmem:[%s9452 + $0x68] sm:$0xf]
        %v9474 = vld [vmem:[%s9452 + $0x6c] sm:$0xf]
        %v9475 = vld [vmem:[%s9452 + $0x70] sm:$0xf]
        %v9476 = vld [vmem:[%s9452 + $0x74] sm:$0xf]
        %v9477 = vld [vmem:[%s9452 + $0x7c] sm:$0xf]
        %v9478 = vld [vmem:[%s9452 + $0x80] sm:$0xf]
        %v9479 = vld [vmem:[%s9452 + $0x84] sm:$0xf]
        %v9480 = vld [vmem:[%s9452 + $0x88] sm:$0xf]
        %v9481 = vld [vmem:[%s9452 + $0x90] sm:$0xf]
        %v9482 = vld [vmem:[%s9452 + $0x94] sm:$0xf]
        %v9483 = vld [vmem:[%s9452 + $0x98] sm:$0xf]
        %v9484 = vld [vmem:[%s9452 + $0x9c] sm:$0xf]
        %v9485 = vld [vmem:[%s9452 + $0xa4] sm:$0xf]
        %v9486 = vld [vmem:[%s9452 + $0xa8] sm:$0xf]
        %v9487 = vld [vmem:[%s9452 + $0xac] sm:$0xf]
        %v9488 = vld [vmem:[%s9452 + $0xb0] sm:$0xf]
        %v9489 = vld [vmem:[%s9452 + $0xb8] sm:$0xf]
        %v9490 = vld [vmem:[%s9452 + $0xbc] sm:$0xf]
        %v9491 = vld [vmem:[%s9452 + $0xc0] sm:$0xf]
        %v9492 = vld [vmem:[%s9452 + $0xc4] sm:$0xf]
        %v9493 = vld [vmem:[%s9452 + $0xcc] sm:$0xf]
        %v9494 = vld [vmem:[%s9452 + $0xd0] sm:$0xf]
        %v9495 = vld [vmem:[%s9452 + $0xd4] sm:$0xf]
        %v9496 = vld [vmem:[%s9452 + $0xd8] sm:$0xf]
        %v9497 = vld [vmem:[%s9452 + $0xe0] sm:$0xf]
        %v9498 = vld [vmem:[%s9452 + $0xe4] sm:$0xf]
        %v9499 = vld [vmem:[%s9452 + $0xe8] sm:$0xf]
        %v9500 = vld [vmem:[%s9452 + $0xec] sm:$0xf]
        %v9501 = vld [vmem:[%s9452 + $0xf4] sm:$0xf]
        %v9502 = vld [vmem:[%s9452 + $0xf8] sm:$0xf]
        %v9503 = vld [vmem:[%s9452 + $0xfc] sm:$0xf]
        %v9504 = vld [vmem:[%s9452 + $0x100] sm:$0xf]
        %v9505 = vld [vmem:[%s9452 + $0x108] sm:$0xf]
        %v9506 = vld [vmem:[%s9452 + $0x10c] sm:$0xf]
        %v9507 = vld [vmem:[%s9452 + $0x110] sm:$0xf]
        %v9508 = vld [vmem:[%s9452 + $0x114] sm:$0xf]
        %v9509 = vld [vmem:[%s9452 + $0x11c] sm:$0xf]
        %v9510 = vld [vmem:[%s9452 + $0x120] sm:$0xf]
        %v9511 = vld [vmem:[%s9452 + $0x124] sm:$0xf]
        %v9512 = vld [vmem:[%s9452 + $0x128] sm:$0xf]
        %v9513 = vld [vmem:[%s9452 + $0x130] sm:$0xf]
        %v9514 = vld [vmem:[%s9452 + $0x134] sm:$0xf]
        %v9515 = vld [vmem:[%s9452 + $0x138] sm:$0xf]
        %v9516 = vld [vmem:[%s9452 + $0x13c] sm:$0xf]
        %v9518 = vshrl.u32 %v9453, 16
        %v9520 = vrot.slane %v9518, 7
        %v9521 = vrot.slane %v9520, 4
        %v9523 = vshrl.u32 %v9454, 16
        %v9525 = vrot.slane %v9523, 7
        %v9526 = vshll.u32 %v9454, 16
        %v9528 = vor.u32 %v9525, %v9526
        %v9529 = vsel %vm2604, %v9521, %v9528
        %v9530 = vrot.slane %v9525, 4
        %v9532 = vshrl.u32 %v9455, 16
        %v9534 = vrot.slane %v9532, 7
        %v9535 = vshll.u32 %v9455, 16
        %v9537 = vor.u32 %v9534, %v9535
        %v9538 = vsel %vm2604, %v9530, %v9537
        %v9540 = vshrl.u32 %v9457, 16
        %v9542 = vrot.slane %v9540, 7
        %v9543 = vrot.slane %v9542, 4
        %v9545 = vshrl.u32 %v9458, 16
        %v9547 = vrot.slane %v9545, 7
        %v9548 = vshll.u32 %v9458, 16
        %v9550 = vor.u32 %v9547, %v9548
        %v9551 = vsel %vm2604, %v9543, %v9550
        %v9552 = vrot.slane %v9547, 4
        %v9554 = vshrl.u32 %v9459, 16
        %v9556 = vrot.slane %v9554, 7
        %v9557 = vshll.u32 %v9459, 16
        %v9559 = vor.u32 %v9556, %v9557
        %v9560 = vsel %vm2604, %v9552, %v9559
        %v9562 = vshrl.u32 %v9461, 16
        %v9564 = vrot.slane %v9562, 7
        %v9565 = vrot.slane %v9564, 4
        %v9567 = vshrl.u32 %v9462, 16
        %v9569 = vrot.slane %v9567, 7
        %v9570 = vshll.u32 %v9462, 16
        %v9572 = vor.u32 %v9569, %v9570
        %v9573 = vsel %vm2604, %v9565, %v9572
        %v9574 = vrot.slane %v9569, 4
        %v9576 = vshrl.u32 %v9463, 16
        %v9578 = vrot.slane %v9576, 7
        %v9579 = vshll.u32 %v9463, 16
        %v9581 = vor.u32 %v9578, %v9579
        %v9582 = vsel %vm2604, %v9574, %v9581
        %v9584 = vshrl.u32 %v9465, 16
        %v9586 = vrot.slane %v9584, 7
        %v9587 = vrot.slane %v9586, 4
        %v9589 = vshrl.u32 %v9466, 16
        %v9591 = vrot.slane %v9589, 7
        %v9592 = vshll.u32 %v9466, 16
        %v9594 = vor.u32 %v9591, %v9592
        %v9595 = vsel %vm2604, %v9587, %v9594
        %v9596 = vrot.slane %v9591, 4
        %v9598 = vshrl.u32 %v9467, 16
        %v9600 = vrot.slane %v9598, 7
        %v9601 = vshll.u32 %v9467, 16
        %v9603 = vor.u32 %v9600, %v9601
        %v9604 = vsel %vm2604, %v9596, %v9603
        %v9606 = vshrl.u32 %v9469, 16
        %v9608 = vrot.slane %v9606, 7
        %v9609 = vrot.slane %v9608, 4
        %v9611 = vshrl.u32 %v9470, 16
        %v9613 = vrot.slane %v9611, 7
        %v9614 = vshll.u32 %v9470, 16
        %v9616 = vor.u32 %v9613, %v9614
        %v9617 = vsel %vm2604, %v9609, %v9616
        %v9618 = vrot.slane %v9613, 4
        %v9620 = vshrl.u32 %v9471, 16
        %v9622 = vrot.slane %v9620, 7
        %v9623 = vshll.u32 %v9471, 16
        %v9625 = vor.u32 %v9622, %v9623
        %v9626 = vsel %vm2604, %v9618, %v9625
        %v9628 = vshrl.u32 %v9473, 16
        %v9630 = vrot.slane %v9628, 7
        %v9631 = vrot.slane %v9630, 4
        %v9633 = vshrl.u32 %v9474, 16
        %v9635 = vrot.slane %v9633, 7
        %v9636 = vshll.u32 %v9474, 16
        %v9638 = vor.u32 %v9635, %v9636
        %v9639 = vsel %vm2604, %v9631, %v9638
        %v9640 = vrot.slane %v9635, 4
        %v9642 = vshrl.u32 %v9475, 16
        %v9644 = vrot.slane %v9642, 7
        %v9645 = vshll.u32 %v9475, 16
        %v9647 = vor.u32 %v9644, %v9645
        %v9648 = vsel %vm2604, %v9640, %v9647
        %v9650 = vshrl.u32 %v9477, 16
        %v9652 = vrot.slane %v9650, 7
        %v9653 = vrot.slane %v9652, 4
        %v9655 = vshrl.u32 %v9478, 16
        %v9657 = vrot.slane %v9655, 7
        %v9658 = vshll.u32 %v9478, 16
        %v9660 = vor.u32 %v9657, %v9658
        %v9661 = vsel %vm2604, %v9653, %v9660
        %v9662 = vrot.slane %v9657, 4
        %v9664 = vshrl.u32 %v9479, 16
        %v9666 = vrot.slane %v9664, 7
        %v9667 = vshll.u32 %v9479, 16
        %v9669 = vor.u32 %v9666, %v9667
        %v9670 = vsel %vm2604, %v9662, %v9669
        %v9672 = vshrl.u32 %v9481, 16
        %v9674 = vrot.slane %v9672, 7
        %v9675 = vrot.slane %v9674, 4
        %v9677 = vshrl.u32 %v9482, 16
        %v9679 = vrot.slane %v9677, 7
        %v9680 = vshll.u32 %v9482, 16
        %v9682 = vor.u32 %v9679, %v9680
        %v9683 = vsel %vm2604, %v9675, %v9682
        %v9684 = vrot.slane %v9679, 4
        %v9686 = vshrl.u32 %v9483, 16
        %v9688 = vrot.slane %v9686, 7
        %v9689 = vshll.u32 %v9483, 16
        %v9691 = vor.u32 %v9688, %v9689
        %v9692 = vsel %vm2604, %v9684, %v9691
        %v9694 = vshrl.u32 %v9485, 16
        %v9696 = vrot.slane %v9694, 7
        %v9697 = vrot.slane %v9696, 4
        %v9699 = vshrl.u32 %v9486, 16
        %v9701 = vrot.slane %v9699, 7
        %v9702 = vshll.u32 %v9486, 16
        %v9704 = vor.u32 %v9701, %v9702
        %v9705 = vsel %vm2604, %v9697, %v9704
        %v9706 = vrot.slane %v9701, 4
        %v9708 = vshrl.u32 %v9487, 16
        %v9710 = vrot.slane %v9708, 7
        %v9711 = vshll.u32 %v9487, 16
        %v9713 = vor.u32 %v9710, %v9711
        %v9714 = vsel %vm2604, %v9706, %v9713
        %v9716 = vshrl.u32 %v9489, 16
        %v9718 = vrot.slane %v9716, 7
        %v9719 = vrot.slane %v9718, 4
        %v9721 = vshrl.u32 %v9490, 16
        %v9723 = vrot.slane %v9721, 7
        %v9724 = vshll.u32 %v9490, 16
        %v9726 = vor.u32 %v9723, %v9724
        %v9727 = vsel %vm2604, %v9719, %v9726
        %v9728 = vrot.slane %v9723, 4
        %v9730 = vshrl.u32 %v9491, 16
        %v9732 = vrot.slane %v9730, 7
        %v9733 = vshll.u32 %v9491, 16
        %v9735 = vor.u32 %v9732, %v9733
        %v9736 = vsel %vm2604, %v9728, %v9735
        %v9738 = vshrl.u32 %v9493, 16
        %v9740 = vrot.slane %v9738, 7
        %v9741 = vrot.slane %v9740, 4
        %v9743 = vshrl.u32 %v9494, 16
        %v9745 = vrot.slane %v9743, 7
        %v9746 = vshll.u32 %v9494, 16
        %v9748 = vor.u32 %v9745, %v9746
        %v9749 = vsel %vm2604, %v9741, %v9748
        %v9750 = vrot.slane %v9745, 4
        %v9752 = vshrl.u32 %v9495, 16
        %v9754 = vrot.slane %v9752, 7
        %v9755 = vshll.u32 %v9495, 16
        %v9757 = vor.u32 %v9754, %v9755
        %v9758 = vsel %vm2604, %v9750, %v9757
        %v9760 = vshrl.u32 %v9497, 16
        %v9762 = vrot.slane %v9760, 7
        %v9763 = vrot.slane %v9762, 4
        %v9765 = vshrl.u32 %v9498, 16
        %v9767 = vrot.slane %v9765, 7
        %v9768 = vshll.u32 %v9498, 16
        %v9770 = vor.u32 %v9767, %v9768
        %v9771 = vsel %vm2604, %v9763, %v9770
        %v9772 = vrot.slane %v9767, 4
        %v9774 = vshrl.u32 %v9499, 16
        %v9776 = vrot.slane %v9774, 7
        %v9777 = vshll.u32 %v9499, 16
        %v9779 = vor.u32 %v9776, %v9777
        %v9780 = vsel %vm2604, %v9772, %v9779
        %v9782 = vshrl.u32 %v9501, 16
        %v9784 = vrot.slane %v9782, 7
        %v9785 = vrot.slane %v9784, 4
        %v9787 = vshrl.u32 %v9502, 16
        %v9789 = vrot.slane %v9787, 7
        %v9790 = vshll.u32 %v9502, 16
        %v9792 = vor.u32 %v9789, %v9790
        %v9793 = vsel %vm2604, %v9785, %v9792
        %v9794 = vrot.slane %v9789, 4
        %v9796 = vshrl.u32 %v9503, 16
        %v9798 = vrot.slane %v9796, 7
        %v9799 = vshll.u32 %v9503, 16
        %v9801 = vor.u32 %v9798, %v9799
        %v9802 = vsel %vm2604, %v9794, %v9801
        %v9804 = vshrl.u32 %v9505, 16
        %v9806 = vrot.slane %v9804, 7
        %v9807 = vrot.slane %v9806, 4
        %v9809 = vshrl.u32 %v9506, 16
        %v9811 = vrot.slane %v9809, 7
        %v9812 = vshll.u32 %v9506, 16
        %v9814 = vor.u32 %v9811, %v9812
        %v9815 = vsel %vm2604, %v9807, %v9814
        %v9816 = vrot.slane %v9811, 4
        %v9818 = vshrl.u32 %v9507, 16
        %v9820 = vrot.slane %v9818, 7
        %v9821 = vshll.u32 %v9507, 16
        %v9823 = vor.u32 %v9820, %v9821
        %v9824 = vsel %vm2604, %v9816, %v9823
        %v9826 = vshrl.u32 %v9509, 16
        %v9828 = vrot.slane %v9826, 7
        %v9829 = vrot.slane %v9828, 4
        %v9831 = vshrl.u32 %v9510, 16
        %v9833 = vrot.slane %v9831, 7
        %v9834 = vshll.u32 %v9510, 16
        %v9836 = vor.u32 %v9833, %v9834
        %v9837 = vsel %vm2604, %v9829, %v9836
        %v9838 = vrot.slane %v9833, 4
        %v9840 = vshrl.u32 %v9511, 16
        %v9842 = vrot.slane %v9840, 7
        %v9843 = vshll.u32 %v9511, 16
        %v9845 = vor.u32 %v9842, %v9843
        %v9846 = vsel %vm2604, %v9838, %v9845
        %v9848 = vshrl.u32 %v9513, 16
        %v9850 = vrot.slane %v9848, 7
        %v9851 = vrot.slane %v9850, 4
        %v9853 = vshrl.u32 %v9514, 16
        %v9855 = vrot.slane %v9853, 7
        %v9856 = vshll.u32 %v9514, 16
        %v9858 = vor.u32 %v9855, %v9856
        %v9859 = vsel %vm2604, %v9851, %v9858
        %v9860 = vrot.slane %v9855, 4
        %v9862 = vshrl.u32 %v9515, 16
        %v9864 = vrot.slane %v9862, 7
        %v9865 = vshll.u32 %v9515, 16
        %v9867 = vor.u32 %v9864, %v9865
        %v9868 = vsel %vm2604, %v9860, %v9867
        %s9869 = scalar_lea.vmem %s6, 12
        %v9870 = vld [vmem:[%s9869] sm:$0x3]
        %v9871 = vunpack.c.l.b16 %v9529
        %v9872 = vunpack.c.l.b16 %v9538
        %v9873 = vunpack.c.l.b16 %v9551
        %v9874 = vunpack.c.l.b16 %v9560
        %v9875 = vunpack.c.l.b16 %v9573
        %v9876 = vunpack.c.l.b16 %v9582
        %v9877 = vunpack.c.l.b16 %v9595
        %v9878 = vunpack.c.l.b16 %v9604
        %v9879 = vunpack.c.l.b16 %v9617
        %v9880 = vunpack.c.l.b16 %v9626
        %v9881 = vunpack.c.l.b16 %v9639
        %v9882 = vunpack.c.l.b16 %v9648
        %v9883 = vunpack.c.l.b16 %v9661
        %v9884 = vunpack.c.l.b16 %v9670
        %v9885 = vunpack.c.l.b16 %v9683
        %v9886 = vunpack.c.l.b16 %v9692
        %v9887 = vunpack.c.l.b16 %v9705
        %v9888 = vunpack.c.l.b16 %v9714
        %v9889 = vunpack.c.l.b16 %v9727
        %v9890 = vunpack.c.l.b16 %v9736
        %v9891 = vunpack.c.l.b16 %v9749
        %v9892 = vunpack.c.l.b16 %v9758
        %v9893 = vunpack.c.l.b16 %v9771
        %v9894 = vunpack.c.l.b16 %v9780
        %v9895 = vunpack.c.l.b16 %v9793
        %v9896 = vunpack.c.l.b16 %v9802
        %v9897 = vunpack.c.l.b16 %v9815
        %v9898 = vunpack.c.l.b16 %v9824
        %v9899 = vunpack.c.l.b16 %v9837
        %v9900 = vunpack.c.l.b16 %v9846
        %v9901 = vunpack.c.l.b16 %v9859
        %v9902 = vunpack.c.l.b16 %v9868
        %v9903 = vpack.c.b16 %v9872, %v9871
        %v9904 = vpack.c.b16 %v9874, %v9873
        %v9905 = vpack.c.b16 %v9876, %v9875
        %v9906 = vpack.c.b16 %v9878, %v9877
        %v9907 = vpack.c.b16 %v9880, %v9879
        %v9908 = vpack.c.b16 %v9882, %v9881
        %v9909 = vpack.c.b16 %v9884, %v9883
        %v9910 = vpack.c.b16 %v9886, %v9885
        %v9911 = vpack.c.b16 %v9888, %v9887
        %v9912 = vpack.c.b16 %v9890, %v9889
        %v9913 = vpack.c.b16 %v9892, %v9891
        %v9914 = vpack.c.b16 %v9894, %v9893
        %v9915 = vpack.c.b16 %v9896, %v9895
        %v9916 = vpack.c.b16 %v9898, %v9897
        %v9917 = vpack.c.b16 %v9900, %v9899
        %v9918 = vpack.c.b16 %v9902, %v9901
        %v9920 = vsel %vm700, %v9903, 0
        %v9923 = vsel %vm700, %v9904, 0
        %v9926 = vsel %vm700, %v9905, 0
        %v9929 = vsel %vm700, %v9906, 0
        %v9932 = vsel %vm700, %v9907, 0
        %v9935 = vsel %vm700, %v9908, 0
        %v9938 = vsel %vm700, %v9909, 0
        %v9941 = vsel %vm700, %v9910, 0
        %v9944 = vsel %vm700, %v9911, 0
        %v9947 = vsel %vm700, %v9912, 0
        %v9950 = vsel %vm700, %v9913, 0
        %v9953 = vsel %vm700, %v9914, 0
        %v9956 = vsel %vm700, %v9915, 0
        %v9959 = vsel %vm700, %v9916, 0
        %v9962 = vsel %vm700, %v9917, 0
        %v9965 = vsel %vm700, %v9918, 0
        %v9968 = vsel %vm713, %v9870, 0
        %9970 = vmatprep.subr.bf16.mxu0 0
        %9971 = vmatpush1.bf16.msra.mxu0 %v9968
        %9972 = vmatprep.subr.bf16.mxu0 0
        %9973 = vmatpush1.bf16.msra.mxu0 0
        %9974 = vmatprep.subr.bf16.mxu0 0
        %9975 = vmatpush1.bf16.msra.mxu0 0
        %9976 = vmatprep.subr.bf16.mxu0 0
        %9977 = vmatpush1.bf16.msra.mxu0 0
        %9978 = vmatprep.subr.bf16.mxu0 0
        %9979 = vmatpush1.bf16.msra.mxu0 0
        %9980 = vmatprep.subr.bf16.mxu0 0
        %9981 = vmatpush1.bf16.msra.mxu0 0
        %9982 = vmatprep.subr.bf16.mxu0 0
        %9983 = vmatpush1.bf16.msra.mxu0 0
        %9984 = vmatprep.subr.bf16.mxu0 0
        %9985 = vmatpush1.bf16.msra.mxu0 0
        %9986 = vmatprep.subr.bf16.mxu0 0
        %9987 = vmatpush1.bf16.msra.mxu0 0
        %9988 = vmatprep.subr.bf16.mxu0 0
        %9989 = vmatpush1.bf16.msra.mxu0 0
        %9990 = vmatprep.subr.bf16.mxu0 0
        %9991 = vmatpush1.bf16.msra.mxu0 0
        %9992 = vmatprep.subr.bf16.mxu0 0
        %9993 = vmatpush1.bf16.msra.mxu0 0
        %9994 = vmatprep.subr.bf16.mxu0 0
        %9995 = vmatpush1.bf16.msra.mxu0 0
        %9996 = vmatprep.subr.bf16.mxu0 0
        %9997 = vmatpush1.bf16.msra.mxu0 0
        %9998 = vmatprep.subr.bf16.mxu0 0
        %9999 = vmatpush1.bf16.msra.mxu0 0
        %10000 = vmatprep.subr.bf16.mxu0 0
        %10001 = vmatpush1.bf16.msra.mxu0 0
        %10002 = vmatprep.mubr.bf16.mxu0 0
        %10003 = vmatmul.mubr.bf16.gmra.mrb[0].mxu0 %v9920
        %v10004 = vpop.f32.mrb[0].mxu0
        %v10005 = vadd.f32 0.0, %v10004
        %v10006 = vpop.f32.mrb[0].mxu0
        %v10007 = vpop.f32.mrb[0].mxu0
        %v10008 = vadd.f32 0.0, %v10007
        %v10009 = vpop.f32.mrb[0].mxu0
        %10010 = vmatprep.mubr.bf16.mxu0 0
        %10011 = vmatmul.mubr.bf16.gmra.mrb[0].mxu0 %v9923
        %v10012 = vpop.f32.mrb[0].mxu0
        %v10013 = vadd.f32 0.0, %v10012
        %v10014 = vpop.f32.mrb[0].mxu0
        %v10015 = vpop.f32.mrb[0].mxu0
        %v10016 = vadd.f32 0.0, %v10015
        %v10017 = vpop.f32.mrb[0].mxu0
        %10018 = vmatprep.mubr.bf16.mxu0 0
        %10019 = vmatmul.mubr.bf16.gmra.mrb[0].mxu0 %v9926
        %v10020 = vpop.f32.mrb[0].mxu0
        %v10021 = vadd.f32 0.0, %v10020
        %v10022 = vpop.f32.mrb[0].mxu0
        %v10023 = vpop.f32.mrb[0].mxu0
        %v10024 = vadd.f32 0.0, %v10023
        %v10025 = vpop.f32.mrb[0].mxu0
        %10026 = vmatprep.mubr.bf16.mxu0 0
        %10027 = vmatmul.mubr.bf16.gmra.mrb[0].mxu0 %v9929
        %v10028 = vpop.f32.mrb[0].mxu0
        %v10029 = vadd.f32 0.0, %v10028
        %v10030 = vpop.f32.mrb[0].mxu0
        %v10031 = vpop.f32.mrb[0].mxu0
        %v10032 = vadd.f32 0.0, %v10031
        %v10033 = vpop.f32.mrb[0].mxu0
        %10034 = vmatprep.mubr.bf16.mxu0 0
        %10035 = vmatmul.mubr.bf16.gmra.mrb[0].mxu0 %v9932
        %v10036 = vpop.f32.mrb[0].mxu0
        %v10037 = vadd.f32 0.0, %v10036
        %v10038 = vpop.f32.mrb[0].mxu0
        %v10039 = vpop.f32.mrb[0].mxu0
        %v10040 = vadd.f32 0.0, %v10039
        %v10041 = vpop.f32.mrb[0].mxu0
        %10042 = vmatprep.mubr.bf16.mxu0 0
        %10043 = vmatmul.mubr.bf16.gmra.mrb[0].mxu0 %v9935
        %v10044 = vpop.f32.mrb[0].mxu0
        %v10045 = vadd.f32 0.0, %v10044
        %v10046 = vpop.f32.mrb[0].mxu0
        %v10047 = vpop.f32.mrb[0].mxu0
        %v10048 = vadd.f32 0.0, %v10047
        %v10049 = vpop.f32.mrb[0].mxu0
        %10050 = vmatprep.mubr.bf16.mxu0 0
        %10051 = vmatmul.mubr.bf16.gmra.mrb[0].mxu0 %v9938
        %v10052 = vpop.f32.mrb[0].mxu0
        %v10053 = vadd.f32 0.0, %v10052
        %v10054 = vpop.f32.mrb[0].mxu0
        %v10055 = vpop.f32.mrb[0].mxu0
        %v10056 = vadd.f32 0.0, %v10055
        %v10057 = vpop.f32.mrb[0].mxu0
        %10058 = vmatprep.mubr.bf16.mxu0 0
        %10059 = vmatmul.mubr.bf16.gmra.mrb[0].mxu0 %v9941
        %v10060 = vpop.f32.mrb[0].mxu0
        %v10061 = vadd.f32 0.0, %v10060
        %v10062 = vpop.f32.mrb[0].mxu0
        %v10063 = vpop.f32.mrb[0].mxu0
        %v10064 = vadd.f32 0.0, %v10063
        %v10065 = vpop.f32.mrb[0].mxu0
        %10066 = vmatprep.mubr.bf16.mxu0 0
        %10067 = vmatmul.mubr.bf16.gmra.mrb[0].mxu0 %v9944
        %v10068 = vpop.f32.mrb[0].mxu0
        %v10069 = vadd.f32 0.0, %v10068
        %v10070 = vpop.f32.mrb[0].mxu0
        %v10071 = vpop.f32.mrb[0].mxu0
        %v10072 = vadd.f32 0.0, %v10071
        %v10073 = vpop.f32.mrb[0].mxu0
        %10074 = vmatprep.mubr.bf16.mxu0 0
        %10075 = vmatmul.mubr.bf16.gmra.mrb[0].mxu0 %v9947
        %v10076 = vpop.f32.mrb[0].mxu0
        %v10077 = vadd.f32 0.0, %v10076
        %v10078 = vpop.f32.mrb[0].mxu0
        %v10079 = vpop.f32.mrb[0].mxu0
        %v10080 = vadd.f32 0.0, %v10079
        %v10081 = vpop.f32.mrb[0].mxu0
        %10082 = vmatprep.mubr.bf16.mxu0 0
        %10083 = vmatmul.mubr.bf16.gmra.mrb[0].mxu0 %v9950
        %v10084 = vpop.f32.mrb[0].mxu0
        %v10085 = vadd.f32 0.0, %v10084
        %v10086 = vpop.f32.mrb[0].mxu0
        %v10087 = vpop.f32.mrb[0].mxu0
        %v10088 = vadd.f32 0.0, %v10087
        %v10089 = vpop.f32.mrb[0].mxu0
        %10090 = vmatprep.mubr.bf16.mxu0 0
        %10091 = vmatmul.mubr.bf16.gmra.mrb[0].mxu0 %v9953
        %v10092 = vpop.f32.mrb[0].mxu0
        %v10093 = vadd.f32 0.0, %v10092
        %v10094 = vpop.f32.mrb[0].mxu0
        %v10095 = vpop.f32.mrb[0].mxu0
        %v10096 = vadd.f32 0.0, %v10095
        %v10097 = vpop.f32.mrb[0].mxu0
        %10098 = vmatprep.mubr.bf16.mxu0 0
        %10099 = vmatmul.mubr.bf16.gmra.mrb[0].mxu0 %v9956
        %v10100 = vpop.f32.mrb[0].mxu0
        %v10101 = vadd.f32 0.0, %v10100
        %v10102 = vpop.f32.mrb[0].mxu0
        %v10103 = vpop.f32.mrb[0].mxu0
        %v10104 = vadd.f32 0.0, %v10103
        %v10105 = vpop.f32.mrb[0].mxu0
        %10106 = vmatprep.mubr.bf16.mxu0 0
        %10107 = vmatmul.mubr.bf16.gmra.mrb[0].mxu0 %v9959
        %v10108 = vpop.f32.mrb[0].mxu0
        %v10109 = vadd.f32 0.0, %v10108
        %v10110 = vpop.f32.mrb[0].mxu0
        %v10111 = vpop.f32.mrb[0].mxu0
        %v10112 = vadd.f32 0.0, %v10111
        %v10113 = vpop.f32.mrb[0].mxu0
        %10114 = vmatprep.mubr.bf16.mxu0 0
        %10115 = vmatmul.mubr.bf16.gmra.mrb[0].mxu0 %v9962
        %v10116 = vpop.f32.mrb[0].mxu0
        %v10117 = vadd.f32 0.0, %v10116
        %v10118 = vpop.f32.mrb[0].mxu0
        %v10119 = vpop.f32.mrb[0].mxu0
        %v10120 = vadd.f32 0.0, %v10119
        %v10121 = vpop.f32.mrb[0].mxu0
        %10122 = vmatprep.mubr.bf16.mxu0 0
        %10123 = vmatmul.mubr.bf16.gmra.mrb[0].mxu0 %v9965
        %v10124 = vpop.f32.mrb[0].mxu0
        %v10125 = vadd.f32 0.0, %v10124
        %v10126 = vpop.f32.mrb[0].mxu0
        %v10127 = vpop.f32.mrb[0].mxu0
        %v10128 = vadd.f32 0.0, %v10127
        %v10129 = vpop.f32.mrb[0].mxu0
        %10130 = vdwg.mxu0
        %v10131 = vadd.f32 %v7704, %v10005
        %v10132 = vadd.f32 %v7705, %v10008
        %v10133 = vadd.f32 %v7706, %v10013
        %v10134 = vadd.f32 %v7707, %v10016
        %v10135 = vadd.f32 %v7708, %v10021
        %v10136 = vadd.f32 %v7709, %v10024
        %v10137 = vadd.f32 %v7710, %v10029
        %v10138 = vadd.f32 %v7711, %v10032
        %v10139 = vadd.f32 %v7712, %v10037
        %v10140 = vadd.f32 %v7713, %v10040
        %v10141 = vadd.f32 %v7714, %v10045
        %v10142 = vadd.f32 %v7715, %v10048
        %v10143 = vadd.f32 %v7716, %v10053
        %v10144 = vadd.f32 %v7717, %v10056
        %v10145 = vadd.f32 %v7718, %v10061
        %v10146 = vadd.f32 %v7719, %v10064
        %v10147 = vadd.f32 %v7720, %v10069
        %v10148 = vadd.f32 %v7721, %v10072
        %v10149 = vadd.f32 %v7722, %v10077
        %v10150 = vadd.f32 %v7723, %v10080
        %v10151 = vadd.f32 %v7724, %v10085
        %v10152 = vadd.f32 %v7725, %v10088
        %v10153 = vadd.f32 %v7726, %v10093
        %v10154 = vadd.f32 %v7727, %v10096
        %v10155 = vadd.f32 %v7728, %v10101
        %v10156 = vadd.f32 %v7729, %v10104
        %v10157 = vadd.f32 %v7730, %v10109
        %v10158 = vadd.f32 %v7731, %v10112
        %v10159 = vadd.f32 %v7732, %v10117
        %v10160 = vadd.f32 %v7733, %v10120
        %v10161 = vadd.f32 %v7734, %v10125
        %v10162 = vadd.f32 %v7735, %v10128
        %s10163 = scalar_lea.vmem %s6, 14
        %v10164 = vld [vmem:[%s10163] sm:$0x3]
        %v10197 = vunpack.c.l.b16 %v9454
        %v10198 = vunpack.c.l.b16 %v9455
        %v10199 = vunpack.c.l.b16 %v9458
        %v10200 = vunpack.c.l.b16 %v9459
        %v10201 = vunpack.c.l.b16 %v9462
        %v10202 = vunpack.c.l.b16 %v9463
        %v10203 = vunpack.c.l.b16 %v9466
        %v10204 = vunpack.c.l.b16 %v9467
        %v10205 = vunpack.c.l.b16 %v9470
        %v10206 = vunpack.c.l.b16 %v9471
        %v10207 = vunpack.c.l.b16 %v9474
        %v10208 = vunpack.c.l.b16 %v9475
        %v10209 = vunpack.c.l.b16 %v9478
        %v10210 = vunpack.c.l.b16 %v9479
        %v10211 = vunpack.c.l.b16 %v9482
        %v10212 = vunpack.c.l.b16 %v9483
        %v10213 = vunpack.c.l.b16 %v9486
        %v10214 = vunpack.c.l.b16 %v9487
        %v10215 = vunpack.c.l.b16 %v9490
        %v10216 = vunpack.c.l.b16 %v9491
        %v10217 = vunpack.c.l.b16 %v9494
        %v10218 = vunpack.c.l.b16 %v9495
        %v10219 = vunpack.c.l.b16 %v9498
        %v10220 = vunpack.c.l.b16 %v9499
        %v10221 = vunpack.c.l.b16 %v9502
        %v10222 = vunpack.c.l.b16 %v9503
        %v10223 = vunpack.c.l.b16 %v9506
        %v10224 = vunpack.c.l.b16 %v9507
        %v10225 = vunpack.c.l.b16 %v9510
        %v10226 = vunpack.c.l.b16 %v9511
        %v10227 = vunpack.c.l.b16 %v9514
        %v10228 = vunpack.c.l.b16 %v9515
        %v10229 = vpack.c.b16 %v10198, %v10197
        %v10230 = vpack.c.b16 %v10200, %v10199
        %v10231 = vpack.c.b16 %v10202, %v10201
        %v10232 = vpack.c.b16 %v10204, %v10203
        %v10233 = vpack.c.b16 %v10206, %v10205
        %v10234 = vpack.c.b16 %v10208, %v10207
        %v10235 = vpack.c.b16 %v10210, %v10209
        %v10236 = vpack.c.b16 %v10212, %v10211
        %v10237 = vpack.c.b16 %v10214, %v10213
        %v10238 = vpack.c.b16 %v10216, %v10215
        %v10239 = vpack.c.b16 %v10218, %v10217
        %v10240 = vpack.c.b16 %v10220, %v10219
        %v10241 = vpack.c.b16 %v10222, %v10221
        %v10242 = vpack.c.b16 %v10224, %v10223
        %v10243 = vpack.c.b16 %v10226, %v10225
        %v10244 = vpack.c.b16 %v10228, %v10227
        %v10246 = vsel %vm700, %v10229, 0
        %v10249 = vsel %vm700, %v10230, 0
        %v10252 = vsel %vm700, %v10231, 0
        %v10255 = vsel %vm700, %v10232, 0
        %v10258 = vsel %vm700, %v10233, 0
        %v10261 = vsel %vm700, %v10234, 0
        %v10264 = vsel %vm700, %v10235, 0
        %v10267 = vsel %vm700, %v10236, 0
        %v10270 = vsel %vm700, %v10237, 0
        %v10273 = vsel %vm700, %v10238, 0
        %v10276 = vsel %vm700, %v10239, 0
        %v10279 = vsel %vm700, %v10240, 0
        %v10282 = vsel %vm700, %v10241, 0
        %v10285 = vsel %vm700, %v10242, 0
        %v10288 = vsel %vm700, %v10243, 0
        %v10291 = vsel %vm700, %v10244, 0
        %v10294 = vsel %vm713, %v10164, 0
        %10296 = vmatprep.subr.bf16.mxu0 0
        %10297 = vmatpush1.bf16.msra.mxu0 %v10294
        %10298 = vmatprep.subr.bf16.mxu0 0
        %10299 = vmatpush1.bf16.msra.mxu0 0
        %10300 = vmatprep.subr.bf16.mxu0 0
        %10301 = vmatpush1.bf16.msra.mxu0 0
        %10302 = vmatprep.subr.bf16.mxu0 0
        %10303 = vmatpush1.bf16.msra.mxu0 0
        %10304 = vmatprep.subr.bf16.mxu0 0
        %10305 = vmatpush1.bf16.msra.mxu0 0
        %10306 = vmatprep.subr.bf16.mxu0 0
        %10307 = vmatpush1.bf16.msra.mxu0 0
        %10308 = vmatprep.subr.bf16.mxu0 0
        %10309 = vmatpush1.bf16.msra.mxu0 0
        %10310 = vmatprep.subr.bf16.mxu0 0
        %10311 = vmatpush1.bf16.msra.mxu0 0
        %10312 = vmatprep.subr.bf16.mxu0 0
        %10313 = vmatpush1.bf16.msra.mxu0 0
        %10314 = vmatprep.subr.bf16.mxu0 0
        %10315 = vmatpush1.bf16.msra.mxu0 0
        %10316 = vmatprep.subr.bf16.mxu0 0
        %10317 = vmatpush1.bf16.msra.mxu0 0
        %10318 = vmatprep.subr.bf16.mxu0 0
        %10319 = vmatpush1.bf16.msra.mxu0 0
        %10320 = vmatprep.subr.bf16.mxu0 0
        %10321 = vmatpush1.bf16.msra.mxu0 0
        %10322 = vmatprep.subr.bf16.mxu0 0
        %10323 = vmatpush1.bf16.msra.mxu0 0
        %10324 = vmatprep.subr.bf16.mxu0 0
        %10325 = vmatpush1.bf16.msra.mxu0 0
        %10326 = vmatprep.subr.bf16.mxu0 0
        %10327 = vmatpush1.bf16.msra.mxu0 0
        %10328 = vmatprep.mubr.bf16.mxu0 0
        %10329 = vmatmul.mubr.bf16.gmra.mrb[0].mxu0 %v10246
        %v10330 = vpop.f32.mrb[0].mxu0
        %v10331 = vadd.f32 0.0, %v10330
        %v10332 = vpop.f32.mrb[0].mxu0
        %v10333 = vpop.f32.mrb[0].mxu0
        %v10334 = vadd.f32 0.0, %v10333
        %v10335 = vpop.f32.mrb[0].mxu0
        %10336 = vmatprep.mubr.bf16.mxu0 0
        %10337 = vmatmul.mubr.bf16.gmra.mrb[0].mxu0 %v10249
        %v10338 = vpop.f32.mrb[0].mxu0
        %v10339 = vadd.f32 0.0, %v10338
        %v10340 = vpop.f32.mrb[0].mxu0
        %v10341 = vpop.f32.mrb[0].mxu0
        %v10342 = vadd.f32 0.0, %v10341
        %v10343 = vpop.f32.mrb[0].mxu0
        %10344 = vmatprep.mubr.bf16.mxu0 0
        %10345 = vmatmul.mubr.bf16.gmra.mrb[0].mxu0 %v10252
        %v10346 = vpop.f32.mrb[0].mxu0
        %v10347 = vadd.f32 0.0, %v10346
        %v10348 = vpop.f32.mrb[0].mxu0
        %v10349 = vpop.f32.mrb[0].mxu0
        %v10350 = vadd.f32 0.0, %v10349
        %v10351 = vpop.f32.mrb[0].mxu0
        %10352 = vmatprep.mubr.bf16.mxu0 0
        %10353 = vmatmul.mubr.bf16.gmra.mrb[0].mxu0 %v10255
        %v10354 = vpop.f32.mrb[0].mxu0
        %v10355 = vadd.f32 0.0, %v10354
        %v10356 = vpop.f32.mrb[0].mxu0
        %v10357 = vpop.f32.mrb[0].mxu0
        %v10358 = vadd.f32 0.0, %v10357
        %v10359 = vpop.f32.mrb[0].mxu0
        %10360 = vmatprep.mubr.bf16.mxu0 0
        %10361 = vmatmul.mubr.bf16.gmra.mrb[0].mxu0 %v10258
        %v10362 = vpop.f32.mrb[0].mxu0
        %v10363 = vadd.f32 0.0, %v10362
        %v10364 = vpop.f32.mrb[0].mxu0
        %v10365 = vpop.f32.mrb[0].mxu0
        %v10366 = vadd.f32 0.0, %v10365
        %v10367 = vpop.f32.mrb[0].mxu0
        %10368 = vmatprep.mubr.bf16.mxu0 0
        %10369 = vmatmul.mubr.bf16.gmra.mrb[0].mxu0 %v10261
        %v10370 = vpop.f32.mrb[0].mxu0
        %v10371 = vadd.f32 0.0, %v10370
        %v10372 = vpop.f32.mrb[0].mxu0
        %v10373 = vpop.f32.mrb[0].mxu0
        %v10374 = vadd.f32 0.0, %v10373
        %v10375 = vpop.f32.mrb[0].mxu0
        %10376 = vmatprep.mubr.bf16.mxu0 0
        %10377 = vmatmul.mubr.bf16.gmra.mrb[0].mxu0 %v10264
        %v10378 = vpop.f32.mrb[0].mxu0
        %v10379 = vadd.f32 0.0, %v10378
        %v10380 = vpop.f32.mrb[0].mxu0
        %v10381 = vpop.f32.mrb[0].mxu0
        %v10382 = vadd.f32 0.0, %v10381
        %v10383 = vpop.f32.mrb[0].mxu0
        %10384 = vmatprep.mubr.bf16.mxu0 0
        %10385 = vmatmul.mubr.bf16.gmra.mrb[0].mxu0 %v10267
        %v10386 = vpop.f32.mrb[0].mxu0
        %v10387 = vadd.f32 0.0, %v10386
        %v10388 = vpop.f32.mrb[0].mxu0
        %v10389 = vpop.f32.mrb[0].mxu0
        %v10390 = vadd.f32 0.0, %v10389
        %v10391 = vpop.f32.mrb[0].mxu0
        %10392 = vmatprep.mubr.bf16.mxu0 0
        %10393 = vmatmul.mubr.bf16.gmra.mrb[0].mxu0 %v10270
        %v10394 = vpop.f32.mrb[0].mxu0
        %v10395 = vadd.f32 0.0, %v10394
        %v10396 = vpop.f32.mrb[0].mxu0
        %v10397 = vpop.f32.mrb[0].mxu0
        %v10398 = vadd.f32 0.0, %v10397
        %v10399 = vpop.f32.mrb[0].mxu0
        %10400 = vmatprep.mubr.bf16.mxu0 0
        %10401 = vmatmul.mubr.bf16.gmra.mrb[0].mxu0 %v10273
        %v10402 = vpop.f32.mrb[0].mxu0
        %v10403 = vadd.f32 0.0, %v10402
        %v10404 = vpop.f32.mrb[0].mxu0
        %v10405 = vpop.f32.mrb[0].mxu0
        %v10406 = vadd.f32 0.0, %v10405
        %v10407 = vpop.f32.mrb[0].mxu0
        %10408 = vmatprep.mubr.bf16.mxu0 0
        %10409 = vmatmul.mubr.bf16.gmra.mrb[0].mxu0 %v10276
        %v10410 = vpop.f32.mrb[0].mxu0
        %v10411 = vadd.f32 0.0, %v10410
        %v10412 = vpop.f32.mrb[0].mxu0
        %v10413 = vpop.f32.mrb[0].mxu0
        %v10414 = vadd.f32 0.0, %v10413
        %v10415 = vpop.f32.mrb[0].mxu0
        %10416 = vmatprep.mubr.bf16.mxu0 0
        %10417 = vmatmul.mubr.bf16.gmra.mrb[0].mxu0 %v10279
        %v10418 = vpop.f32.mrb[0].mxu0
        %v10419 = vadd.f32 0.0, %v10418
        %v10420 = vpop.f32.mrb[0].mxu0
        %v10421 = vpop.f32.mrb[0].mxu0
        %v10422 = vadd.f32 0.0, %v10421
        %v10423 = vpop.f32.mrb[0].mxu0
        %10424 = vmatprep.mubr.bf16.mxu0 0
        %10425 = vmatmul.mubr.bf16.gmra.mrb[0].mxu0 %v10282
        %v10426 = vpop.f32.mrb[0].mxu0
        %v10427 = vadd.f32 0.0, %v10426
        %v10428 = vpop.f32.mrb[0].mxu0
        %v10429 = vpop.f32.mrb[0].mxu0
        %v10430 = vadd.f32 0.0, %v10429
        %v10431 = vpop.f32.mrb[0].mxu0
        %10432 = vmatprep.mubr.bf16.mxu0 0
        %10433 = vmatmul.mubr.bf16.gmra.mrb[0].mxu0 %v10285
        %v10434 = vpop.f32.mrb[0].mxu0
        %v10435 = vadd.f32 0.0, %v10434
        %v10436 = vpop.f32.mrb[0].mxu0
        %v10437 = vpop.f32.mrb[0].mxu0
        %v10438 = vadd.f32 0.0, %v10437
        %v10439 = vpop.f32.mrb[0].mxu0
        %10440 = vmatprep.mubr.bf16.mxu0 0
        %10441 = vmatmul.mubr.bf16.gmra.mrb[0].mxu0 %v10288
        %v10442 = vpop.f32.mrb[0].mxu0
        %v10443 = vadd.f32 0.0, %v10442
        %v10444 = vpop.f32.mrb[0].mxu0
        %v10445 = vpop.f32.mrb[0].mxu0
        %v10446 = vadd.f32 0.0, %v10445
        %v10447 = vpop.f32.mrb[0].mxu0
        %10448 = vmatprep.mubr.bf16.mxu0 0
        %10449 = vmatmul.mubr.bf16.gmra.mrb[0].mxu0 %v10291
        %v10450 = vpop.f32.mrb[0].mxu0
        %v10451 = vadd.f32 0.0, %v10450
        %v10452 = vpop.f32.mrb[0].mxu0
        %v10453 = vpop.f32.mrb[0].mxu0
        %v10454 = vadd.f32 0.0, %v10453
        %v10455 = vpop.f32.mrb[0].mxu0
        %10456 = vdwg.mxu0
        %v10457 = vadd.f32 %v10131, %v10331
        %v10458 = vadd.f32 %v10132, %v10334
        %v10459 = vadd.f32 %v10133, %v10339
        %v10460 = vadd.f32 %v10134, %v10342
        %v10461 = vadd.f32 %v10135, %v10347
        %v10462 = vadd.f32 %v10136, %v10350
        %v10463 = vadd.f32 %v10137, %v10355
        %v10464 = vadd.f32 %v10138, %v10358
        %v10465 = vadd.f32 %v10139, %v10363
        %v10466 = vadd.f32 %v10140, %v10366
        %v10467 = vadd.f32 %v10141, %v10371
        %v10468 = vadd.f32 %v10142, %v10374
        %v10469 = vadd.f32 %v10143, %v10379
        %v10470 = vadd.f32 %v10144, %v10382
        %v10471 = vadd.f32 %v10145, %v10387
        %v10472 = vadd.f32 %v10146, %v10390
        %v10473 = vadd.f32 %v10147, %v10395
        %v10474 = vadd.f32 %v10148, %v10398
        %v10475 = vadd.f32 %v10149, %v10403
        %v10476 = vadd.f32 %v10150, %v10406
        %v10477 = vadd.f32 %v10151, %v10411
        %v10478 = vadd.f32 %v10152, %v10414
        %v10479 = vadd.f32 %v10153, %v10419
        %v10480 = vadd.f32 %v10154, %v10422
        %v10481 = vadd.f32 %v10155, %v10427
        %v10482 = vadd.f32 %v10156, %v10430
        %v10483 = vadd.f32 %v10157, %v10435
        %v10484 = vadd.f32 %v10158, %v10438
        %v10485 = vadd.f32 %v10159, %v10443
        %v10486 = vadd.f32 %v10160, %v10446
        %v10487 = vadd.f32 %v10161, %v10451
        %v10488 = vadd.f32 %v10162, %v10454
        %v10489 = vrot.slane %v9523, 4
        %v10490 = vrot.slane %v9526, 5
        %v10491 = vor.u32 %v10489, %v10490
        %v10492 = vrot.slane %v10491, 4
        %v10493 = vrot.slane %v9535, 5
        %v10494 = vsel %vm3514, %v10492, %v10493
        %v10495 = vrot.slane %v9532, 4
        %v10496 = vor.u32 %v10495, %v10493
        %v10497 = vrot.slane %v10496, 4
        %v10499 = vshll.u32 %v9456, 16
        %v10501 = vrot.slane %v10499, 5
        %v10502 = vsel %vm3514, %v10497, %v10501
        %v10503 = vrot.slane %v9545, 4
        %v10504 = vrot.slane %v9548, 5
        %v10505 = vor.u32 %v10503, %v10504
        %v10506 = vrot.slane %v10505, 4
        %v10507 = vrot.slane %v9557, 5
        %v10508 = vsel %vm3514, %v10506, %v10507
        %v10509 = vrot.slane %v9554, 4
        %v10510 = vor.u32 %v10509, %v10507
        %v10511 = vrot.slane %v10510, 4
        %v10513 = vshll.u32 %v9460, 16
        %v10515 = vrot.slane %v10513, 5
        %v10516 = vsel %vm3514, %v10511, %v10515
        %v10517 = vrot.slane %v9567, 4
        %v10518 = vrot.slane %v9570, 5
        %v10519 = vor.u32 %v10517, %v10518
        %v10520 = vrot.slane %v10519, 4
        %v10521 = vrot.slane %v9579, 5
        %v10522 = vsel %vm3514, %v10520, %v10521
        %v10523 = vrot.slane %v9576, 4
        %v10524 = vor.u32 %v10523, %v10521
        %v10525 = vrot.slane %v10524, 4
        %v10527 = vshll.u32 %v9464, 16
        %v10529 = vrot.slane %v10527, 5
        %v10530 = vsel %vm3514, %v10525, %v10529
        %v10531 = vrot.slane %v9589, 4
        %v10532 = vrot.slane %v9592, 5
        %v10533 = vor.u32 %v10531, %v10532
        %v10534 = vrot.slane %v10533, 4
        %v10535 = vrot.slane %v9601, 5
        %v10536 = vsel %vm3514, %v10534, %v10535
        %v10537 = vrot.slane %v9598, 4
        %v10538 = vor.u32 %v10537, %v10535
        %v10539 = vrot.slane %v10538, 4
        %v10541 = vshll.u32 %v9468, 16
        %v10543 = vrot.slane %v10541, 5
        %v10544 = vsel %vm3514, %v10539, %v10543
        %v10545 = vrot.slane %v9611, 4
        %v10546 = vrot.slane %v9614, 5
        %v10547 = vor.u32 %v10545, %v10546
        %v10548 = vrot.slane %v10547, 4
        %v10549 = vrot.slane %v9623, 5
        %v10550 = vsel %vm3514, %v10548, %v10549
        %v10551 = vrot.slane %v9620, 4
        %v10552 = vor.u32 %v10551, %v10549
        %v10553 = vrot.slane %v10552, 4
        %v10555 = vshll.u32 %v9472, 16
        %v10557 = vrot.slane %v10555, 5
        %v10558 = vsel %vm3514, %v10553, %v10557
        %v10559 = vrot.slane %v9633, 4
        %v10560 = vrot.slane %v9636, 5
        %v10561 = vor.u32 %v10559, %v10560
        %v10562 = vrot.slane %v10561, 4
        %v10563 = vrot.slane %v9645, 5
        %v10564 = vsel %vm3514, %v10562, %v10563
        %v10565 = vrot.slane %v9642, 4
        %v10566 = vor.u32 %v10565, %v10563
        %v10567 = vrot.slane %v10566, 4
        %v10569 = vshll.u32 %v9476, 16
        %v10571 = vrot.slane %v10569, 5
        %v10572 = vsel %vm3514, %v10567, %v10571
        %v10573 = vrot.slane %v9655, 4
        %v10574 = vrot.slane %v9658, 5
        %v10575 = vor.u32 %v10573, %v10574
        %v10576 = vrot.slane %v10575, 4
        %v10577 = vrot.slane %v9667, 5
        %v10578 = vsel %vm3514, %v10576, %v10577
        %v10579 = vrot.slane %v9664, 4
        %v10580 = vor.u32 %v10579, %v10577
        %v10581 = vrot.slane %v10580, 4
        %v10583 = vshll.u32 %v9480, 16
        %v10585 = vrot.slane %v10583, 5
        %v10586 = vsel %vm3514, %v10581, %v10585
        %v10587 = vrot.slane %v9677, 4
        %v10588 = vrot.slane %v9680, 5
        %v10589 = vor.u32 %v10587, %v10588
        %v10590 = vrot.slane %v10589, 4
        %v10591 = vrot.slane %v9689, 5
        %v10592 = vsel %vm3514, %v10590, %v10591
        %v10593 = vrot.slane %v9686, 4
        %v10594 = vor.u32 %v10593, %v10591
        %v10595 = vrot.slane %v10594, 4
        %v10597 = vshll.u32 %v9484, 16
        %v10599 = vrot.slane %v10597, 5
        %v10600 = vsel %vm3514, %v10595, %v10599
        %v10601 = vrot.slane %v9699, 4
        %v10602 = vrot.slane %v9702, 5
        %v10603 = vor.u32 %v10601, %v10602
        %v10604 = vrot.slane %v10603, 4
        %v10605 = vrot.slane %v9711, 5
        %v10606 = vsel %vm3514, %v10604, %v10605
        %v10607 = vrot.slane %v9708, 4
        %v10608 = vor.u32 %v10607, %v10605
        %v10609 = vrot.slane %v10608, 4
        %v10611 = vshll.u32 %v9488, 16
        %v10613 = vrot.slane %v10611, 5
        %v10614 = vsel %vm3514, %v10609, %v10613
        %v10615 = vrot.slane %v9721, 4
        %v10616 = vrot.slane %v9724, 5
        %v10617 = vor.u32 %v10615, %v10616
        %v10618 = vrot.slane %v10617, 4
        %v10619 = vrot.slane %v9733, 5
        %v10620 = vsel %vm3514, %v10618, %v10619
        %v10621 = vrot.slane %v9730, 4
        %v10622 = vor.u32 %v10621, %v10619
        %v10623 = vrot.slane %v10622, 4
        %v10625 = vshll.u32 %v9492, 16
        %v10627 = vrot.slane %v10625, 5
        %v10628 = vsel %vm3514, %v10623, %v10627
        %v10629 = vrot.slane %v9743, 4
        %v10630 = vrot.slane %v9746, 5
        %v10631 = vor.u32 %v10629, %v10630
        %v10632 = vrot.slane %v10631, 4
        %v10633 = vrot.slane %v9755, 5
        %v10634 = vsel %vm3514, %v10632, %v10633
        %v10635 = vrot.slane %v9752, 4
        %v10636 = vor.u32 %v10635, %v10633
        %v10637 = vrot.slane %v10636, 4
        %v10639 = vshll.u32 %v9496, 16
        %v10641 = vrot.slane %v10639, 5
        %v10642 = vsel %vm3514, %v10637, %v10641
        %v10643 = vrot.slane %v9765, 4
        %v10644 = vrot.slane %v9768, 5
        %v10645 = vor.u32 %v10643, %v10644
        %v10646 = vrot.slane %v10645, 4
        %v10647 = vrot.slane %v9777, 5
        %v10648 = vsel %vm3514, %v10646, %v10647
        %v10649 = vrot.slane %v9774, 4
        %v10650 = vor.u32 %v10649, %v10647
        %v10651 = vrot.slane %v10650, 4
        %v10653 = vshll.u32 %v9500, 16
        %v10655 = vrot.slane %v10653, 5
        %v10656 = vsel %vm3514, %v10651, %v10655
        %v10657 = vrot.slane %v9787, 4
        %v10658 = vrot.slane %v9790, 5
        %v10659 = vor.u32 %v10657, %v10658
        %v10660 = vrot.slane %v10659, 4
        %v10661 = vrot.slane %v9799, 5
        %v10662 = vsel %vm3514, %v10660, %v10661
        %v10663 = vrot.slane %v9796, 4
        %v10664 = vor.u32 %v10663, %v10661
        %v10665 = vrot.slane %v10664, 4
        %v10667 = vshll.u32 %v9504, 16
        %v10669 = vrot.slane %v10667, 5
        %v10670 = vsel %vm3514, %v10665, %v10669
        %v10671 = vrot.slane %v9809, 4
        %v10672 = vrot.slane %v9812, 5
        %v10673 = vor.u32 %v10671, %v10672
        %v10674 = vrot.slane %v10673, 4
        %v10675 = vrot.slane %v9821, 5
        %v10676 = vsel %vm3514, %v10674, %v10675
        %v10677 = vrot.slane %v9818, 4
        %v10678 = vor.u32 %v10677, %v10675
        %v10679 = vrot.slane %v10678, 4
        %v10681 = vshll.u32 %v9508, 16
        %v10683 = vrot.slane %v10681, 5
        %v10684 = vsel %vm3514, %v10679, %v10683
        %v10685 = vrot.slane %v9831, 4
        %v10686 = vrot.slane %v9834, 5
        %v10687 = vor.u32 %v10685, %v10686
        %v10688 = vrot.slane %v10687, 4
        %v10689 = vrot.slane %v9843, 5
        %v10690 = vsel %vm3514, %v10688, %v10689
        %v10691 = vrot.slane %v9840, 4
        %v10692 = vor.u32 %v10691, %v10689
        %v10693 = vrot.slane %v10692, 4
        %v10695 = vshll.u32 %v9512, 16
        %v10697 = vrot.slane %v10695, 5
        %v10698 = vsel %vm3514, %v10693, %v10697
        %v10699 = vrot.slane %v9853, 4
        %v10700 = vrot.slane %v9856, 5
        %v10701 = vor.u32 %v10699, %v10700
        %v10702 = vrot.slane %v10701, 4
        %v10703 = vrot.slane %v9865, 5
        %v10704 = vsel %vm3514, %v10702, %v10703
        %v10705 = vrot.slane %v9862, 4
        %v10706 = vor.u32 %v10705, %v10703
        %v10707 = vrot.slane %v10706, 4
        %v10709 = vshll.u32 %v9516, 16
        %v10711 = vrot.slane %v10709, 5
        %v10712 = vsel %vm3514, %v10707, %v10711
        %s10713 = scalar_lea.vmem %s6, 16
        %v10714 = vld [vmem:[%s10713] sm:$0x3]
        %v10715 = vunpack.c.l.b16 %v10494
        %v10716 = vunpack.c.l.b16 %v10502
        %v10717 = vunpack.c.l.b16 %v10508
        %v10718 = vunpack.c.l.b16 %v10516
        %v10719 = vunpack.c.l.b16 %v10522
        %v10720 = vunpack.c.l.b16 %v10530
        %v10721 = vunpack.c.l.b16 %v10536
        %v10722 = vunpack.c.l.b16 %v10544
        %v10723 = vunpack.c.l.b16 %v10550
        %v10724 = vunpack.c.l.b16 %v10558
        %v10725 = vunpack.c.l.b16 %v10564
        %v10726 = vunpack.c.l.b16 %v10572
        %v10727 = vunpack.c.l.b16 %v10578
        %v10728 = vunpack.c.l.b16 %v10586
        %v10729 = vunpack.c.l.b16 %v10592
        %v10730 = vunpack.c.l.b16 %v10600
        %v10731 = vunpack.c.l.b16 %v10606
        %v10732 = vunpack.c.l.b16 %v10614
        %v10733 = vunpack.c.l.b16 %v10620
        %v10734 = vunpack.c.l.b16 %v10628
        %v10735 = vunpack.c.l.b16 %v10634
        %v10736 = vunpack.c.l.b16 %v10642
        %v10737 = vunpack.c.l.b16 %v10648
        %v10738 = vunpack.c.l.b16 %v10656
        %v10739 = vunpack.c.l.b16 %v10662
        %v10740 = vunpack.c.l.b16 %v10670
        %v10741 = vunpack.c.l.b16 %v10676
        %v10742 = vunpack.c.l.b16 %v10684
        %v10743 = vunpack.c.l.b16 %v10690
        %v10744 = vunpack.c.l.b16 %v10698
        %v10745 = vunpack.c.l.b16 %v10704
        %v10746 = vunpack.c.l.b16 %v10712
        %v10747 = vpack.c.b16 %v10716, %v10715
        %v10748 = vpack.c.b16 %v10718, %v10717
        %v10749 = vpack.c.b16 %v10720, %v10719
        %v10750 = vpack.c.b16 %v10722, %v10721
        %v10751 = vpack.c.b16 %v10724, %v10723
        %v10752 = vpack.c.b16 %v10726, %v10725
        %v10753 = vpack.c.b16 %v10728, %v10727
        %v10754 = vpack.c.b16 %v10730, %v10729
        %v10755 = vpack.c.b16 %v10732, %v10731
        %v10756 = vpack.c.b16 %v10734, %v10733
        %v10757 = vpack.c.b16 %v10736, %v10735
        %v10758 = vpack.c.b16 %v10738, %v10737
        %v10759 = vpack.c.b16 %v10740, %v10739
        %v10760 = vpack.c.b16 %v10742, %v10741
        %v10761 = vpack.c.b16 %v10744, %v10743
        %v10762 = vpack.c.b16 %v10746, %v10745
        %v10764 = vsel %vm700, %v10747, 0
        %v10767 = vsel %vm700, %v10748, 0
        %v10770 = vsel %vm700, %v10749, 0
        %v10773 = vsel %vm700, %v10750, 0
        %v10776 = vsel %vm700, %v10751, 0
        %v10779 = vsel %vm700, %v10752, 0
        %v10782 = vsel %vm700, %v10753, 0
        %v10785 = vsel %vm700, %v10754, 0
        %v10788 = vsel %vm700, %v10755, 0
        %v10791 = vsel %vm700, %v10756, 0
        %v10794 = vsel %vm700, %v10757, 0
        %v10797 = vsel %vm700, %v10758, 0
        %v10800 = vsel %vm700, %v10759, 0
        %v10803 = vsel %vm700, %v10760, 0
        %v10806 = vsel %vm700, %v10761, 0
        %v10809 = vsel %vm700, %v10762, 0
        %v10812 = vsel %vm713, %v10714, 0
        %10814 = vmatprep.subr.bf16.mxu0 0
        %10815 = vmatpush1.bf16.msra.mxu0 %v10812
        %10816 = vmatprep.subr.bf16.mxu0 0
        %10817 = vmatpush1.bf16.msra.mxu0 0
        %10818 = vmatprep.subr.bf16.mxu0 0
        %10819 = vmatpush1.bf16.msra.mxu0 0
        %10820 = vmatprep.subr.bf16.mxu0 0
        %10821 = vmatpush1.bf16.msra.mxu0 0
        %10822 = vmatprep.subr.bf16.mxu0 0
        %10823 = vmatpush1.bf16.msra.mxu0 0
        %10824 = vmatprep.subr.bf16.mxu0 0
        %10825 = vmatpush1.bf16.msra.mxu0 0
        %10826 = vmatprep.subr.bf16.mxu0 0
        %10827 = vmatpush1.bf16.msra.mxu0 0
        %10828 = vmatprep.subr.bf16.mxu0 0
        %10829 = vmatpush1.bf16.msra.mxu0 0
        %10830 = vmatprep.subr.bf16.mxu0 0
        %10831 = vmatpush1.bf16.msra.mxu0 0
        %10832 = vmatprep.subr.bf16.mxu0 0
        %10833 = vmatpush1.bf16.msra.mxu0 0
        %10834 = vmatprep.subr.bf16.mxu0 0
        %10835 = vmatpush1.bf16.msra.mxu0 0
        %10836 = vmatprep.subr.bf16.mxu0 0
        %10837 = vmatpush1.bf16.msra.mxu0 0
        %10838 = vmatprep.subr.bf16.mxu0 0
        %10839 = vmatpush1.bf16.msra.mxu0 0
        %10840 = vmatprep.subr.bf16.mxu0 0
        %10841 = vmatpush1.bf16.msra.mxu0 0
        %10842 = vmatprep.subr.bf16.mxu0 0
        %10843 = vmatpush1.bf16.msra.mxu0 0
        %10844 = vmatprep.subr.bf16.mxu0 0
        %10845 = vmatpush1.bf16.msra.mxu0 0
        %10846 = vmatprep.mubr.bf16.mxu0 0
        %10847 = vmatmul.mubr.bf16.gmra.mrb[0].mxu0 %v10764
        %v10848 = vpop.f32.mrb[0].mxu0
        %v10849 = vadd.f32 0.0, %v10848
        %v10850 = vpop.f32.mrb[0].mxu0
        %v10851 = vpop.f32.mrb[0].mxu0
        %v10852 = vadd.f32 0.0, %v10851
        %v10853 = vpop.f32.mrb[0].mxu0
        %10854 = vmatprep.mubr.bf16.mxu0 0
        %10855 = vmatmul.mubr.bf16.gmra.mrb[0].mxu0 %v10767
        %v10856 = vpop.f32.mrb[0].mxu0
        %v10857 = vadd.f32 0.0, %v10856
        %v10858 = vpop.f32.mrb[0].mxu0
        %v10859 = vpop.f32.mrb[0].mxu0
        %v10860 = vadd.f32 0.0, %v10859
        %v10861 = vpop.f32.mrb[0].mxu0
        %10862 = vmatprep.mubr.bf16.mxu0 0
        %10863 = vmatmul.mubr.bf16.gmra.mrb[0].mxu0 %v10770
        %v10864 = vpop.f32.mrb[0].mxu0
        %v10865 = vadd.f32 0.0, %v10864
        %v10866 = vpop.f32.mrb[0].mxu0
        %v10867 = vpop.f32.mrb[0].mxu0
        %v10868 = vadd.f32 0.0, %v10867
        %v10869 = vpop.f32.mrb[0].mxu0
        %10870 = vmatprep.mubr.bf16.mxu0 0
        %10871 = vmatmul.mubr.bf16.gmra.mrb[0].mxu0 %v10773
        %v10872 = vpop.f32.mrb[0].mxu0
        %v10873 = vadd.f32 0.0, %v10872
        %v10874 = vpop.f32.mrb[0].mxu0
        %v10875 = vpop.f32.mrb[0].mxu0
        %v10876 = vadd.f32 0.0, %v10875
        %v10877 = vpop.f32.mrb[0].mxu0
        %10878 = vmatprep.mubr.bf16.mxu0 0
        %10879 = vmatmul.mubr.bf16.gmra.mrb[0].mxu0 %v10776
        %v10880 = vpop.f32.mrb[0].mxu0
        %v10881 = vadd.f32 0.0, %v10880
        %v10882 = vpop.f32.mrb[0].mxu0
        %v10883 = vpop.f32.mrb[0].mxu0
        %v10884 = vadd.f32 0.0, %v10883
        %v10885 = vpop.f32.mrb[0].mxu0
        %10886 = vmatprep.mubr.bf16.mxu0 0
        %10887 = vmatmul.mubr.bf16.gmra.mrb[0].mxu0 %v10779
        %v10888 = vpop.f32.mrb[0].mxu0
        %v10889 = vadd.f32 0.0, %v10888
        %v10890 = vpop.f32.mrb[0].mxu0
        %v10891 = vpop.f32.mrb[0].mxu0
        %v10892 = vadd.f32 0.0, %v10891
        %v10893 = vpop.f32.mrb[0].mxu0
        %10894 = vmatprep.mubr.bf16.mxu0 0
        %10895 = vmatmul.mubr.bf16.gmra.mrb[0].mxu0 %v10782
        %v10896 = vpop.f32.mrb[0].mxu0
        %v10897 = vadd.f32 0.0, %v10896
        %v10898 = vpop.f32.mrb[0].mxu0
        %v10899 = vpop.f32.mrb[0].mxu0
        %v10900 = vadd.f32 0.0, %v10899
        %v10901 = vpop.f32.mrb[0].mxu0
        %10902 = vmatprep.mubr.bf16.mxu0 0
        %10903 = vmatmul.mubr.bf16.gmra.mrb[0].mxu0 %v10785
        %v10904 = vpop.f32.mrb[0].mxu0
        %v10905 = vadd.f32 0.0, %v10904
        %v10906 = vpop.f32.mrb[0].mxu0
        %v10907 = vpop.f32.mrb[0].mxu0
        %v10908 = vadd.f32 0.0, %v10907
        %v10909 = vpop.f32.mrb[0].mxu0
        %10910 = vmatprep.mubr.bf16.mxu0 0
        %10911 = vmatmul.mubr.bf16.gmra.mrb[0].mxu0 %v10788
        %v10912 = vpop.f32.mrb[0].mxu0
        %v10913 = vadd.f32 0.0, %v10912
        %v10914 = vpop.f32.mrb[0].mxu0
        %v10915 = vpop.f32.mrb[0].mxu0
        %v10916 = vadd.f32 0.0, %v10915
        %v10917 = vpop.f32.mrb[0].mxu0
        %10918 = vmatprep.mubr.bf16.mxu0 0
        %10919 = vmatmul.mubr.bf16.gmra.mrb[0].mxu0 %v10791
        %v10920 = vpop.f32.mrb[0].mxu0
        %v10921 = vadd.f32 0.0, %v10920
        %v10922 = vpop.f32.mrb[0].mxu0
        %v10923 = vpop.f32.mrb[0].mxu0
        %v10924 = vadd.f32 0.0, %v10923
        %v10925 = vpop.f32.mrb[0].mxu0
        %10926 = vmatprep.mubr.bf16.mxu0 0
        %10927 = vmatmul.mubr.bf16.gmra.mrb[0].mxu0 %v10794
        %v10928 = vpop.f32.mrb[0].mxu0
        %v10929 = vadd.f32 0.0, %v10928
        %v10930 = vpop.f32.mrb[0].mxu0
        %v10931 = vpop.f32.mrb[0].mxu0
        %v10932 = vadd.f32 0.0, %v10931
        %v10933 = vpop.f32.mrb[0].mxu0
        %10934 = vmatprep.mubr.bf16.mxu0 0
        %10935 = vmatmul.mubr.bf16.gmra.mrb[0].mxu0 %v10797
        %v10936 = vpop.f32.mrb[0].mxu0
        %v10937 = vadd.f32 0.0, %v10936
        %v10938 = vpop.f32.mrb[0].mxu0
        %v10939 = vpop.f32.mrb[0].mxu0
        %v10940 = vadd.f32 0.0, %v10939
        %v10941 = vpop.f32.mrb[0].mxu0
        %10942 = vmatprep.mubr.bf16.mxu0 0
        %10943 = vmatmul.mubr.bf16.gmra.mrb[0].mxu0 %v10800
        %v10944 = vpop.f32.mrb[0].mxu0
        %v10945 = vadd.f32 0.0, %v10944
        %v10946 = vpop.f32.mrb[0].mxu0
        %v10947 = vpop.f32.mrb[0].mxu0
        %v10948 = vadd.f32 0.0, %v10947
        %v10949 = vpop.f32.mrb[0].mxu0
        %10950 = vmatprep.mubr.bf16.mxu0 0
        %10951 = vmatmul.mubr.bf16.gmra.mrb[0].mxu0 %v10803
        %v10952 = vpop.f32.mrb[0].mxu0
        %v10953 = vadd.f32 0.0, %v10952
        %v10954 = vpop.f32.mrb[0].mxu0
        %v10955 = vpop.f32.mrb[0].mxu0
        %v10956 = vadd.f32 0.0, %v10955
        %v10957 = vpop.f32.mrb[0].mxu0
        %10958 = vmatprep.mubr.bf16.mxu0 0
        %10959 = vmatmul.mubr.bf16.gmra.mrb[0].mxu0 %v10806
        %v10960 = vpop.f32.mrb[0].mxu0
        %v10961 = vadd.f32 0.0, %v10960
        %v10962 = vpop.f32.mrb[0].mxu0
        %v10963 = vpop.f32.mrb[0].mxu0
        %v10964 = vadd.f32 0.0, %v10963
        %v10965 = vpop.f32.mrb[0].mxu0
        %10966 = vmatprep.mubr.bf16.mxu0 0
        %10967 = vmatmul.mubr.bf16.gmra.mrb[0].mxu0 %v10809
        %v10968 = vpop.f32.mrb[0].mxu0
        %v10969 = vadd.f32 0.0, %v10968
        %v10970 = vpop.f32.mrb[0].mxu0
        %v10971 = vpop.f32.mrb[0].mxu0
        %v10972 = vadd.f32 0.0, %v10971
        %v10973 = vpop.f32.mrb[0].mxu0
        %10974 = vdwg.mxu0
        %v10975 = vadd.f32 %v10457, %v10849
        %v10976 = vadd.f32 %v10458, %v10852
        %v10977 = vadd.f32 %v10459, %v10857
        %v10978 = vadd.f32 %v10460, %v10860
        %v10979 = vadd.f32 %v10461, %v10865
        %v10980 = vadd.f32 %v10462, %v10868
        %v10981 = vadd.f32 %v10463, %v10873
        %v10982 = vadd.f32 %v10464, %v10876
        %v10983 = vadd.f32 %v10465, %v10881
        %v10984 = vadd.f32 %v10466, %v10884
        %v10985 = vadd.f32 %v10467, %v10889
        %v10986 = vadd.f32 %v10468, %v10892
        %v10987 = vadd.f32 %v10469, %v10897
        %v10988 = vadd.f32 %v10470, %v10900
        %v10989 = vadd.f32 %v10471, %v10905
        %v10990 = vadd.f32 %v10472, %v10908
        %v10991 = vadd.f32 %v10473, %v10913
        %v10992 = vadd.f32 %v10474, %v10916
        %v10993 = vadd.f32 %v10475, %v10921
        %v10994 = vadd.f32 %v10476, %v10924
        %v10995 = vadd.f32 %v10477, %v10929
        %v10996 = vadd.f32 %v10478, %v10932
        %v10997 = vadd.f32 %v10479, %v10937
        %v10998 = vadd.f32 %v10480, %v10940
        %v10999 = vadd.f32 %v10481, %v10945
        %v11000 = vadd.f32 %v10482, %v10948
        %v11001 = vadd.f32 %v10483, %v10953
        %v11002 = vadd.f32 %v10484, %v10956
        %v11003 = vadd.f32 %v10485, %v10961
        %v11004 = vadd.f32 %v10486, %v10964
        %v11005 = vadd.f32 %v10487, %v10969
        %v11006 = vadd.f32 %v10488, %v10972
        %v11007 = vadd.f32 %v9420, %v10975
        %v11008 = vadd.f32 %v9421, %v10976
        %v11009 = vadd.f32 %v9422, %v10977
        %v11010 = vadd.f32 %v9423, %v10978
        %v11011 = vadd.f32 %v9424, %v10979
        %v11012 = vadd.f32 %v9425, %v10980
        %v11013 = vadd.f32 %v9426, %v10981
        %v11014 = vadd.f32 %v9427, %v10982
        %v11015 = vadd.f32 %v9428, %v10983
        %v11016 = vadd.f32 %v9429, %v10984
        %v11017 = vadd.f32 %v9430, %v10985
        %v11018 = vadd.f32 %v9431, %v10986
        %v11019 = vadd.f32 %v9432, %v10987
        %v11020 = vadd.f32 %v9433, %v10988
        %v11021 = vadd.f32 %v9434, %v10989
        %v11022 = vadd.f32 %v9435, %v10990
        %v11023 = vadd.f32 %v9436, %v10991
        %v11024 = vadd.f32 %v9437, %v10992
        %v11025 = vadd.f32 %v9438, %v10993
        %v11026 = vadd.f32 %v9439, %v10994
        %v11027 = vadd.f32 %v9440, %v10995
        %v11028 = vadd.f32 %v9441, %v10996
        %v11029 = vadd.f32 %v9442, %v10997
        %v11030 = vadd.f32 %v9443, %v10998
        %v11031 = vadd.f32 %v9444, %v10999
        %v11032 = vadd.f32 %v9445, %v11000
        %v11033 = vadd.f32 %v9446, %v11001
        %v11034 = vadd.f32 %v9447, %v11002
        %v11035 = vadd.f32 %v9448, %v11003
        %v11036 = vadd.f32 %v9449, %v11004
        %v11037 = vadd.f32 %v9450, %v11005
        %v11038 = vadd.f32 %v9451, %v11006
        %v11039 = vld [vmem:[%s7] sm:$0x1]
        %v11041 = vlaneseq
        %v11042 = vshrl.u32 %v11041, 7
        %v11043 = vsub.s32 0, %v11042
        %v11044 = vrot.slane %v11039, %v11043
        %v11046 = vmul.f32 %v11007, %v11044
        %v11047 = vmul.f32 %v11008, %v11044
        %v11048 = vmul.f32 %v11009, %v11044
        %v11049 = vmul.f32 %v11010, %v11044
        %v11050 = vmul.f32 %v11011, %v11044
        %v11051 = vmul.f32 %v11012, %v11044
        %v11052 = vmul.f32 %v11013, %v11044
        %v11053 = vmul.f32 %v11014, %v11044
        %v11054 = vmul.f32 %v11015, %v11044
        %v11055 = vmul.f32 %v11016, %v11044
        %v11056 = vmul.f32 %v11017, %v11044
        %v11057 = vmul.f32 %v11018, %v11044
        %v11058 = vmul.f32 %v11019, %v11044
        %v11059 = vmul.f32 %v11020, %v11044
        %v11060 = vmul.f32 %v11021, %v11044
        %v11061 = vmul.f32 %v11022, %v11044
        %v11062 = vmul.f32 %v11023, %v11044
        %v11063 = vmul.f32 %v11024, %v11044
        %v11064 = vmul.f32 %v11025, %v11044
        %v11065 = vmul.f32 %v11026, %v11044
        %v11066 = vmul.f32 %v11027, %v11044
        %v11067 = vmul.f32 %v11028, %v11044
        %v11068 = vmul.f32 %v11029, %v11044
        %v11069 = vmul.f32 %v11030, %v11044
        %v11070 = vmul.f32 %v11031, %v11044
        %v11071 = vmul.f32 %v11032, %v11044
        %v11072 = vmul.f32 %v11033, %v11044
        %v11073 = vmul.f32 %v11034, %v11044
        %v11074 = vmul.f32 %v11035, %v11044
        %v11075 = vmul.f32 %v11036, %v11044
        %v11076 = vmul.f32 %v11037, %v11044
        %v11077 = vmul.f32 %v11038, %v11044
        %v11078 = vld [vmem:[%s8] sm:$0x1]
        %v11080 = vlaneseq
        %v11081 = vshrl.u32 %v11080, 7
        %v11082 = vsub.s32 0, %v11081
        %v11083 = vrot.slane %v11078, %v11082
        %v11085 = vadd.f32 %v11046, %v11083
        %v11086 = vadd.f32 %v11047, %v11083
        %v11087 = vadd.f32 %v11048, %v11083
        %v11088 = vadd.f32 %v11049, %v11083
        %v11089 = vadd.f32 %v11050, %v11083
        %v11090 = vadd.f32 %v11051, %v11083
        %v11091 = vadd.f32 %v11052, %v11083
        %v11092 = vadd.f32 %v11053, %v11083
        %v11093 = vadd.f32 %v11054, %v11083
        %v11094 = vadd.f32 %v11055, %v11083
        %v11095 = vadd.f32 %v11056, %v11083
        %v11096 = vadd.f32 %v11057, %v11083
        %v11097 = vadd.f32 %v11058, %v11083
        %v11098 = vadd.f32 %v11059, %v11083
        %v11099 = vadd.f32 %v11060, %v11083
        %v11100 = vadd.f32 %v11061, %v11083
        %v11101 = vadd.f32 %v11062, %v11083
        %v11102 = vadd.f32 %v11063, %v11083
        %v11103 = vadd.f32 %v11064, %v11083
        %v11104 = vadd.f32 %v11065, %v11083
        %v11105 = vadd.f32 %v11066, %v11083
        %v11106 = vadd.f32 %v11067, %v11083
        %v11107 = vadd.f32 %v11068, %v11083
        %v11108 = vadd.f32 %v11069, %v11083
        %v11109 = vadd.f32 %v11070, %v11083
        %v11110 = vadd.f32 %v11071, %v11083
        %v11111 = vadd.f32 %v11072, %v11083
        %v11112 = vadd.f32 %v11073, %v11083
        %v11113 = vadd.f32 %v11074, %v11083
        %v11114 = vadd.f32 %v11075, %v11083
        %v11115 = vadd.f32 %v11076, %v11083
        %v11116 = vadd.f32 %v11077, %v11083
        %vm11117 = vcmask 261120
        %11118 = vst.msk [vmem:[%s325] sm:$0xff] %vm11117, %v11085
        %11119 = vst.msk [vmem:[%s325 + $0x8] sm:$0xff] %vm11117, %v11086
        %11120 = vst.msk [vmem:[%s325 + $0x10] sm:$0xff] %vm11117, %v11087
        %11121 = vst.msk [vmem:[%s325 + $0x18] sm:$0xff] %vm11117, %v11088
        %11122 = vst.msk [vmem:[%s325 + $0x20] sm:$0xff] %vm11117, %v11089
        %11123 = vst.msk [vmem:[%s325 + $0x28] sm:$0xff] %vm11117, %v11090
        %11124 = vst.msk [vmem:[%s325 + $0x30] sm:$0xff] %vm11117, %v11091
        %11125 = vst.msk [vmem:[%s325 + $0x38] sm:$0xff] %vm11117, %v11092
        %11126 = vst.msk [vmem:[%s325 + $0x40] sm:$0xff] %vm11117, %v11093
        %11127 = vst.msk [vmem:[%s325 + $0x48] sm:$0xff] %vm11117, %v11094
        %11128 = vst.msk [vmem:[%s325 + $0x50] sm:$0xff] %vm11117, %v11095
        %11129 = vst.msk [vmem:[%s325 + $0x58] sm:$0xff] %vm11117, %v11096
        %11130 = vst.msk [vmem:[%s325 + $0x60] sm:$0xff] %vm11117, %v11097
        %11131 = vst.msk [vmem:[%s325 + $0x68] sm:$0xff] %vm11117, %v11098
        %11132 = vst.msk [vmem:[%s325 + $0x70] sm:$0xff] %vm11117, %v11099
        %11133 = vst.msk [vmem:[%s325 + $0x78] sm:$0xff] %vm11117, %v11100
        %11134 = vst.msk [vmem:[%s325 + $0x80] sm:$0xff] %vm11117, %v11101
        %11135 = vst.msk [vmem:[%s325 + $0x88] sm:$0xff] %vm11117, %v11102
        %11136 = vst.msk [vmem:[%s325 + $0x90] sm:$0xff] %vm11117, %v11103
        %11137 = vst.msk [vmem:[%s325 + $0x98] sm:$0xff] %vm11117, %v11104
        %11138 = vst.msk [vmem:[%s325 + $0xa0] sm:$0xff] %vm11117, %v11105
        %11139 = vst.msk [vmem:[%s325 + $0xa8] sm:$0xff] %vm11117, %v11106
        %11140 = vst.msk [vmem:[%s325 + $0xb0] sm:$0xff] %vm11117, %v11107
        %11141 = vst.msk [vmem:[%s325 + $0xb8] sm:$0xff] %vm11117, %v11108
        %11142 = vst.msk [vmem:[%s325 + $0xc0] sm:$0xff] %vm11117, %v11109
        %11143 = vst.msk [vmem:[%s325 + $0xc8] sm:$0xff] %vm11117, %v11110
        %11144 = vst.msk [vmem:[%s325 + $0xd0] sm:$0xff] %vm11117, %v11111
        %11145 = vst.msk [vmem:[%s325 + $0xd8] sm:$0xff] %vm11117, %v11112
        %11146 = vst.msk [vmem:[%s325 + $0xe0] sm:$0xff] %vm11117, %v11113
        %11147 = vst.msk [vmem:[%s325 + $0xe8] sm:$0xff] %vm11117, %v11114
        %11148 = vst.msk [vmem:[%s325 + $0xf0] sm:$0xff] %vm11117, %v11115
        %11149 = vst.msk [vmem:[%s325 + $0xf8] sm:$0xff] %vm11117, %v11116
        %s11150 = sand.u32 %s225, 1
        %s11151 = scalar_lea.sflag [#allocation5], %s11150
        %s11152 = sand.u32 %s225, 1
        %s11153 = smul.addr %s11152, 256
        %s11154 = scalar_lea.vmem [#allocation4], %s11153
        // Predicated region
        $region61: #{tpu_custom_call.1} parent=55 // pred_check
          %p11155 = pneg %p235
        $region62: #{tpu_custom_call.1} parent=55 // pred_check_branch
          %11157 = sbr.rel (%p11155) target = $region64
        $region63: #{tpu_custom_call.1} parent=55 // pred_region
          %s11159 = ssub.s32 4096, 4096
          %11160 = vsyncadd %s11151, %s11159
          %s11161 = smul.addr %s23, 32
          %s11162 = smul.addr %s11161, 128
          %s11163 = scalar_lea.hbm %s9, %s11162
          %s11164 = sshll.u32 %s11154, 4
          %s11165 = int_to_ptr.vmem [resolvable:$true] %s11164
          %11170 = dma.vmem_to_hbm [thread:$0]  %s11165, 4096, %s11163, %s11151, 128, 128, 8
        $region64: #{tpu_custom_call.1} parent=55 // pred_fallthru
          _
      $region56: #{tpu_custom_call.1} parent=5 // pred_fallthru
        _
      %p11171 = scmp.le.s32.totalorder 2, %s18
      // Predicated region
      $region65: #{tpu_custom_call.1} parent=5 // pred_check
        %p11172 = pneg %p11171
      $region66: #{tpu_custom_call.1} parent=5 // pred_check_branch
        %11174 = sbr.rel (%p11172) target = $region68
      $region67: #{tpu_custom_call.1} parent=5 // pred_region
        %s11175 = ssub.s32 %s18, 2
        // Predicated region
        $region69: #{tpu_custom_call.1} parent=67 // pred_check
          %p11176 = pneg %p241
        $region70: #{tpu_custom_call.1} parent=67 // pred_check_branch
          %11178 = sbr.rel (%p11176) target = $region72
        $region71: #{tpu_custom_call.1} parent=67 // pred_region
          %s11179 = sand.u32 %s226, 1
          %s11180 = scalar_lea.sflag [#allocation5], %s11179
          %s11181 = sand.u32 %s226, 1
          %s11182 = smul.addr %s11181, 256
          %s11183 = scalar_lea.vmem [#allocation4], %s11182
          %11184 = dma.done %s11180, 4096
        $region72: #{tpu_custom_call.1} parent=67 // pred_fallthru
          _
      $region68: #{tpu_custom_call.1} parent=5 // pred_fallthru
        _
    $region6: #{tpu_custom_call.1} parent=1 // loop_footer
      %s22 = sadd.s32 1, %s18
    $region7: #{tpu_custom_call.1} parent=1 // loop_footer_branch
      %17 = sbr.rel target = $region3
    $region8: #{tpu_custom_call.1} parent=1 // loop_exit
      _
    %11185 = vsyncpa [#allocation5], 1
    %s11186 = scalar_lea.sflag [#allocation5], 1
    %11187 = vsyncpa %s11186, 1

</llo_original>
